<compile_context>
chip_gen: v7x
topology: tpu7x:2x2x1
jax: 0.10.0
libtpu: 0.0.40
codegen_flags: <defaults>
</compile_context>

<pallas_src>
import functools
import math

import jax
import jax.numpy as jnp
from jax import lax
from jax.experimental import pallas as pl
from jax.experimental.pallas import tpu as pltpu

LEAKY_SLOPE = 0.01   # torch.nn.LeakyReLU default negative_slope
BN_EPS = 1e-5        # torch.nn.BatchNorm2d default eps


def _cdiv(a, b):
    return -(-a // b)


def _round_up(a, b):
    return _cdiv(a, b) * b


def _conv_bn_act_kernel(x_ref, w_ref, b_ref, o_ref, *scratch, k, s, th, wo, c1):
    """One (batch, row-tile) grid step.

    x_ref : (1, Hp, Wp, C1)   bf16 padded NHWC image (resident across row tiles)
    w_ref : (k*k*C1, C2p)     bf16 conv weight with BN scale folded in
    b_ref : (1, C2p)          f32  fused bias ((conv_bias - mean)*scale + beta)
    o_ref : (1, th*Wo, C2p)   f32  output rows of this tile
    scratch[0] (k > 1 only): (th*Wo, k*k*C1) bf16 in-VMEM im2col block
    """
    r = pl.program_id(1)
    row0 = r * (th * s)
    m = th * wo

    def load_tap(dy, dx):
        # (th, Wo, C1) input window feeding this tile for filter tap (dy, dx).
        # Stride > 1 uses strided pl.ds ref loads so only the needed rows /
        # columns travel to vregs (no in-vreg strided selects).
        if s == 1:
            return x_ref[0, pl.ds(row0 + dy, th), dx:dx + wo, :]
        return x_ref[0, pl.ds(row0 + dy, th, stride=s),
                     pl.ds(dx, wo, stride=s), :]

    if k == 1:
        lhs = load_tap(0, 0).reshape(m, c1)
    else:
        patch_ref = scratch[0]
        for dy in range(k):
            for dx in range(k):
                col = (dy * k + dx) * c1
                patch_ref[:, col:col + c1] = load_tap(dy, dx).reshape(m, c1)
        lhs = patch_ref[...]

    # Single MXU matmul per tile (K = k*k*C1), f32 accumulation.
    y = jnp.dot(lhs, w_ref[...], preferred_element_type=jnp.float32)
    y = y + b_ref[...]                                  # conv bias + BN shift
    y = jnp.where(y >= 0.0, y, LEAKY_SLOPE * y)         # LeakyReLU
    o_ref[0] = y.astype(o_ref.dtype)


def _pick_row_tile(ho, wo, target=512):
    """Pick the row-tile height th.

    `wo` is already padded to a multiple of 8 so any th keeps the GEMM M dim
    (th*wo) sublane aligned.  Prefer a divisor of Ho with th*wo >= target; if
    none exists in a reasonable range, pick the th with the least Ho padding
    (padded rows compute on zero padding and are sliced off by the wrapper).
    """
    th_min = max(1, _cdiv(target, wo))
    best = None
    for th in range(th_min, min(ho, 2 * th_min) + 1):
        if ho % th == 0:
            best = th
            break
    if best is None:
        lo = min(th_min, ho)
        hi = min(2 * th_min, max(ho, lo))
        best = min(range(lo, hi + 1), key=lambda t: _cdiv(ho, t) * t)
    n_rt = _cdiv(ho, best)
    return best, n_rt, n_rt * best


def _build_call(n, n_rt, hp_use, wp_use, c1, kkc1, c2p, m, k, s, th, wo_pad,
                img_buffers, use_pipeline_mode):
    def spec(shape, index_map, buffers=None):
        if use_pipeline_mode and buffers == 1:
            # Constant-index (or large resident) blocks: no double buffering.
            return pl.BlockSpec(shape, index_map, pipeline_mode=pl.Buffered(1))
        return pl.BlockSpec(shape, index_map)

    kernel = functools.partial(_conv_bn_act_kernel,
                               k=k, s=s, th=th, wo=wo_pad, c1=c1)
    scratch = ([pltpu.VMEM((m, kkc1), jnp.bfloat16)] if k > 1 else [])

    # VMEM budget (lane/sublane padded blocks), clamped to chip capacity w/ headroom.
    img_bytes = hp_use * _round_up(wp_use, 8) * _round_up(c1, 128) * 2
    w_bytes = _round_up(kkc1, 16) * _round_up(c2p, 128) * 2
    b_bytes = 8 * _round_up(c2p, 128) * 4
    o_bytes = _round_up(m, 8) * _round_up(c2p, 128) * 4
    p_bytes = (_round_up(m, 16) * _round_up(kkc1, 128) * 2) if k > 1 else 0
    est = img_buffers * img_bytes + w_bytes + b_bytes + 2 * o_bytes + p_bytes
    try:
        cap = int(pltpu.get_tpu_info().vmem_capacity_bytes)
    except Exception:                         # older jax / query unavailable
        cap = 64 * 1024 * 1024
    vmem_limit = int(min(cap * 3 // 4, max(32 << 20, 2 * est)))

    # v7x: shard the batch axis across TensorCores (disjoint images); when the
    # batch is 1 let the runtime shard row tiles instead.
    dim_sem = ("parallel", "arbitrary") if n >= 2 else ("parallel", "parallel")

    return pl.pallas_call(
        kernel,
        out_shape=jax.ShapeDtypeStruct((n, n_rt * m, c2p), jnp.float32),
        grid_spec=pltpu.PrefetchScalarGridSpec(
            num_scalar_prefetch=0,
            grid=(n, n_rt),
            in_specs=[
                spec((1, hp_use, wp_use, c1), lambda b, r: (b, 0, 0, 0),
                     buffers=img_buffers),                            # image
                spec((kkc1, c2p), lambda b, r: (0, 0), buffers=1),    # weight
                spec((1, c2p), lambda b, r: (0, 0), buffers=1),       # bias
            ],
            out_specs=pl.BlockSpec((1, m, c2p), lambda b, r: (b, r, 0)),
            scratch_shapes=scratch),
        compiler_params=pltpu.CompilerParams(
            dimension_semantics=dim_sem,
            vmem_limit_bytes=vmem_limit),
    )


def conv_forward(x, weight, conv_bias, gamma, beta, run_mean, run_var, *, k, s, p):
    """Conv.forward: LeakyReLU(BatchNorm2d_eval(Conv2d(x))).  NCHW in / out.

    Not wrapped in jax.jit here so the pl.Buffered fallback below can catch
    lowering errors eagerly; wrap with jax.jit(static_argnames=("k","s","p"))
    in production.
    """
    n, c1, h, w = x.shape
    c2 = weight.shape[0]
    ho = (h + 2 * p - k) // s + 1
    wo = (w + 2 * p - k) // s + 1
    hp, wp = h + 2 * p, w + 2 * p
    kkc1 = k * k * c1
    c2p = _round_up(c2, 256) if c2 > 128 else _round_up(c2, 128)   # lane-dense N
    wo_pad = _round_up(wo, 8)                                       # aligned M tiles

    th, n_rt, ho_pad = _pick_row_tile(ho, wo_pad)
    m = th * wo_pad
    hp_use = max(hp, (ho_pad - 1) * s + k)       # extra zero rows for ragged Ho
    wp_use = max(wp, (wo_pad - 1) * s + k)       # extra zero cols for padded Wo

    # Layout glue: NCHW -> padded NHWC, bf16 for the MXU stream (single pass).
    # TODO(synk): keep channel-padded NHWC bf16 between layers to drop this pass
    #             and the slice/transpose epilogue below.
    x_pad = jnp.pad(jnp.transpose(x, (0, 2, 3, 1)),
                    ((0, 0), (p, hp_use - h - p), (p, wp_use - w - p), (0, 0))
                    ).astype(jnp.bfloat16)

    # Fold BN scale into the conv weight; conv bias + BN shift into one bias.
    bn_scale = gamma / jnp.sqrt(run_var + BN_EPS)                    # (C2,)
    w_k = jnp.transpose(weight, (2, 3, 1, 0)) * bn_scale             # (k,k,C1,C2)
    w_k = jnp.pad(w_k, ((0, 0), (0, 0), (0, 0), (0, c2p - c2)))
    w_k = w_k.reshape(kkc1, c2p).astype(jnp.bfloat16)                # K = k*k*C1
    bias = (conv_bias - run_mean) * bn_scale + beta
    bias = jnp.pad(bias, (0, c2p - c2)).reshape(1, c2p).astype(jnp.float32)

    img_bytes = hp_use * _round_up(wp_use, 8) * _round_up(c1, 128) * 2
    img_buffers = 1 if img_bytes > (4 << 20) else 2

    try:
        call = _build_call(n, n_rt, hp_use, wp_use, c1, kkc1, c2p, m, k, s, th,
                           wo_pad, img_buffers, use_pipeline_mode=True)
        out = call(x_pad, w_k, bias)
    except Exception:
        # Fallback for jax versions without BlockSpec(pipeline_mode=pl.Buffered).
        call = _build_call(n, n_rt, hp_use, wp_use, c1, kkc1, c2p, m, k, s, th,
                           wo_pad, img_buffers, use_pipeline_mode=False)
        out = call(x_pad, w_k, bias)

    # Drop row/column/channel padding, back to NCHW (module contract).
    out = out.reshape(n, ho_pad, wo_pad, c2p)[:, :ho, :wo, :c2]
    return jnp.transpose(out, (0, 3, 1, 2))


# ----------------------------- references ----------------------------------

def _reference(x, weight, conv_bias, gamma, beta, run_mean, run_var, k, s, p):
    """Full-f32 reference: LeakyReLU(BN_eval(Conv2d(x)))."""
    y = lax.conv_general_dilated(
        x, weight, window_strides=(s, s), padding=[(p, p), (p, p)],
        dimension_numbers=("NCHW", "OIHW", "NCHW"))
    y = y + conv_bias[None, :, None, None]
    y = (y - run_mean[None, :, None, None]) / jnp.sqrt(
        run_var[None, :, None, None] + BN_EPS)
    y = y * gamma[None, :, None, None] + beta[None, :, None, None]
    return jnp.where(y >= 0.0, y, LEAKY_SLOPE * y)


def _reference_bf16(x, weight, conv_bias, gamma, beta, run_mean, run_var, k, s, p):
    """Reference mirroring the kernel's bf16 operand quantization exactly."""
    bn_scale = gamma / jnp.sqrt(run_var + BN_EPS)
    w_q = (weight * bn_scale[:, None, None, None]
           ).astype(jnp.bfloat16).astype(jnp.float32)
    x_q = x.astype(jnp.bfloat16).astype(jnp.float32)
    y = lax.conv_general_dilated(
        x_q, w_q, window_strides=(s, s), padding=[(p, p), (p, p)],
        dimension_numbers=("NCHW", "OIHW", "NCHW"))
    bias = (conv_bias - run_mean) * bn_scale + beta
    y = y + bias[None, :, None, None]
    return jnp.where(y >= 0.0, y, LEAKY_SLOPE * y)


if __name__ == "__main__":
    key = jax.random.PRNGKey(0)
    configs = [
        # (c1, c2, k, s, h, w)
        (4, 8, 3, 1, 16, 16),    # common 3x3 conv
        (4, 8, 1, 1, 16, 16),    # Conv default k=1
        (8, 16, 3, 1, 32, 32),   # multiple row tiles per image
        (4, 8, 3, 1, 65, 16),    # ragged Ho (padded row tiles)
    ]
    for cfg_i, (c1, c2, k, s, h, w) in enumerate(configs):
        p = k // 2  # autopad
        kx, kw, kb, kg, kbe, km, kv = jax.random.split(
            jax.random.fold_in(key, cfg_i), 7)

        x = jax.random.normal(kx, (2, c1, h, w), dtype=jnp.float32)
        weight = 0.1 * jax.random.normal(kw, (c2, c1, k, k), dtype=jnp.float32)
        conv_bias = 0.1 * jax.random.normal(kb, (c2,), dtype=jnp.float32)
        gamma = 1.0 + 0.1 * jax.random.normal(kg, (c2,), dtype=jnp.float32)
        beta = 0.1 * jax.random.normal(kbe, (c2,), dtype=jnp.float32)
        run_mean = 0.1 * jax.random.normal(km, (c2,), dtype=jnp.float32)
        run_var = jnp.abs(1.0 + 0.1 * jax.random.normal(kv, (c2,), dtype=jnp.float32))

        out = conv_forward(x, weight, conv_bias, gamma, beta, run_mean, run_var,
                           k=k, s=s, p=p)
        out = jax.block_until_ready(out)

        ref_f32 = _reference(x, weight, conv_bias, gamma, beta, run_mean,
                             run_var, k, s, p)
        ref_q = _reference_bf16(x, weight, conv_bias, gamma, beta, run_mean,
                                run_var, k, s, p)
        ho = (h + 2 * p - k) // s + 1
        wo = (w + 2 * p - k) // s + 1
        assert out.shape == ref_f32.shape == (2, c2, ho, wo)
        # Tight check vs. a reference with matching bf16 operand quantization.
        assert jnp.max(jnp.abs(out - ref_q)) < 1e-3, "mismatch vs bf16-matched ref"
        # Loose sanity check vs. the full-precision reference (bf16 operands).
        assert jnp.max(jnp.abs(out - ref_f32)) < 1e-1, "mismatch vs f32 reference"

    print("KERNEL_OK")
</pallas_src>

<mosaic_0001>
module attributes {stable_mosaic.version = 11 : i64} {
  func.func @_conv_bn_act_kernel(%arg0: i32, %arg1: i32, %arg2: memref<1x18x18x4xbf16, #tpu.memory_space<vmem>>, %arg3: memref<36x128xbf16, #tpu.memory_space<vmem>>, %arg4: memref<1x128xf32, #tpu.memory_space<vmem>>, %arg5: memref<1x256x128xf32, #tpu.memory_space<vmem>>, %arg6: memref<256x36xbf16, #tpu.memory_space<vmem>>) attributes {dimension_semantics = [#tpu.dimension_semantics<parallel>, #tpu.dimension_semantics<arbitrary>], iteration_bounds = array<i64: 2, 1>, scalar_prefetch = 0 : i64, scratch_operands = 1 : i64, tpu.core_type = #tpu.core_type<tc>, window_params = [{transform_indices = @transform_0, window_bounds = array<i64: 1, 18, 18, 4>}, {pipeline_mode = #tpu.pipeline_mode<synchronous>, transform_indices = @transform_1, window_bounds = array<i64: 36, 128>}, {pipeline_mode = #tpu.pipeline_mode<synchronous>, transform_indices = @transform_2, window_bounds = array<i64: 1, 128>}, {transform_indices = @transform_3, window_bounds = array<i64: 1, 256, 128>}]} {
    %c16_i32 = arith.constant 16 : i32
    %0 = arith.muli %arg1, %c16_i32 : i32
    %c0_i32 = arith.constant 0 : i32
    %1 = arith.addi %0, %c0_i32 : i32
    %c0 = arith.constant 0 : index
    %2 = arith.index_cast %1 : i32 to index
    %c0_0 = arith.constant 0 : index
    %c0_1 = arith.constant 0 : index
    %3 = vector.load %arg2[%c0, %2, %c0_0, %c0_1] : memref<1x18x18x4xbf16, #tpu.memory_space<vmem>>, vector<1x16x16x4xbf16>
    %4 = vector.shape_cast %3 : vector<1x16x16x4xbf16> to vector<16x16x4xbf16>
    %5 = vector.shape_cast %4 : vector<16x16x4xbf16> to vector<256x4xbf16>
    %c0_2 = arith.constant 0 : index
    %c0_3 = arith.constant 0 : index
    %6 = vector.load %arg6[%c0_2, %c0_3] : memref<256x36xbf16, #tpu.memory_space<vmem>>, vector<256x4xbf16>
    tpu.vector_store %arg6[%c0_2, %c0_3], %5 {strides = array<i32>} : memref<256x36xbf16, #tpu.memory_space<vmem>>, vector<256x4xbf16>,
    %c0_i32_4 = arith.constant 0 : i32
    %7 = arith.addi %0, %c0_i32_4 : i32
    %c0_5 = arith.constant 0 : index
    %8 = arith.index_cast %7 : i32 to index
    %c1 = arith.constant 1 : index
    %c0_6 = arith.constant 0 : index
    %9 = vector.load %arg2[%c0_5, %8, %c1, %c0_6] : memref<1x18x18x4xbf16, #tpu.memory_space<vmem>>, vector<1x16x16x4xbf16>
    %10 = vector.shape_cast %9 : vector<1x16x16x4xbf16> to vector<16x16x4xbf16>
    %11 = vector.shape_cast %10 : vector<16x16x4xbf16> to vector<256x4xbf16>
    %c0_7 = arith.constant 0 : index
    %c4 = arith.constant 4 : index
    %12 = vector.load %arg6[%c0_7, %c4] : memref<256x36xbf16, #tpu.memory_space<vmem>>, vector<256x4xbf16>
    tpu.vector_store %arg6[%c0_7, %c4], %11 {strides = array<i32>} : memref<256x36xbf16, #tpu.memory_space<vmem>>, vector<256x4xbf16>,
    %c0_i32_8 = arith.constant 0 : i32
    %13 = arith.addi %0, %c0_i32_8 : i32
    %c0_9 = arith.constant 0 : index
    %14 = arith.index_cast %13 : i32 to index
    %c2 = arith.constant 2 : index
    %c0_10 = arith.constant 0 : index
    %15 = vector.load %arg2[%c0_9, %14, %c2, %c0_10] : memref<1x18x18x4xbf16, #tpu.memory_space<vmem>>, vector<1x16x16x4xbf16>
    %16 = vector.shape_cast %15 : vector<1x16x16x4xbf16> to vector<16x16x4xbf16>
    %17 = vector.shape_cast %16 : vector<16x16x4xbf16> to vector<256x4xbf16>
    %c0_11 = arith.constant 0 : index
    %c8 = arith.constant 8 : index
    %18 = vector.load %arg6[%c0_11, %c8] : memref<256x36xbf16, #tpu.memory_space<vmem>>, vector<256x4xbf16>
    tpu.vector_store %arg6[%c0_11, %c8], %17 {strides = array<i32>} : memref<256x36xbf16, #tpu.memory_space<vmem>>, vector<256x4xbf16>,
    %c1_i32 = arith.constant 1 : i32
    %19 = arith.addi %0, %c1_i32 : i32
    %c0_12 = arith.constant 0 : index
    %20 = arith.index_cast %19 : i32 to index
    %c0_13 = arith.constant 0 : index
    %c0_14 = arith.constant 0 : index
    %21 = vector.load %arg2[%c0_12, %20, %c0_13, %c0_14] : memref<1x18x18x4xbf16, #tpu.memory_space<vmem>>, vector<1x16x16x4xbf16>
    %22 = vector.shape_cast %21 : vector<1x16x16x4xbf16> to vector<16x16x4xbf16>
    %23 = vector.shape_cast %22 : vector<16x16x4xbf16> to vector<256x4xbf16>
    %c0_15 = arith.constant 0 : index
    %c12 = arith.constant 12 : index
    %24 = vector.load %arg6[%c0_15, %c12] : memref<256x36xbf16, #tpu.memory_space<vmem>>, vector<256x4xbf16>
    tpu.vector_store %arg6[%c0_15, %c12], %23 {strides = array<i32>} : memref<256x36xbf16, #tpu.memory_space<vmem>>, vector<256x4xbf16>,
    %c1_i32_16 = arith.constant 1 : i32
    %25 = arith.addi %0, %c1_i32_16 : i32
    %c0_17 = arith.constant 0 : index
    %26 = arith.index_cast %25 : i32 to index
    %c1_18 = arith.constant 1 : index
    %c0_19 = arith.constant 0 : index
    %27 = vector.load %arg2[%c0_17, %26, %c1_18, %c0_19] : memref<1x18x18x4xbf16, #tpu.memory_space<vmem>>, vector<1x16x16x4xbf16>
    %28 = vector.shape_cast %27 : vector<1x16x16x4xbf16> to vector<16x16x4xbf16>
    %29 = vector.shape_cast %28 : vector<16x16x4xbf16> to vector<256x4xbf16>
    %c0_20 = arith.constant 0 : index
    %c16 = arith.constant 16 : index
    %30 = vector.load %arg6[%c0_20, %c16] : memref<256x36xbf16, #tpu.memory_space<vmem>>, vector<256x4xbf16>
    tpu.vector_store %arg6[%c0_20, %c16], %29 {strides = array<i32>} : memref<256x36xbf16, #tpu.memory_space<vmem>>, vector<256x4xbf16>,
    %c1_i32_21 = arith.constant 1 : i32
    %31 = arith.addi %0, %c1_i32_21 : i32
    %c0_22 = arith.constant 0 : index
    %32 = arith.index_cast %31 : i32 to index
    %c2_23 = arith.constant 2 : index
    %c0_24 = arith.constant 0 : index
    %33 = vector.load %arg2[%c0_22, %32, %c2_23, %c0_24] : memref<1x18x18x4xbf16, #tpu.memory_space<vmem>>, vector<1x16x16x4xbf16>
    %34 = vector.shape_cast %33 : vector<1x16x16x4xbf16> to vector<16x16x4xbf16>
    %35 = vector.shape_cast %34 : vector<16x16x4xbf16> to vector<256x4xbf16>
    %c0_25 = arith.constant 0 : index
    %c20 = arith.constant 20 : index
    %36 = vector.load %arg6[%c0_25, %c20] : memref<256x36xbf16, #tpu.memory_space<vmem>>, vector<256x4xbf16>
    tpu.vector_store %arg6[%c0_25, %c20], %35 {strides = array<i32>} : memref<256x36xbf16, #tpu.memory_space<vmem>>, vector<256x4xbf16>,
    %c2_i32 = arith.constant 2 : i32
    %37 = arith.addi %0, %c2_i32 : i32
    %c0_26 = arith.constant 0 : index
    %38 = arith.index_cast %37 : i32 to index
    %c0_27 = arith.constant 0 : index
    %c0_28 = arith.constant 0 : index
    %39 = vector.load %arg2[%c0_26, %38, %c0_27, %c0_28] : memref<1x18x18x4xbf16, #tpu.memory_space<vmem>>, vector<1x16x16x4xbf16>
    %40 = vector.shape_cast %39 : vector<1x16x16x4xbf16> to vector<16x16x4xbf16>
    %41 = vector.shape_cast %40 : vector<16x16x4xbf16> to vector<256x4xbf16>
    %c0_29 = arith.constant 0 : index
    %c24 = arith.constant 24 : index
    %42 = vector.load %arg6[%c0_29, %c24] : memref<256x36xbf16, #tpu.memory_space<vmem>>, vector<256x4xbf16>
    tpu.vector_store %arg6[%c0_29, %c24], %41 {strides = array<i32>} : memref<256x36xbf16, #tpu.memory_space<vmem>>, vector<256x4xbf16>,
    %c2_i32_30 = arith.constant 2 : i32
    %43 = arith.addi %0, %c2_i32_30 : i32
    %c0_31 = arith.constant 0 : index
    %44 = arith.index_cast %43 : i32 to index
    %c1_32 = arith.constant 1 : index
    %c0_33 = arith.constant 0 : index
    %45 = vector.load %arg2[%c0_31, %44, %c1_32, %c0_33] : memref<1x18x18x4xbf16, #tpu.memory_space<vmem>>, vector<1x16x16x4xbf16>
    %46 = vector.shape_cast %45 : vector<1x16x16x4xbf16> to vector<16x16x4xbf16>
    %47 = vector.shape_cast %46 : vector<16x16x4xbf16> to vector<256x4xbf16>
    %c0_34 = arith.constant 0 : index
    %c28 = arith.constant 28 : index
    %48 = vector.load %arg6[%c0_34, %c28] : memref<256x36xbf16, #tpu.memory_space<vmem>>, vector<256x4xbf16>
    tpu.vector_store %arg6[%c0_34, %c28], %47 {strides = array<i32>} : memref<256x36xbf16, #tpu.memory_space<vmem>>, vector<256x4xbf16>,
    %c2_i32_35 = arith.constant 2 : i32
    %49 = arith.addi %0, %c2_i32_35 : i32
    %c0_36 = arith.constant 0 : index
    %50 = arith.index_cast %49 : i32 to index
    %c2_37 = arith.constant 2 : index
    %c0_38 = arith.constant 0 : index
    %51 = vector.load %arg2[%c0_36, %50, %c2_37, %c0_38] : memref<1x18x18x4xbf16, #tpu.memory_space<vmem>>, vector<1x16x16x4xbf16>
    %52 = vector.shape_cast %51 : vector<1x16x16x4xbf16> to vector<16x16x4xbf16>
    %53 = vector.shape_cast %52 : vector<16x16x4xbf16> to vector<256x4xbf16>
    %c0_39 = arith.constant 0 : index
    %c32 = arith.constant 32 : index
    %54 = vector.load %arg6[%c0_39, %c32] : memref<256x36xbf16, #tpu.memory_space<vmem>>, vector<256x4xbf16>
    tpu.vector_store %arg6[%c0_39, %c32], %53 {strides = array<i32>} : memref<256x36xbf16, #tpu.memory_space<vmem>>, vector<256x4xbf16>,
    %c0_40 = arith.constant 0 : index
    %c0_41 = arith.constant 0 : index
    %55 = vector.load %arg6[%c0_40, %c0_41] : memref<256x36xbf16, #tpu.memory_space<vmem>>, vector<256x36xbf16>
    %c0_42 = arith.constant 0 : index
    %c0_43 = arith.constant 0 : index
    %56 = vector.load %arg3[%c0_42, %c0_43] : memref<36x128xbf16, #tpu.memory_space<vmem>>, vector<36x128xbf16>
    %cst = arith.constant dense<0.000000e+00> : vector<256x128xf32>
    %57 = tpu.matmul %55, %56, %cst {dimension_numbers = #tpu.dot_dimension_numbers<[1], [0], [0], [1], [0, 0, 1, 1], [], []>} : vector<256x36xbf16>, vector<36x128xbf16>, vector<256x128xf32> -> vector<256x128xf32>
    %c0_44 = arith.constant 0 : index
    %c0_45 = arith.constant 0 : index
    %58 = vector.load %arg4[%c0_44, %c0_45] : memref<1x128xf32, #tpu.memory_space<vmem>>, vector<1x128xf32>
    %59 = vector.broadcast %58 : vector<1x128xf32> to vector<256x128xf32>
    %60 = arith.addf %57, %59 : vector<256x128xf32>
    %cst_46 = arith.constant 0.000000e+00 : f32
    %61 = vector.broadcast %cst_46 : f32 to vector<256x128xf32>
    %62 = arith.cmpf oge, %60, %61 : vector<256x128xf32>
    %cst_47 = arith.constant 0.00999999977 : f32
    %63 = vector.broadcast %cst_47 : f32 to vector<256x128xf32>
    %64 = arith.mulf %63, %60 : vector<256x128xf32>
    %65 = arith.select %62, %60, %64 : vector<256x128xi1>, vector<256x128xf32>
    %c0_48 = arith.constant 0 : index
    %c0_49 = arith.constant 0 : index
    %c0_50 = arith.constant 0 : index
    %66 = vector.load %arg5[%c0_48, %c0_49, %c0_50] : memref<1x256x128xf32, #tpu.memory_space<vmem>>, vector<1x256x128xf32>
    %67 = vector.shape_cast %66 : vector<1x256x128xf32> to vector<256x128xf32>
    %68 = vector.shape_cast %65 : vector<256x128xf32> to vector<1x256x128xf32>
    tpu.vector_store %arg5[%c0_48, %c0_49, %c0_50], %68 {strides = array<i32>} : memref<1x256x128xf32, #tpu.memory_space<vmem>>, vector<1x256x128xf32>,
    return
  }
  func.func @transform_0(%arg0: i32, %arg1: i32) -> (i32, i32, i32, i32) {
    %c0_i32 = arith.constant 0 : i32
    %c0_i32_0 = arith.constant 0 : i32
    %c0_i32_1 = arith.constant 0 : i32
    %c0_i32_2 = arith.constant 0 : i32
    return %arg0, %c0_i32, %c0_i32_0, %c0_i32_1 : i32, i32, i32, i32
  }
  func.func @transform_1(%arg0: i32, %arg1: i32) -> (i32, i32) {
    %c0_i32 = arith.constant 0 : i32
    %c0_i32_0 = arith.constant 0 : i32
    %c0_i32_1 = arith.constant 0 : i32
    return %c0_i32, %c0_i32_0 : i32, i32
  }
  func.func @transform_2(%arg0: i32, %arg1: i32) -> (i32, i32) {
    %c0_i32 = arith.constant 0 : i32
    %c0_i32_0 = arith.constant 0 : i32
    %c0_i32_1 = arith.constant 0 : i32
    return %c0_i32, %c0_i32_0 : i32, i32
  }
  func.func @transform_3(%arg0: i32, %arg1: i32) -> (i32, i32, i32) {
    %c0_i32 = arith.constant 0 : i32
    %c0_i32_0 = arith.constant 0 : i32
    return %arg0, %arg1, %c0_i32 : i32, i32, i32
  }
}

module attributes {stable_mosaic.version = 11 : i64} {
  func.func @_conv_bn_act_kernel(%arg0: i32, %arg1: i32, %arg2: memref<1x18x18x4xbf16, #tpu.memory_space<vmem>>, %arg3: memref<36x128xbf16, #tpu.memory_space<vmem>>, %arg4: memref<1x128xf32, #tpu.memory_space<vmem>>, %arg5: memref<1x256x128xf32, #tpu.memory_space<vmem>>, %arg6: memref<256x36xbf16, #tpu.memory_space<vmem>>) attributes {dimension_semantics = [#tpu.dimension_semantics<parallel>, #tpu.dimension_semantics<arbitrary>], iteration_bounds = array<i64: 2, 1>, scalar_prefetch = 0 : i64, scratch_operands = 1 : i64, tpu.core_type = #tpu.core_type<tc>, window_params = [{transform_indices = @transform_0, window_bounds = array<i64: 1, 18, 18, 4>}, {pipeline_mode = #tpu.pipeline_mode<synchronous>, transform_indices = @transform_1, window_bounds = array<i64: 36, 128>}, {pipeline_mode = #tpu.pipeline_mode<synchronous>, transform_indices = @transform_2, window_bounds = array<i64: 1, 128>}, {transform_indices = @transform_3, window_bounds = array<i64: 1, 256, 128>}]} {
    %c16_i32 = arith.constant 16 : i32
    %0 = arith.muli %arg1, %c16_i32 : i32
    %c0_i32 = arith.constant 0 : i32
    %1 = arith.addi %0, %c0_i32 : i32
    %c0 = arith.constant 0 : index
    %2 = arith.index_cast %1 : i32 to index
    %c0_0 = arith.constant 0 : index
    %c0_1 = arith.constant 0 : index
    %3 = vector.load %arg2[%c0, %2, %c0_0, %c0_1] : memref<1x18x18x4xbf16, #tpu.memory_space<vmem>>, vector<1x16x16x4xbf16>
    %4 = vector.shape_cast %3 : vector<1x16x16x4xbf16> to vector<16x16x4xbf16>
    %5 = vector.shape_cast %4 : vector<16x16x4xbf16> to vector<256x4xbf16>
    %c0_2 = arith.constant 0 : index
    %c0_3 = arith.constant 0 : index
    %6 = vector.load %arg6[%c0_2, %c0_3] : memref<256x36xbf16, #tpu.memory_space<vmem>>, vector<256x4xbf16>
    tpu.vector_store %arg6[%c0_2, %c0_3], %5 {strides = array<i32>} : memref<256x36xbf16, #tpu.memory_space<vmem>>, vector<256x4xbf16>,
    %c0_i32_4 = arith.constant 0 : i32
    %7 = arith.addi %0, %c0_i32_4 : i32
    %c0_5 = arith.constant 0 : index
    %8 = arith.index_cast %7 : i32 to index
    %c1 = arith.constant 1 : index
    %c0_6 = arith.constant 0 : index
    %9 = vector.load %arg2[%c0_5, %8, %c1, %c0_6] : memref<1x18x18x4xbf16, #tpu.memory_space<vmem>>, vector<1x16x16x4xbf16>
    %10 = vector.shape_cast %9 : vector<1x16x16x4xbf16> to vector<16x16x4xbf16>
    %11 = vector.shape_cast %10 : vector<16x16x4xbf16> to vector<256x4xbf16>
    %c0_7 = arith.constant 0 : index
    %c4 = arith.constant 4 : index
    %12 = vector.load %arg6[%c0_7, %c4] : memref<256x36xbf16, #tpu.memory_space<vmem>>, vector<256x4xbf16>
    tpu.vector_store %arg6[%c0_7, %c4], %11 {strides = array<i32>} : memref<256x36xbf16, #tpu.memory_space<vmem>>, vector<256x4xbf16>,
    %c0_i32_8 = arith.constant 0 : i32
    %13 = arith.addi %0, %c0_i32_8 : i32
    %c0_9 = arith.constant 0 : index
    %14 = arith.index_cast %13 : i32 to index
    %c2 = arith.constant 2 : index
    %c0_10 = arith.constant 0 : index
    %15 = vector.load %arg2[%c0_9, %14, %c2, %c0_10] : memref<1x18x18x4xbf16, #tpu.memory_space<vmem>>, vector<1x16x16x4xbf16>
    %16 = vector.shape_cast %15 : vector<1x16x16x4xbf16> to vector<16x16x4xbf16>
    %17 = vector.shape_cast %16 : vector<16x16x4xbf16> to vector<256x4xbf16>
    %c0_11 = arith.constant 0 : index
    %c8 = arith.constant 8 : index
    %18 = vector.load %arg6[%c0_11, %c8] : memref<256x36xbf16, #tpu.memory_space<vmem>>, vector<256x4xbf16>
    tpu.vector_store %arg6[%c0_11, %c8], %17 {strides = array<i32>} : memref<256x36xbf16, #tpu.memory_space<vmem>>, vector<256x4xbf16>,
    %c1_i32 = arith.constant 1 : i32
    %19 = arith.addi %0, %c1_i32 : i32
    %c0_12 = arith.constant 0 : index
    %20 = arith.index_cast %19 : i32 to index
    %c0_13 = arith.constant 0 : index
    %c0_14 = arith.constant 0 : index
    %21 = vector.load %arg2[%c0_12, %20, %c0_13, %c0_14] : memref<1x18x18x4xbf16, #tpu.memory_space<vmem>>, vector<1x16x16x4xbf16>
    %22 = vector.shape_cast %21 : vector<1x16x16x4xbf16> to vector<16x16x4xbf16>
    %23 = vector.shape_cast %22 : vector<16x16x4xbf16> to vector<256x4xbf16>
    %c0_15 = arith.constant 0 : index
    %c12 = arith.constant 12 : index
    %24 = vector.load %arg6[%c0_15, %c12] : memref<256x36xbf16, #tpu.memory_space<vmem>>, vector<256x4xbf16>
    tpu.vector_store %arg6[%c0_15, %c12], %23 {strides = array<i32>} : memref<256x36xbf16, #tpu.memory_space<vmem>>, vector<256x4xbf16>,
    %c1_i32_16 = arith.constant 1 : i32
    %25 = arith.addi %0, %c1_i32_16 : i32
    %c0_17 = arith.constant 0 : index
    %26 = arith.index_cast %25 : i32 to index
    %c1_18 = arith.constant 1 : index
    %c0_19 = arith.constant 0 : index
    %27 = vector.load %arg2[%c0_17, %26, %c1_18, %c0_19] : memref<1x18x18x4xbf16, #tpu.memory_space<vmem>>, vector<1x16x16x4xbf16>
    %28 = vector.shape_cast %27 : vector<1x16x16x4xbf16> to vector<16x16x4xbf16>
    %29 = vector.shape_cast %28 : vector<16x16x4xbf16> to vector<256x4xbf16>
    %c0_20 = arith.constant 0 : index
    %c16 = arith.constant 16 : index
    %30 = vector.load %arg6[%c0_20, %c16] : memref<256x36xbf16, #tpu.memory_space<vmem>>, vector<256x4xbf16>
    tpu.vector_store %arg6[%c0_20, %c16], %29 {strides = array<i32>} : memref<256x36xbf16, #tpu.memory_space<vmem>>, vector<256x4xbf16>,
    %c1_i32_21 = arith.constant 1 : i32
    %31 = arith.addi %0, %c1_i32_21 : i32
    %c0_22 = arith.constant 0 : index
    %32 = arith.index_cast %31 : i32 to index
    %c2_23 = arith.constant 2 : index
    %c0_24 = arith.constant 0 : index
    %33 = vector.load %arg2[%c0_22, %32, %c2_23, %c0_24] : memref<1x18x18x4xbf16, #tpu.memory_space<vmem>>, vector<1x16x16x4xbf16>
    %34 = vector.shape_cast %33 : vector<1x16x16x4xbf16> to vector<16x16x4xbf16>
    %35 = vector.shape_cast %34 : vector<16x16x4xbf16> to vector<256x4xbf16>
    %c0_25 = arith.constant 0 : index
    %c20 = arith.constant 20 : index
    %36 = vector.load %arg6[%c0_25, %c20] : memref<256x36xbf16, #tpu.memory_space<vmem>>, vector<256x4xbf16>
    tpu.vector_store %arg6[%c0_25, %c20], %35 {strides = array<i32>} : memref<256x36xbf16, #tpu.memory_space<vmem>>, vector<256x4xbf16>,
    %c2_i32 = arith.constant 2 : i32
    %37 = arith.addi %0, %c2_i32 : i32
    %c0_26 = arith.constant 0 : index
    %38 = arith.index_cast %37 : i32 to index
    %c0_27 = arith.constant 0 : index
    %c0_28 = arith.constant 0 : index
    %39 = vector.load %arg2[%c0_26, %38, %c0_27, %c0_28] : memref<1x18x18x4xbf16, #tpu.memory_space<vmem>>, vector<1x16x16x4xbf16>
    %40 = vector.shape_cast %39 : vector<1x16x16x4xbf16> to vector<16x16x4xbf16>
    %41 = vector.shape_cast %40 : vector<16x16x4xbf16> to vector<256x4xbf16>
    %c0_29 = arith.constant 0 : index
    %c24 = arith.constant 24 : index
    %42 = vector.load %arg6[%c0_29, %c24] : memref<256x36xbf16, #tpu.memory_space<vmem>>, vector<256x4xbf16>
    tpu.vector_store %arg6[%c0_29, %c24], %41 {strides = array<i32>} : memref<256x36xbf16, #tpu.memory_space<vmem>>, vector<256x4xbf16>,
    %c2_i32_30 = arith.constant 2 : i32
    %43 = arith.addi %0, %c2_i32_30 : i32
    %c0_31 = arith.constant 0 : index
    %44 = arith.index_cast %43 : i32 to index
    %c1_32 = arith.constant 1 : index
    %c0_33 = arith.constant 0 : index
    %45 = vector.load %arg2[%c0_31, %44, %c1_32, %c0_33] : memref<1x18x18x4xbf16, #tpu.memory_space<vmem>>, vector<1x16x16x4xbf16>
    %46 = vector.shape_cast %45 : vector<1x16x16x4xbf16> to vector<16x16x4xbf16>
    %47 = vector.shape_cast %46 : vector<16x16x4xbf16> to vector<256x4xbf16>
    %c0_34 = arith.constant 0 : index
    %c28 = arith.constant 28 : index
    %48 = vector.load %arg6[%c0_34, %c28] : memref<256x36xbf16, #tpu.memory_space<vmem>>, vector<256x4xbf16>
    tpu.vector_store %arg6[%c0_34, %c28], %47 {strides = array<i32>} : memref<256x36xbf16, #tpu.memory_space<vmem>>, vector<256x4xbf16>,
    %c2_i32_35 = arith.constant 2 : i32
    %49 = arith.addi %0, %c2_i32_35 : i32
    %c0_36 = arith.constant 0 : index
    %50 = arith.index_cast %49 : i32 to index
    %c2_37 = arith.constant 2 : index
    %c0_38 = arith.constant 0 : index
    %51 = vector.load %arg2[%c0_36, %50, %c2_37, %c0_38] : memref<1x18x18x4xbf16, #tpu.memory_space<vmem>>, vector<1x16x16x4xbf16>
    %52 = vector.shape_cast %51 : vector<1x16x16x4xbf16> to vector<16x16x4xbf16>
    %53 = vector.shape_cast %52 : vector<16x16x4xbf16> to vector<256x4xbf16>
    %c0_39 = arith.constant 0 : index
    %c32 = arith.constant 32 : index
    %54 = vector.load %arg6[%c0_39, %c32] : memref<256x36xbf16, #tpu.memory_space<vmem>>, vector<256x4xbf16>
    tpu.vector_store %arg6[%c0_39, %c32], %53 {strides = array<i32>} : memref<256x36xbf16, #tpu.memory_space<vmem>>, vector<256x4xbf16>,
    %c0_40 = arith.constant 0 : index
    %c0_41 = arith.constant 0 : index
    %55 = vector.load %arg6[%c0_40, %c0_41] : memref<256x36xbf16, #tpu.memory_space<vmem>>, vector<256x36xbf16>
    %c0_42 = arith.constant 0 : index
    %c0_43 = arith.constant 0 : index
    %56 = vector.load %arg3[%c0_42, %c0_43] : memref<36x128xbf16, #tpu.memory_space<vmem>>, vector<36x128xbf16>
    %cst = arith.constant dense<0.000000e+00> : vector<256x128xf32>
    %57 = tpu.matmul %55, %56, %cst {dimension_numbers = #tpu.dot_dimension_numbers<[1], [0], [0], [1], [0, 0, 1, 1], [], []>} : vector<256x36xbf16>, vector<36x128xbf16>, vector<256x128xf32> -> vector<256x128xf32>
    %c0_44 = arith.constant 0 : index
    %c0_45 = arith.constant 0 : index
    %58 = vector.load %arg4[%c0_44, %c0_45] : memref<1x128xf32, #tpu.memory_space<vmem>>, vector<1x128xf32>
    %59 = vector.broadcast %58 : vector<1x128xf32> to vector<256x128xf32>
    %60 = arith.addf %57, %59 : vector<256x128xf32>
    %cst_46 = arith.constant 0.000000e+00 : f32
    %61 = vector.broadcast %cst_46 : f32 to vector<256x128xf32>
    %62 = arith.cmpf oge, %60, %61 : vector<256x128xf32>
    %cst_47 = arith.constant 0.00999999977 : f32
    %63 = vector.broadcast %cst_47 : f32 to vector<256x128xf32>
    %64 = arith.mulf %63, %60 : vector<256x128xf32>
    %65 = arith.select %62, %60, %64 : vector<256x128xi1>, vector<256x128xf32>
    %c0_48 = arith.constant 0 : index
    %c0_49 = arith.constant 0 : index
    %c0_50 = arith.constant 0 : index
    %66 = vector.load %arg5[%c0_48, %c0_49, %c0_50] : memref<1x256x128xf32, #tpu.memory_space<vmem>>, vector<1x256x128xf32>
    %67 = vector.shape_cast %66 : vector<1x256x128xf32> to vector<256x128xf32>
    %68 = vector.shape_cast %65 : vector<256x128xf32> to vector<1x256x128xf32>
    tpu.vector_store %arg5[%c0_48, %c0_49, %c0_50], %68 {strides = array<i32>} : memref<1x256x128xf32, #tpu.memory_space<vmem>>, vector<1x256x128xf32>,
    return
  }
  func.func @transform_0(%arg0: i32, %arg1: i32) -> (i32, i32, i32, i32) {
    %c0_i32 = arith.constant 0 : i32
    %c0_i32_0 = arith.constant 0 : i32
    %c0_i32_1 = arith.constant 0 : i32
    %c0_i32_2 = arith.constant 0 : i32
    return %arg0, %c0_i32, %c0_i32_0, %c0_i32_1 : i32, i32, i32, i32
  }
  func.func @transform_1(%arg0: i32, %arg1: i32) -> (i32, i32) {
    %c0_i32 = arith.constant 0 : i32
    %c0_i32_0 = arith.constant 0 : i32
    %c0_i32_1 = arith.constant 0 : i32
    return %c0_i32, %c0_i32_0 : i32, i32
  }
  func.func @transform_2(%arg0: i32, %arg1: i32) -> (i32, i32) {
    %c0_i32 = arith.constant 0 : i32
    %c0_i32_0 = arith.constant 0 : i32
    %c0_i32_1 = arith.constant 0 : i32
    return %c0_i32, %c0_i32_0 : i32, i32
  }
  func.func @transform_3(%arg0: i32, %arg1: i32) -> (i32, i32, i32) {
    %c0_i32 = arith.constant 0 : i32
    %c0_i32_0 = arith.constant 0 : i32
    return %arg0, %arg1, %c0_i32 : i32, i32, i32
  }
}

</mosaic_0001>

<llo_original>
// kernel: tpu_custom_call.1
$region0: #{tpu_custom_call.1}
  #allocation0 [shape = 'u32[]', space=smem, size = 0x4, offset = 0x4, fixed_abs, tag = 'smem constant byte address 0x4 - core index']
  #allocation1 [shape = 'u32[144,128]{1,0:T(1,128)}', space=vmem, size = 0x12000, scoped, tag = 'internal scratch']
  #allocation2 [shape = 'bf16[256,36]{1,0:T(16,128)(2,1)}', space=vmem, size = 0x10000, scoped, tag = 'scratch operand']
  %s0 = inlined_call_operand.vmem [shape: bf16[2,18,18,4], index: 0, kind: input, shape index: {}]
  %s1 = inlined_call_operand.vmem [shape: bf16[36,128], index: 1, kind: input, shape index: {}]
  %s2 = inlined_call_operand.vmem [shape: f32[1,128], index: 2, kind: input, shape index: {}]
  %s3 = inlined_call_operand.hbm [shape: f32[2,256,128], index: 3, kind: output, shape index: {}]
  %s4 = sld [smem:[#allocation0]]
  $region45: #{tpu_custom_call.1} parent=0
    _
  %s6 = ssub.s32 1, %s4
  %s7 = scalar_select 0, %s6, %s4
  $region1: #{tpu_custom_call.1} parent=0
    #allocation3 [shape = 'u8[262144]{0}', space=vmem, size = 0x40000, scoped, tag = 'output window, operand 0']
    #allocation4 [shape = 's32[2]{0}', space=sflag, size = 0x8, scoped, tag = 'scoped memory for tpu_custom_call.1']
    %8 = vsyncpa [#allocation4], 0
    %s9 = scalar_lea.sflag [#allocation4], 1
    %10 = vsyncpa %s9, 0
    loop: start=0, step=1, limit=4
    $region2: #{tpu_custom_call.1} parent=1 // loop_pre_header
      _
    $region3: #{tpu_custom_call.1} parent=1 // loop_header
      %s12 = sphi 0, %s16
      %p13 = scmp.ge.s32.totalorder %s12, 4
      %s19 = sphi 0, %s31
      %s20 = sphi 0, %s27
      %s21 = sphi 0, %s19
      %s22 = sphi 0, %s20
      %s23 = sphi 0, %s21
      %s24 = sphi 0, %s22
      %s34 = sphi 0, %s36
      %s37 = sphi 0, %s34
      %s38 = sphi 0, %s37
      %s54 = sphi 0, %s38
      %s58 = sphi 0, %s58
      %s60 = sphi 0, %s58
      %s61 = sphi 0, %s60
      %s75 = sphi 0, %s61
      %s79 = sphi 0, %s79
      %s81 = sphi 0, %s79
      %s82 = sphi 0, %s81
      %s96 = sphi 0, %s82
      %s104 = sphi 0, %s106
      %s107 = sphi 0, %s104
      %s108 = sphi 0, %s107
      %s124 = sphi 0, %s108
    $region4: #{tpu_custom_call.1} parent=1 // loop_header_branch
      %15 = sbr.rel (%p13) target = $region8
    $region5: #{tpu_custom_call.1} parent=1 // loop_body
      %s17 = ssub.s32 %s12, 1
      %s18 = ssub.s32 %s12, 2
      %s25 = sadd.s32 1, %s20
      %p26 = scmp.ge.s32.totalorder %s25, 1
      %s27 = scalar_select %p26, 0, %s25
      %s28 = sadd.s32 1, %s19
      %s29 = scalar_select %p26, %s28, %s19
      %p30 = scmp.ge.s32.totalorder %s29, 2
      %s31 = scalar_select %p30, 0, %s29
      %s32 = ssub.s32 %s19, %s31
      %p33 = scmp.eq.s32.totalorder %s32, 0
      %s35 = sadd.s32 %s34, 1
      %s36 = scalar_select %p33, %s34, %s35
      %p39 = pneg %p33
      %p40 = scmp.eq.s32.totalorder %s12, 1
      %p41 = por %p39, %p40
      %p42 = scmp.ne.s32.totalorder %s34, %s37
      %p43 = scmp.eq.s32.totalorder %s12, 0
      %p44 = por %p42, %p43
      %p45 = scmp.ne.s32.totalorder %s34, %s37
      %p46 = scmp.eq.s32.totalorder %s17, 1
      %p47 = por %p45, %p46
      %p48 = scmp.ne.s32.totalorder %s37, %s38
      %p49 = scmp.eq.s32.totalorder %s17, 0
      %p50 = por %p48, %p49
      %p51 = scmp.ne.s32.totalorder %s37, %s38
      %p52 = scmp.eq.s32.totalorder %s18, 1
      %p53 = por %p51, %p52
      %p55 = scmp.ne.s32.totalorder %s38, %s54
      %p56 = scmp.eq.s32.totalorder %s18, 0
      %p57 = por %p55, %p56
      %s59 = sadd.s32 %s58, 1
      %p62 = scmp.eq.s32.totalorder %s12, 1
      %p63 = scmp.ne.s32.totalorder %s58, %s60
      %p64 = scmp.eq.s32.totalorder %s12, 0
      %p65 = por %p63, %p64
      %p66 = scmp.ne.s32.totalorder %s58, %s60
      %p67 = scmp.eq.s32.totalorder %s17, 1
      %p68 = por %p66, %p67
      %p69 = scmp.ne.s32.totalorder %s60, %s61
      %p70 = scmp.eq.s32.totalorder %s17, 0
      %p71 = por %p69, %p70
      %p72 = scmp.ne.s32.totalorder %s60, %s61
      %p73 = scmp.eq.s32.totalorder %s18, 1
      %p74 = por %p72, %p73
      %p76 = scmp.ne.s32.totalorder %s61, %s75
      %p77 = scmp.eq.s32.totalorder %s18, 0
      %p78 = por %p76, %p77
      %s80 = sadd.s32 %s79, 1
      %p83 = scmp.eq.s32.totalorder %s12, 1
      %p84 = scmp.ne.s32.totalorder %s79, %s81
      %p85 = scmp.eq.s32.totalorder %s12, 0
      %p86 = por %p84, %p85
      %p87 = scmp.ne.s32.totalorder %s79, %s81
      %p88 = scmp.eq.s32.totalorder %s17, 1
      %p89 = por %p87, %p88
      %p90 = scmp.ne.s32.totalorder %s81, %s82
      %p91 = scmp.eq.s32.totalorder %s17, 0
      %p92 = por %p90, %p91
      %p93 = scmp.ne.s32.totalorder %s81, %s82
      %p94 = scmp.eq.s32.totalorder %s18, 1
      %p95 = por %p93, %p94
      %p97 = scmp.ne.s32.totalorder %s82, %s96
      %p98 = scmp.eq.s32.totalorder %s18, 0
      %p99 = por %p97, %p98
      %s100 = ssub.s32 %s19, %s31
      %s101 = ssub.s32 %s20, %s27
      %s102 = sor.u32 %s100, %s101
      %p103 = scmp.eq.s32.totalorder %s102, 0
      %s105 = sadd.s32 %s104, 1
      %s106 = scalar_select %p103, %s104, %s105
      %p109 = pneg %p103
      %p110 = scmp.eq.s32.totalorder %s12, 1
      %p111 = por %p109, %p110
      %p112 = scmp.ne.s32.totalorder %s104, %s107
      %p113 = scmp.eq.s32.totalorder %s12, 0
      %p114 = por %p112, %p113
      %p115 = scmp.ne.s32.totalorder %s104, %s107
      %p116 = scmp.eq.s32.totalorder %s17, 1
      %p117 = por %p115, %p116
      %p118 = scmp.ne.s32.totalorder %s107, %s108
      %p119 = scmp.eq.s32.totalorder %s17, 0
      %p120 = por %p118, %p119
      %p121 = scmp.ne.s32.totalorder %s107, %s108
      %p122 = scmp.eq.s32.totalorder %s18, 1
      %p123 = por %p121, %p122
      %p125 = scmp.ne.s32.totalorder %s108, %s124
      %p126 = scmp.eq.s32.totalorder %s18, 0
      %p127 = por %p125, %p126
      %p128 = scmp.le.s32.totalorder 1, %s12
      %p129 = scmp.lt.s32.totalorder %s12, 3
      %p130 = pnand %p128, %p129
      %p131 = pneg %p130
      // Predicated region
      $region9: #{tpu_custom_call.1} parent=5 // pred_check
        _
      $region10: #{tpu_custom_call.1} parent=5 // pred_check_branch
        %133 = sbr.rel (%p130) target = $region12
      $region11: #{tpu_custom_call.1} parent=5 // pred_region
        %s134 = ssub.s32 %s12, 1
        // Predicated region
        $region13: #{tpu_custom_call.1} parent=11 // pred_check
          %p135 = pneg %p71
        $region14: #{tpu_custom_call.1} parent=11 // pred_check_branch
          %137 = sbr.rel (%p135) target = $region16
        $region15: #{tpu_custom_call.1} parent=11 // pred_region
          _
        $region16: #{tpu_custom_call.1} parent=11 // pred_fallthru
          _
        // Predicated region
        $region17: #{tpu_custom_call.1} parent=11 // pred_check
          %p138 = pneg %p92
        $region18: #{tpu_custom_call.1} parent=11 // pred_check_branch
          %140 = sbr.rel (%p138) target = $region20
        $region19: #{tpu_custom_call.1} parent=11 // pred_region
          _
        $region20: #{tpu_custom_call.1} parent=11 // pred_fallthru
          _
      $region12: #{tpu_custom_call.1} parent=5 // pred_fallthru
        _
      %p141 = scmp.lt.s32.totalorder %s12, 2
      // Predicated region
      $region21: #{tpu_custom_call.1} parent=5 // pred_check
        %p142 = pneg %p141
      $region22: #{tpu_custom_call.1} parent=5 // pred_check_branch
        %144 = sbr.rel (%p142) target = $region24
      $region23: #{tpu_custom_call.1} parent=5 // pred_region
        // Predicated region
        $region25: #{tpu_custom_call.1} parent=23 // pred_check
          %p145 = pneg %p44
        $region26: #{tpu_custom_call.1} parent=23 // pred_check_branch
          %147 = sbr.rel (%p145) target = $region28
        $region27: #{tpu_custom_call.1} parent=23 // pred_region
          %p148 = scmp.lt.s32.totalorder %s19, 1
          %s149 = scalar_select %p148, %s19, 1
          %s150 = smul.addr %s149, 54
          %s151 = smul.addr %s150, 4
          %s152 = scalar_lea.vmem %s0, %s151
        $region28: #{tpu_custom_call.1} parent=23 // pred_fallthru
          _
      $region24: #{tpu_custom_call.1} parent=5 // pred_fallthru
        _
      %p153 = scmp.le.s32.totalorder 1, %s12
      %p154 = scmp.lt.s32.totalorder %s12, 3
      %p155 = pnand %p153, %p154
      %p156 = pneg %p155
      // Predicated region
      $region29: #{tpu_custom_call.1} parent=5 // pred_check
        _
      $region30: #{tpu_custom_call.1} parent=5 // pred_check_branch
        %158 = sbr.rel (%p155) target = $region32
      $region31: #{tpu_custom_call.1} parent=5 // pred_region
        %s159 = ssub.s32 %s12, 1
        %p160 = scmp.lt.s32.totalorder %s21, 1
        %s161 = scalar_select %p160, %s21, 1
        %s162 = smul.addr %s161, 54
        %s163 = smul.addr %s162, 4
        %s164 = scalar_lea.vmem %s0, %s163
        %p165 = pneg %p50
        %p166 = pneg %p47
        %p167 = pneg %p71
        %p168 = pneg %p68
        %p169 = pneg %p92
        %p170 = pneg %p89
        %p171 = pneg %p120
        %p172 = pneg %p117
        %s173 = sand.u32 %s107, 1
        %s174 = scalar_lea.sflag [#allocation4], %s173
        %s175 = sand.u32 %s107, 1
        %s176 = smul.addr %s175, 256
        %s177 = scalar_lea.vmem [#allocation3], %s176
        %p178 = scmp.lt.s32.totalorder %s21, 1
        %s179 = scalar_select %p178, %s21, 1
        %s180 = smul.addr %s179, 54
        %s181 = smul.addr %s180, 4
        %s182 = scalar_lea.vmem %s0, %s181
        %s183 = smul.u32 32, %s22
        %s185 = smul.u32 %s22, 16
        %s186 = smul.u32 %s185, 3
        %s187 = smul.addr %s186, 4
        %s188 = scalar_lea.vmem %s182, %s187
        %v189 = vld [vmem:[%s188] sm:$0xf]
        %v190 = vld [vmem:[%s188 + $0x4] sm:$0xf]
        %v191 = vld [vmem:[%s188 + $0xc] sm:$0xf]
        %v192 = vld [vmem:[%s188 + $0x10] sm:$0xf]
        %v193 = vld [vmem:[%s188 + $0x18] sm:$0xf]
        %v194 = vld [vmem:[%s188 + $0x1c] sm:$0xf]
        %v195 = vld [vmem:[%s188 + $0x24] sm:$0xf]
        %v196 = vld [vmem:[%s188 + $0x28] sm:$0xf]
        %v197 = vld [vmem:[%s188 + $0x30] sm:$0xf]
        %v198 = vld [vmem:[%s188 + $0x34] sm:$0xf]
        %v199 = vld [vmem:[%s188 + $0x3c] sm:$0xf]
        %v200 = vld [vmem:[%s188 + $0x40] sm:$0xf]
        %v201 = vld [vmem:[%s188 + $0x48] sm:$0xf]
        %v202 = vld [vmem:[%s188 + $0x4c] sm:$0xf]
        %v203 = vld [vmem:[%s188 + $0x54] sm:$0xf]
        %v204 = vld [vmem:[%s188 + $0x58] sm:$0xf]
        %v205 = vld [vmem:[%s188 + $0x60] sm:$0xf]
        %v206 = vld [vmem:[%s188 + $0x64] sm:$0xf]
        %v207 = vld [vmem:[%s188 + $0x6c] sm:$0xf]
        %v208 = vld [vmem:[%s188 + $0x70] sm:$0xf]
        %v209 = vld [vmem:[%s188 + $0x78] sm:$0xf]
        %v210 = vld [vmem:[%s188 + $0x7c] sm:$0xf]
        %v211 = vld [vmem:[%s188 + $0x84] sm:$0xf]
        %v212 = vld [vmem:[%s188 + $0x88] sm:$0xf]
        %v213 = vld [vmem:[%s188 + $0x90] sm:$0xf]
        %v214 = vld [vmem:[%s188 + $0x94] sm:$0xf]
        %v215 = vld [vmem:[%s188 + $0x9c] sm:$0xf]
        %v216 = vld [vmem:[%s188 + $0xa0] sm:$0xf]
        %v217 = vld [vmem:[%s188 + $0xa8] sm:$0xf]
        %v218 = vld [vmem:[%s188 + $0xac] sm:$0xf]
        %v219 = vld [vmem:[%s188 + $0xb4] sm:$0xf]
        %v220 = vld [vmem:[%s188 + $0xb8] sm:$0xf]
        %v253 = vunpack.c.l.b16 %v189
        %v254 = vunpack.c.l.b16 %v190
        %v255 = vunpack.c.l.b16 %v191
        %v256 = vunpack.c.l.b16 %v192
        %v257 = vunpack.c.l.b16 %v193
        %v258 = vunpack.c.l.b16 %v194
        %v259 = vunpack.c.l.b16 %v195
        %v260 = vunpack.c.l.b16 %v196
        %v261 = vunpack.c.l.b16 %v197
        %v262 = vunpack.c.l.b16 %v198
        %v263 = vunpack.c.l.b16 %v199
        %v264 = vunpack.c.l.b16 %v200
        %v265 = vunpack.c.l.b16 %v201
        %v266 = vunpack.c.l.b16 %v202
        %v267 = vunpack.c.l.b16 %v203
        %v268 = vunpack.c.l.b16 %v204
        %v269 = vunpack.c.l.b16 %v205
        %v270 = vunpack.c.l.b16 %v206
        %v271 = vunpack.c.l.b16 %v207
        %v272 = vunpack.c.l.b16 %v208
        %v273 = vunpack.c.l.b16 %v209
        %v274 = vunpack.c.l.b16 %v210
        %v275 = vunpack.c.l.b16 %v211
        %v276 = vunpack.c.l.b16 %v212
        %v277 = vunpack.c.l.b16 %v213
        %v278 = vunpack.c.l.b16 %v214
        %v279 = vunpack.c.l.b16 %v215
        %v280 = vunpack.c.l.b16 %v216
        %v281 = vunpack.c.l.b16 %v217
        %v282 = vunpack.c.l.b16 %v218
        %v283 = vunpack.c.l.b16 %v219
        %v284 = vunpack.c.l.b16 %v220
        %v285 = vpack.c.b16 %v254, %v253
        %v286 = vpack.c.b16 %v256, %v255
        %v287 = vpack.c.b16 %v258, %v257
        %v288 = vpack.c.b16 %v260, %v259
        %v289 = vpack.c.b16 %v262, %v261
        %v290 = vpack.c.b16 %v264, %v263
        %v291 = vpack.c.b16 %v266, %v265
        %v292 = vpack.c.b16 %v268, %v267
        %v293 = vpack.c.b16 %v270, %v269
        %v294 = vpack.c.b16 %v272, %v271
        %v295 = vpack.c.b16 %v274, %v273
        %v296 = vpack.c.b16 %v276, %v275
        %v297 = vpack.c.b16 %v278, %v277
        %v298 = vpack.c.b16 %v280, %v279
        %v299 = vpack.c.b16 %v282, %v281
        %v300 = vpack.c.b16 %v284, %v283
        %vm317 = vcmask 31744
        %318 = vst.msk [vmem:[#allocation2] sm:$0xff] %vm317, %v285
        %319 = vst.msk [vmem:[#allocation2 + $0x8] sm:$0xff] %vm317, %v286
        %320 = vst.msk [vmem:[#allocation2 + $0x10] sm:$0xff] %vm317, %v287
        %321 = vst.msk [vmem:[#allocation2 + $0x18] sm:$0xff] %vm317, %v288
        %322 = vst.msk [vmem:[#allocation2 + $0x20] sm:$0xff] %vm317, %v289
        %323 = vst.msk [vmem:[#allocation2 + $0x28] sm:$0xff] %vm317, %v290
        %324 = vst.msk [vmem:[#allocation2 + $0x30] sm:$0xff] %vm317, %v291
        %325 = vst.msk [vmem:[#allocation2 + $0x38] sm:$0xff] %vm317, %v292
        %326 = vst.msk [vmem:[#allocation2 + $0x40] sm:$0xff] %vm317, %v293
        %327 = vst.msk [vmem:[#allocation2 + $0x48] sm:$0xff] %vm317, %v294
        %328 = vst.msk [vmem:[#allocation2 + $0x50] sm:$0xff] %vm317, %v295
        %329 = vst.msk [vmem:[#allocation2 + $0x58] sm:$0xff] %vm317, %v296
        %330 = vst.msk [vmem:[#allocation2 + $0x60] sm:$0xff] %vm317, %v297
        %331 = vst.msk [vmem:[#allocation2 + $0x68] sm:$0xff] %vm317, %v298
        %332 = vst.msk [vmem:[#allocation2 + $0x70] sm:$0xff] %vm317, %v299
        %333 = vst.msk [vmem:[#allocation2 + $0x78] sm:$0xff] %vm317, %v300
        %v334 = vld [vmem:[%s188] sm:$0xf]
        %v335 = vld [vmem:[%s188 + $0x4] sm:$0xf]
        %v336 = vld [vmem:[%s188 + $0x8] sm:$0x1]
        %v337 = vld [vmem:[%s188 + $0xc] sm:$0xf]
        %v338 = vld [vmem:[%s188 + $0x10] sm:$0xf]
        %v339 = vld [vmem:[%s188 + $0x14] sm:$0x1]
        %v340 = vld [vmem:[%s188 + $0x18] sm:$0xf]
        %v341 = vld [vmem:[%s188 + $0x1c] sm:$0xf]
        %v342 = vld [vmem:[%s188 + $0x20] sm:$0x1]
        %v343 = vld [vmem:[%s188 + $0x24] sm:$0xf]
        %v344 = vld [vmem:[%s188 + $0x28] sm:$0xf]
        %v345 = vld [vmem:[%s188 + $0x2c] sm:$0x1]
        %v346 = vld [vmem:[%s188 + $0x30] sm:$0xf]
        %v347 = vld [vmem:[%s188 + $0x34] sm:$0xf]
        %v348 = vld [vmem:[%s188 + $0x38] sm:$0x1]
        %v349 = vld [vmem:[%s188 + $0x3c] sm:$0xf]
        %v350 = vld [vmem:[%s188 + $0x40] sm:$0xf]
        %v351 = vld [vmem:[%s188 + $0x44] sm:$0x1]
        %v352 = vld [vmem:[%s188 + $0x48] sm:$0xf]
        %v353 = vld [vmem:[%s188 + $0x4c] sm:$0xf]
        %v354 = vld [vmem:[%s188 + $0x50] sm:$0x1]
        %v355 = vld [vmem:[%s188 + $0x54] sm:$0xf]
        %v356 = vld [vmem:[%s188 + $0x58] sm:$0xf]
        %v357 = vld [vmem:[%s188 + $0x5c] sm:$0x1]
        %v358 = vld [vmem:[%s188 + $0x60] sm:$0xf]
        %v359 = vld [vmem:[%s188 + $0x64] sm:$0xf]
        %v360 = vld [vmem:[%s188 + $0x68] sm:$0x1]
        %v361 = vld [vmem:[%s188 + $0x6c] sm:$0xf]
        %v362 = vld [vmem:[%s188 + $0x70] sm:$0xf]
        %v363 = vld [vmem:[%s188 + $0x74] sm:$0x1]
        %v364 = vld [vmem:[%s188 + $0x78] sm:$0xf]
        %v365 = vld [vmem:[%s188 + $0x7c] sm:$0xf]
        %v366 = vld [vmem:[%s188 + $0x80] sm:$0x1]
        %v367 = vld [vmem:[%s188 + $0x84] sm:$0xf]
        %v368 = vld [vmem:[%s188 + $0x88] sm:$0xf]
        %v369 = vld [vmem:[%s188 + $0x8c] sm:$0x1]
        %v370 = vld [vmem:[%s188 + $0x90] sm:$0xf]
        %v371 = vld [vmem:[%s188 + $0x94] sm:$0xf]
        %v372 = vld [vmem:[%s188 + $0x98] sm:$0x1]
        %v373 = vld [vmem:[%s188 + $0x9c] sm:$0xf]
        %v374 = vld [vmem:[%s188 + $0xa0] sm:$0xf]
        %v375 = vld [vmem:[%s188 + $0xa4] sm:$0x1]
        %v376 = vld [vmem:[%s188 + $0xa8] sm:$0xf]
        %v377 = vld [vmem:[%s188 + $0xac] sm:$0xf]
        %v378 = vld [vmem:[%s188 + $0xb0] sm:$0x1]
        %v379 = vld [vmem:[%s188 + $0xb4] sm:$0xf]
        %v380 = vld [vmem:[%s188 + $0xb8] sm:$0xf]
        %v381 = vld [vmem:[%s188 + $0xbc] sm:$0x1]
        %vm382 = vsmask.f32 3328
        %vm383 = vsmask.f32 7440
        %vm384 = vmor %vm382, %vm383
        %v386 = vshrl.u32 %v334, 16
        %v388 = vrot.slane %v386, 4
        %v389 = vshll.u32 %v334, 16
        %v391 = vrot.slane %v389, 5
        %v392 = vor.u32 %v388, %v391
        %v393 = vrot.slane %v392, 4
        %v395 = vshll.u32 %v335, 16
        %v397 = vrot.slane %v395, 5
        %v398 = vsel %vm384, %v393, %v397
        %v399 = vshrl.u32 %v335, 16
        %v401 = vrot.slane %v399, 4
        %v402 = vor.u32 %v401, %v397
        %v403 = vrot.slane %v402, 4
        %v405 = vshll.u32 %v336, 16
        %v407 = vrot.slane %v405, 5
        %v408 = vsel %vm384, %v403, %v407
        %v410 = vshrl.u32 %v337, 16
        %v412 = vrot.slane %v410, 4
        %v413 = vshll.u32 %v337, 16
        %v415 = vrot.slane %v413, 5
        %v416 = vor.u32 %v412, %v415
        %v417 = vrot.slane %v416, 4
        %v419 = vshll.u32 %v338, 16
        %v421 = vrot.slane %v419, 5
        %v422 = vsel %vm384, %v417, %v421
        %v423 = vshrl.u32 %v338, 16
        %v425 = vrot.slane %v423, 4
        %v426 = vor.u32 %v425, %v421
        %v427 = vrot.slane %v426, 4
        %v429 = vshll.u32 %v339, 16
        %v431 = vrot.slane %v429, 5
        %v432 = vsel %vm384, %v427, %v431
        %v434 = vshrl.u32 %v340, 16
        %v436 = vrot.slane %v434, 4
        %v437 = vshll.u32 %v340, 16
        %v439 = vrot.slane %v437, 5
        %v440 = vor.u32 %v436, %v439
        %v441 = vrot.slane %v440, 4
        %v443 = vshll.u32 %v341, 16
        %v445 = vrot.slane %v443, 5
        %v446 = vsel %vm384, %v441, %v445
        %v447 = vshrl.u32 %v341, 16
        %v449 = vrot.slane %v447, 4
        %v450 = vor.u32 %v449, %v445
        %v451 = vrot.slane %v450, 4
        %v453 = vshll.u32 %v342, 16
        %v455 = vrot.slane %v453, 5
        %v456 = vsel %vm384, %v451, %v455
        %v458 = vshrl.u32 %v343, 16
        %v460 = vrot.slane %v458, 4
        %v461 = vshll.u32 %v343, 16
        %v463 = vrot.slane %v461, 5
        %v464 = vor.u32 %v460, %v463
        %v465 = vrot.slane %v464, 4
        %v467 = vshll.u32 %v344, 16
        %v469 = vrot.slane %v467, 5
        %v470 = vsel %vm384, %v465, %v469
        %v471 = vshrl.u32 %v344, 16
        %v473 = vrot.slane %v471, 4
        %v474 = vor.u32 %v473, %v469
        %v475 = vrot.slane %v474, 4
        %v477 = vshll.u32 %v345, 16
        %v479 = vrot.slane %v477, 5
        %v480 = vsel %vm384, %v475, %v479
        %v482 = vshrl.u32 %v346, 16
        %v484 = vrot.slane %v482, 4
        %v485 = vshll.u32 %v346, 16
        %v487 = vrot.slane %v485, 5
        %v488 = vor.u32 %v484, %v487
        %v489 = vrot.slane %v488, 4
        %v491 = vshll.u32 %v347, 16
        %v493 = vrot.slane %v491, 5
        %v494 = vsel %vm384, %v489, %v493
        %v495 = vshrl.u32 %v347, 16
        %v497 = vrot.slane %v495, 4
        %v498 = vor.u32 %v497, %v493
        %v499 = vrot.slane %v498, 4
        %v501 = vshll.u32 %v348, 16
        %v503 = vrot.slane %v501, 5
        %v504 = vsel %vm384, %v499, %v503
        %v506 = vshrl.u32 %v349, 16
        %v508 = vrot.slane %v506, 4
        %v509 = vshll.u32 %v349, 16
        %v511 = vrot.slane %v509, 5
        %v512 = vor.u32 %v508, %v511
        %v513 = vrot.slane %v512, 4
        %v515 = vshll.u32 %v350, 16
        %v517 = vrot.slane %v515, 5
        %v518 = vsel %vm384, %v513, %v517
        %v519 = vshrl.u32 %v350, 16
        %v521 = vrot.slane %v519, 4
        %v522 = vor.u32 %v521, %v517
        %v523 = vrot.slane %v522, 4
        %v525 = vshll.u32 %v351, 16
        %v527 = vrot.slane %v525, 5
        %v528 = vsel %vm384, %v523, %v527
        %v530 = vshrl.u32 %v352, 16
        %v532 = vrot.slane %v530, 4
        %v533 = vshll.u32 %v352, 16
        %v535 = vrot.slane %v533, 5
        %v536 = vor.u32 %v532, %v535
        %v537 = vrot.slane %v536, 4
        %v539 = vshll.u32 %v353, 16
        %v541 = vrot.slane %v539, 5
        %v542 = vsel %vm384, %v537, %v541
        %v543 = vshrl.u32 %v353, 16
        %v545 = vrot.slane %v543, 4
        %v546 = vor.u32 %v545, %v541
        %v547 = vrot.slane %v546, 4
        %v549 = vshll.u32 %v354, 16
        %v551 = vrot.slane %v549, 5
        %v552 = vsel %vm384, %v547, %v551
        %v554 = vshrl.u32 %v355, 16
        %v556 = vrot.slane %v554, 4
        %v557 = vshll.u32 %v355, 16
        %v559 = vrot.slane %v557, 5
        %v560 = vor.u32 %v556, %v559
        %v561 = vrot.slane %v560, 4
        %v563 = vshll.u32 %v356, 16
        %v565 = vrot.slane %v563, 5
        %v566 = vsel %vm384, %v561, %v565
        %v567 = vshrl.u32 %v356, 16
        %v569 = vrot.slane %v567, 4
        %v570 = vor.u32 %v569, %v565
        %v571 = vrot.slane %v570, 4
        %v573 = vshll.u32 %v357, 16
        %v575 = vrot.slane %v573, 5
        %v576 = vsel %vm384, %v571, %v575
        %v578 = vshrl.u32 %v358, 16
        %v580 = vrot.slane %v578, 4
        %v581 = vshll.u32 %v358, 16
        %v583 = vrot.slane %v581, 5
        %v584 = vor.u32 %v580, %v583
        %v585 = vrot.slane %v584, 4
        %v587 = vshll.u32 %v359, 16
        %v589 = vrot.slane %v587, 5
        %v590 = vsel %vm384, %v585, %v589
        %v591 = vshrl.u32 %v359, 16
        %v593 = vrot.slane %v591, 4
        %v594 = vor.u32 %v593, %v589
        %v595 = vrot.slane %v594, 4
        %v597 = vshll.u32 %v360, 16
        %v599 = vrot.slane %v597, 5
        %v600 = vsel %vm384, %v595, %v599
        %v602 = vshrl.u32 %v361, 16
        %v604 = vrot.slane %v602, 4
        %v605 = vshll.u32 %v361, 16
        %v607 = vrot.slane %v605, 5
        %v608 = vor.u32 %v604, %v607
        %v609 = vrot.slane %v608, 4
        %v611 = vshll.u32 %v362, 16
        %v613 = vrot.slane %v611, 5
        %v614 = vsel %vm384, %v609, %v613
        %v615 = vshrl.u32 %v362, 16
        %v617 = vrot.slane %v615, 4
        %v618 = vor.u32 %v617, %v613
        %v619 = vrot.slane %v618, 4
        %v621 = vshll.u32 %v363, 16
        %v623 = vrot.slane %v621, 5
        %v624 = vsel %vm384, %v619, %v623
        %v626 = vshrl.u32 %v364, 16
        %v628 = vrot.slane %v626, 4
        %v629 = vshll.u32 %v364, 16
        %v631 = vrot.slane %v629, 5
        %v632 = vor.u32 %v628, %v631
        %v633 = vrot.slane %v632, 4
        %v635 = vshll.u32 %v365, 16
        %v637 = vrot.slane %v635, 5
        %v638 = vsel %vm384, %v633, %v637
        %v639 = vshrl.u32 %v365, 16
        %v641 = vrot.slane %v639, 4
        %v642 = vor.u32 %v641, %v637
        %v643 = vrot.slane %v642, 4
        %v645 = vshll.u32 %v366, 16
        %v647 = vrot.slane %v645, 5
        %v648 = vsel %vm384, %v643, %v647
        %v650 = vshrl.u32 %v367, 16
        %v652 = vrot.slane %v650, 4
        %v653 = vshll.u32 %v367, 16
        %v655 = vrot.slane %v653, 5
        %v656 = vor.u32 %v652, %v655
        %v657 = vrot.slane %v656, 4
        %v659 = vshll.u32 %v368, 16
        %v661 = vrot.slane %v659, 5
        %v662 = vsel %vm384, %v657, %v661
        %v663 = vshrl.u32 %v368, 16
        %v665 = vrot.slane %v663, 4
        %v666 = vor.u32 %v665, %v661
        %v667 = vrot.slane %v666, 4
        %v669 = vshll.u32 %v369, 16
        %v671 = vrot.slane %v669, 5
        %v672 = vsel %vm384, %v667, %v671
        %v674 = vshrl.u32 %v370, 16
        %v676 = vrot.slane %v674, 4
        %v677 = vshll.u32 %v370, 16
        %v679 = vrot.slane %v677, 5
        %v680 = vor.u32 %v676, %v679
        %v681 = vrot.slane %v680, 4
        %v683 = vshll.u32 %v371, 16
        %v685 = vrot.slane %v683, 5
        %v686 = vsel %vm384, %v681, %v685
        %v687 = vshrl.u32 %v371, 16
        %v689 = vrot.slane %v687, 4
        %v690 = vor.u32 %v689, %v685
        %v691 = vrot.slane %v690, 4
        %v693 = vshll.u32 %v372, 16
        %v695 = vrot.slane %v693, 5
        %v696 = vsel %vm384, %v691, %v695
        %v698 = vshrl.u32 %v373, 16
        %v700 = vrot.slane %v698, 4
        %v701 = vshll.u32 %v373, 16
        %v703 = vrot.slane %v701, 5
        %v704 = vor.u32 %v700, %v703
        %v705 = vrot.slane %v704, 4
        %v707 = vshll.u32 %v374, 16
        %v709 = vrot.slane %v707, 5
        %v710 = vsel %vm384, %v705, %v709
        %v711 = vshrl.u32 %v374, 16
        %v713 = vrot.slane %v711, 4
        %v714 = vor.u32 %v713, %v709
        %v715 = vrot.slane %v714, 4
        %v717 = vshll.u32 %v375, 16
        %v719 = vrot.slane %v717, 5
        %v720 = vsel %vm384, %v715, %v719
        %v722 = vshrl.u32 %v376, 16
        %v724 = vrot.slane %v722, 4
        %v725 = vshll.u32 %v376, 16
        %v727 = vrot.slane %v725, 5
        %v728 = vor.u32 %v724, %v727
        %v729 = vrot.slane %v728, 4
        %v731 = vshll.u32 %v377, 16
        %v733 = vrot.slane %v731, 5
        %v734 = vsel %vm384, %v729, %v733
        %v735 = vshrl.u32 %v377, 16
        %v737 = vrot.slane %v735, 4
        %v738 = vor.u32 %v737, %v733
        %v739 = vrot.slane %v738, 4
        %v741 = vshll.u32 %v378, 16
        %v743 = vrot.slane %v741, 5
        %v744 = vsel %vm384, %v739, %v743
        %v746 = vshrl.u32 %v379, 16
        %v748 = vrot.slane %v746, 4
        %v749 = vshll.u32 %v379, 16
        %v751 = vrot.slane %v749, 5
        %v752 = vor.u32 %v748, %v751
        %v753 = vrot.slane %v752, 4
        %v755 = vshll.u32 %v380, 16
        %v757 = vrot.slane %v755, 5
        %v758 = vsel %vm384, %v753, %v757
        %v759 = vshrl.u32 %v380, 16
        %v761 = vrot.slane %v759, 4
        %v762 = vor.u32 %v761, %v757
        %v763 = vrot.slane %v762, 4
        %v765 = vshll.u32 %v381, 16
        %v767 = vrot.slane %v765, 5
        %v768 = vsel %vm384, %v763, %v767
        %v769 = vunpack.c.l.b16 %v398
        %v770 = vunpack.c.l.b16 %v408
        %v771 = vunpack.c.l.b16 %v422
        %v772 = vunpack.c.l.b16 %v432
        %v773 = vunpack.c.l.b16 %v446
        %v774 = vunpack.c.l.b16 %v456
        %v775 = vunpack.c.l.b16 %v470
        %v776 = vunpack.c.l.b16 %v480
        %v777 = vunpack.c.l.b16 %v494
        %v778 = vunpack.c.l.b16 %v504
        %v779 = vunpack.c.l.b16 %v518
        %v780 = vunpack.c.l.b16 %v528
        %v781 = vunpack.c.l.b16 %v542
        %v782 = vunpack.c.l.b16 %v552
        %v783 = vunpack.c.l.b16 %v566
        %v784 = vunpack.c.l.b16 %v576
        %v785 = vunpack.c.l.b16 %v590
        %v786 = vunpack.c.l.b16 %v600
        %v787 = vunpack.c.l.b16 %v614
        %v788 = vunpack.c.l.b16 %v624
        %v789 = vunpack.c.l.b16 %v638
        %v790 = vunpack.c.l.b16 %v648
        %v791 = vunpack.c.l.b16 %v662
        %v792 = vunpack.c.l.b16 %v672
        %v793 = vunpack.c.l.b16 %v686
        %v794 = vunpack.c.l.b16 %v696
        %v795 = vunpack.c.l.b16 %v710
        %v796 = vunpack.c.l.b16 %v720
        %v797 = vunpack.c.l.b16 %v734
        %v798 = vunpack.c.l.b16 %v744
        %v799 = vunpack.c.l.b16 %v758
        %v800 = vunpack.c.l.b16 %v768
        %v801 = vpack.c.b16 %v770, %v769
        %v802 = vpack.c.b16 %v772, %v771
        %v803 = vpack.c.b16 %v774, %v773
        %v804 = vpack.c.b16 %v776, %v775
        %v805 = vpack.c.b16 %v778, %v777
        %v806 = vpack.c.b16 %v780, %v779
        %v807 = vpack.c.b16 %v782, %v781
        %v808 = vpack.c.b16 %v784, %v783
        %v809 = vpack.c.b16 %v786, %v785
        %v810 = vpack.c.b16 %v788, %v787
        %v811 = vpack.c.b16 %v790, %v789
        %v812 = vpack.c.b16 %v792, %v791
        %v813 = vpack.c.b16 %v794, %v793
        %v814 = vpack.c.b16 %v796, %v795
        %v815 = vpack.c.b16 %v798, %v797
        %v816 = vpack.c.b16 %v800, %v799
        %817 = vrot.lane.b32.xlu0 %v801, 4
        %v818 = vpop.permute.xlu0 %817
        %819 = vrot.lane.b32.xlu0 %v802, 4
        %v820 = vpop.permute.xlu0 %819
        %821 = vrot.lane.b32.xlu0 %v803, 4
        %v822 = vpop.permute.xlu0 %821
        %823 = vrot.lane.b32.xlu0 %v804, 4
        %v824 = vpop.permute.xlu0 %823
        %825 = vrot.lane.b32.xlu0 %v805, 4
        %v826 = vpop.permute.xlu0 %825
        %827 = vrot.lane.b32.xlu0 %v806, 4
        %v828 = vpop.permute.xlu0 %827
        %829 = vrot.lane.b32.xlu0 %v807, 4
        %v830 = vpop.permute.xlu0 %829
        %831 = vrot.lane.b32.xlu0 %v808, 4
        %v832 = vpop.permute.xlu0 %831
        %833 = vrot.lane.b32.xlu0 %v809, 4
        %v834 = vpop.permute.xlu0 %833
        %835 = vrot.lane.b32.xlu0 %v810, 4
        %v836 = vpop.permute.xlu0 %835
        %837 = vrot.lane.b32.xlu0 %v811, 4
        %v838 = vpop.permute.xlu0 %837
        %839 = vrot.lane.b32.xlu0 %v812, 4
        %v840 = vpop.permute.xlu0 %839
        %841 = vrot.lane.b32.xlu0 %v813, 4
        %v842 = vpop.permute.xlu0 %841
        %843 = vrot.lane.b32.xlu0 %v814, 4
        %v844 = vpop.permute.xlu0 %843
        %845 = vrot.lane.b32.xlu0 %v815, 4
        %v846 = vpop.permute.xlu0 %845
        %847 = vrot.lane.b32.xlu0 %v816, 4
        %v848 = vpop.permute.xlu0 %847
        %vm865 = vcmask 64544
        %866 = vst.msk [vmem:[#allocation2] sm:$0xff] %vm865, %v818
        %867 = vst.msk [vmem:[#allocation2 + $0x8] sm:$0xff] %vm865, %v820
        %868 = vst.msk [vmem:[#allocation2 + $0x10] sm:$0xff] %vm865, %v822
        %869 = vst.msk [vmem:[#allocation2 + $0x18] sm:$0xff] %vm865, %v824
        %870 = vst.msk [vmem:[#allocation2 + $0x20] sm:$0xff] %vm865, %v826
        %871 = vst.msk [vmem:[#allocation2 + $0x28] sm:$0xff] %vm865, %v828
        %872 = vst.msk [vmem:[#allocation2 + $0x30] sm:$0xff] %vm865, %v830
        %873 = vst.msk [vmem:[#allocation2 + $0x38] sm:$0xff] %vm865, %v832
        %874 = vst.msk [vmem:[#allocation2 + $0x40] sm:$0xff] %vm865, %v834
        %875 = vst.msk [vmem:[#allocation2 + $0x48] sm:$0xff] %vm865, %v836
        %876 = vst.msk [vmem:[#allocation2 + $0x50] sm:$0xff] %vm865, %v838
        %877 = vst.msk [vmem:[#allocation2 + $0x58] sm:$0xff] %vm865, %v840
        %878 = vst.msk [vmem:[#allocation2 + $0x60] sm:$0xff] %vm865, %v842
        %879 = vst.msk [vmem:[#allocation2 + $0x68] sm:$0xff] %vm865, %v844
        %880 = vst.msk [vmem:[#allocation2 + $0x70] sm:$0xff] %vm865, %v846
        %881 = vst.msk [vmem:[#allocation2 + $0x78] sm:$0xff] %vm865, %v848
        %v882 = vld [vmem:[%s188] sm:$0xe]
        %v883 = vld [vmem:[%s188 + $0x4] sm:$0xf]
        %v884 = vld [vmem:[%s188 + $0x8] sm:$0x1]
        %v885 = vld [vmem:[%s188 + $0xc] sm:$0xe]
        %v886 = vld [vmem:[%s188 + $0x10] sm:$0xf]
        %v887 = vld [vmem:[%s188 + $0x14] sm:$0x1]
        %v888 = vld [vmem:[%s188 + $0x18] sm:$0xe]
        %v889 = vld [vmem:[%s188 + $0x1c] sm:$0xf]
        %v890 = vld [vmem:[%s188 + $0x20] sm:$0x1]
        %v891 = vld [vmem:[%s188 + $0x24] sm:$0xe]
        %v892 = vld [vmem:[%s188 + $0x28] sm:$0xf]
        %v893 = vld [vmem:[%s188 + $0x2c] sm:$0x1]
        %v894 = vld [vmem:[%s188 + $0x30] sm:$0xe]
        %v895 = vld [vmem:[%s188 + $0x34] sm:$0xf]
        %v896 = vld [vmem:[%s188 + $0x38] sm:$0x1]
        %v897 = vld [vmem:[%s188 + $0x3c] sm:$0xe]
        %v898 = vld [vmem:[%s188 + $0x40] sm:$0xf]
        %v899 = vld [vmem:[%s188 + $0x44] sm:$0x1]
        %v900 = vld [vmem:[%s188 + $0x48] sm:$0xe]
        %v901 = vld [vmem:[%s188 + $0x4c] sm:$0xf]
        %v902 = vld [vmem:[%s188 + $0x50] sm:$0x1]
        %v903 = vld [vmem:[%s188 + $0x54] sm:$0xe]
        %v904 = vld [vmem:[%s188 + $0x58] sm:$0xf]
        %v905 = vld [vmem:[%s188 + $0x5c] sm:$0x1]
        %v906 = vld [vmem:[%s188 + $0x60] sm:$0xe]
        %v907 = vld [vmem:[%s188 + $0x64] sm:$0xf]
        %v908 = vld [vmem:[%s188 + $0x68] sm:$0x1]
        %v909 = vld [vmem:[%s188 + $0x6c] sm:$0xe]
        %v910 = vld [vmem:[%s188 + $0x70] sm:$0xf]
        %v911 = vld [vmem:[%s188 + $0x74] sm:$0x1]
        %v912 = vld [vmem:[%s188 + $0x78] sm:$0xe]
        %v913 = vld [vmem:[%s188 + $0x7c] sm:$0xf]
        %v914 = vld [vmem:[%s188 + $0x80] sm:$0x1]
        %v915 = vld [vmem:[%s188 + $0x84] sm:$0xe]
        %v916 = vld [vmem:[%s188 + $0x88] sm:$0xf]
        %v917 = vld [vmem:[%s188 + $0x8c] sm:$0x1]
        %v918 = vld [vmem:[%s188 + $0x90] sm:$0xe]
        %v919 = vld [vmem:[%s188 + $0x94] sm:$0xf]
        %v920 = vld [vmem:[%s188 + $0x98] sm:$0x1]
        %v921 = vld [vmem:[%s188 + $0x9c] sm:$0xe]
        %v922 = vld [vmem:[%s188 + $0xa0] sm:$0xf]
        %v923 = vld [vmem:[%s188 + $0xa4] sm:$0x1]
        %v924 = vld [vmem:[%s188 + $0xa8] sm:$0xe]
        %v925 = vld [vmem:[%s188 + $0xac] sm:$0xf]
        %v926 = vld [vmem:[%s188 + $0xb0] sm:$0x1]
        %v927 = vld [vmem:[%s188 + $0xb4] sm:$0xe]
        %v928 = vld [vmem:[%s188 + $0xb8] sm:$0xf]
        %v929 = vld [vmem:[%s188 + $0xbc] sm:$0x1]
        %vm978 = vcmask 1042432
        %vm979 = vcmask 1046532
        %vm980 = vmor %vm978, %vm979
        %v981 = vrot.slane %v882, 5
        %v982 = vrot.slane %v981, 4
        %v983 = vrot.slane %v883, 5
        %v984 = vsel %vm980, %v982, %v983
        %v985 = vrot.slane %v983, 4
        %v986 = vrot.slane %v884, 5
        %v987 = vsel %vm980, %v985, %v986
        %v988 = vrot.slane %v885, 5
        %v989 = vrot.slane %v988, 4
        %v990 = vrot.slane %v886, 5
        %v991 = vsel %vm980, %v989, %v990
        %v992 = vrot.slane %v990, 4
        %v993 = vrot.slane %v887, 5
        %v994 = vsel %vm980, %v992, %v993
        %v995 = vrot.slane %v888, 5
        %v996 = vrot.slane %v995, 4
        %v997 = vrot.slane %v889, 5
        %v998 = vsel %vm980, %v996, %v997
        %v999 = vrot.slane %v997, 4
        %v1000 = vrot.slane %v890, 5
        %v1001 = vsel %vm980, %v999, %v1000
        %v1002 = vrot.slane %v891, 5
        %v1003 = vrot.slane %v1002, 4
        %v1004 = vrot.slane %v892, 5
        %v1005 = vsel %vm980, %v1003, %v1004
        %v1006 = vrot.slane %v1004, 4
        %v1007 = vrot.slane %v893, 5
        %v1008 = vsel %vm980, %v1006, %v1007
        %v1009 = vrot.slane %v894, 5
        %v1010 = vrot.slane %v1009, 4
        %v1011 = vrot.slane %v895, 5
        %v1012 = vsel %vm980, %v1010, %v1011
        %v1013 = vrot.slane %v1011, 4
        %v1014 = vrot.slane %v896, 5
        %v1015 = vsel %vm980, %v1013, %v1014
        %v1016 = vrot.slane %v897, 5
        %v1017 = vrot.slane %v1016, 4
        %v1018 = vrot.slane %v898, 5
        %v1019 = vsel %vm980, %v1017, %v1018
        %v1020 = vrot.slane %v1018, 4
        %v1021 = vrot.slane %v899, 5
        %v1022 = vsel %vm980, %v1020, %v1021
        %v1023 = vrot.slane %v900, 5
        %v1024 = vrot.slane %v1023, 4
        %v1025 = vrot.slane %v901, 5
        %v1026 = vsel %vm980, %v1024, %v1025
        %v1027 = vrot.slane %v1025, 4
        %v1028 = vrot.slane %v902, 5
        %v1029 = vsel %vm980, %v1027, %v1028
        %v1030 = vrot.slane %v903, 5
        %v1031 = vrot.slane %v1030, 4
        %v1032 = vrot.slane %v904, 5
        %v1033 = vsel %vm980, %v1031, %v1032
        %v1034 = vrot.slane %v1032, 4
        %v1035 = vrot.slane %v905, 5
        %v1036 = vsel %vm980, %v1034, %v1035
        %v1037 = vrot.slane %v906, 5
        %v1038 = vrot.slane %v1037, 4
        %v1039 = vrot.slane %v907, 5
        %v1040 = vsel %vm980, %v1038, %v1039
        %v1041 = vrot.slane %v1039, 4
        %v1042 = vrot.slane %v908, 5
        %v1043 = vsel %vm980, %v1041, %v1042
        %v1044 = vrot.slane %v909, 5
        %v1045 = vrot.slane %v1044, 4
        %v1046 = vrot.slane %v910, 5
        %v1047 = vsel %vm980, %v1045, %v1046
        %v1048 = vrot.slane %v1046, 4
        %v1049 = vrot.slane %v911, 5
        %v1050 = vsel %vm980, %v1048, %v1049
        %v1051 = vrot.slane %v912, 5
        %v1052 = vrot.slane %v1051, 4
        %v1053 = vrot.slane %v913, 5
        %v1054 = vsel %vm980, %v1052, %v1053
        %v1055 = vrot.slane %v1053, 4
        %v1056 = vrot.slane %v914, 5
        %v1057 = vsel %vm980, %v1055, %v1056
        %v1058 = vrot.slane %v915, 5
        %v1059 = vrot.slane %v1058, 4
        %v1060 = vrot.slane %v916, 5
        %v1061 = vsel %vm980, %v1059, %v1060
        %v1062 = vrot.slane %v1060, 4
        %v1063 = vrot.slane %v917, 5
        %v1064 = vsel %vm980, %v1062, %v1063
        %v1065 = vrot.slane %v918, 5
        %v1066 = vrot.slane %v1065, 4
        %v1067 = vrot.slane %v919, 5
        %v1068 = vsel %vm980, %v1066, %v1067
        %v1069 = vrot.slane %v1067, 4
        %v1070 = vrot.slane %v920, 5
        %v1071 = vsel %vm980, %v1069, %v1070
        %v1072 = vrot.slane %v921, 5
        %v1073 = vrot.slane %v1072, 4
        %v1074 = vrot.slane %v922, 5
        %v1075 = vsel %vm980, %v1073, %v1074
        %v1076 = vrot.slane %v1074, 4
        %v1077 = vrot.slane %v923, 5
        %v1078 = vsel %vm980, %v1076, %v1077
        %v1079 = vrot.slane %v924, 5
        %v1080 = vrot.slane %v1079, 4
        %v1081 = vrot.slane %v925, 5
        %v1082 = vsel %vm980, %v1080, %v1081
        %v1083 = vrot.slane %v1081, 4
        %v1084 = vrot.slane %v926, 5
        %v1085 = vsel %vm980, %v1083, %v1084
        %v1086 = vrot.slane %v927, 5
        %v1087 = vrot.slane %v1086, 4
        %v1088 = vrot.slane %v928, 5
        %v1089 = vsel %vm980, %v1087, %v1088
        %v1090 = vrot.slane %v1088, 4
        %v1091 = vrot.slane %v929, 5
        %v1092 = vsel %vm980, %v1090, %v1091
        %v1093 = vunpack.c.l.b16 %v984
        %v1094 = vunpack.c.l.b16 %v987
        %v1095 = vunpack.c.l.b16 %v991
        %v1096 = vunpack.c.l.b16 %v994
        %v1097 = vunpack.c.l.b16 %v998
        %v1098 = vunpack.c.l.b16 %v1001
        %v1099 = vunpack.c.l.b16 %v1005
        %v1100 = vunpack.c.l.b16 %v1008
        %v1101 = vunpack.c.l.b16 %v1012
        %v1102 = vunpack.c.l.b16 %v1015
        %v1103 = vunpack.c.l.b16 %v1019
        %v1104 = vunpack.c.l.b16 %v1022
        %v1105 = vunpack.c.l.b16 %v1026
        %v1106 = vunpack.c.l.b16 %v1029
        %v1107 = vunpack.c.l.b16 %v1033
        %v1108 = vunpack.c.l.b16 %v1036
        %v1109 = vunpack.c.l.b16 %v1040
        %v1110 = vunpack.c.l.b16 %v1043
        %v1111 = vunpack.c.l.b16 %v1047
        %v1112 = vunpack.c.l.b16 %v1050
        %v1113 = vunpack.c.l.b16 %v1054
        %v1114 = vunpack.c.l.b16 %v1057
        %v1115 = vunpack.c.l.b16 %v1061
        %v1116 = vunpack.c.l.b16 %v1064
        %v1117 = vunpack.c.l.b16 %v1068
        %v1118 = vunpack.c.l.b16 %v1071
        %v1119 = vunpack.c.l.b16 %v1075
        %v1120 = vunpack.c.l.b16 %v1078
        %v1121 = vunpack.c.l.b16 %v1082
        %v1122 = vunpack.c.l.b16 %v1085
        %v1123 = vunpack.c.l.b16 %v1089
        %v1124 = vunpack.c.l.b16 %v1092
        %v1125 = vpack.c.b16 %v1094, %v1093
        %v1126 = vpack.c.b16 %v1096, %v1095
        %v1127 = vpack.c.b16 %v1098, %v1097
        %v1128 = vpack.c.b16 %v1100, %v1099
        %v1129 = vpack.c.b16 %v1102, %v1101
        %v1130 = vpack.c.b16 %v1104, %v1103
        %v1131 = vpack.c.b16 %v1106, %v1105
        %v1132 = vpack.c.b16 %v1108, %v1107
        %v1133 = vpack.c.b16 %v1110, %v1109
        %v1134 = vpack.c.b16 %v1112, %v1111
        %v1135 = vpack.c.b16 %v1114, %v1113
        %v1136 = vpack.c.b16 %v1116, %v1115
        %v1137 = vpack.c.b16 %v1118, %v1117
        %v1138 = vpack.c.b16 %v1120, %v1119
        %v1139 = vpack.c.b16 %v1122, %v1121
        %v1140 = vpack.c.b16 %v1124, %v1123
        %1141 = vrot.lane.b32.xlu0 %v1125, 8
        %v1142 = vpop.permute.xlu0 %1141
        %1143 = vrot.lane.b32.xlu0 %v1126, 8
        %v1144 = vpop.permute.xlu0 %1143
        %1145 = vrot.lane.b32.xlu0 %v1127, 8
        %v1146 = vpop.permute.xlu0 %1145
        %1147 = vrot.lane.b32.xlu0 %v1128, 8
        %v1148 = vpop.permute.xlu0 %1147
        %1149 = vrot.lane.b32.xlu0 %v1129, 8
        %v1150 = vpop.permute.xlu0 %1149
        %1151 = vrot.lane.b32.xlu0 %v1130, 8
        %v1152 = vpop.permute.xlu0 %1151
        %1153 = vrot.lane.b32.xlu0 %v1131, 8
        %v1154 = vpop.permute.xlu0 %1153
        %1155 = vrot.lane.b32.xlu0 %v1132, 8
        %v1156 = vpop.permute.xlu0 %1155
        %1157 = vrot.lane.b32.xlu0 %v1133, 8
        %v1158 = vpop.permute.xlu0 %1157
        %1159 = vrot.lane.b32.xlu0 %v1134, 8
        %v1160 = vpop.permute.xlu0 %1159
        %1161 = vrot.lane.b32.xlu0 %v1135, 8
        %v1162 = vpop.permute.xlu0 %1161
        %1163 = vrot.lane.b32.xlu0 %v1136, 8
        %v1164 = vpop.permute.xlu0 %1163
        %1165 = vrot.lane.b32.xlu0 %v1137, 8
        %v1166 = vpop.permute.xlu0 %1165
        %1167 = vrot.lane.b32.xlu0 %v1138, 8
        %v1168 = vpop.permute.xlu0 %1167
        %1169 = vrot.lane.b32.xlu0 %v1139, 8
        %v1170 = vpop.permute.xlu0 %1169
        %1171 = vrot.lane.b32.xlu0 %v1140, 8
        %v1172 = vpop.permute.xlu0 %1171
        %vm1189 = vcmask 97344
        %1190 = vst.msk [vmem:[#allocation2] sm:$0xff] %vm1189, %v1142
        %1191 = vst.msk [vmem:[#allocation2 + $0x8] sm:$0xff] %vm1189, %v1144
        %1192 = vst.msk [vmem:[#allocation2 + $0x10] sm:$0xff] %vm1189, %v1146
        %1193 = vst.msk [vmem:[#allocation2 + $0x18] sm:$0xff] %vm1189, %v1148
        %1194 = vst.msk [vmem:[#allocation2 + $0x20] sm:$0xff] %vm1189, %v1150
        %1195 = vst.msk [vmem:[#allocation2 + $0x28] sm:$0xff] %vm1189, %v1152
        %1196 = vst.msk [vmem:[#allocation2 + $0x30] sm:$0xff] %vm1189, %v1154
        %1197 = vst.msk [vmem:[#allocation2 + $0x38] sm:$0xff] %vm1189, %v1156
        %1198 = vst.msk [vmem:[#allocation2 + $0x40] sm:$0xff] %vm1189, %v1158
        %1199 = vst.msk [vmem:[#allocation2 + $0x48] sm:$0xff] %vm1189, %v1160
        %1200 = vst.msk [vmem:[#allocation2 + $0x50] sm:$0xff] %vm1189, %v1162
        %1201 = vst.msk [vmem:[#allocation2 + $0x58] sm:$0xff] %vm1189, %v1164
        %1202 = vst.msk [vmem:[#allocation2 + $0x60] sm:$0xff] %vm1189, %v1166
        %1203 = vst.msk [vmem:[#allocation2 + $0x68] sm:$0xff] %vm1189, %v1168
        %1204 = vst.msk [vmem:[#allocation2 + $0x70] sm:$0xff] %vm1189, %v1170
        %1205 = vst.msk [vmem:[#allocation2 + $0x78] sm:$0xff] %vm1189, %v1172
        %s1206 = sadd.s32 %s185, 1
        %s1207 = smul.u32 %s1206, 3
        %s1208 = smul.addr %s1207, 4
        %s1209 = scalar_lea.vmem %s182, %s1208
        %v1210 = vld [vmem:[%s1209] sm:$0xf]
        %v1211 = vld [vmem:[%s1209 + $0x4] sm:$0xf]
        %v1212 = vld [vmem:[%s1209 + $0xc] sm:$0xf]
        %v1213 = vld [vmem:[%s1209 + $0x10] sm:$0xf]
        %v1214 = vld [vmem:[%s1209 + $0x18] sm:$0xf]
        %v1215 = vld [vmem:[%s1209 + $0x1c] sm:$0xf]
        %v1216 = vld [vmem:[%s1209 + $0x24] sm:$0xf]
        %v1217 = vld [vmem:[%s1209 + $0x28] sm:$0xf]
        %v1218 = vld [vmem:[%s1209 + $0x30] sm:$0xf]
        %v1219 = vld [vmem:[%s1209 + $0x34] sm:$0xf]
        %v1220 = vld [vmem:[%s1209 + $0x3c] sm:$0xf]
        %v1221 = vld [vmem:[%s1209 + $0x40] sm:$0xf]
        %v1222 = vld [vmem:[%s1209 + $0x48] sm:$0xf]
        %v1223 = vld [vmem:[%s1209 + $0x4c] sm:$0xf]
        %v1224 = vld [vmem:[%s1209 + $0x54] sm:$0xf]
        %v1225 = vld [vmem:[%s1209 + $0x58] sm:$0xf]
        %v1226 = vld [vmem:[%s1209 + $0x60] sm:$0xf]
        %v1227 = vld [vmem:[%s1209 + $0x64] sm:$0xf]
        %v1228 = vld [vmem:[%s1209 + $0x6c] sm:$0xf]
        %v1229 = vld [vmem:[%s1209 + $0x70] sm:$0xf]
        %v1230 = vld [vmem:[%s1209 + $0x78] sm:$0xf]
        %v1231 = vld [vmem:[%s1209 + $0x7c] sm:$0xf]
        %v1232 = vld [vmem:[%s1209 + $0x84] sm:$0xf]
        %v1233 = vld [vmem:[%s1209 + $0x88] sm:$0xf]
        %v1234 = vld [vmem:[%s1209 + $0x90] sm:$0xf]
        %v1235 = vld [vmem:[%s1209 + $0x94] sm:$0xf]
        %v1236 = vld [vmem:[%s1209 + $0x9c] sm:$0xf]
        %v1237 = vld [vmem:[%s1209 + $0xa0] sm:$0xf]
        %v1238 = vld [vmem:[%s1209 + $0xa8] sm:$0xf]
        %v1239 = vld [vmem:[%s1209 + $0xac] sm:$0xf]
        %v1240 = vld [vmem:[%s1209 + $0xb4] sm:$0xf]
        %v1241 = vld [vmem:[%s1209 + $0xb8] sm:$0xf]
        %v1274 = vunpack.c.l.b16 %v1210
        %v1275 = vunpack.c.l.b16 %v1211
        %v1276 = vunpack.c.l.b16 %v1212
        %v1277 = vunpack.c.l.b16 %v1213
        %v1278 = vunpack.c.l.b16 %v1214
        %v1279 = vunpack.c.l.b16 %v1215
        %v1280 = vunpack.c.l.b16 %v1216
        %v1281 = vunpack.c.l.b16 %v1217
        %v1282 = vunpack.c.l.b16 %v1218
        %v1283 = vunpack.c.l.b16 %v1219
        %v1284 = vunpack.c.l.b16 %v1220
        %v1285 = vunpack.c.l.b16 %v1221
        %v1286 = vunpack.c.l.b16 %v1222
        %v1287 = vunpack.c.l.b16 %v1223
        %v1288 = vunpack.c.l.b16 %v1224
        %v1289 = vunpack.c.l.b16 %v1225
        %v1290 = vunpack.c.l.b16 %v1226
        %v1291 = vunpack.c.l.b16 %v1227
        %v1292 = vunpack.c.l.b16 %v1228
        %v1293 = vunpack.c.l.b16 %v1229
        %v1294 = vunpack.c.l.b16 %v1230
        %v1295 = vunpack.c.l.b16 %v1231
        %v1296 = vunpack.c.l.b16 %v1232
        %v1297 = vunpack.c.l.b16 %v1233
        %v1298 = vunpack.c.l.b16 %v1234
        %v1299 = vunpack.c.l.b16 %v1235
        %v1300 = vunpack.c.l.b16 %v1236
        %v1301 = vunpack.c.l.b16 %v1237
        %v1302 = vunpack.c.l.b16 %v1238
        %v1303 = vunpack.c.l.b16 %v1239
        %v1304 = vunpack.c.l.b16 %v1240
        %v1305 = vunpack.c.l.b16 %v1241
        %v1306 = vpack.c.b16 %v1275, %v1274
        %v1307 = vpack.c.b16 %v1277, %v1276
        %v1308 = vpack.c.b16 %v1279, %v1278
        %v1309 = vpack.c.b16 %v1281, %v1280
        %v1310 = vpack.c.b16 %v1283, %v1282
        %v1311 = vpack.c.b16 %v1285, %v1284
        %v1312 = vpack.c.b16 %v1287, %v1286
        %v1313 = vpack.c.b16 %v1289, %v1288
        %v1314 = vpack.c.b16 %v1291, %v1290
        %v1315 = vpack.c.b16 %v1293, %v1292
        %v1316 = vpack.c.b16 %v1295, %v1294
        %v1317 = vpack.c.b16 %v1297, %v1296
        %v1318 = vpack.c.b16 %v1299, %v1298
        %v1319 = vpack.c.b16 %v1301, %v1300
        %v1320 = vpack.c.b16 %v1303, %v1302
        %v1321 = vpack.c.b16 %v1305, %v1304
        %1322 = vrot.lane.b32.xlu0 %v1306, 12
        %v1323 = vpop.permute.xlu0 %1322
        %1324 = vrot.lane.b32.xlu0 %v1307, 12
        %v1325 = vpop.permute.xlu0 %1324
        %1326 = vrot.lane.b32.xlu0 %v1308, 12
        %v1327 = vpop.permute.xlu0 %1326
        %1328 = vrot.lane.b32.xlu0 %v1309, 12
        %v1329 = vpop.permute.xlu0 %1328
        %1330 = vrot.lane.b32.xlu0 %v1310, 12
        %v1331 = vpop.permute.xlu0 %1330
        %1332 = vrot.lane.b32.xlu0 %v1311, 12
        %v1333 = vpop.permute.xlu0 %1332
        %1334 = vrot.lane.b32.xlu0 %v1312, 12
        %v1335 = vpop.permute.xlu0 %1334
        %1336 = vrot.lane.b32.xlu0 %v1313, 12
        %v1337 = vpop.permute.xlu0 %1336
        %1338 = vrot.lane.b32.xlu0 %v1314, 12
        %v1339 = vpop.permute.xlu0 %1338
        %1340 = vrot.lane.b32.xlu0 %v1315, 12
        %v1341 = vpop.permute.xlu0 %1340
        %1342 = vrot.lane.b32.xlu0 %v1316, 12
        %v1343 = vpop.permute.xlu0 %1342
        %1344 = vrot.lane.b32.xlu0 %v1317, 12
        %v1345 = vpop.permute.xlu0 %1344
        %1346 = vrot.lane.b32.xlu0 %v1318, 12
        %v1347 = vpop.permute.xlu0 %1346
        %1348 = vrot.lane.b32.xlu0 %v1319, 12
        %v1349 = vpop.permute.xlu0 %1348
        %1350 = vrot.lane.b32.xlu0 %v1320, 12
        %v1351 = vpop.permute.xlu0 %1350
        %1352 = vrot.lane.b32.xlu0 %v1321, 12
        %v1353 = vpop.permute.xlu0 %1352
        %vm1370 = vcmask 130144
        %1371 = vst.msk [vmem:[#allocation2] sm:$0xff] %vm1370, %v1323
        %1372 = vst.msk [vmem:[#allocation2 + $0x8] sm:$0xff] %vm1370, %v1325
        %1373 = vst.msk [vmem:[#allocation2 + $0x10] sm:$0xff] %vm1370, %v1327
        %1374 = vst.msk [vmem:[#allocation2 + $0x18] sm:$0xff] %vm1370, %v1329
        %1375 = vst.msk [vmem:[#allocation2 + $0x20] sm:$0xff] %vm1370, %v1331
        %1376 = vst.msk [vmem:[#allocation2 + $0x28] sm:$0xff] %vm1370, %v1333
        %1377 = vst.msk [vmem:[#allocation2 + $0x30] sm:$0xff] %vm1370, %v1335
        %1378 = vst.msk [vmem:[#allocation2 + $0x38] sm:$0xff] %vm1370, %v1337
        %1379 = vst.msk [vmem:[#allocation2 + $0x40] sm:$0xff] %vm1370, %v1339
        %1380 = vst.msk [vmem:[#allocation2 + $0x48] sm:$0xff] %vm1370, %v1341
        %1381 = vst.msk [vmem:[#allocation2 + $0x50] sm:$0xff] %vm1370, %v1343
        %1382 = vst.msk [vmem:[#allocation2 + $0x58] sm:$0xff] %vm1370, %v1345
        %1383 = vst.msk [vmem:[#allocation2 + $0x60] sm:$0xff] %vm1370, %v1347
        %1384 = vst.msk [vmem:[#allocation2 + $0x68] sm:$0xff] %vm1370, %v1349
        %1385 = vst.msk [vmem:[#allocation2 + $0x70] sm:$0xff] %vm1370, %v1351
        %1386 = vst.msk [vmem:[#allocation2 + $0x78] sm:$0xff] %vm1370, %v1353
        %v1387 = vld [vmem:[%s1209] sm:$0xf]
        %v1388 = vld [vmem:[%s1209 + $0x4] sm:$0xf]
        %v1389 = vld [vmem:[%s1209 + $0x8] sm:$0x1]
        %v1390 = vld [vmem:[%s1209 + $0xc] sm:$0xf]
        %v1391 = vld [vmem:[%s1209 + $0x10] sm:$0xf]
        %v1392 = vld [vmem:[%s1209 + $0x14] sm:$0x1]
        %v1393 = vld [vmem:[%s1209 + $0x18] sm:$0xf]
        %v1394 = vld [vmem:[%s1209 + $0x1c] sm:$0xf]
        %v1395 = vld [vmem:[%s1209 + $0x20] sm:$0x1]
        %v1396 = vld [vmem:[%s1209 + $0x24] sm:$0xf]
        %v1397 = vld [vmem:[%s1209 + $0x28] sm:$0xf]
        %v1398 = vld [vmem:[%s1209 + $0x2c] sm:$0x1]
        %v1399 = vld [vmem:[%s1209 + $0x30] sm:$0xf]
        %v1400 = vld [vmem:[%s1209 + $0x34] sm:$0xf]
        %v1401 = vld [vmem:[%s1209 + $0x38] sm:$0x1]
        %v1402 = vld [vmem:[%s1209 + $0x3c] sm:$0xf]
        %v1403 = vld [vmem:[%s1209 + $0x40] sm:$0xf]
        %v1404 = vld [vmem:[%s1209 + $0x44] sm:$0x1]
        %v1405 = vld [vmem:[%s1209 + $0x48] sm:$0xf]
        %v1406 = vld [vmem:[%s1209 + $0x4c] sm:$0xf]
        %v1407 = vld [vmem:[%s1209 + $0x50] sm:$0x1]
        %v1408 = vld [vmem:[%s1209 + $0x54] sm:$0xf]
        %v1409 = vld [vmem:[%s1209 + $0x58] sm:$0xf]
        %v1410 = vld [vmem:[%s1209 + $0x5c] sm:$0x1]
        %v1411 = vld [vmem:[%s1209 + $0x60] sm:$0xf]
        %v1412 = vld [vmem:[%s1209 + $0x64] sm:$0xf]
        %v1413 = vld [vmem:[%s1209 + $0x68] sm:$0x1]
        %v1414 = vld [vmem:[%s1209 + $0x6c] sm:$0xf]
        %v1415 = vld [vmem:[%s1209 + $0x70] sm:$0xf]
        %v1416 = vld [vmem:[%s1209 + $0x74] sm:$0x1]
        %v1417 = vld [vmem:[%s1209 + $0x78] sm:$0xf]
        %v1418 = vld [vmem:[%s1209 + $0x7c] sm:$0xf]
        %v1419 = vld [vmem:[%s1209 + $0x80] sm:$0x1]
        %v1420 = vld [vmem:[%s1209 + $0x84] sm:$0xf]
        %v1421 = vld [vmem:[%s1209 + $0x88] sm:$0xf]
        %v1422 = vld [vmem:[%s1209 + $0x8c] sm:$0x1]
        %v1423 = vld [vmem:[%s1209 + $0x90] sm:$0xf]
        %v1424 = vld [vmem:[%s1209 + $0x94] sm:$0xf]
        %v1425 = vld [vmem:[%s1209 + $0x98] sm:$0x1]
        %v1426 = vld [vmem:[%s1209 + $0x9c] sm:$0xf]
        %v1427 = vld [vmem:[%s1209 + $0xa0] sm:$0xf]
        %v1428 = vld [vmem:[%s1209 + $0xa4] sm:$0x1]
        %v1429 = vld [vmem:[%s1209 + $0xa8] sm:$0xf]
        %v1430 = vld [vmem:[%s1209 + $0xac] sm:$0xf]
        %v1431 = vld [vmem:[%s1209 + $0xb0] sm:$0x1]
        %v1432 = vld [vmem:[%s1209 + $0xb4] sm:$0xf]
        %v1433 = vld [vmem:[%s1209 + $0xb8] sm:$0xf]
        %v1434 = vld [vmem:[%s1209 + $0xbc] sm:$0x1]
        %v1436 = vshrl.u32 %v1387, 16
        %v1438 = vrot.slane %v1436, 4
        %v1439 = vshll.u32 %v1387, 16
        %v1441 = vrot.slane %v1439, 5
        %v1442 = vor.u32 %v1438, %v1441
        %v1443 = vrot.slane %v1442, 4
        %v1445 = vshll.u32 %v1388, 16
        %v1447 = vrot.slane %v1445, 5
        %v1448 = vsel %vm384, %v1443, %v1447
        %v1449 = vshrl.u32 %v1388, 16
        %v1451 = vrot.slane %v1449, 4
        %v1452 = vor.u32 %v1451, %v1447
        %v1453 = vrot.slane %v1452, 4
        %v1455 = vshll.u32 %v1389, 16
        %v1457 = vrot.slane %v1455, 5
        %v1458 = vsel %vm384, %v1453, %v1457
        %v1460 = vshrl.u32 %v1390, 16
        %v1462 = vrot.slane %v1460, 4
        %v1463 = vshll.u32 %v1390, 16
        %v1465 = vrot.slane %v1463, 5
        %v1466 = vor.u32 %v1462, %v1465
        %v1467 = vrot.slane %v1466, 4
        %v1469 = vshll.u32 %v1391, 16
        %v1471 = vrot.slane %v1469, 5
        %v1472 = vsel %vm384, %v1467, %v1471
        %v1473 = vshrl.u32 %v1391, 16
        %v1475 = vrot.slane %v1473, 4
        %v1476 = vor.u32 %v1475, %v1471
        %v1477 = vrot.slane %v1476, 4
        %v1479 = vshll.u32 %v1392, 16
        %v1481 = vrot.slane %v1479, 5
        %v1482 = vsel %vm384, %v1477, %v1481
        %v1484 = vshrl.u32 %v1393, 16
        %v1486 = vrot.slane %v1484, 4
        %v1487 = vshll.u32 %v1393, 16
        %v1489 = vrot.slane %v1487, 5
        %v1490 = vor.u32 %v1486, %v1489
        %v1491 = vrot.slane %v1490, 4
        %v1493 = vshll.u32 %v1394, 16
        %v1495 = vrot.slane %v1493, 5
        %v1496 = vsel %vm384, %v1491, %v1495
        %v1497 = vshrl.u32 %v1394, 16
        %v1499 = vrot.slane %v1497, 4
        %v1500 = vor.u32 %v1499, %v1495
        %v1501 = vrot.slane %v1500, 4
        %v1503 = vshll.u32 %v1395, 16
        %v1505 = vrot.slane %v1503, 5
        %v1506 = vsel %vm384, %v1501, %v1505
        %v1508 = vshrl.u32 %v1396, 16
        %v1510 = vrot.slane %v1508, 4
        %v1511 = vshll.u32 %v1396, 16
        %v1513 = vrot.slane %v1511, 5
        %v1514 = vor.u32 %v1510, %v1513
        %v1515 = vrot.slane %v1514, 4
        %v1517 = vshll.u32 %v1397, 16
        %v1519 = vrot.slane %v1517, 5
        %v1520 = vsel %vm384, %v1515, %v1519
        %v1521 = vshrl.u32 %v1397, 16
        %v1523 = vrot.slane %v1521, 4
        %v1524 = vor.u32 %v1523, %v1519
        %v1525 = vrot.slane %v1524, 4
        %v1527 = vshll.u32 %v1398, 16
        %v1529 = vrot.slane %v1527, 5
        %v1530 = vsel %vm384, %v1525, %v1529
        %v1532 = vshrl.u32 %v1399, 16
        %v1534 = vrot.slane %v1532, 4
        %v1535 = vshll.u32 %v1399, 16
        %v1537 = vrot.slane %v1535, 5
        %v1538 = vor.u32 %v1534, %v1537
        %v1539 = vrot.slane %v1538, 4
        %v1541 = vshll.u32 %v1400, 16
        %v1543 = vrot.slane %v1541, 5
        %v1544 = vsel %vm384, %v1539, %v1543
        %v1545 = vshrl.u32 %v1400, 16
        %v1547 = vrot.slane %v1545, 4
        %v1548 = vor.u32 %v1547, %v1543
        %v1549 = vrot.slane %v1548, 4
        %v1551 = vshll.u32 %v1401, 16
        %v1553 = vrot.slane %v1551, 5
        %v1554 = vsel %vm384, %v1549, %v1553
        %v1556 = vshrl.u32 %v1402, 16
        %v1558 = vrot.slane %v1556, 4
        %v1559 = vshll.u32 %v1402, 16
        %v1561 = vrot.slane %v1559, 5
        %v1562 = vor.u32 %v1558, %v1561
        %v1563 = vrot.slane %v1562, 4
        %v1565 = vshll.u32 %v1403, 16
        %v1567 = vrot.slane %v1565, 5
        %v1568 = vsel %vm384, %v1563, %v1567
        %v1569 = vshrl.u32 %v1403, 16
        %v1571 = vrot.slane %v1569, 4
        %v1572 = vor.u32 %v1571, %v1567
        %v1573 = vrot.slane %v1572, 4
        %v1575 = vshll.u32 %v1404, 16
        %v1577 = vrot.slane %v1575, 5
        %v1578 = vsel %vm384, %v1573, %v1577
        %v1580 = vshrl.u32 %v1405, 16
        %v1582 = vrot.slane %v1580, 4
        %v1583 = vshll.u32 %v1405, 16
        %v1585 = vrot.slane %v1583, 5
        %v1586 = vor.u32 %v1582, %v1585
        %v1587 = vrot.slane %v1586, 4
        %v1589 = vshll.u32 %v1406, 16
        %v1591 = vrot.slane %v1589, 5
        %v1592 = vsel %vm384, %v1587, %v1591
        %v1593 = vshrl.u32 %v1406, 16
        %v1595 = vrot.slane %v1593, 4
        %v1596 = vor.u32 %v1595, %v1591
        %v1597 = vrot.slane %v1596, 4
        %v1599 = vshll.u32 %v1407, 16
        %v1601 = vrot.slane %v1599, 5
        %v1602 = vsel %vm384, %v1597, %v1601
        %v1604 = vshrl.u32 %v1408, 16
        %v1606 = vrot.slane %v1604, 4
        %v1607 = vshll.u32 %v1408, 16
        %v1609 = vrot.slane %v1607, 5
        %v1610 = vor.u32 %v1606, %v1609
        %v1611 = vrot.slane %v1610, 4
        %v1613 = vshll.u32 %v1409, 16
        %v1615 = vrot.slane %v1613, 5
        %v1616 = vsel %vm384, %v1611, %v1615
        %v1617 = vshrl.u32 %v1409, 16
        %v1619 = vrot.slane %v1617, 4
        %v1620 = vor.u32 %v1619, %v1615
        %v1621 = vrot.slane %v1620, 4
        %v1623 = vshll.u32 %v1410, 16
        %v1625 = vrot.slane %v1623, 5
        %v1626 = vsel %vm384, %v1621, %v1625
        %v1628 = vshrl.u32 %v1411, 16
        %v1630 = vrot.slane %v1628, 4
        %v1631 = vshll.u32 %v1411, 16
        %v1633 = vrot.slane %v1631, 5
        %v1634 = vor.u32 %v1630, %v1633
        %v1635 = vrot.slane %v1634, 4
        %v1637 = vshll.u32 %v1412, 16
        %v1639 = vrot.slane %v1637, 5
        %v1640 = vsel %vm384, %v1635, %v1639
        %v1641 = vshrl.u32 %v1412, 16
        %v1643 = vrot.slane %v1641, 4
        %v1644 = vor.u32 %v1643, %v1639
        %v1645 = vrot.slane %v1644, 4
        %v1647 = vshll.u32 %v1413, 16
        %v1649 = vrot.slane %v1647, 5
        %v1650 = vsel %vm384, %v1645, %v1649
        %v1652 = vshrl.u32 %v1414, 16
        %v1654 = vrot.slane %v1652, 4
        %v1655 = vshll.u32 %v1414, 16
        %v1657 = vrot.slane %v1655, 5
        %v1658 = vor.u32 %v1654, %v1657
        %v1659 = vrot.slane %v1658, 4
        %v1661 = vshll.u32 %v1415, 16
        %v1663 = vrot.slane %v1661, 5
        %v1664 = vsel %vm384, %v1659, %v1663
        %v1665 = vshrl.u32 %v1415, 16
        %v1667 = vrot.slane %v1665, 4
        %v1668 = vor.u32 %v1667, %v1663
        %v1669 = vrot.slane %v1668, 4
        %v1671 = vshll.u32 %v1416, 16
        %v1673 = vrot.slane %v1671, 5
        %v1674 = vsel %vm384, %v1669, %v1673
        %v1676 = vshrl.u32 %v1417, 16
        %v1678 = vrot.slane %v1676, 4
        %v1679 = vshll.u32 %v1417, 16
        %v1681 = vrot.slane %v1679, 5
        %v1682 = vor.u32 %v1678, %v1681
        %v1683 = vrot.slane %v1682, 4
        %v1685 = vshll.u32 %v1418, 16
        %v1687 = vrot.slane %v1685, 5
        %v1688 = vsel %vm384, %v1683, %v1687
        %v1689 = vshrl.u32 %v1418, 16
        %v1691 = vrot.slane %v1689, 4
        %v1692 = vor.u32 %v1691, %v1687
        %v1693 = vrot.slane %v1692, 4
        %v1695 = vshll.u32 %v1419, 16
        %v1697 = vrot.slane %v1695, 5
        %v1698 = vsel %vm384, %v1693, %v1697
        %v1700 = vshrl.u32 %v1420, 16
        %v1702 = vrot.slane %v1700, 4
        %v1703 = vshll.u32 %v1420, 16
        %v1705 = vrot.slane %v1703, 5
        %v1706 = vor.u32 %v1702, %v1705
        %v1707 = vrot.slane %v1706, 4
        %v1709 = vshll.u32 %v1421, 16
        %v1711 = vrot.slane %v1709, 5
        %v1712 = vsel %vm384, %v1707, %v1711
        %v1713 = vshrl.u32 %v1421, 16
        %v1715 = vrot.slane %v1713, 4
        %v1716 = vor.u32 %v1715, %v1711
        %v1717 = vrot.slane %v1716, 4
        %v1719 = vshll.u32 %v1422, 16
        %v1721 = vrot.slane %v1719, 5
        %v1722 = vsel %vm384, %v1717, %v1721
        %v1724 = vshrl.u32 %v1423, 16
        %v1726 = vrot.slane %v1724, 4
        %v1727 = vshll.u32 %v1423, 16
        %v1729 = vrot.slane %v1727, 5
        %v1730 = vor.u32 %v1726, %v1729
        %v1731 = vrot.slane %v1730, 4
        %v1733 = vshll.u32 %v1424, 16
        %v1735 = vrot.slane %v1733, 5
        %v1736 = vsel %vm384, %v1731, %v1735
        %v1737 = vshrl.u32 %v1424, 16
        %v1739 = vrot.slane %v1737, 4
        %v1740 = vor.u32 %v1739, %v1735
        %v1741 = vrot.slane %v1740, 4
        %v1743 = vshll.u32 %v1425, 16
        %v1745 = vrot.slane %v1743, 5
        %v1746 = vsel %vm384, %v1741, %v1745
        %v1748 = vshrl.u32 %v1426, 16
        %v1750 = vrot.slane %v1748, 4
        %v1751 = vshll.u32 %v1426, 16
        %v1753 = vrot.slane %v1751, 5
        %v1754 = vor.u32 %v1750, %v1753
        %v1755 = vrot.slane %v1754, 4
        %v1757 = vshll.u32 %v1427, 16
        %v1759 = vrot.slane %v1757, 5
        %v1760 = vsel %vm384, %v1755, %v1759
        %v1761 = vshrl.u32 %v1427, 16
        %v1763 = vrot.slane %v1761, 4
        %v1764 = vor.u32 %v1763, %v1759
        %v1765 = vrot.slane %v1764, 4
        %v1767 = vshll.u32 %v1428, 16
        %v1769 = vrot.slane %v1767, 5
        %v1770 = vsel %vm384, %v1765, %v1769
        %v1772 = vshrl.u32 %v1429, 16
        %v1774 = vrot.slane %v1772, 4
        %v1775 = vshll.u32 %v1429, 16
        %v1777 = vrot.slane %v1775, 5
        %v1778 = vor.u32 %v1774, %v1777
        %v1779 = vrot.slane %v1778, 4
        %v1781 = vshll.u32 %v1430, 16
        %v1783 = vrot.slane %v1781, 5
        %v1784 = vsel %vm384, %v1779, %v1783
        %v1785 = vshrl.u32 %v1430, 16
        %v1787 = vrot.slane %v1785, 4
        %v1788 = vor.u32 %v1787, %v1783
        %v1789 = vrot.slane %v1788, 4
        %v1791 = vshll.u32 %v1431, 16
        %v1793 = vrot.slane %v1791, 5
        %v1794 = vsel %vm384, %v1789, %v1793
        %v1796 = vshrl.u32 %v1432, 16
        %v1798 = vrot.slane %v1796, 4
        %v1799 = vshll.u32 %v1432, 16
        %v1801 = vrot.slane %v1799, 5
        %v1802 = vor.u32 %v1798, %v1801
        %v1803 = vrot.slane %v1802, 4
        %v1805 = vshll.u32 %v1433, 16
        %v1807 = vrot.slane %v1805, 5
        %v1808 = vsel %vm384, %v1803, %v1807
        %v1809 = vshrl.u32 %v1433, 16
        %v1811 = vrot.slane %v1809, 4
        %v1812 = vor.u32 %v1811, %v1807
        %v1813 = vrot.slane %v1812, 4
        %v1815 = vshll.u32 %v1434, 16
        %v1817 = vrot.slane %v1815, 5
        %v1818 = vsel %vm384, %v1813, %v1817
        %v1819 = vunpack.c.l.b16 %v1448
        %v1820 = vunpack.c.l.b16 %v1458
        %v1821 = vunpack.c.l.b16 %v1472
        %v1822 = vunpack.c.l.b16 %v1482
        %v1823 = vunpack.c.l.b16 %v1496
        %v1824 = vunpack.c.l.b16 %v1506
        %v1825 = vunpack.c.l.b16 %v1520
        %v1826 = vunpack.c.l.b16 %v1530
        %v1827 = vunpack.c.l.b16 %v1544
        %v1828 = vunpack.c.l.b16 %v1554
        %v1829 = vunpack.c.l.b16 %v1568
        %v1830 = vunpack.c.l.b16 %v1578
        %v1831 = vunpack.c.l.b16 %v1592
        %v1832 = vunpack.c.l.b16 %v1602
        %v1833 = vunpack.c.l.b16 %v1616
        %v1834 = vunpack.c.l.b16 %v1626
        %v1835 = vunpack.c.l.b16 %v1640
        %v1836 = vunpack.c.l.b16 %v1650
        %v1837 = vunpack.c.l.b16 %v1664
        %v1838 = vunpack.c.l.b16 %v1674
        %v1839 = vunpack.c.l.b16 %v1688
        %v1840 = vunpack.c.l.b16 %v1698
        %v1841 = vunpack.c.l.b16 %v1712
        %v1842 = vunpack.c.l.b16 %v1722
        %v1843 = vunpack.c.l.b16 %v1736
        %v1844 = vunpack.c.l.b16 %v1746
        %v1845 = vunpack.c.l.b16 %v1760
        %v1846 = vunpack.c.l.b16 %v1770
        %v1847 = vunpack.c.l.b16 %v1784
        %v1848 = vunpack.c.l.b16 %v1794
        %v1849 = vunpack.c.l.b16 %v1808
        %v1850 = vunpack.c.l.b16 %v1818
        %v1851 = vpack.c.b16 %v1820, %v1819
        %v1852 = vpack.c.b16 %v1822, %v1821
        %v1853 = vpack.c.b16 %v1824, %v1823
        %v1854 = vpack.c.b16 %v1826, %v1825
        %v1855 = vpack.c.b16 %v1828, %v1827
        %v1856 = vpack.c.b16 %v1830, %v1829
        %v1857 = vpack.c.b16 %v1832, %v1831
        %v1858 = vpack.c.b16 %v1834, %v1833
        %v1859 = vpack.c.b16 %v1836, %v1835
        %v1860 = vpack.c.b16 %v1838, %v1837
        %v1861 = vpack.c.b16 %v1840, %v1839
        %v1862 = vpack.c.b16 %v1842, %v1841
        %v1863 = vpack.c.b16 %v1844, %v1843
        %v1864 = vpack.c.b16 %v1846, %v1845
        %v1865 = vpack.c.b16 %v1848, %v1847
        %v1866 = vpack.c.b16 %v1850, %v1849
        %1867 = vrot.lane.b32.xlu0 %v1851, 16
        %v1868 = vpop.permute.xlu0 %1867
        %1869 = vrot.lane.b32.xlu0 %v1852, 16
        %v1870 = vpop.permute.xlu0 %1869
        %1871 = vrot.lane.b32.xlu0 %v1853, 16
        %v1872 = vpop.permute.xlu0 %1871
        %1873 = vrot.lane.b32.xlu0 %v1854, 16
        %v1874 = vpop.permute.xlu0 %1873
        %1875 = vrot.lane.b32.xlu0 %v1855, 16
        %v1876 = vpop.permute.xlu0 %1875
        %1877 = vrot.lane.b32.xlu0 %v1856, 16
        %v1878 = vpop.permute.xlu0 %1877
        %1879 = vrot.lane.b32.xlu0 %v1857, 16
        %v1880 = vpop.permute.xlu0 %1879
        %1881 = vrot.lane.b32.xlu0 %v1858, 16
        %v1882 = vpop.permute.xlu0 %1881
        %1883 = vrot.lane.b32.xlu0 %v1859, 16
        %v1884 = vpop.permute.xlu0 %1883
        %1885 = vrot.lane.b32.xlu0 %v1860, 16
        %v1886 = vpop.permute.xlu0 %1885
        %1887 = vrot.lane.b32.xlu0 %v1861, 16
        %v1888 = vpop.permute.xlu0 %1887
        %1889 = vrot.lane.b32.xlu0 %v1862, 16
        %v1890 = vpop.permute.xlu0 %1889
        %1891 = vrot.lane.b32.xlu0 %v1863, 16
        %v1892 = vpop.permute.xlu0 %1891
        %1893 = vrot.lane.b32.xlu0 %v1864, 16
        %v1894 = vpop.permute.xlu0 %1893
        %1895 = vrot.lane.b32.xlu0 %v1865, 16
        %v1896 = vpop.permute.xlu0 %1895
        %1897 = vrot.lane.b32.xlu0 %v1866, 16
        %v1898 = vpop.permute.xlu0 %1897
        %vm1915 = vcmask 162944
        %1916 = vst.msk [vmem:[#allocation2] sm:$0xff] %vm1915, %v1868
        %1917 = vst.msk [vmem:[#allocation2 + $0x8] sm:$0xff] %vm1915, %v1870
        %1918 = vst.msk [vmem:[#allocation2 + $0x10] sm:$0xff] %vm1915, %v1872
        %1919 = vst.msk [vmem:[#allocation2 + $0x18] sm:$0xff] %vm1915, %v1874
        %1920 = vst.msk [vmem:[#allocation2 + $0x20] sm:$0xff] %vm1915, %v1876
        %1921 = vst.msk [vmem:[#allocation2 + $0x28] sm:$0xff] %vm1915, %v1878
        %1922 = vst.msk [vmem:[#allocation2 + $0x30] sm:$0xff] %vm1915, %v1880
        %1923 = vst.msk [vmem:[#allocation2 + $0x38] sm:$0xff] %vm1915, %v1882
        %1924 = vst.msk [vmem:[#allocation2 + $0x40] sm:$0xff] %vm1915, %v1884
        %1925 = vst.msk [vmem:[#allocation2 + $0x48] sm:$0xff] %vm1915, %v1886
        %1926 = vst.msk [vmem:[#allocation2 + $0x50] sm:$0xff] %vm1915, %v1888
        %1927 = vst.msk [vmem:[#allocation2 + $0x58] sm:$0xff] %vm1915, %v1890
        %1928 = vst.msk [vmem:[#allocation2 + $0x60] sm:$0xff] %vm1915, %v1892
        %1929 = vst.msk [vmem:[#allocation2 + $0x68] sm:$0xff] %vm1915, %v1894
        %1930 = vst.msk [vmem:[#allocation2 + $0x70] sm:$0xff] %vm1915, %v1896
        %1931 = vst.msk [vmem:[#allocation2 + $0x78] sm:$0xff] %vm1915, %v1898
        %v1932 = vld [vmem:[%s1209] sm:$0xe]
        %v1933 = vld [vmem:[%s1209 + $0x4] sm:$0xf]
        %v1934 = vld [vmem:[%s1209 + $0x8] sm:$0x1]
        %v1935 = vld [vmem:[%s1209 + $0xc] sm:$0xe]
        %v1936 = vld [vmem:[%s1209 + $0x10] sm:$0xf]
        %v1937 = vld [vmem:[%s1209 + $0x14] sm:$0x1]
        %v1938 = vld [vmem:[%s1209 + $0x18] sm:$0xe]
        %v1939 = vld [vmem:[%s1209 + $0x1c] sm:$0xf]
        %v1940 = vld [vmem:[%s1209 + $0x20] sm:$0x1]
        %v1941 = vld [vmem:[%s1209 + $0x24] sm:$0xe]
        %v1942 = vld [vmem:[%s1209 + $0x28] sm:$0xf]
        %v1943 = vld [vmem:[%s1209 + $0x2c] sm:$0x1]
        %v1944 = vld [vmem:[%s1209 + $0x30] sm:$0xe]
        %v1945 = vld [vmem:[%s1209 + $0x34] sm:$0xf]
        %v1946 = vld [vmem:[%s1209 + $0x38] sm:$0x1]
        %v1947 = vld [vmem:[%s1209 + $0x3c] sm:$0xe]
        %v1948 = vld [vmem:[%s1209 + $0x40] sm:$0xf]
        %v1949 = vld [vmem:[%s1209 + $0x44] sm:$0x1]
        %v1950 = vld [vmem:[%s1209 + $0x48] sm:$0xe]
        %v1951 = vld [vmem:[%s1209 + $0x4c] sm:$0xf]
        %v1952 = vld [vmem:[%s1209 + $0x50] sm:$0x1]
        %v1953 = vld [vmem:[%s1209 + $0x54] sm:$0xe]
        %v1954 = vld [vmem:[%s1209 + $0x58] sm:$0xf]
        %v1955 = vld [vmem:[%s1209 + $0x5c] sm:$0x1]
        %v1956 = vld [vmem:[%s1209 + $0x60] sm:$0xe]
        %v1957 = vld [vmem:[%s1209 + $0x64] sm:$0xf]
        %v1958 = vld [vmem:[%s1209 + $0x68] sm:$0x1]
        %v1959 = vld [vmem:[%s1209 + $0x6c] sm:$0xe]
        %v1960 = vld [vmem:[%s1209 + $0x70] sm:$0xf]
        %v1961 = vld [vmem:[%s1209 + $0x74] sm:$0x1]
        %v1962 = vld [vmem:[%s1209 + $0x78] sm:$0xe]
        %v1963 = vld [vmem:[%s1209 + $0x7c] sm:$0xf]
        %v1964 = vld [vmem:[%s1209 + $0x80] sm:$0x1]
        %v1965 = vld [vmem:[%s1209 + $0x84] sm:$0xe]
        %v1966 = vld [vmem:[%s1209 + $0x88] sm:$0xf]
        %v1967 = vld [vmem:[%s1209 + $0x8c] sm:$0x1]
        %v1968 = vld [vmem:[%s1209 + $0x90] sm:$0xe]
        %v1969 = vld [vmem:[%s1209 + $0x94] sm:$0xf]
        %v1970 = vld [vmem:[%s1209 + $0x98] sm:$0x1]
        %v1971 = vld [vmem:[%s1209 + $0x9c] sm:$0xe]
        %v1972 = vld [vmem:[%s1209 + $0xa0] sm:$0xf]
        %v1973 = vld [vmem:[%s1209 + $0xa4] sm:$0x1]
        %v1974 = vld [vmem:[%s1209 + $0xa8] sm:$0xe]
        %v1975 = vld [vmem:[%s1209 + $0xac] sm:$0xf]
        %v1976 = vld [vmem:[%s1209 + $0xb0] sm:$0x1]
        %v1977 = vld [vmem:[%s1209 + $0xb4] sm:$0xe]
        %v1978 = vld [vmem:[%s1209 + $0xb8] sm:$0xf]
        %v1979 = vld [vmem:[%s1209 + $0xbc] sm:$0x1]
        %v2028 = vrot.slane %v1932, 5
        %v2029 = vrot.slane %v2028, 4
        %v2030 = vrot.slane %v1933, 5
        %v2031 = vsel %vm980, %v2029, %v2030
        %v2032 = vrot.slane %v2030, 4
        %v2033 = vrot.slane %v1934, 5
        %v2034 = vsel %vm980, %v2032, %v2033
        %v2035 = vrot.slane %v1935, 5
        %v2036 = vrot.slane %v2035, 4
        %v2037 = vrot.slane %v1936, 5
        %v2038 = vsel %vm980, %v2036, %v2037
        %v2039 = vrot.slane %v2037, 4
        %v2040 = vrot.slane %v1937, 5
        %v2041 = vsel %vm980, %v2039, %v2040
        %v2042 = vrot.slane %v1938, 5
        %v2043 = vrot.slane %v2042, 4
        %v2044 = vrot.slane %v1939, 5
        %v2045 = vsel %vm980, %v2043, %v2044
        %v2046 = vrot.slane %v2044, 4
        %v2047 = vrot.slane %v1940, 5
        %v2048 = vsel %vm980, %v2046, %v2047
        %v2049 = vrot.slane %v1941, 5
        %v2050 = vrot.slane %v2049, 4
        %v2051 = vrot.slane %v1942, 5
        %v2052 = vsel %vm980, %v2050, %v2051
        %v2053 = vrot.slane %v2051, 4
        %v2054 = vrot.slane %v1943, 5
        %v2055 = vsel %vm980, %v2053, %v2054
        %v2056 = vrot.slane %v1944, 5
        %v2057 = vrot.slane %v2056, 4
        %v2058 = vrot.slane %v1945, 5
        %v2059 = vsel %vm980, %v2057, %v2058
        %v2060 = vrot.slane %v2058, 4
        %v2061 = vrot.slane %v1946, 5
        %v2062 = vsel %vm980, %v2060, %v2061
        %v2063 = vrot.slane %v1947, 5
        %v2064 = vrot.slane %v2063, 4
        %v2065 = vrot.slane %v1948, 5
        %v2066 = vsel %vm980, %v2064, %v2065
        %v2067 = vrot.slane %v2065, 4
        %v2068 = vrot.slane %v1949, 5
        %v2069 = vsel %vm980, %v2067, %v2068
        %v2070 = vrot.slane %v1950, 5
        %v2071 = vrot.slane %v2070, 4
        %v2072 = vrot.slane %v1951, 5
        %v2073 = vsel %vm980, %v2071, %v2072
        %v2074 = vrot.slane %v2072, 4
        %v2075 = vrot.slane %v1952, 5
        %v2076 = vsel %vm980, %v2074, %v2075
        %v2077 = vrot.slane %v1953, 5
        %v2078 = vrot.slane %v2077, 4
        %v2079 = vrot.slane %v1954, 5
        %v2080 = vsel %vm980, %v2078, %v2079
        %v2081 = vrot.slane %v2079, 4
        %v2082 = vrot.slane %v1955, 5
        %v2083 = vsel %vm980, %v2081, %v2082
        %v2084 = vrot.slane %v1956, 5
        %v2085 = vrot.slane %v2084, 4
        %v2086 = vrot.slane %v1957, 5
        %v2087 = vsel %vm980, %v2085, %v2086
        %v2088 = vrot.slane %v2086, 4
        %v2089 = vrot.slane %v1958, 5
        %v2090 = vsel %vm980, %v2088, %v2089
        %v2091 = vrot.slane %v1959, 5
        %v2092 = vrot.slane %v2091, 4
        %v2093 = vrot.slane %v1960, 5
        %v2094 = vsel %vm980, %v2092, %v2093
        %v2095 = vrot.slane %v2093, 4
        %v2096 = vrot.slane %v1961, 5
        %v2097 = vsel %vm980, %v2095, %v2096
        %v2098 = vrot.slane %v1962, 5
        %v2099 = vrot.slane %v2098, 4
        %v2100 = vrot.slane %v1963, 5
        %v2101 = vsel %vm980, %v2099, %v2100
        %v2102 = vrot.slane %v2100, 4
        %v2103 = vrot.slane %v1964, 5
        %v2104 = vsel %vm980, %v2102, %v2103
        %v2105 = vrot.slane %v1965, 5
        %v2106 = vrot.slane %v2105, 4
        %v2107 = vrot.slane %v1966, 5
        %v2108 = vsel %vm980, %v2106, %v2107
        %v2109 = vrot.slane %v2107, 4
        %v2110 = vrot.slane %v1967, 5
        %v2111 = vsel %vm980, %v2109, %v2110
        %v2112 = vrot.slane %v1968, 5
        %v2113 = vrot.slane %v2112, 4
        %v2114 = vrot.slane %v1969, 5
        %v2115 = vsel %vm980, %v2113, %v2114
        %v2116 = vrot.slane %v2114, 4
        %v2117 = vrot.slane %v1970, 5
        %v2118 = vsel %vm980, %v2116, %v2117
        %v2119 = vrot.slane %v1971, 5
        %v2120 = vrot.slane %v2119, 4
        %v2121 = vrot.slane %v1972, 5
        %v2122 = vsel %vm980, %v2120, %v2121
        %v2123 = vrot.slane %v2121, 4
        %v2124 = vrot.slane %v1973, 5
        %v2125 = vsel %vm980, %v2123, %v2124
        %v2126 = vrot.slane %v1974, 5
        %v2127 = vrot.slane %v2126, 4
        %v2128 = vrot.slane %v1975, 5
        %v2129 = vsel %vm980, %v2127, %v2128
        %v2130 = vrot.slane %v2128, 4
        %v2131 = vrot.slane %v1976, 5
        %v2132 = vsel %vm980, %v2130, %v2131
        %v2133 = vrot.slane %v1977, 5
        %v2134 = vrot.slane %v2133, 4
        %v2135 = vrot.slane %v1978, 5
        %v2136 = vsel %vm980, %v2134, %v2135
        %v2137 = vrot.slane %v2135, 4
        %v2138 = vrot.slane %v1979, 5
        %v2139 = vsel %vm980, %v2137, %v2138
        %v2140 = vunpack.c.l.b16 %v2031
        %v2141 = vunpack.c.l.b16 %v2034
        %v2142 = vunpack.c.l.b16 %v2038
        %v2143 = vunpack.c.l.b16 %v2041
        %v2144 = vunpack.c.l.b16 %v2045
        %v2145 = vunpack.c.l.b16 %v2048
        %v2146 = vunpack.c.l.b16 %v2052
        %v2147 = vunpack.c.l.b16 %v2055
        %v2148 = vunpack.c.l.b16 %v2059
        %v2149 = vunpack.c.l.b16 %v2062
        %v2150 = vunpack.c.l.b16 %v2066
        %v2151 = vunpack.c.l.b16 %v2069
        %v2152 = vunpack.c.l.b16 %v2073
        %v2153 = vunpack.c.l.b16 %v2076
        %v2154 = vunpack.c.l.b16 %v2080
        %v2155 = vunpack.c.l.b16 %v2083
        %v2156 = vunpack.c.l.b16 %v2087
        %v2157 = vunpack.c.l.b16 %v2090
        %v2158 = vunpack.c.l.b16 %v2094
        %v2159 = vunpack.c.l.b16 %v2097
        %v2160 = vunpack.c.l.b16 %v2101
        %v2161 = vunpack.c.l.b16 %v2104
        %v2162 = vunpack.c.l.b16 %v2108
        %v2163 = vunpack.c.l.b16 %v2111
        %v2164 = vunpack.c.l.b16 %v2115
        %v2165 = vunpack.c.l.b16 %v2118
        %v2166 = vunpack.c.l.b16 %v2122
        %v2167 = vunpack.c.l.b16 %v2125
        %v2168 = vunpack.c.l.b16 %v2129
        %v2169 = vunpack.c.l.b16 %v2132
        %v2170 = vunpack.c.l.b16 %v2136
        %v2171 = vunpack.c.l.b16 %v2139
        %v2172 = vpack.c.b16 %v2141, %v2140
        %v2173 = vpack.c.b16 %v2143, %v2142
        %v2174 = vpack.c.b16 %v2145, %v2144
        %v2175 = vpack.c.b16 %v2147, %v2146
        %v2176 = vpack.c.b16 %v2149, %v2148
        %v2177 = vpack.c.b16 %v2151, %v2150
        %v2178 = vpack.c.b16 %v2153, %v2152
        %v2179 = vpack.c.b16 %v2155, %v2154
        %v2180 = vpack.c.b16 %v2157, %v2156
        %v2181 = vpack.c.b16 %v2159, %v2158
        %v2182 = vpack.c.b16 %v2161, %v2160
        %v2183 = vpack.c.b16 %v2163, %v2162
        %v2184 = vpack.c.b16 %v2165, %v2164
        %v2185 = vpack.c.b16 %v2167, %v2166
        %v2186 = vpack.c.b16 %v2169, %v2168
        %v2187 = vpack.c.b16 %v2171, %v2170
        %2188 = vrot.lane.b32.xlu0 %v2172, 20
        %v2189 = vpop.permute.xlu0 %2188
        %2190 = vrot.lane.b32.xlu0 %v2173, 20
        %v2191 = vpop.permute.xlu0 %2190
        %2192 = vrot.lane.b32.xlu0 %v2174, 20
        %v2193 = vpop.permute.xlu0 %2192
        %2194 = vrot.lane.b32.xlu0 %v2175, 20
        %v2195 = vpop.permute.xlu0 %2194
        %2196 = vrot.lane.b32.xlu0 %v2176, 20
        %v2197 = vpop.permute.xlu0 %2196
        %2198 = vrot.lane.b32.xlu0 %v2177, 20
        %v2199 = vpop.permute.xlu0 %2198
        %2200 = vrot.lane.b32.xlu0 %v2178, 20
        %v2201 = vpop.permute.xlu0 %2200
        %2202 = vrot.lane.b32.xlu0 %v2179, 20
        %v2203 = vpop.permute.xlu0 %2202
        %2204 = vrot.lane.b32.xlu0 %v2180, 20
        %v2205 = vpop.permute.xlu0 %2204
        %2206 = vrot.lane.b32.xlu0 %v2181, 20
        %v2207 = vpop.permute.xlu0 %2206
        %2208 = vrot.lane.b32.xlu0 %v2182, 20
        %v2209 = vpop.permute.xlu0 %2208
        %2210 = vrot.lane.b32.xlu0 %v2183, 20
        %v2211 = vpop.permute.xlu0 %2210
        %2212 = vrot.lane.b32.xlu0 %v2184, 20
        %v2213 = vpop.permute.xlu0 %2212
        %2214 = vrot.lane.b32.xlu0 %v2185, 20
        %v2215 = vpop.permute.xlu0 %2214
        %2216 = vrot.lane.b32.xlu0 %v2186, 20
        %v2217 = vpop.permute.xlu0 %2216
        %2218 = vrot.lane.b32.xlu0 %v2187, 20
        %v2219 = vpop.permute.xlu0 %2218
        %vm2236 = vcmask 195744
        %2237 = vst.msk [vmem:[#allocation2] sm:$0xff] %vm2236, %v2189
        %2238 = vst.msk [vmem:[#allocation2 + $0x8] sm:$0xff] %vm2236, %v2191
        %2239 = vst.msk [vmem:[#allocation2 + $0x10] sm:$0xff] %vm2236, %v2193
        %2240 = vst.msk [vmem:[#allocation2 + $0x18] sm:$0xff] %vm2236, %v2195
        %2241 = vst.msk [vmem:[#allocation2 + $0x20] sm:$0xff] %vm2236, %v2197
        %2242 = vst.msk [vmem:[#allocation2 + $0x28] sm:$0xff] %vm2236, %v2199
        %2243 = vst.msk [vmem:[#allocation2 + $0x30] sm:$0xff] %vm2236, %v2201
        %2244 = vst.msk [vmem:[#allocation2 + $0x38] sm:$0xff] %vm2236, %v2203
        %2245 = vst.msk [vmem:[#allocation2 + $0x40] sm:$0xff] %vm2236, %v2205
        %2246 = vst.msk [vmem:[#allocation2 + $0x48] sm:$0xff] %vm2236, %v2207
        %2247 = vst.msk [vmem:[#allocation2 + $0x50] sm:$0xff] %vm2236, %v2209
        %2248 = vst.msk [vmem:[#allocation2 + $0x58] sm:$0xff] %vm2236, %v2211
        %2249 = vst.msk [vmem:[#allocation2 + $0x60] sm:$0xff] %vm2236, %v2213
        %2250 = vst.msk [vmem:[#allocation2 + $0x68] sm:$0xff] %vm2236, %v2215
        %2251 = vst.msk [vmem:[#allocation2 + $0x70] sm:$0xff] %vm2236, %v2217
        %2252 = vst.msk [vmem:[#allocation2 + $0x78] sm:$0xff] %vm2236, %v2219
        %s2253 = sadd.s32 %s185, 2
        %s2254 = smul.u32 %s2253, 3
        %s2255 = smul.addr %s2254, 4
        %s2256 = scalar_lea.vmem %s182, %s2255
        %v2257 = vld [vmem:[%s2256] sm:$0xf]
        %v2258 = vld [vmem:[%s2256 + $0x4] sm:$0xf]
        %v2259 = vld [vmem:[%s2256 + $0xc] sm:$0xf]
        %v2260 = vld [vmem:[%s2256 + $0x10] sm:$0xf]
        %v2261 = vld [vmem:[%s2256 + $0x18] sm:$0xf]
        %v2262 = vld [vmem:[%s2256 + $0x1c] sm:$0xf]
        %v2263 = vld [vmem:[%s2256 + $0x24] sm:$0xf]
        %v2264 = vld [vmem:[%s2256 + $0x28] sm:$0xf]
        %v2265 = vld [vmem:[%s2256 + $0x30] sm:$0xf]
        %v2266 = vld [vmem:[%s2256 + $0x34] sm:$0xf]
        %v2267 = vld [vmem:[%s2256 + $0x3c] sm:$0xf]
        %v2268 = vld [vmem:[%s2256 + $0x40] sm:$0xf]
        %v2269 = vld [vmem:[%s2256 + $0x48] sm:$0xf]
        %v2270 = vld [vmem:[%s2256 + $0x4c] sm:$0xf]
        %v2271 = vld [vmem:[%s2256 + $0x54] sm:$0xf]
        %v2272 = vld [vmem:[%s2256 + $0x58] sm:$0xf]
        %v2273 = vld [vmem:[%s2256 + $0x60] sm:$0xf]
        %v2274 = vld [vmem:[%s2256 + $0x64] sm:$0xf]
        %v2275 = vld [vmem:[%s2256 + $0x6c] sm:$0xf]
        %v2276 = vld [vmem:[%s2256 + $0x70] sm:$0xf]
        %v2277 = vld [vmem:[%s2256 + $0x78] sm:$0xf]
        %v2278 = vld [vmem:[%s2256 + $0x7c] sm:$0xf]
        %v2279 = vld [vmem:[%s2256 + $0x84] sm:$0xf]
        %v2280 = vld [vmem:[%s2256 + $0x88] sm:$0xf]
        %v2281 = vld [vmem:[%s2256 + $0x90] sm:$0xf]
        %v2282 = vld [vmem:[%s2256 + $0x94] sm:$0xf]
        %v2283 = vld [vmem:[%s2256 + $0x9c] sm:$0xf]
        %v2284 = vld [vmem:[%s2256 + $0xa0] sm:$0xf]
        %v2285 = vld [vmem:[%s2256 + $0xa8] sm:$0xf]
        %v2286 = vld [vmem:[%s2256 + $0xac] sm:$0xf]
        %v2287 = vld [vmem:[%s2256 + $0xb4] sm:$0xf]
        %v2288 = vld [vmem:[%s2256 + $0xb8] sm:$0xf]
        %v2321 = vunpack.c.l.b16 %v2257
        %v2322 = vunpack.c.l.b16 %v2258
        %v2323 = vunpack.c.l.b16 %v2259
        %v2324 = vunpack.c.l.b16 %v2260
        %v2325 = vunpack.c.l.b16 %v2261
        %v2326 = vunpack.c.l.b16 %v2262
        %v2327 = vunpack.c.l.b16 %v2263
        %v2328 = vunpack.c.l.b16 %v2264
        %v2329 = vunpack.c.l.b16 %v2265
        %v2330 = vunpack.c.l.b16 %v2266
        %v2331 = vunpack.c.l.b16 %v2267
        %v2332 = vunpack.c.l.b16 %v2268
        %v2333 = vunpack.c.l.b16 %v2269
        %v2334 = vunpack.c.l.b16 %v2270
        %v2335 = vunpack.c.l.b16 %v2271
        %v2336 = vunpack.c.l.b16 %v2272
        %v2337 = vunpack.c.l.b16 %v2273
        %v2338 = vunpack.c.l.b16 %v2274
        %v2339 = vunpack.c.l.b16 %v2275
        %v2340 = vunpack.c.l.b16 %v2276
        %v2341 = vunpack.c.l.b16 %v2277
        %v2342 = vunpack.c.l.b16 %v2278
        %v2343 = vunpack.c.l.b16 %v2279
        %v2344 = vunpack.c.l.b16 %v2280
        %v2345 = vunpack.c.l.b16 %v2281
        %v2346 = vunpack.c.l.b16 %v2282
        %v2347 = vunpack.c.l.b16 %v2283
        %v2348 = vunpack.c.l.b16 %v2284
        %v2349 = vunpack.c.l.b16 %v2285
        %v2350 = vunpack.c.l.b16 %v2286
        %v2351 = vunpack.c.l.b16 %v2287
        %v2352 = vunpack.c.l.b16 %v2288
        %v2353 = vpack.c.b16 %v2322, %v2321
        %v2354 = vpack.c.b16 %v2324, %v2323
        %v2355 = vpack.c.b16 %v2326, %v2325
        %v2356 = vpack.c.b16 %v2328, %v2327
        %v2357 = vpack.c.b16 %v2330, %v2329
        %v2358 = vpack.c.b16 %v2332, %v2331
        %v2359 = vpack.c.b16 %v2334, %v2333
        %v2360 = vpack.c.b16 %v2336, %v2335
        %v2361 = vpack.c.b16 %v2338, %v2337
        %v2362 = vpack.c.b16 %v2340, %v2339
        %v2363 = vpack.c.b16 %v2342, %v2341
        %v2364 = vpack.c.b16 %v2344, %v2343
        %v2365 = vpack.c.b16 %v2346, %v2345
        %v2366 = vpack.c.b16 %v2348, %v2347
        %v2367 = vpack.c.b16 %v2350, %v2349
        %v2368 = vpack.c.b16 %v2352, %v2351
        %2369 = vrot.lane.b32.xlu0 %v2353, 24
        %v2370 = vpop.permute.xlu0 %2369
        %2371 = vrot.lane.b32.xlu0 %v2354, 24
        %v2372 = vpop.permute.xlu0 %2371
        %2373 = vrot.lane.b32.xlu0 %v2355, 24
        %v2374 = vpop.permute.xlu0 %2373
        %2375 = vrot.lane.b32.xlu0 %v2356, 24
        %v2376 = vpop.permute.xlu0 %2375
        %2377 = vrot.lane.b32.xlu0 %v2357, 24
        %v2378 = vpop.permute.xlu0 %2377
        %2379 = vrot.lane.b32.xlu0 %v2358, 24
        %v2380 = vpop.permute.xlu0 %2379
        %2381 = vrot.lane.b32.xlu0 %v2359, 24
        %v2382 = vpop.permute.xlu0 %2381
        %2383 = vrot.lane.b32.xlu0 %v2360, 24
        %v2384 = vpop.permute.xlu0 %2383
        %2385 = vrot.lane.b32.xlu0 %v2361, 24
        %v2386 = vpop.permute.xlu0 %2385
        %2387 = vrot.lane.b32.xlu0 %v2362, 24
        %v2388 = vpop.permute.xlu0 %2387
        %2389 = vrot.lane.b32.xlu0 %v2363, 24
        %v2390 = vpop.permute.xlu0 %2389
        %2391 = vrot.lane.b32.xlu0 %v2364, 24
        %v2392 = vpop.permute.xlu0 %2391
        %2393 = vrot.lane.b32.xlu0 %v2365, 24
        %v2394 = vpop.permute.xlu0 %2393
        %2395 = vrot.lane.b32.xlu0 %v2366, 24
        %v2396 = vpop.permute.xlu0 %2395
        %2397 = vrot.lane.b32.xlu0 %v2367, 24
        %v2398 = vpop.permute.xlu0 %2397
        %2399 = vrot.lane.b32.xlu0 %v2368, 24
        %v2400 = vpop.permute.xlu0 %2399
        %vm2417 = vcmask 228544
        %2418 = vst.msk [vmem:[#allocation2] sm:$0xff] %vm2417, %v2370
        %2419 = vst.msk [vmem:[#allocation2 + $0x8] sm:$0xff] %vm2417, %v2372
        %2420 = vst.msk [vmem:[#allocation2 + $0x10] sm:$0xff] %vm2417, %v2374
        %2421 = vst.msk [vmem:[#allocation2 + $0x18] sm:$0xff] %vm2417, %v2376
        %2422 = vst.msk [vmem:[#allocation2 + $0x20] sm:$0xff] %vm2417, %v2378
        %2423 = vst.msk [vmem:[#allocation2 + $0x28] sm:$0xff] %vm2417, %v2380
        %2424 = vst.msk [vmem:[#allocation2 + $0x30] sm:$0xff] %vm2417, %v2382
        %2425 = vst.msk [vmem:[#allocation2 + $0x38] sm:$0xff] %vm2417, %v2384
        %2426 = vst.msk [vmem:[#allocation2 + $0x40] sm:$0xff] %vm2417, %v2386
        %2427 = vst.msk [vmem:[#allocation2 + $0x48] sm:$0xff] %vm2417, %v2388
        %2428 = vst.msk [vmem:[#allocation2 + $0x50] sm:$0xff] %vm2417, %v2390
        %2429 = vst.msk [vmem:[#allocation2 + $0x58] sm:$0xff] %vm2417, %v2392
        %2430 = vst.msk [vmem:[#allocation2 + $0x60] sm:$0xff] %vm2417, %v2394
        %2431 = vst.msk [vmem:[#allocation2 + $0x68] sm:$0xff] %vm2417, %v2396
        %2432 = vst.msk [vmem:[#allocation2 + $0x70] sm:$0xff] %vm2417, %v2398
        %2433 = vst.msk [vmem:[#allocation2 + $0x78] sm:$0xff] %vm2417, %v2400
        %v2434 = vld [vmem:[%s2256] sm:$0xf]
        %v2435 = vld [vmem:[%s2256 + $0x4] sm:$0xf]
        %v2436 = vld [vmem:[%s2256 + $0x8] sm:$0x1]
        %v2437 = vld [vmem:[%s2256 + $0xc] sm:$0xf]
        %v2438 = vld [vmem:[%s2256 + $0x10] sm:$0xf]
        %v2439 = vld [vmem:[%s2256 + $0x14] sm:$0x1]
        %v2440 = vld [vmem:[%s2256 + $0x18] sm:$0xf]
        %v2441 = vld [vmem:[%s2256 + $0x1c] sm:$0xf]
        %v2442 = vld [vmem:[%s2256 + $0x20] sm:$0x1]
        %v2443 = vld [vmem:[%s2256 + $0x24] sm:$0xf]
        %v2444 = vld [vmem:[%s2256 + $0x28] sm:$0xf]
        %v2445 = vld [vmem:[%s2256 + $0x2c] sm:$0x1]
        %v2446 = vld [vmem:[%s2256 + $0x30] sm:$0xf]
        %v2447 = vld [vmem:[%s2256 + $0x34] sm:$0xf]
        %v2448 = vld [vmem:[%s2256 + $0x38] sm:$0x1]
        %v2449 = vld [vmem:[%s2256 + $0x3c] sm:$0xf]
        %v2450 = vld [vmem:[%s2256 + $0x40] sm:$0xf]
        %v2451 = vld [vmem:[%s2256 + $0x44] sm:$0x1]
        %v2452 = vld [vmem:[%s2256 + $0x48] sm:$0xf]
        %v2453 = vld [vmem:[%s2256 + $0x4c] sm:$0xf]
        %v2454 = vld [vmem:[%s2256 + $0x50] sm:$0x1]
        %v2455 = vld [vmem:[%s2256 + $0x54] sm:$0xf]
        %v2456 = vld [vmem:[%s2256 + $0x58] sm:$0xf]
        %v2457 = vld [vmem:[%s2256 + $0x5c] sm:$0x1]
        %v2458 = vld [vmem:[%s2256 + $0x60] sm:$0xf]
        %v2459 = vld [vmem:[%s2256 + $0x64] sm:$0xf]
        %v2460 = vld [vmem:[%s2256 + $0x68] sm:$0x1]
        %v2461 = vld [vmem:[%s2256 + $0x6c] sm:$0xf]
        %v2462 = vld [vmem:[%s2256 + $0x70] sm:$0xf]
        %v2463 = vld [vmem:[%s2256 + $0x74] sm:$0x1]
        %v2464 = vld [vmem:[%s2256 + $0x78] sm:$0xf]
        %v2465 = vld [vmem:[%s2256 + $0x7c] sm:$0xf]
        %v2466 = vld [vmem:[%s2256 + $0x80] sm:$0x1]
        %v2467 = vld [vmem:[%s2256 + $0x84] sm:$0xf]
        %v2468 = vld [vmem:[%s2256 + $0x88] sm:$0xf]
        %v2469 = vld [vmem:[%s2256 + $0x8c] sm:$0x1]
        %v2470 = vld [vmem:[%s2256 + $0x90] sm:$0xf]
        %v2471 = vld [vmem:[%s2256 + $0x94] sm:$0xf]
        %v2472 = vld [vmem:[%s2256 + $0x98] sm:$0x1]
        %v2473 = vld [vmem:[%s2256 + $0x9c] sm:$0xf]
        %v2474 = vld [vmem:[%s2256 + $0xa0] sm:$0xf]
        %v2475 = vld [vmem:[%s2256 + $0xa4] sm:$0x1]
        %v2476 = vld [vmem:[%s2256 + $0xa8] sm:$0xf]
        %v2477 = vld [vmem:[%s2256 + $0xac] sm:$0xf]
        %v2478 = vld [vmem:[%s2256 + $0xb0] sm:$0x1]
        %v2479 = vld [vmem:[%s2256 + $0xb4] sm:$0xf]
        %v2480 = vld [vmem:[%s2256 + $0xb8] sm:$0xf]
        %v2481 = vld [vmem:[%s2256 + $0xbc] sm:$0x1]
        %v2483 = vshrl.u32 %v2434, 16
        %v2485 = vrot.slane %v2483, 4
        %v2486 = vshll.u32 %v2434, 16
        %v2488 = vrot.slane %v2486, 5
        %v2489 = vor.u32 %v2485, %v2488
        %v2490 = vrot.slane %v2489, 4
        %v2492 = vshll.u32 %v2435, 16
        %v2494 = vrot.slane %v2492, 5
        %v2495 = vsel %vm384, %v2490, %v2494
        %v2496 = vshrl.u32 %v2435, 16
        %v2498 = vrot.slane %v2496, 4
        %v2499 = vor.u32 %v2498, %v2494
        %v2500 = vrot.slane %v2499, 4
        %v2502 = vshll.u32 %v2436, 16
        %v2504 = vrot.slane %v2502, 5
        %v2505 = vsel %vm384, %v2500, %v2504
        %v2507 = vshrl.u32 %v2437, 16
        %v2509 = vrot.slane %v2507, 4
        %v2510 = vshll.u32 %v2437, 16
        %v2512 = vrot.slane %v2510, 5
        %v2513 = vor.u32 %v2509, %v2512
        %v2514 = vrot.slane %v2513, 4
        %v2516 = vshll.u32 %v2438, 16
        %v2518 = vrot.slane %v2516, 5
        %v2519 = vsel %vm384, %v2514, %v2518
        %v2520 = vshrl.u32 %v2438, 16
        %v2522 = vrot.slane %v2520, 4
        %v2523 = vor.u32 %v2522, %v2518
        %v2524 = vrot.slane %v2523, 4
        %v2526 = vshll.u32 %v2439, 16
        %v2528 = vrot.slane %v2526, 5
        %v2529 = vsel %vm384, %v2524, %v2528
        %v2531 = vshrl.u32 %v2440, 16
        %v2533 = vrot.slane %v2531, 4
        %v2534 = vshll.u32 %v2440, 16
        %v2536 = vrot.slane %v2534, 5
        %v2537 = vor.u32 %v2533, %v2536
        %v2538 = vrot.slane %v2537, 4
        %v2540 = vshll.u32 %v2441, 16
        %v2542 = vrot.slane %v2540, 5
        %v2543 = vsel %vm384, %v2538, %v2542
        %v2544 = vshrl.u32 %v2441, 16
        %v2546 = vrot.slane %v2544, 4
        %v2547 = vor.u32 %v2546, %v2542
        %v2548 = vrot.slane %v2547, 4
        %v2550 = vshll.u32 %v2442, 16
        %v2552 = vrot.slane %v2550, 5
        %v2553 = vsel %vm384, %v2548, %v2552
        %v2555 = vshrl.u32 %v2443, 16
        %v2557 = vrot.slane %v2555, 4
        %v2558 = vshll.u32 %v2443, 16
        %v2560 = vrot.slane %v2558, 5
        %v2561 = vor.u32 %v2557, %v2560
        %v2562 = vrot.slane %v2561, 4
        %v2564 = vshll.u32 %v2444, 16
        %v2566 = vrot.slane %v2564, 5
        %v2567 = vsel %vm384, %v2562, %v2566
        %v2568 = vshrl.u32 %v2444, 16
        %v2570 = vrot.slane %v2568, 4
        %v2571 = vor.u32 %v2570, %v2566
        %v2572 = vrot.slane %v2571, 4
        %v2574 = vshll.u32 %v2445, 16
        %v2576 = vrot.slane %v2574, 5
        %v2577 = vsel %vm384, %v2572, %v2576
        %v2579 = vshrl.u32 %v2446, 16
        %v2581 = vrot.slane %v2579, 4
        %v2582 = vshll.u32 %v2446, 16
        %v2584 = vrot.slane %v2582, 5
        %v2585 = vor.u32 %v2581, %v2584
        %v2586 = vrot.slane %v2585, 4
        %v2588 = vshll.u32 %v2447, 16
        %v2590 = vrot.slane %v2588, 5
        %v2591 = vsel %vm384, %v2586, %v2590
        %v2592 = vshrl.u32 %v2447, 16
        %v2594 = vrot.slane %v2592, 4
        %v2595 = vor.u32 %v2594, %v2590
        %v2596 = vrot.slane %v2595, 4
        %v2598 = vshll.u32 %v2448, 16
        %v2600 = vrot.slane %v2598, 5
        %v2601 = vsel %vm384, %v2596, %v2600
        %v2603 = vshrl.u32 %v2449, 16
        %v2605 = vrot.slane %v2603, 4
        %v2606 = vshll.u32 %v2449, 16
        %v2608 = vrot.slane %v2606, 5
        %v2609 = vor.u32 %v2605, %v2608
        %v2610 = vrot.slane %v2609, 4
        %v2612 = vshll.u32 %v2450, 16
        %v2614 = vrot.slane %v2612, 5
        %v2615 = vsel %vm384, %v2610, %v2614
        %v2616 = vshrl.u32 %v2450, 16
        %v2618 = vrot.slane %v2616, 4
        %v2619 = vor.u32 %v2618, %v2614
        %v2620 = vrot.slane %v2619, 4
        %v2622 = vshll.u32 %v2451, 16
        %v2624 = vrot.slane %v2622, 5
        %v2625 = vsel %vm384, %v2620, %v2624
        %v2627 = vshrl.u32 %v2452, 16
        %v2629 = vrot.slane %v2627, 4
        %v2630 = vshll.u32 %v2452, 16
        %v2632 = vrot.slane %v2630, 5
        %v2633 = vor.u32 %v2629, %v2632
        %v2634 = vrot.slane %v2633, 4
        %v2636 = vshll.u32 %v2453, 16
        %v2638 = vrot.slane %v2636, 5
        %v2639 = vsel %vm384, %v2634, %v2638
        %v2640 = vshrl.u32 %v2453, 16
        %v2642 = vrot.slane %v2640, 4
        %v2643 = vor.u32 %v2642, %v2638
        %v2644 = vrot.slane %v2643, 4
        %v2646 = vshll.u32 %v2454, 16
        %v2648 = vrot.slane %v2646, 5
        %v2649 = vsel %vm384, %v2644, %v2648
        %v2651 = vshrl.u32 %v2455, 16
        %v2653 = vrot.slane %v2651, 4
        %v2654 = vshll.u32 %v2455, 16
        %v2656 = vrot.slane %v2654, 5
        %v2657 = vor.u32 %v2653, %v2656
        %v2658 = vrot.slane %v2657, 4
        %v2660 = vshll.u32 %v2456, 16
        %v2662 = vrot.slane %v2660, 5
        %v2663 = vsel %vm384, %v2658, %v2662
        %v2664 = vshrl.u32 %v2456, 16
        %v2666 = vrot.slane %v2664, 4
        %v2667 = vor.u32 %v2666, %v2662
        %v2668 = vrot.slane %v2667, 4
        %v2670 = vshll.u32 %v2457, 16
        %v2672 = vrot.slane %v2670, 5
        %v2673 = vsel %vm384, %v2668, %v2672
        %v2675 = vshrl.u32 %v2458, 16
        %v2677 = vrot.slane %v2675, 4
        %v2678 = vshll.u32 %v2458, 16
        %v2680 = vrot.slane %v2678, 5
        %v2681 = vor.u32 %v2677, %v2680
        %v2682 = vrot.slane %v2681, 4
        %v2684 = vshll.u32 %v2459, 16
        %v2686 = vrot.slane %v2684, 5
        %v2687 = vsel %vm384, %v2682, %v2686
        %v2688 = vshrl.u32 %v2459, 16
        %v2690 = vrot.slane %v2688, 4
        %v2691 = vor.u32 %v2690, %v2686
        %v2692 = vrot.slane %v2691, 4
        %v2694 = vshll.u32 %v2460, 16
        %v2696 = vrot.slane %v2694, 5
        %v2697 = vsel %vm384, %v2692, %v2696
        %v2699 = vshrl.u32 %v2461, 16
        %v2701 = vrot.slane %v2699, 4
        %v2702 = vshll.u32 %v2461, 16
        %v2704 = vrot.slane %v2702, 5
        %v2705 = vor.u32 %v2701, %v2704
        %v2706 = vrot.slane %v2705, 4
        %v2708 = vshll.u32 %v2462, 16
        %v2710 = vrot.slane %v2708, 5
        %v2711 = vsel %vm384, %v2706, %v2710
        %v2712 = vshrl.u32 %v2462, 16
        %v2714 = vrot.slane %v2712, 4
        %v2715 = vor.u32 %v2714, %v2710
        %v2716 = vrot.slane %v2715, 4
        %v2718 = vshll.u32 %v2463, 16
        %v2720 = vrot.slane %v2718, 5
        %v2721 = vsel %vm384, %v2716, %v2720
        %v2723 = vshrl.u32 %v2464, 16
        %v2725 = vrot.slane %v2723, 4
        %v2726 = vshll.u32 %v2464, 16
        %v2728 = vrot.slane %v2726, 5
        %v2729 = vor.u32 %v2725, %v2728
        %v2730 = vrot.slane %v2729, 4
        %v2732 = vshll.u32 %v2465, 16
        %v2734 = vrot.slane %v2732, 5
        %v2735 = vsel %vm384, %v2730, %v2734
        %v2736 = vshrl.u32 %v2465, 16
        %v2738 = vrot.slane %v2736, 4
        %v2739 = vor.u32 %v2738, %v2734
        %v2740 = vrot.slane %v2739, 4
        %v2742 = vshll.u32 %v2466, 16
        %v2744 = vrot.slane %v2742, 5
        %v2745 = vsel %vm384, %v2740, %v2744
        %v2747 = vshrl.u32 %v2467, 16
        %v2749 = vrot.slane %v2747, 4
        %v2750 = vshll.u32 %v2467, 16
        %v2752 = vrot.slane %v2750, 5
        %v2753 = vor.u32 %v2749, %v2752
        %v2754 = vrot.slane %v2753, 4
        %v2756 = vshll.u32 %v2468, 16
        %v2758 = vrot.slane %v2756, 5
        %v2759 = vsel %vm384, %v2754, %v2758
        %v2760 = vshrl.u32 %v2468, 16
        %v2762 = vrot.slane %v2760, 4
        %v2763 = vor.u32 %v2762, %v2758
        %v2764 = vrot.slane %v2763, 4
        %v2766 = vshll.u32 %v2469, 16
        %v2768 = vrot.slane %v2766, 5
        %v2769 = vsel %vm384, %v2764, %v2768
        %v2771 = vshrl.u32 %v2470, 16
        %v2773 = vrot.slane %v2771, 4
        %v2774 = vshll.u32 %v2470, 16
        %v2776 = vrot.slane %v2774, 5
        %v2777 = vor.u32 %v2773, %v2776
        %v2778 = vrot.slane %v2777, 4
        %v2780 = vshll.u32 %v2471, 16
        %v2782 = vrot.slane %v2780, 5
        %v2783 = vsel %vm384, %v2778, %v2782
        %v2784 = vshrl.u32 %v2471, 16
        %v2786 = vrot.slane %v2784, 4
        %v2787 = vor.u32 %v2786, %v2782
        %v2788 = vrot.slane %v2787, 4
        %v2790 = vshll.u32 %v2472, 16
        %v2792 = vrot.slane %v2790, 5
        %v2793 = vsel %vm384, %v2788, %v2792
        %v2795 = vshrl.u32 %v2473, 16
        %v2797 = vrot.slane %v2795, 4
        %v2798 = vshll.u32 %v2473, 16
        %v2800 = vrot.slane %v2798, 5
        %v2801 = vor.u32 %v2797, %v2800
        %v2802 = vrot.slane %v2801, 4
        %v2804 = vshll.u32 %v2474, 16
        %v2806 = vrot.slane %v2804, 5
        %v2807 = vsel %vm384, %v2802, %v2806
        %v2808 = vshrl.u32 %v2474, 16
        %v2810 = vrot.slane %v2808, 4
        %v2811 = vor.u32 %v2810, %v2806
        %v2812 = vrot.slane %v2811, 4
        %v2814 = vshll.u32 %v2475, 16
        %v2816 = vrot.slane %v2814, 5
        %v2817 = vsel %vm384, %v2812, %v2816
        %v2819 = vshrl.u32 %v2476, 16
        %v2821 = vrot.slane %v2819, 4
        %v2822 = vshll.u32 %v2476, 16
        %v2824 = vrot.slane %v2822, 5
        %v2825 = vor.u32 %v2821, %v2824
        %v2826 = vrot.slane %v2825, 4
        %v2828 = vshll.u32 %v2477, 16
        %v2830 = vrot.slane %v2828, 5
        %v2831 = vsel %vm384, %v2826, %v2830
        %v2832 = vshrl.u32 %v2477, 16
        %v2834 = vrot.slane %v2832, 4
        %v2835 = vor.u32 %v2834, %v2830
        %v2836 = vrot.slane %v2835, 4
        %v2838 = vshll.u32 %v2478, 16
        %v2840 = vrot.slane %v2838, 5
        %v2841 = vsel %vm384, %v2836, %v2840
        %v2843 = vshrl.u32 %v2479, 16
        %v2845 = vrot.slane %v2843, 4
        %v2846 = vshll.u32 %v2479, 16
        %v2848 = vrot.slane %v2846, 5
        %v2849 = vor.u32 %v2845, %v2848
        %v2850 = vrot.slane %v2849, 4
        %v2852 = vshll.u32 %v2480, 16
        %v2854 = vrot.slane %v2852, 5
        %v2855 = vsel %vm384, %v2850, %v2854
        %v2856 = vshrl.u32 %v2480, 16
        %v2858 = vrot.slane %v2856, 4
        %v2859 = vor.u32 %v2858, %v2854
        %v2860 = vrot.slane %v2859, 4
        %v2862 = vshll.u32 %v2481, 16
        %v2864 = vrot.slane %v2862, 5
        %v2865 = vsel %vm384, %v2860, %v2864
        %v2866 = vunpack.c.l.b16 %v2495
        %v2867 = vunpack.c.l.b16 %v2505
        %v2868 = vunpack.c.l.b16 %v2519
        %v2869 = vunpack.c.l.b16 %v2529
        %v2870 = vunpack.c.l.b16 %v2543
        %v2871 = vunpack.c.l.b16 %v2553
        %v2872 = vunpack.c.l.b16 %v2567
        %v2873 = vunpack.c.l.b16 %v2577
        %v2874 = vunpack.c.l.b16 %v2591
        %v2875 = vunpack.c.l.b16 %v2601
        %v2876 = vunpack.c.l.b16 %v2615
        %v2877 = vunpack.c.l.b16 %v2625
        %v2878 = vunpack.c.l.b16 %v2639
        %v2879 = vunpack.c.l.b16 %v2649
        %v2880 = vunpack.c.l.b16 %v2663
        %v2881 = vunpack.c.l.b16 %v2673
        %v2882 = vunpack.c.l.b16 %v2687
        %v2883 = vunpack.c.l.b16 %v2697
        %v2884 = vunpack.c.l.b16 %v2711
        %v2885 = vunpack.c.l.b16 %v2721
        %v2886 = vunpack.c.l.b16 %v2735
        %v2887 = vunpack.c.l.b16 %v2745
        %v2888 = vunpack.c.l.b16 %v2759
        %v2889 = vunpack.c.l.b16 %v2769
        %v2890 = vunpack.c.l.b16 %v2783
        %v2891 = vunpack.c.l.b16 %v2793
        %v2892 = vunpack.c.l.b16 %v2807
        %v2893 = vunpack.c.l.b16 %v2817
        %v2894 = vunpack.c.l.b16 %v2831
        %v2895 = vunpack.c.l.b16 %v2841
        %v2896 = vunpack.c.l.b16 %v2855
        %v2897 = vunpack.c.l.b16 %v2865
        %v2898 = vpack.c.b16 %v2867, %v2866
        %v2899 = vpack.c.b16 %v2869, %v2868
        %v2900 = vpack.c.b16 %v2871, %v2870
        %v2901 = vpack.c.b16 %v2873, %v2872
        %v2902 = vpack.c.b16 %v2875, %v2874
        %v2903 = vpack.c.b16 %v2877, %v2876
        %v2904 = vpack.c.b16 %v2879, %v2878
        %v2905 = vpack.c.b16 %v2881, %v2880
        %v2906 = vpack.c.b16 %v2883, %v2882
        %v2907 = vpack.c.b16 %v2885, %v2884
        %v2908 = vpack.c.b16 %v2887, %v2886
        %v2909 = vpack.c.b16 %v2889, %v2888
        %v2910 = vpack.c.b16 %v2891, %v2890
        %v2911 = vpack.c.b16 %v2893, %v2892
        %v2912 = vpack.c.b16 %v2895, %v2894
        %v2913 = vpack.c.b16 %v2897, %v2896
        %2914 = vrot.lane.b32.xlu0 %v2898, 28
        %v2915 = vpop.permute.xlu0 %2914
        %2916 = vrot.lane.b32.xlu0 %v2899, 28
        %v2917 = vpop.permute.xlu0 %2916
        %2918 = vrot.lane.b32.xlu0 %v2900, 28
        %v2919 = vpop.permute.xlu0 %2918
        %2920 = vrot.lane.b32.xlu0 %v2901, 28
        %v2921 = vpop.permute.xlu0 %2920
        %2922 = vrot.lane.b32.xlu0 %v2902, 28
        %v2923 = vpop.permute.xlu0 %2922
        %2924 = vrot.lane.b32.xlu0 %v2903, 28
        %v2925 = vpop.permute.xlu0 %2924
        %2926 = vrot.lane.b32.xlu0 %v2904, 28
        %v2927 = vpop.permute.xlu0 %2926
        %2928 = vrot.lane.b32.xlu0 %v2905, 28
        %v2929 = vpop.permute.xlu0 %2928
        %2930 = vrot.lane.b32.xlu0 %v2906, 28
        %v2931 = vpop.permute.xlu0 %2930
        %2932 = vrot.lane.b32.xlu0 %v2907, 28
        %v2933 = vpop.permute.xlu0 %2932
        %2934 = vrot.lane.b32.xlu0 %v2908, 28
        %v2935 = vpop.permute.xlu0 %2934
        %2936 = vrot.lane.b32.xlu0 %v2909, 28
        %v2937 = vpop.permute.xlu0 %2936
        %2938 = vrot.lane.b32.xlu0 %v2910, 28
        %v2939 = vpop.permute.xlu0 %2938
        %2940 = vrot.lane.b32.xlu0 %v2911, 28
        %v2941 = vpop.permute.xlu0 %2940
        %2942 = vrot.lane.b32.xlu0 %v2912, 28
        %v2943 = vpop.permute.xlu0 %2942
        %2944 = vrot.lane.b32.xlu0 %v2913, 28
        %v2945 = vpop.permute.xlu0 %2944
        %vm2962 = vcmask 261344
        %2963 = vst.msk [vmem:[#allocation2] sm:$0xff] %vm2962, %v2915
        %2964 = vst.msk [vmem:[#allocation2 + $0x8] sm:$0xff] %vm2962, %v2917
        %2965 = vst.msk [vmem:[#allocation2 + $0x10] sm:$0xff] %vm2962, %v2919
        %2966 = vst.msk [vmem:[#allocation2 + $0x18] sm:$0xff] %vm2962, %v2921
        %2967 = vst.msk [vmem:[#allocation2 + $0x20] sm:$0xff] %vm2962, %v2923
        %2968 = vst.msk [vmem:[#allocation2 + $0x28] sm:$0xff] %vm2962, %v2925
        %2969 = vst.msk [vmem:[#allocation2 + $0x30] sm:$0xff] %vm2962, %v2927
        %2970 = vst.msk [vmem:[#allocation2 + $0x38] sm:$0xff] %vm2962, %v2929
        %2971 = vst.msk [vmem:[#allocation2 + $0x40] sm:$0xff] %vm2962, %v2931
        %2972 = vst.msk [vmem:[#allocation2 + $0x48] sm:$0xff] %vm2962, %v2933
        %2973 = vst.msk [vmem:[#allocation2 + $0x50] sm:$0xff] %vm2962, %v2935
        %2974 = vst.msk [vmem:[#allocation2 + $0x58] sm:$0xff] %vm2962, %v2937
        %2975 = vst.msk [vmem:[#allocation2 + $0x60] sm:$0xff] %vm2962, %v2939
        %2976 = vst.msk [vmem:[#allocation2 + $0x68] sm:$0xff] %vm2962, %v2941
        %2977 = vst.msk [vmem:[#allocation2 + $0x70] sm:$0xff] %vm2962, %v2943
        %2978 = vst.msk [vmem:[#allocation2 + $0x78] sm:$0xff] %vm2962, %v2945
        %v2979 = vld [vmem:[%s2256] sm:$0xe]
        %v2980 = vld [vmem:[%s2256 + $0x4] sm:$0xf]
        %v2981 = vld [vmem:[%s2256 + $0x8] sm:$0x1]
        %v2982 = vld [vmem:[%s2256 + $0xc] sm:$0xe]
        %v2983 = vld [vmem:[%s2256 + $0x10] sm:$0xf]
        %v2984 = vld [vmem:[%s2256 + $0x14] sm:$0x1]
        %v2985 = vld [vmem:[%s2256 + $0x18] sm:$0xe]
        %v2986 = vld [vmem:[%s2256 + $0x1c] sm:$0xf]
        %v2987 = vld [vmem:[%s2256 + $0x20] sm:$0x1]
        %v2988 = vld [vmem:[%s2256 + $0x24] sm:$0xe]
        %v2989 = vld [vmem:[%s2256 + $0x28] sm:$0xf]
        %v2990 = vld [vmem:[%s2256 + $0x2c] sm:$0x1]
        %v2991 = vld [vmem:[%s2256 + $0x30] sm:$0xe]
        %v2992 = vld [vmem:[%s2256 + $0x34] sm:$0xf]
        %v2993 = vld [vmem:[%s2256 + $0x38] sm:$0x1]
        %v2994 = vld [vmem:[%s2256 + $0x3c] sm:$0xe]
        %v2995 = vld [vmem:[%s2256 + $0x40] sm:$0xf]
        %v2996 = vld [vmem:[%s2256 + $0x44] sm:$0x1]
        %v2997 = vld [vmem:[%s2256 + $0x48] sm:$0xe]
        %v2998 = vld [vmem:[%s2256 + $0x4c] sm:$0xf]
        %v2999 = vld [vmem:[%s2256 + $0x50] sm:$0x1]
        %v3000 = vld [vmem:[%s2256 + $0x54] sm:$0xe]
        %v3001 = vld [vmem:[%s2256 + $0x58] sm:$0xf]
        %v3002 = vld [vmem:[%s2256 + $0x5c] sm:$0x1]
        %v3003 = vld [vmem:[%s2256 + $0x60] sm:$0xe]
        %v3004 = vld [vmem:[%s2256 + $0x64] sm:$0xf]
        %v3005 = vld [vmem:[%s2256 + $0x68] sm:$0x1]
        %v3006 = vld [vmem:[%s2256 + $0x6c] sm:$0xe]
        %v3007 = vld [vmem:[%s2256 + $0x70] sm:$0xf]
        %v3008 = vld [vmem:[%s2256 + $0x74] sm:$0x1]
        %v3009 = vld [vmem:[%s2256 + $0x78] sm:$0xe]
        %v3010 = vld [vmem:[%s2256 + $0x7c] sm:$0xf]
        %v3011 = vld [vmem:[%s2256 + $0x80] sm:$0x1]
        %v3012 = vld [vmem:[%s2256 + $0x84] sm:$0xe]
        %v3013 = vld [vmem:[%s2256 + $0x88] sm:$0xf]
        %v3014 = vld [vmem:[%s2256 + $0x8c] sm:$0x1]
        %v3015 = vld [vmem:[%s2256 + $0x90] sm:$0xe]
        %v3016 = vld [vmem:[%s2256 + $0x94] sm:$0xf]
        %v3017 = vld [vmem:[%s2256 + $0x98] sm:$0x1]
        %v3018 = vld [vmem:[%s2256 + $0x9c] sm:$0xe]
        %v3019 = vld [vmem:[%s2256 + $0xa0] sm:$0xf]
        %v3020 = vld [vmem:[%s2256 + $0xa4] sm:$0x1]
        %v3021 = vld [vmem:[%s2256 + $0xa8] sm:$0xe]
        %v3022 = vld [vmem:[%s2256 + $0xac] sm:$0xf]
        %v3023 = vld [vmem:[%s2256 + $0xb0] sm:$0x1]
        %v3024 = vld [vmem:[%s2256 + $0xb4] sm:$0xe]
        %v3025 = vld [vmem:[%s2256 + $0xb8] sm:$0xf]
        %v3026 = vld [vmem:[%s2256 + $0xbc] sm:$0x1]
        %v3075 = vrot.slane %v2979, 5
        %v3076 = vrot.slane %v3075, 4
        %v3077 = vrot.slane %v2980, 5
        %v3078 = vsel %vm980, %v3076, %v3077
        %v3079 = vrot.slane %v3077, 4
        %v3080 = vrot.slane %v2981, 5
        %v3081 = vsel %vm980, %v3079, %v3080
        %v3082 = vrot.slane %v2982, 5
        %v3083 = vrot.slane %v3082, 4
        %v3084 = vrot.slane %v2983, 5
        %v3085 = vsel %vm980, %v3083, %v3084
        %v3086 = vrot.slane %v3084, 4
        %v3087 = vrot.slane %v2984, 5
        %v3088 = vsel %vm980, %v3086, %v3087
        %v3089 = vrot.slane %v2985, 5
        %v3090 = vrot.slane %v3089, 4
        %v3091 = vrot.slane %v2986, 5
        %v3092 = vsel %vm980, %v3090, %v3091
        %v3093 = vrot.slane %v3091, 4
        %v3094 = vrot.slane %v2987, 5
        %v3095 = vsel %vm980, %v3093, %v3094
        %v3096 = vrot.slane %v2988, 5
        %v3097 = vrot.slane %v3096, 4
        %v3098 = vrot.slane %v2989, 5
        %v3099 = vsel %vm980, %v3097, %v3098
        %v3100 = vrot.slane %v3098, 4
        %v3101 = vrot.slane %v2990, 5
        %v3102 = vsel %vm980, %v3100, %v3101
        %v3103 = vrot.slane %v2991, 5
        %v3104 = vrot.slane %v3103, 4
        %v3105 = vrot.slane %v2992, 5
        %v3106 = vsel %vm980, %v3104, %v3105
        %v3107 = vrot.slane %v3105, 4
        %v3108 = vrot.slane %v2993, 5
        %v3109 = vsel %vm980, %v3107, %v3108
        %v3110 = vrot.slane %v2994, 5
        %v3111 = vrot.slane %v3110, 4
        %v3112 = vrot.slane %v2995, 5
        %v3113 = vsel %vm980, %v3111, %v3112
        %v3114 = vrot.slane %v3112, 4
        %v3115 = vrot.slane %v2996, 5
        %v3116 = vsel %vm980, %v3114, %v3115
        %v3117 = vrot.slane %v2997, 5
        %v3118 = vrot.slane %v3117, 4
        %v3119 = vrot.slane %v2998, 5
        %v3120 = vsel %vm980, %v3118, %v3119
        %v3121 = vrot.slane %v3119, 4
        %v3122 = vrot.slane %v2999, 5
        %v3123 = vsel %vm980, %v3121, %v3122
        %v3124 = vrot.slane %v3000, 5
        %v3125 = vrot.slane %v3124, 4
        %v3126 = vrot.slane %v3001, 5
        %v3127 = vsel %vm980, %v3125, %v3126
        %v3128 = vrot.slane %v3126, 4
        %v3129 = vrot.slane %v3002, 5
        %v3130 = vsel %vm980, %v3128, %v3129
        %v3131 = vrot.slane %v3003, 5
        %v3132 = vrot.slane %v3131, 4
        %v3133 = vrot.slane %v3004, 5
        %v3134 = vsel %vm980, %v3132, %v3133
        %v3135 = vrot.slane %v3133, 4
        %v3136 = vrot.slane %v3005, 5
        %v3137 = vsel %vm980, %v3135, %v3136
        %v3138 = vrot.slane %v3006, 5
        %v3139 = vrot.slane %v3138, 4
        %v3140 = vrot.slane %v3007, 5
        %v3141 = vsel %vm980, %v3139, %v3140
        %v3142 = vrot.slane %v3140, 4
        %v3143 = vrot.slane %v3008, 5
        %v3144 = vsel %vm980, %v3142, %v3143
        %v3145 = vrot.slane %v3009, 5
        %v3146 = vrot.slane %v3145, 4
        %v3147 = vrot.slane %v3010, 5
        %v3148 = vsel %vm980, %v3146, %v3147
        %v3149 = vrot.slane %v3147, 4
        %v3150 = vrot.slane %v3011, 5
        %v3151 = vsel %vm980, %v3149, %v3150
        %v3152 = vrot.slane %v3012, 5
        %v3153 = vrot.slane %v3152, 4
        %v3154 = vrot.slane %v3013, 5
        %v3155 = vsel %vm980, %v3153, %v3154
        %v3156 = vrot.slane %v3154, 4
        %v3157 = vrot.slane %v3014, 5
        %v3158 = vsel %vm980, %v3156, %v3157
        %v3159 = vrot.slane %v3015, 5
        %v3160 = vrot.slane %v3159, 4
        %v3161 = vrot.slane %v3016, 5
        %v3162 = vsel %vm980, %v3160, %v3161
        %v3163 = vrot.slane %v3161, 4
        %v3164 = vrot.slane %v3017, 5
        %v3165 = vsel %vm980, %v3163, %v3164
        %v3166 = vrot.slane %v3018, 5
        %v3167 = vrot.slane %v3166, 4
        %v3168 = vrot.slane %v3019, 5
        %v3169 = vsel %vm980, %v3167, %v3168
        %v3170 = vrot.slane %v3168, 4
        %v3171 = vrot.slane %v3020, 5
        %v3172 = vsel %vm980, %v3170, %v3171
        %v3173 = vrot.slane %v3021, 5
        %v3174 = vrot.slane %v3173, 4
        %v3175 = vrot.slane %v3022, 5
        %v3176 = vsel %vm980, %v3174, %v3175
        %v3177 = vrot.slane %v3175, 4
        %v3178 = vrot.slane %v3023, 5
        %v3179 = vsel %vm980, %v3177, %v3178
        %v3180 = vrot.slane %v3024, 5
        %v3181 = vrot.slane %v3180, 4
        %v3182 = vrot.slane %v3025, 5
        %v3183 = vsel %vm980, %v3181, %v3182
        %v3184 = vrot.slane %v3182, 4
        %v3185 = vrot.slane %v3026, 5
        %v3186 = vsel %vm980, %v3184, %v3185
        %v3187 = vunpack.c.l.b16 %v3078
        %v3188 = vunpack.c.l.b16 %v3081
        %v3189 = vunpack.c.l.b16 %v3085
        %v3190 = vunpack.c.l.b16 %v3088
        %v3191 = vunpack.c.l.b16 %v3092
        %v3192 = vunpack.c.l.b16 %v3095
        %v3193 = vunpack.c.l.b16 %v3099
        %v3194 = vunpack.c.l.b16 %v3102
        %v3195 = vunpack.c.l.b16 %v3106
        %v3196 = vunpack.c.l.b16 %v3109
        %v3197 = vunpack.c.l.b16 %v3113
        %v3198 = vunpack.c.l.b16 %v3116
        %v3199 = vunpack.c.l.b16 %v3120
        %v3200 = vunpack.c.l.b16 %v3123
        %v3201 = vunpack.c.l.b16 %v3127
        %v3202 = vunpack.c.l.b16 %v3130
        %v3203 = vunpack.c.l.b16 %v3134
        %v3204 = vunpack.c.l.b16 %v3137
        %v3205 = vunpack.c.l.b16 %v3141
        %v3206 = vunpack.c.l.b16 %v3144
        %v3207 = vunpack.c.l.b16 %v3148
        %v3208 = vunpack.c.l.b16 %v3151
        %v3209 = vunpack.c.l.b16 %v3155
        %v3210 = vunpack.c.l.b16 %v3158
        %v3211 = vunpack.c.l.b16 %v3162
        %v3212 = vunpack.c.l.b16 %v3165
        %v3213 = vunpack.c.l.b16 %v3169
        %v3214 = vunpack.c.l.b16 %v3172
        %v3215 = vunpack.c.l.b16 %v3176
        %v3216 = vunpack.c.l.b16 %v3179
        %v3217 = vunpack.c.l.b16 %v3183
        %v3218 = vunpack.c.l.b16 %v3186
        %v3219 = vpack.c.b16 %v3188, %v3187
        %v3220 = vpack.c.b16 %v3190, %v3189
        %v3221 = vpack.c.b16 %v3192, %v3191
        %v3222 = vpack.c.b16 %v3194, %v3193
        %v3223 = vpack.c.b16 %v3196, %v3195
        %v3224 = vpack.c.b16 %v3198, %v3197
        %v3225 = vpack.c.b16 %v3200, %v3199
        %v3226 = vpack.c.b16 %v3202, %v3201
        %v3227 = vpack.c.b16 %v3204, %v3203
        %v3228 = vpack.c.b16 %v3206, %v3205
        %v3229 = vpack.c.b16 %v3208, %v3207
        %v3230 = vpack.c.b16 %v3210, %v3209
        %v3231 = vpack.c.b16 %v3212, %v3211
        %v3232 = vpack.c.b16 %v3214, %v3213
        %v3233 = vpack.c.b16 %v3216, %v3215
        %v3234 = vpack.c.b16 %v3218, %v3217
        %3235 = vrot.lane.b32.xlu0 %v3219, 32
        %v3236 = vpop.permute.xlu0 %3235
        %3237 = vrot.lane.b32.xlu0 %v3220, 32
        %v3238 = vpop.permute.xlu0 %3237
        %3239 = vrot.lane.b32.xlu0 %v3221, 32
        %v3240 = vpop.permute.xlu0 %3239
        %3241 = vrot.lane.b32.xlu0 %v3222, 32
        %v3242 = vpop.permute.xlu0 %3241
        %3243 = vrot.lane.b32.xlu0 %v3223, 32
        %v3244 = vpop.permute.xlu0 %3243
        %3245 = vrot.lane.b32.xlu0 %v3224, 32
        %v3246 = vpop.permute.xlu0 %3245
        %3247 = vrot.lane.b32.xlu0 %v3225, 32
        %v3248 = vpop.permute.xlu0 %3247
        %3249 = vrot.lane.b32.xlu0 %v3226, 32
        %v3250 = vpop.permute.xlu0 %3249
        %3251 = vrot.lane.b32.xlu0 %v3227, 32
        %v3252 = vpop.permute.xlu0 %3251
        %3253 = vrot.lane.b32.xlu0 %v3228, 32
        %v3254 = vpop.permute.xlu0 %3253
        %3255 = vrot.lane.b32.xlu0 %v3229, 32
        %v3256 = vpop.permute.xlu0 %3255
        %3257 = vrot.lane.b32.xlu0 %v3230, 32
        %v3258 = vpop.permute.xlu0 %3257
        %3259 = vrot.lane.b32.xlu0 %v3231, 32
        %v3260 = vpop.permute.xlu0 %3259
        %3261 = vrot.lane.b32.xlu0 %v3232, 32
        %v3262 = vpop.permute.xlu0 %3261
        %3263 = vrot.lane.b32.xlu0 %v3233, 32
        %v3264 = vpop.permute.xlu0 %3263
        %3265 = vrot.lane.b32.xlu0 %v3234, 32
        %v3266 = vpop.permute.xlu0 %3265
        %vm3283 = vcmask 294144
        %3284 = vst.msk [vmem:[#allocation2] sm:$0xff] %vm3283, %v3236
        %3285 = vst.msk [vmem:[#allocation2 + $0x8] sm:$0xff] %vm3283, %v3238
        %3286 = vst.msk [vmem:[#allocation2 + $0x10] sm:$0xff] %vm3283, %v3240
        %3287 = vst.msk [vmem:[#allocation2 + $0x18] sm:$0xff] %vm3283, %v3242
        %3288 = vst.msk [vmem:[#allocation2 + $0x20] sm:$0xff] %vm3283, %v3244
        %3289 = vst.msk [vmem:[#allocation2 + $0x28] sm:$0xff] %vm3283, %v3246
        %3290 = vst.msk [vmem:[#allocation2 + $0x30] sm:$0xff] %vm3283, %v3248
        %3291 = vst.msk [vmem:[#allocation2 + $0x38] sm:$0xff] %vm3283, %v3250
        %3292 = vst.msk [vmem:[#allocation2 + $0x40] sm:$0xff] %vm3283, %v3252
        %3293 = vst.msk [vmem:[#allocation2 + $0x48] sm:$0xff] %vm3283, %v3254
        %3294 = vst.msk [vmem:[#allocation2 + $0x50] sm:$0xff] %vm3283, %v3256
        %3295 = vst.msk [vmem:[#allocation2 + $0x58] sm:$0xff] %vm3283, %v3258
        %3296 = vst.msk [vmem:[#allocation2 + $0x60] sm:$0xff] %vm3283, %v3260
        %3297 = vst.msk [vmem:[#allocation2 + $0x68] sm:$0xff] %vm3283, %v3262
        %3298 = vst.msk [vmem:[#allocation2 + $0x70] sm:$0xff] %vm3283, %v3264
        %3299 = vst.msk [vmem:[#allocation2 + $0x78] sm:$0xff] %vm3283, %v3266
        %v3300 = vld [vmem:[#allocation2] sm:$0xff]
        %v3301 = vld [vmem:[#allocation2 + $0x8] sm:$0xff]
        %v3302 = vld [vmem:[#allocation2 + $0x10] sm:$0xff]
        %v3303 = vld [vmem:[#allocation2 + $0x18] sm:$0xff]
        %v3304 = vld [vmem:[#allocation2 + $0x20] sm:$0xff]
        %v3305 = vld [vmem:[#allocation2 + $0x28] sm:$0xff]
        %v3306 = vld [vmem:[#allocation2 + $0x30] sm:$0xff]
        %v3307 = vld [vmem:[#allocation2 + $0x38] sm:$0xff]
        %v3308 = vld [vmem:[#allocation2 + $0x40] sm:$0xff]
        %v3309 = vld [vmem:[#allocation2 + $0x48] sm:$0xff]
        %v3310 = vld [vmem:[#allocation2 + $0x50] sm:$0xff]
        %v3311 = vld [vmem:[#allocation2 + $0x58] sm:$0xff]
        %v3312 = vld [vmem:[#allocation2 + $0x60] sm:$0xff]
        %v3313 = vld [vmem:[#allocation2 + $0x68] sm:$0xff]
        %v3314 = vld [vmem:[#allocation2 + $0x70] sm:$0xff]
        %v3315 = vld [vmem:[#allocation2 + $0x78] sm:$0xff]
        %v3316 = vld [vmem:[%s1] sm:$0xf]
        %v3317 = vld [vmem:[%s1 + $0x4] sm:$0xf]
        %v3318 = vld [vmem:[%s1 + $0x8] sm:$0xf]
        %v3319 = vld [vmem:[%s1 + $0xc] sm:$0xf]
        %v3320 = vld [vmem:[%s1 + $0x10] sm:$0x3]
        %v3321 = vld [vmem:[%s2] sm:$0x1]
        %v3323 = vlaneseq
        %v3324 = vshrl.u32 %v3323, 7
        %v3325 = vsub.s32 0, %v3324
        %v3326 = vrot.slane %v3321, %v3325
        %v3333 = vunpack.c.l.b16 %v3316
        %v3334 = vunpack.c.l.b16 %v3317
        %v3335 = vunpack.c.l.b16 %v3318
        %v3336 = vunpack.c.l.b16 %v3319
        %v3337 = vunpack.c.l.b16 %v3320
        %v3338 = vpack.c.b16 %v3334, %v3333
        %v3339 = vpack.c.b16 %v3336, %v3335
        %v3340 = vpack.c.b16 %v3337, %v3337
        %vm3343 = vcmask 293888
        %v3345 = vsel %vm3343, %v3300, 0
        %v3348 = vsel %vm3343, %v3301, 0
        %v3351 = vsel %vm3343, %v3302, 0
        %v3354 = vsel %vm3343, %v3303, 0
        %v3357 = vsel %vm3343, %v3304, 0
        %v3360 = vsel %vm3343, %v3305, 0
        %v3363 = vsel %vm3343, %v3306, 0
        %v3366 = vsel %vm3343, %v3307, 0
        %v3369 = vsel %vm3343, %v3308, 0
        %v3372 = vsel %vm3343, %v3309, 0
        %v3375 = vsel %vm3343, %v3310, 0
        %v3378 = vsel %vm3343, %v3311, 0
        %v3381 = vsel %vm3343, %v3312, 0
        %v3384 = vsel %vm3343, %v3313, 0
        %v3387 = vsel %vm3343, %v3314, 0
        %v3390 = vsel %vm3343, %v3315, 0
        %vm3392 = vcmask 1041408
        %v3394 = vsel %vm3392, %v3340, 0
        %3396 = vmatprep.subr.bf16.mxu0 0
        %3397 = vmatpush1.bf16.msra.mxu0 %v3338
        %3398 = vmatprep.subr.bf16.mxu0 0
        %3399 = vmatpush1.bf16.msra.mxu0 %v3339
        %3400 = vmatprep.subr.bf16.mxu0 0
        %3401 = vmatpush1.bf16.msra.mxu0 %v3394
        %3402 = vmatprep.subr.bf16.mxu0 0
        %3403 = vmatpush1.bf16.msra.mxu0 0
        %3404 = vmatprep.subr.bf16.mxu0 0
        %3405 = vmatpush1.bf16.msra.mxu0 0
        %3406 = vmatprep.subr.bf16.mxu0 0
        %3407 = vmatpush1.bf16.msra.mxu0 0
        %3408 = vmatprep.subr.bf16.mxu0 0
        %3409 = vmatpush1.bf16.msra.mxu0 0
        %3410 = vmatprep.subr.bf16.mxu0 0
        %3411 = vmatpush1.bf16.msra.mxu0 0
        %3412 = vmatprep.subr.bf16.mxu0 0
        %3413 = vmatpush1.bf16.msra.mxu0 0
        %3414 = vmatprep.subr.bf16.mxu0 0
        %3415 = vmatpush1.bf16.msra.mxu0 0
        %3416 = vmatprep.subr.bf16.mxu0 0
        %3417 = vmatpush1.bf16.msra.mxu0 0
        %3418 = vmatprep.subr.bf16.mxu0 0
        %3419 = vmatpush1.bf16.msra.mxu0 0
        %3420 = vmatprep.subr.bf16.mxu0 0
        %3421 = vmatpush1.bf16.msra.mxu0 0
        %3422 = vmatprep.subr.bf16.mxu0 0
        %3423 = vmatpush1.bf16.msra.mxu0 0
        %3424 = vmatprep.subr.bf16.mxu0 0
        %3425 = vmatpush1.bf16.msra.mxu0 0
        %3426 = vmatprep.subr.bf16.mxu0 0
        %3427 = vmatpush1.bf16.msra.mxu0 0
        %3428 = vmatprep.mubr.bf16.mxu0 0
        %3429 = vmatmul.mubr.bf16.gmra.mrb[0].mxu0 %v3345
        %v3430 = vpop.f32.mrb[0].mxu0
        %v3431 = vadd.f32 %v3326, %v3430
        %v3432 = vpop.f32.mrb[0].mxu0
        %v3433 = vpop.f32.mrb[0].mxu0
        %v3434 = vadd.f32 %v3326, %v3433
        %v3435 = vpop.f32.mrb[0].mxu0
        %3436 = vmatprep.mubr.bf16.mxu0 0
        %3437 = vmatmul.mubr.bf16.gmra.mrb[0].mxu0 %v3348
        %v3438 = vpop.f32.mrb[0].mxu0
        %v3439 = vadd.f32 %v3326, %v3438
        %v3440 = vpop.f32.mrb[0].mxu0
        %v3441 = vpop.f32.mrb[0].mxu0
        %v3442 = vadd.f32 %v3326, %v3441
        %v3443 = vpop.f32.mrb[0].mxu0
        %3444 = vmatprep.mubr.bf16.mxu0 0
        %3445 = vmatmul.mubr.bf16.gmra.mrb[0].mxu0 %v3351
        %v3446 = vpop.f32.mrb[0].mxu0
        %v3447 = vadd.f32 %v3326, %v3446
        %v3448 = vpop.f32.mrb[0].mxu0
        %v3449 = vpop.f32.mrb[0].mxu0
        %v3450 = vadd.f32 %v3326, %v3449
        %v3451 = vpop.f32.mrb[0].mxu0
        %3452 = vmatprep.mubr.bf16.mxu0 0
        %3453 = vmatmul.mubr.bf16.gmra.mrb[0].mxu0 %v3354
        %v3454 = vpop.f32.mrb[0].mxu0
        %v3455 = vadd.f32 %v3326, %v3454
        %v3456 = vpop.f32.mrb[0].mxu0
        %v3457 = vpop.f32.mrb[0].mxu0
        %v3458 = vadd.f32 %v3326, %v3457
        %v3459 = vpop.f32.mrb[0].mxu0
        %3460 = vmatprep.mubr.bf16.mxu0 0
        %3461 = vmatmul.mubr.bf16.gmra.mrb[0].mxu0 %v3357
        %v3462 = vpop.f32.mrb[0].mxu0
        %v3463 = vadd.f32 %v3326, %v3462
        %v3464 = vpop.f32.mrb[0].mxu0
        %v3465 = vpop.f32.mrb[0].mxu0
        %v3466 = vadd.f32 %v3326, %v3465
        %v3467 = vpop.f32.mrb[0].mxu0
        %3468 = vmatprep.mubr.bf16.mxu0 0
        %3469 = vmatmul.mubr.bf16.gmra.mrb[0].mxu0 %v3360
        %v3470 = vpop.f32.mrb[0].mxu0
        %v3471 = vadd.f32 %v3326, %v3470
        %v3472 = vpop.f32.mrb[0].mxu0
        %v3473 = vpop.f32.mrb[0].mxu0
        %v3474 = vadd.f32 %v3326, %v3473
        %v3475 = vpop.f32.mrb[0].mxu0
        %3476 = vmatprep.mubr.bf16.mxu0 0
        %3477 = vmatmul.mubr.bf16.gmra.mrb[0].mxu0 %v3363
        %v3478 = vpop.f32.mrb[0].mxu0
        %v3479 = vadd.f32 %v3326, %v3478
        %v3480 = vpop.f32.mrb[0].mxu0
        %v3481 = vpop.f32.mrb[0].mxu0
        %v3482 = vadd.f32 %v3326, %v3481
        %v3483 = vpop.f32.mrb[0].mxu0
        %3484 = vmatprep.mubr.bf16.mxu0 0
        %3485 = vmatmul.mubr.bf16.gmra.mrb[0].mxu0 %v3366
        %v3486 = vpop.f32.mrb[0].mxu0
        %v3487 = vadd.f32 %v3326, %v3486
        %v3488 = vpop.f32.mrb[0].mxu0
        %v3489 = vpop.f32.mrb[0].mxu0
        %v3490 = vadd.f32 %v3326, %v3489
        %v3491 = vpop.f32.mrb[0].mxu0
        %3492 = vmatprep.mubr.bf16.mxu0 0
        %3493 = vmatmul.mubr.bf16.gmra.mrb[0].mxu0 %v3369
        %v3494 = vpop.f32.mrb[0].mxu0
        %v3495 = vadd.f32 %v3326, %v3494
        %v3496 = vpop.f32.mrb[0].mxu0
        %v3497 = vpop.f32.mrb[0].mxu0
        %v3498 = vadd.f32 %v3326, %v3497
        %v3499 = vpop.f32.mrb[0].mxu0
        %3500 = vmatprep.mubr.bf16.mxu0 0
        %3501 = vmatmul.mubr.bf16.gmra.mrb[0].mxu0 %v3372
        %v3502 = vpop.f32.mrb[0].mxu0
        %v3503 = vadd.f32 %v3326, %v3502
        %v3504 = vpop.f32.mrb[0].mxu0
        %v3505 = vpop.f32.mrb[0].mxu0
        %v3506 = vadd.f32 %v3326, %v3505
        %v3507 = vpop.f32.mrb[0].mxu0
        %3508 = vmatprep.mubr.bf16.mxu0 0
        %3509 = vmatmul.mubr.bf16.gmra.mrb[0].mxu0 %v3375
        %v3510 = vpop.f32.mrb[0].mxu0
        %v3511 = vadd.f32 %v3326, %v3510
        %v3512 = vpop.f32.mrb[0].mxu0
        %v3513 = vpop.f32.mrb[0].mxu0
        %v3514 = vadd.f32 %v3326, %v3513
        %v3515 = vpop.f32.mrb[0].mxu0
        %3516 = vmatprep.mubr.bf16.mxu0 0
        %3517 = vmatmul.mubr.bf16.gmra.mrb[0].mxu0 %v3378
        %v3518 = vpop.f32.mrb[0].mxu0
        %v3519 = vadd.f32 %v3326, %v3518
        %v3520 = vpop.f32.mrb[0].mxu0
        %v3521 = vpop.f32.mrb[0].mxu0
        %v3522 = vadd.f32 %v3326, %v3521
        %v3523 = vpop.f32.mrb[0].mxu0
        %3524 = vmatprep.mubr.bf16.mxu0 0
        %3525 = vmatmul.mubr.bf16.gmra.mrb[0].mxu0 %v3381
        %v3526 = vpop.f32.mrb[0].mxu0
        %v3527 = vadd.f32 %v3326, %v3526
        %v3528 = vpop.f32.mrb[0].mxu0
        %v3529 = vpop.f32.mrb[0].mxu0
        %v3530 = vadd.f32 %v3326, %v3529
        %v3531 = vpop.f32.mrb[0].mxu0
        %3532 = vmatprep.mubr.bf16.mxu0 0
        %3533 = vmatmul.mubr.bf16.gmra.mrb[0].mxu0 %v3384
        %v3534 = vpop.f32.mrb[0].mxu0
        %v3535 = vadd.f32 %v3326, %v3534
        %v3536 = vpop.f32.mrb[0].mxu0
        %v3537 = vpop.f32.mrb[0].mxu0
        %v3538 = vadd.f32 %v3326, %v3537
        %v3539 = vpop.f32.mrb[0].mxu0
        %3540 = vmatprep.mubr.bf16.mxu0 0
        %3541 = vmatmul.mubr.bf16.gmra.mrb[0].mxu0 %v3387
        %v3542 = vpop.f32.mrb[0].mxu0
        %v3543 = vadd.f32 %v3326, %v3542
        %v3544 = vpop.f32.mrb[0].mxu0
        %v3545 = vpop.f32.mrb[0].mxu0
        %v3546 = vadd.f32 %v3326, %v3545
        %v3547 = vpop.f32.mrb[0].mxu0
        %3548 = vmatprep.mubr.bf16.mxu0 0
        %3549 = vmatmul.mubr.bf16.gmra.mrb[0].mxu0 %v3390
        %v3550 = vpop.f32.mrb[0].mxu0
        %v3551 = vadd.f32 %v3326, %v3550
        %v3552 = vpop.f32.mrb[0].mxu0
        %v3553 = vpop.f32.mrb[0].mxu0
        %v3554 = vadd.f32 %v3326, %v3553
        %v3555 = vpop.f32.mrb[0].mxu0
        %3556 = vdwg.mxu0
        %vm3557 = vcmp.ge.f32.partialorder %v3431, 0.0
        %vm3558 = vcmp.ge.f32.partialorder %v3434, 0.0
        %vm3559 = vcmp.ge.f32.partialorder %v3439, 0.0
        %vm3560 = vcmp.ge.f32.partialorder %v3442, 0.0
        %vm3561 = vcmp.ge.f32.partialorder %v3447, 0.0
        %vm3562 = vcmp.ge.f32.partialorder %v3450, 0.0
        %vm3563 = vcmp.ge.f32.partialorder %v3455, 0.0
        %vm3564 = vcmp.ge.f32.partialorder %v3458, 0.0
        %vm3565 = vcmp.ge.f32.partialorder %v3463, 0.0
        %vm3566 = vcmp.ge.f32.partialorder %v3466, 0.0
        %vm3567 = vcmp.ge.f32.partialorder %v3471, 0.0
        %vm3568 = vcmp.ge.f32.partialorder %v3474, 0.0
        %vm3569 = vcmp.ge.f32.partialorder %v3479, 0.0
        %vm3570 = vcmp.ge.f32.partialorder %v3482, 0.0
        %vm3571 = vcmp.ge.f32.partialorder %v3487, 0.0
        %vm3572 = vcmp.ge.f32.partialorder %v3490, 0.0
        %vm3573 = vcmp.ge.f32.partialorder %v3495, 0.0
        %vm3574 = vcmp.ge.f32.partialorder %v3498, 0.0
        %vm3575 = vcmp.ge.f32.partialorder %v3503, 0.0
        %vm3576 = vcmp.ge.f32.partialorder %v3506, 0.0
        %vm3577 = vcmp.ge.f32.partialorder %v3511, 0.0
        %vm3578 = vcmp.ge.f32.partialorder %v3514, 0.0
        %vm3579 = vcmp.ge.f32.partialorder %v3519, 0.0
        %vm3580 = vcmp.ge.f32.partialorder %v3522, 0.0
        %vm3581 = vcmp.ge.f32.partialorder %v3527, 0.0
        %vm3582 = vcmp.ge.f32.partialorder %v3530, 0.0
        %vm3583 = vcmp.ge.f32.partialorder %v3535, 0.0
        %vm3584 = vcmp.ge.f32.partialorder %v3538, 0.0
        %vm3585 = vcmp.ge.f32.partialorder %v3543, 0.0
        %vm3586 = vcmp.ge.f32.partialorder %v3546, 0.0
        %vm3587 = vcmp.ge.f32.partialorder %v3551, 0.0
        %vm3588 = vcmp.ge.f32.partialorder %v3554, 0.0
        %v3589 = vmul.f32 %v3431, 0.01
        %v3590 = vmul.f32 %v3434, 0.01
        %v3591 = vmul.f32 %v3439, 0.01
        %v3592 = vmul.f32 %v3442, 0.01
        %v3593 = vmul.f32 %v3447, 0.01
        %v3594 = vmul.f32 %v3450, 0.01
        %v3595 = vmul.f32 %v3455, 0.01
        %v3596 = vmul.f32 %v3458, 0.01
        %v3597 = vmul.f32 %v3463, 0.01
        %v3598 = vmul.f32 %v3466, 0.01
        %v3599 = vmul.f32 %v3471, 0.01
        %v3600 = vmul.f32 %v3474, 0.01
        %v3601 = vmul.f32 %v3479, 0.01
        %v3602 = vmul.f32 %v3482, 0.01
        %v3603 = vmul.f32 %v3487, 0.01
        %v3604 = vmul.f32 %v3490, 0.01
        %v3605 = vmul.f32 %v3495, 0.01
        %v3606 = vmul.f32 %v3498, 0.01
        %v3607 = vmul.f32 %v3503, 0.01
        %v3608 = vmul.f32 %v3506, 0.01
        %v3609 = vmul.f32 %v3511, 0.01
        %v3610 = vmul.f32 %v3514, 0.01
        %v3611 = vmul.f32 %v3519, 0.01
        %v3612 = vmul.f32 %v3522, 0.01
        %v3613 = vmul.f32 %v3527, 0.01
        %v3614 = vmul.f32 %v3530, 0.01
        %v3615 = vmul.f32 %v3535, 0.01
        %v3616 = vmul.f32 %v3538, 0.01
        %v3617 = vmul.f32 %v3543, 0.01
        %v3618 = vmul.f32 %v3546, 0.01
        %v3619 = vmul.f32 %v3551, 0.01
        %v3620 = vmul.f32 %v3554, 0.01
        %v3621 = vsel %vm3557, %v3431, %v3589
        %v3622 = vsel %vm3558, %v3434, %v3590
        %v3623 = vsel %vm3559, %v3439, %v3591
        %v3624 = vsel %vm3560, %v3442, %v3592
        %v3625 = vsel %vm3561, %v3447, %v3593
        %v3626 = vsel %vm3562, %v3450, %v3594
        %v3627 = vsel %vm3563, %v3455, %v3595
        %v3628 = vsel %vm3564, %v3458, %v3596
        %v3629 = vsel %vm3565, %v3463, %v3597
        %v3630 = vsel %vm3566, %v3466, %v3598
        %v3631 = vsel %vm3567, %v3471, %v3599
        %v3632 = vsel %vm3568, %v3474, %v3600
        %v3633 = vsel %vm3569, %v3479, %v3601
        %v3634 = vsel %vm3570, %v3482, %v3602
        %v3635 = vsel %vm3571, %v3487, %v3603
        %v3636 = vsel %vm3572, %v3490, %v3604
        %v3637 = vsel %vm3573, %v3495, %v3605
        %v3638 = vsel %vm3574, %v3498, %v3606
        %v3639 = vsel %vm3575, %v3503, %v3607
        %v3640 = vsel %vm3576, %v3506, %v3608
        %v3641 = vsel %vm3577, %v3511, %v3609
        %v3642 = vsel %vm3578, %v3514, %v3610
        %v3643 = vsel %vm3579, %v3519, %v3611
        %v3644 = vsel %vm3580, %v3522, %v3612
        %v3645 = vsel %vm3581, %v3527, %v3613
        %v3646 = vsel %vm3582, %v3530, %v3614
        %v3647 = vsel %vm3583, %v3535, %v3615
        %v3648 = vsel %vm3584, %v3538, %v3616
        %v3649 = vsel %vm3585, %v3543, %v3617
        %v3650 = vsel %vm3586, %v3546, %v3618
        %v3651 = vsel %vm3587, %v3551, %v3619
        %v3652 = vsel %vm3588, %v3554, %v3620
        %3653 = vst [vmem:[%s177] sm:$0xff] %v3621
        %3654 = vst [vmem:[%s177 + $0x8] sm:$0xff] %v3622
        %3655 = vst [vmem:[%s177 + $0x10] sm:$0xff] %v3623
        %3656 = vst [vmem:[%s177 + $0x18] sm:$0xff] %v3624
        %3657 = vst [vmem:[%s177 + $0x20] sm:$0xff] %v3625
        %3658 = vst [vmem:[%s177 + $0x28] sm:$0xff] %v3626
        %3659 = vst [vmem:[%s177 + $0x30] sm:$0xff] %v3627
        %3660 = vst [vmem:[%s177 + $0x38] sm:$0xff] %v3628
        %3661 = vst [vmem:[%s177 + $0x40] sm:$0xff] %v3629
        %3662 = vst [vmem:[%s177 + $0x48] sm:$0xff] %v3630
        %3663 = vst [vmem:[%s177 + $0x50] sm:$0xff] %v3631
        %3664 = vst [vmem:[%s177 + $0x58] sm:$0xff] %v3632
        %3665 = vst [vmem:[%s177 + $0x60] sm:$0xff] %v3633
        %3666 = vst [vmem:[%s177 + $0x68] sm:$0xff] %v3634
        %3667 = vst [vmem:[%s177 + $0x70] sm:$0xff] %v3635
        %3668 = vst [vmem:[%s177 + $0x78] sm:$0xff] %v3636
        %3669 = vst [vmem:[%s177 + $0x80] sm:$0xff] %v3637
        %3670 = vst [vmem:[%s177 + $0x88] sm:$0xff] %v3638
        %3671 = vst [vmem:[%s177 + $0x90] sm:$0xff] %v3639
        %3672 = vst [vmem:[%s177 + $0x98] sm:$0xff] %v3640
        %3673 = vst [vmem:[%s177 + $0xa0] sm:$0xff] %v3641
        %3674 = vst [vmem:[%s177 + $0xa8] sm:$0xff] %v3642
        %3675 = vst [vmem:[%s177 + $0xb0] sm:$0xff] %v3643
        %3676 = vst [vmem:[%s177 + $0xb8] sm:$0xff] %v3644
        %3677 = vst [vmem:[%s177 + $0xc0] sm:$0xff] %v3645
        %3678 = vst [vmem:[%s177 + $0xc8] sm:$0xff] %v3646
        %3679 = vst [vmem:[%s177 + $0xd0] sm:$0xff] %v3647
        %3680 = vst [vmem:[%s177 + $0xd8] sm:$0xff] %v3648
        %3681 = vst [vmem:[%s177 + $0xe0] sm:$0xff] %v3649
        %3682 = vst [vmem:[%s177 + $0xe8] sm:$0xff] %v3650
        %3683 = vst [vmem:[%s177 + $0xf0] sm:$0xff] %v3651
        %3684 = vst [vmem:[%s177 + $0xf8] sm:$0xff] %v3652
        %s3685 = sand.u32 %s107, 1
        %s3686 = scalar_lea.sflag [#allocation4], %s3685
        %s3687 = sand.u32 %s107, 1
        %s3688 = smul.addr %s3687, 256
        %s3689 = scalar_lea.vmem [#allocation3], %s3688
        // Predicated region
        $region33: #{tpu_custom_call.1} parent=31 // pred_check
          %p3690 = pneg %p117
        $region34: #{tpu_custom_call.1} parent=31 // pred_check_branch
          %3692 = sbr.rel (%p3690) target = $region36
        $region35: #{tpu_custom_call.1} parent=31 // pred_region
          %s3693 = smul.u32 32, %s22
          %s3695 = ssub.s32 4096, 4096
          %3696 = vsyncadd %s3686, %s3695
          %s3697 = smul.addr %s21, 32
          %s3698 = sadd.s32 %s3693, %s3697
          %s3699 = smul.addr %s3698, 128
          %s3700 = scalar_lea.hbm %s3, %s3699
          %s3701 = sshll.u32 %s3689, 4
          %s3702 = int_to_ptr.vmem [resolvable:$true] %s3701
          %3707 = dma.vmem_to_hbm [thread:$0]  %s3702, 4096, %s3700, %s3686, 128, 128, 8
        $region36: #{tpu_custom_call.1} parent=31 // pred_fallthru
          _
      $region32: #{tpu_custom_call.1} parent=5 // pred_fallthru
        _
      %p3708 = scmp.le.s32.totalorder 2, %s12
      // Predicated region
      $region37: #{tpu_custom_call.1} parent=5 // pred_check
        %p3709 = pneg %p3708
      $region38: #{tpu_custom_call.1} parent=5 // pred_check_branch
        %3711 = sbr.rel (%p3709) target = $region40
      $region39: #{tpu_custom_call.1} parent=5 // pred_region
        %s3712 = ssub.s32 %s12, 2
        // Predicated region
        $region41: #{tpu_custom_call.1} parent=39 // pred_check
          %p3713 = pneg %p123
        $region42: #{tpu_custom_call.1} parent=39 // pred_check_branch
          %3715 = sbr.rel (%p3713) target = $region44
        $region43: #{tpu_custom_call.1} parent=39 // pred_region
          %s3716 = sand.u32 %s108, 1
          %s3717 = scalar_lea.sflag [#allocation4], %s3716
          %s3718 = sand.u32 %s108, 1
          %s3719 = smul.addr %s3718, 256
          %s3720 = scalar_lea.vmem [#allocation3], %s3719
          %3721 = dma.done %s3717, 4096
        $region44: #{tpu_custom_call.1} parent=39 // pred_fallthru
          _
      $region40: #{tpu_custom_call.1} parent=5 // pred_fallthru
        _
    $region6: #{tpu_custom_call.1} parent=1 // loop_footer
      %s16 = sadd.s32 1, %s12
    $region7: #{tpu_custom_call.1} parent=1 // loop_footer_branch
      %11 = sbr.rel target = $region3
    $region8: #{tpu_custom_call.1} parent=1 // loop_exit
      _
    %3722 = vsyncpa [#allocation4], 1
    %s3723 = scalar_lea.sflag [#allocation4], 1
    %3724 = vsyncpa %s3723, 1

// kernel: tpu_custom_call.1
$region0: #{tpu_custom_call.1}
  #allocation0 [shape = 'u32[]', space=smem, size = 0x4, offset = 0x4, fixed_abs, tag = 'smem constant byte address 0x4 - core index']
  #allocation1 [shape = 'u32[144,128]{1,0:T(1,128)}', space=vmem, size = 0x12000, scoped, tag = 'internal scratch']
  #allocation2 [shape = 'bf16[256,36]{1,0:T(16,128)(2,1)}', space=vmem, size = 0x10000, scoped, tag = 'scratch operand']
  %s0 = inlined_call_operand.vmem [shape: bf16[2,18,18,4], index: 0, kind: input, shape index: {}]
  %s1 = inlined_call_operand.vmem [shape: bf16[36,128], index: 1, kind: input, shape index: {}]
  %s2 = inlined_call_operand.vmem [shape: f32[1,128], index: 2, kind: input, shape index: {}]
  %s3 = inlined_call_operand.hbm [shape: f32[2,256,128], index: 3, kind: output, shape index: {}]
  %s4 = sld [smem:[#allocation0]]
  $region45: #{tpu_custom_call.1} parent=0
    _
  %s6 = ssub.s32 1, %s4
  %s7 = scalar_select 0, %s6, %s4
  $region1: #{tpu_custom_call.1} parent=0
    #allocation3 [shape = 'u8[262144]{0}', space=vmem, size = 0x40000, scoped, tag = 'output window, operand 0']
    #allocation4 [shape = 's32[2]{0}', space=sflag, size = 0x8, scoped, tag = 'scoped memory for tpu_custom_call.1']
    %8 = vsyncpa [#allocation4], 0
    %s9 = scalar_lea.sflag [#allocation4], 1
    %10 = vsyncpa %s9, 0
    loop: start=0, step=1, limit=4
    $region2: #{tpu_custom_call.1} parent=1 // loop_pre_header
      _
    $region3: #{tpu_custom_call.1} parent=1 // loop_header
      %s12 = sphi 0, %s16
      %p13 = scmp.ge.s32.totalorder %s12, 4
      %s19 = sphi 0, %s31
      %s20 = sphi 0, %s27
      %s21 = sphi 0, %s19
      %s22 = sphi 0, %s20
      %s23 = sphi 0, %s21
      %s24 = sphi 0, %s22
      %s34 = sphi 0, %s36
      %s37 = sphi 0, %s34
      %s38 = sphi 0, %s37
      %s54 = sphi 0, %s38
      %s58 = sphi 0, %s58
      %s60 = sphi 0, %s58
      %s61 = sphi 0, %s60
      %s75 = sphi 0, %s61
      %s79 = sphi 0, %s79
      %s81 = sphi 0, %s79
      %s82 = sphi 0, %s81
      %s96 = sphi 0, %s82
      %s104 = sphi 0, %s106
      %s107 = sphi 0, %s104
      %s108 = sphi 0, %s107
      %s124 = sphi 0, %s108
    $region4: #{tpu_custom_call.1} parent=1 // loop_header_branch
      %15 = sbr.rel (%p13) target = $region8
    $region5: #{tpu_custom_call.1} parent=1 // loop_body
      %s17 = ssub.s32 %s12, 1
      %s18 = ssub.s32 %s12, 2
      %s25 = sadd.s32 1, %s20
      %p26 = scmp.ge.s32.totalorder %s25, 1
      %s27 = scalar_select %p26, 0, %s25
      %s28 = sadd.s32 1, %s19
      %s29 = scalar_select %p26, %s28, %s19
      %p30 = scmp.ge.s32.totalorder %s29, 2
      %s31 = scalar_select %p30, 0, %s29
      %s32 = ssub.s32 %s19, %s31
      %p33 = scmp.eq.s32.totalorder %s32, 0
      %s35 = sadd.s32 %s34, 1
      %s36 = scalar_select %p33, %s34, %s35
      %p39 = pneg %p33
      %p40 = scmp.eq.s32.totalorder %s12, 1
      %p41 = por %p39, %p40
      %p42 = scmp.ne.s32.totalorder %s34, %s37
      %p43 = scmp.eq.s32.totalorder %s12, 0
      %p44 = por %p42, %p43
      %p45 = scmp.ne.s32.totalorder %s34, %s37
      %p46 = scmp.eq.s32.totalorder %s17, 1
      %p47 = por %p45, %p46
      %p48 = scmp.ne.s32.totalorder %s37, %s38
      %p49 = scmp.eq.s32.totalorder %s17, 0
      %p50 = por %p48, %p49
      %p51 = scmp.ne.s32.totalorder %s37, %s38
      %p52 = scmp.eq.s32.totalorder %s18, 1
      %p53 = por %p51, %p52
      %p55 = scmp.ne.s32.totalorder %s38, %s54
      %p56 = scmp.eq.s32.totalorder %s18, 0
      %p57 = por %p55, %p56
      %s59 = sadd.s32 %s58, 1
      %p62 = scmp.eq.s32.totalorder %s12, 1
      %p63 = scmp.ne.s32.totalorder %s58, %s60
      %p64 = scmp.eq.s32.totalorder %s12, 0
      %p65 = por %p63, %p64
      %p66 = scmp.ne.s32.totalorder %s58, %s60
      %p67 = scmp.eq.s32.totalorder %s17, 1
      %p68 = por %p66, %p67
      %p69 = scmp.ne.s32.totalorder %s60, %s61
      %p70 = scmp.eq.s32.totalorder %s17, 0
      %p71 = por %p69, %p70
      %p72 = scmp.ne.s32.totalorder %s60, %s61
      %p73 = scmp.eq.s32.totalorder %s18, 1
      %p74 = por %p72, %p73
      %p76 = scmp.ne.s32.totalorder %s61, %s75
      %p77 = scmp.eq.s32.totalorder %s18, 0
      %p78 = por %p76, %p77
      %s80 = sadd.s32 %s79, 1
      %p83 = scmp.eq.s32.totalorder %s12, 1
      %p84 = scmp.ne.s32.totalorder %s79, %s81
      %p85 = scmp.eq.s32.totalorder %s12, 0
      %p86 = por %p84, %p85
      %p87 = scmp.ne.s32.totalorder %s79, %s81
      %p88 = scmp.eq.s32.totalorder %s17, 1
      %p89 = por %p87, %p88
      %p90 = scmp.ne.s32.totalorder %s81, %s82
      %p91 = scmp.eq.s32.totalorder %s17, 0
      %p92 = por %p90, %p91
      %p93 = scmp.ne.s32.totalorder %s81, %s82
      %p94 = scmp.eq.s32.totalorder %s18, 1
      %p95 = por %p93, %p94
      %p97 = scmp.ne.s32.totalorder %s82, %s96
      %p98 = scmp.eq.s32.totalorder %s18, 0
      %p99 = por %p97, %p98
      %s100 = ssub.s32 %s19, %s31
      %s101 = ssub.s32 %s20, %s27
      %s102 = sor.u32 %s100, %s101
      %p103 = scmp.eq.s32.totalorder %s102, 0
      %s105 = sadd.s32 %s104, 1
      %s106 = scalar_select %p103, %s104, %s105
      %p109 = pneg %p103
      %p110 = scmp.eq.s32.totalorder %s12, 1
      %p111 = por %p109, %p110
      %p112 = scmp.ne.s32.totalorder %s104, %s107
      %p113 = scmp.eq.s32.totalorder %s12, 0
      %p114 = por %p112, %p113
      %p115 = scmp.ne.s32.totalorder %s104, %s107
      %p116 = scmp.eq.s32.totalorder %s17, 1
      %p117 = por %p115, %p116
      %p118 = scmp.ne.s32.totalorder %s107, %s108
      %p119 = scmp.eq.s32.totalorder %s17, 0
      %p120 = por %p118, %p119
      %p121 = scmp.ne.s32.totalorder %s107, %s108
      %p122 = scmp.eq.s32.totalorder %s18, 1
      %p123 = por %p121, %p122
      %p125 = scmp.ne.s32.totalorder %s108, %s124
      %p126 = scmp.eq.s32.totalorder %s18, 0
      %p127 = por %p125, %p126
      %p128 = scmp.le.s32.totalorder 1, %s12
      %p129 = scmp.lt.s32.totalorder %s12, 3
      %p130 = pnand %p128, %p129
      %p131 = pneg %p130
      // Predicated region
      $region9: #{tpu_custom_call.1} parent=5 // pred_check
        _
      $region10: #{tpu_custom_call.1} parent=5 // pred_check_branch
        %133 = sbr.rel (%p130) target = $region12
      $region11: #{tpu_custom_call.1} parent=5 // pred_region
        %s134 = ssub.s32 %s12, 1
        // Predicated region
        $region13: #{tpu_custom_call.1} parent=11 // pred_check
          %p135 = pneg %p71
        $region14: #{tpu_custom_call.1} parent=11 // pred_check_branch
          %137 = sbr.rel (%p135) target = $region16
        $region15: #{tpu_custom_call.1} parent=11 // pred_region
          _
        $region16: #{tpu_custom_call.1} parent=11 // pred_fallthru
          _
        // Predicated region
        $region17: #{tpu_custom_call.1} parent=11 // pred_check
          %p138 = pneg %p92
        $region18: #{tpu_custom_call.1} parent=11 // pred_check_branch
          %140 = sbr.rel (%p138) target = $region20
        $region19: #{tpu_custom_call.1} parent=11 // pred_region
          _
        $region20: #{tpu_custom_call.1} parent=11 // pred_fallthru
          _
      $region12: #{tpu_custom_call.1} parent=5 // pred_fallthru
        _
      %p141 = scmp.lt.s32.totalorder %s12, 2
      // Predicated region
      $region21: #{tpu_custom_call.1} parent=5 // pred_check
        %p142 = pneg %p141
      $region22: #{tpu_custom_call.1} parent=5 // pred_check_branch
        %144 = sbr.rel (%p142) target = $region24
      $region23: #{tpu_custom_call.1} parent=5 // pred_region
        // Predicated region
        $region25: #{tpu_custom_call.1} parent=23 // pred_check
          %p145 = pneg %p44
        $region26: #{tpu_custom_call.1} parent=23 // pred_check_branch
          %147 = sbr.rel (%p145) target = $region28
        $region27: #{tpu_custom_call.1} parent=23 // pred_region
          %p148 = scmp.lt.s32.totalorder %s19, 1
          %s149 = scalar_select %p148, %s19, 1
          %s150 = smul.addr %s149, 54
          %s151 = smul.addr %s150, 4
          %s152 = scalar_lea.vmem %s0, %s151
        $region28: #{tpu_custom_call.1} parent=23 // pred_fallthru
          _
      $region24: #{tpu_custom_call.1} parent=5 // pred_fallthru
        _
      %p153 = scmp.le.s32.totalorder 1, %s12
      %p154 = scmp.lt.s32.totalorder %s12, 3
      %p155 = pnand %p153, %p154
      %p156 = pneg %p155
      // Predicated region
      $region29: #{tpu_custom_call.1} parent=5 // pred_check
        _
      $region30: #{tpu_custom_call.1} parent=5 // pred_check_branch
        %158 = sbr.rel (%p155) target = $region32
      $region31: #{tpu_custom_call.1} parent=5 // pred_region
        %s159 = ssub.s32 %s12, 1
        %p160 = scmp.lt.s32.totalorder %s21, 1
        %s161 = scalar_select %p160, %s21, 1
        %s162 = smul.addr %s161, 54
        %s163 = smul.addr %s162, 4
        %s164 = scalar_lea.vmem %s0, %s163
        %p165 = pneg %p50
        %p166 = pneg %p47
        %p167 = pneg %p71
        %p168 = pneg %p68
        %p169 = pneg %p92
        %p170 = pneg %p89
        %p171 = pneg %p120
        %p172 = pneg %p117
        %s173 = sand.u32 %s107, 1
        %s174 = scalar_lea.sflag [#allocation4], %s173
        %s175 = sand.u32 %s107, 1
        %s176 = smul.addr %s175, 256
        %s177 = scalar_lea.vmem [#allocation3], %s176
        %p178 = scmp.lt.s32.totalorder %s21, 1
        %s179 = scalar_select %p178, %s21, 1
        %s180 = smul.addr %s179, 54
        %s181 = smul.addr %s180, 4
        %s182 = scalar_lea.vmem %s0, %s181
        %s183 = smul.u32 32, %s22
        %s185 = smul.u32 %s22, 16
        %s186 = smul.u32 %s185, 3
        %s187 = smul.addr %s186, 4
        %s188 = scalar_lea.vmem %s182, %s187
        %v189 = vld [vmem:[%s188] sm:$0xf]
        %v190 = vld [vmem:[%s188 + $0x4] sm:$0xf]
        %v191 = vld [vmem:[%s188 + $0xc] sm:$0xf]
        %v192 = vld [vmem:[%s188 + $0x10] sm:$0xf]
        %v193 = vld [vmem:[%s188 + $0x18] sm:$0xf]
        %v194 = vld [vmem:[%s188 + $0x1c] sm:$0xf]
        %v195 = vld [vmem:[%s188 + $0x24] sm:$0xf]
        %v196 = vld [vmem:[%s188 + $0x28] sm:$0xf]
        %v197 = vld [vmem:[%s188 + $0x30] sm:$0xf]
        %v198 = vld [vmem:[%s188 + $0x34] sm:$0xf]
        %v199 = vld [vmem:[%s188 + $0x3c] sm:$0xf]
        %v200 = vld [vmem:[%s188 + $0x40] sm:$0xf]
        %v201 = vld [vmem:[%s188 + $0x48] sm:$0xf]
        %v202 = vld [vmem:[%s188 + $0x4c] sm:$0xf]
        %v203 = vld [vmem:[%s188 + $0x54] sm:$0xf]
        %v204 = vld [vmem:[%s188 + $0x58] sm:$0xf]
        %v205 = vld [vmem:[%s188 + $0x60] sm:$0xf]
        %v206 = vld [vmem:[%s188 + $0x64] sm:$0xf]
        %v207 = vld [vmem:[%s188 + $0x6c] sm:$0xf]
        %v208 = vld [vmem:[%s188 + $0x70] sm:$0xf]
        %v209 = vld [vmem:[%s188 + $0x78] sm:$0xf]
        %v210 = vld [vmem:[%s188 + $0x7c] sm:$0xf]
        %v211 = vld [vmem:[%s188 + $0x84] sm:$0xf]
        %v212 = vld [vmem:[%s188 + $0x88] sm:$0xf]
        %v213 = vld [vmem:[%s188 + $0x90] sm:$0xf]
        %v214 = vld [vmem:[%s188 + $0x94] sm:$0xf]
        %v215 = vld [vmem:[%s188 + $0x9c] sm:$0xf]
        %v216 = vld [vmem:[%s188 + $0xa0] sm:$0xf]
        %v217 = vld [vmem:[%s188 + $0xa8] sm:$0xf]
        %v218 = vld [vmem:[%s188 + $0xac] sm:$0xf]
        %v219 = vld [vmem:[%s188 + $0xb4] sm:$0xf]
        %v220 = vld [vmem:[%s188 + $0xb8] sm:$0xf]
        %v253 = vunpack.c.l.b16 %v189
        %v254 = vunpack.c.l.b16 %v190
        %v255 = vunpack.c.l.b16 %v191
        %v256 = vunpack.c.l.b16 %v192
        %v257 = vunpack.c.l.b16 %v193
        %v258 = vunpack.c.l.b16 %v194
        %v259 = vunpack.c.l.b16 %v195
        %v260 = vunpack.c.l.b16 %v196
        %v261 = vunpack.c.l.b16 %v197
        %v262 = vunpack.c.l.b16 %v198
        %v263 = vunpack.c.l.b16 %v199
        %v264 = vunpack.c.l.b16 %v200
        %v265 = vunpack.c.l.b16 %v201
        %v266 = vunpack.c.l.b16 %v202
        %v267 = vunpack.c.l.b16 %v203
        %v268 = vunpack.c.l.b16 %v204
        %v269 = vunpack.c.l.b16 %v205
        %v270 = vunpack.c.l.b16 %v206
        %v271 = vunpack.c.l.b16 %v207
        %v272 = vunpack.c.l.b16 %v208
        %v273 = vunpack.c.l.b16 %v209
        %v274 = vunpack.c.l.b16 %v210
        %v275 = vunpack.c.l.b16 %v211
        %v276 = vunpack.c.l.b16 %v212
        %v277 = vunpack.c.l.b16 %v213
        %v278 = vunpack.c.l.b16 %v214
        %v279 = vunpack.c.l.b16 %v215
        %v280 = vunpack.c.l.b16 %v216
        %v281 = vunpack.c.l.b16 %v217
        %v282 = vunpack.c.l.b16 %v218
        %v283 = vunpack.c.l.b16 %v219
        %v284 = vunpack.c.l.b16 %v220
        %v285 = vpack.c.b16 %v254, %v253
        %v286 = vpack.c.b16 %v256, %v255
        %v287 = vpack.c.b16 %v258, %v257
        %v288 = vpack.c.b16 %v260, %v259
        %v289 = vpack.c.b16 %v262, %v261
        %v290 = vpack.c.b16 %v264, %v263
        %v291 = vpack.c.b16 %v266, %v265
        %v292 = vpack.c.b16 %v268, %v267
        %v293 = vpack.c.b16 %v270, %v269
        %v294 = vpack.c.b16 %v272, %v271
        %v295 = vpack.c.b16 %v274, %v273
        %v296 = vpack.c.b16 %v276, %v275
        %v297 = vpack.c.b16 %v278, %v277
        %v298 = vpack.c.b16 %v280, %v279
        %v299 = vpack.c.b16 %v282, %v281
        %v300 = vpack.c.b16 %v284, %v283
        %vm317 = vcmask 31744
        %318 = vst.msk [vmem:[#allocation2] sm:$0xff] %vm317, %v285
        %319 = vst.msk [vmem:[#allocation2 + $0x8] sm:$0xff] %vm317, %v286
        %320 = vst.msk [vmem:[#allocation2 + $0x10] sm:$0xff] %vm317, %v287
        %321 = vst.msk [vmem:[#allocation2 + $0x18] sm:$0xff] %vm317, %v288
        %322 = vst.msk [vmem:[#allocation2 + $0x20] sm:$0xff] %vm317, %v289
        %323 = vst.msk [vmem:[#allocation2 + $0x28] sm:$0xff] %vm317, %v290
        %324 = vst.msk [vmem:[#allocation2 + $0x30] sm:$0xff] %vm317, %v291
        %325 = vst.msk [vmem:[#allocation2 + $0x38] sm:$0xff] %vm317, %v292
        %326 = vst.msk [vmem:[#allocation2 + $0x40] sm:$0xff] %vm317, %v293
        %327 = vst.msk [vmem:[#allocation2 + $0x48] sm:$0xff] %vm317, %v294
        %328 = vst.msk [vmem:[#allocation2 + $0x50] sm:$0xff] %vm317, %v295
        %329 = vst.msk [vmem:[#allocation2 + $0x58] sm:$0xff] %vm317, %v296
        %330 = vst.msk [vmem:[#allocation2 + $0x60] sm:$0xff] %vm317, %v297
        %331 = vst.msk [vmem:[#allocation2 + $0x68] sm:$0xff] %vm317, %v298
        %332 = vst.msk [vmem:[#allocation2 + $0x70] sm:$0xff] %vm317, %v299
        %333 = vst.msk [vmem:[#allocation2 + $0x78] sm:$0xff] %vm317, %v300
        %v334 = vld [vmem:[%s188] sm:$0xf]
        %v335 = vld [vmem:[%s188 + $0x4] sm:$0xf]
        %v336 = vld [vmem:[%s188 + $0x8] sm:$0x1]
        %v337 = vld [vmem:[%s188 + $0xc] sm:$0xf]
        %v338 = vld [vmem:[%s188 + $0x10] sm:$0xf]
        %v339 = vld [vmem:[%s188 + $0x14] sm:$0x1]
        %v340 = vld [vmem:[%s188 + $0x18] sm:$0xf]
        %v341 = vld [vmem:[%s188 + $0x1c] sm:$0xf]
        %v342 = vld [vmem:[%s188 + $0x20] sm:$0x1]
        %v343 = vld [vmem:[%s188 + $0x24] sm:$0xf]
        %v344 = vld [vmem:[%s188 + $0x28] sm:$0xf]
        %v345 = vld [vmem:[%s188 + $0x2c] sm:$0x1]
        %v346 = vld [vmem:[%s188 + $0x30] sm:$0xf]
        %v347 = vld [vmem:[%s188 + $0x34] sm:$0xf]
        %v348 = vld [vmem:[%s188 + $0x38] sm:$0x1]
        %v349 = vld [vmem:[%s188 + $0x3c] sm:$0xf]
        %v350 = vld [vmem:[%s188 + $0x40] sm:$0xf]
        %v351 = vld [vmem:[%s188 + $0x44] sm:$0x1]
        %v352 = vld [vmem:[%s188 + $0x48] sm:$0xf]
        %v353 = vld [vmem:[%s188 + $0x4c] sm:$0xf]
        %v354 = vld [vmem:[%s188 + $0x50] sm:$0x1]
        %v355 = vld [vmem:[%s188 + $0x54] sm:$0xf]
        %v356 = vld [vmem:[%s188 + $0x58] sm:$0xf]
        %v357 = vld [vmem:[%s188 + $0x5c] sm:$0x1]
        %v358 = vld [vmem:[%s188 + $0x60] sm:$0xf]
        %v359 = vld [vmem:[%s188 + $0x64] sm:$0xf]
        %v360 = vld [vmem:[%s188 + $0x68] sm:$0x1]
        %v361 = vld [vmem:[%s188 + $0x6c] sm:$0xf]
        %v362 = vld [vmem:[%s188 + $0x70] sm:$0xf]
        %v363 = vld [vmem:[%s188 + $0x74] sm:$0x1]
        %v364 = vld [vmem:[%s188 + $0x78] sm:$0xf]
        %v365 = vld [vmem:[%s188 + $0x7c] sm:$0xf]
        %v366 = vld [vmem:[%s188 + $0x80] sm:$0x1]
        %v367 = vld [vmem:[%s188 + $0x84] sm:$0xf]
        %v368 = vld [vmem:[%s188 + $0x88] sm:$0xf]
        %v369 = vld [vmem:[%s188 + $0x8c] sm:$0x1]
        %v370 = vld [vmem:[%s188 + $0x90] sm:$0xf]
        %v371 = vld [vmem:[%s188 + $0x94] sm:$0xf]
        %v372 = vld [vmem:[%s188 + $0x98] sm:$0x1]
        %v373 = vld [vmem:[%s188 + $0x9c] sm:$0xf]
        %v374 = vld [vmem:[%s188 + $0xa0] sm:$0xf]
        %v375 = vld [vmem:[%s188 + $0xa4] sm:$0x1]
        %v376 = vld [vmem:[%s188 + $0xa8] sm:$0xf]
        %v377 = vld [vmem:[%s188 + $0xac] sm:$0xf]
        %v378 = vld [vmem:[%s188 + $0xb0] sm:$0x1]
        %v379 = vld [vmem:[%s188 + $0xb4] sm:$0xf]
        %v380 = vld [vmem:[%s188 + $0xb8] sm:$0xf]
        %v381 = vld [vmem:[%s188 + $0xbc] sm:$0x1]
        %vm382 = vsmask.f32 3328
        %vm383 = vsmask.f32 7440
        %vm384 = vmor %vm382, %vm383
        %v386 = vshrl.u32 %v334, 16
        %v388 = vrot.slane %v386, 4
        %v389 = vshll.u32 %v334, 16
        %v391 = vrot.slane %v389, 5
        %v392 = vor.u32 %v388, %v391
        %v393 = vrot.slane %v392, 4
        %v395 = vshll.u32 %v335, 16
        %v397 = vrot.slane %v395, 5
        %v398 = vsel %vm384, %v393, %v397
        %v399 = vshrl.u32 %v335, 16
        %v401 = vrot.slane %v399, 4
        %v402 = vor.u32 %v401, %v397
        %v403 = vrot.slane %v402, 4
        %v405 = vshll.u32 %v336, 16
        %v407 = vrot.slane %v405, 5
        %v408 = vsel %vm384, %v403, %v407
        %v410 = vshrl.u32 %v337, 16
        %v412 = vrot.slane %v410, 4
        %v413 = vshll.u32 %v337, 16
        %v415 = vrot.slane %v413, 5
        %v416 = vor.u32 %v412, %v415
        %v417 = vrot.slane %v416, 4
        %v419 = vshll.u32 %v338, 16
        %v421 = vrot.slane %v419, 5
        %v422 = vsel %vm384, %v417, %v421
        %v423 = vshrl.u32 %v338, 16
        %v425 = vrot.slane %v423, 4
        %v426 = vor.u32 %v425, %v421
        %v427 = vrot.slane %v426, 4
        %v429 = vshll.u32 %v339, 16
        %v431 = vrot.slane %v429, 5
        %v432 = vsel %vm384, %v427, %v431
        %v434 = vshrl.u32 %v340, 16
        %v436 = vrot.slane %v434, 4
        %v437 = vshll.u32 %v340, 16
        %v439 = vrot.slane %v437, 5
        %v440 = vor.u32 %v436, %v439
        %v441 = vrot.slane %v440, 4
        %v443 = vshll.u32 %v341, 16
        %v445 = vrot.slane %v443, 5
        %v446 = vsel %vm384, %v441, %v445
        %v447 = vshrl.u32 %v341, 16
        %v449 = vrot.slane %v447, 4
        %v450 = vor.u32 %v449, %v445
        %v451 = vrot.slane %v450, 4
        %v453 = vshll.u32 %v342, 16
        %v455 = vrot.slane %v453, 5
        %v456 = vsel %vm384, %v451, %v455
        %v458 = vshrl.u32 %v343, 16
        %v460 = vrot.slane %v458, 4
        %v461 = vshll.u32 %v343, 16
        %v463 = vrot.slane %v461, 5
        %v464 = vor.u32 %v460, %v463
        %v465 = vrot.slane %v464, 4
        %v467 = vshll.u32 %v344, 16
        %v469 = vrot.slane %v467, 5
        %v470 = vsel %vm384, %v465, %v469
        %v471 = vshrl.u32 %v344, 16
        %v473 = vrot.slane %v471, 4
        %v474 = vor.u32 %v473, %v469
        %v475 = vrot.slane %v474, 4
        %v477 = vshll.u32 %v345, 16
        %v479 = vrot.slane %v477, 5
        %v480 = vsel %vm384, %v475, %v479
        %v482 = vshrl.u32 %v346, 16
        %v484 = vrot.slane %v482, 4
        %v485 = vshll.u32 %v346, 16
        %v487 = vrot.slane %v485, 5
        %v488 = vor.u32 %v484, %v487
        %v489 = vrot.slane %v488, 4
        %v491 = vshll.u32 %v347, 16
        %v493 = vrot.slane %v491, 5
        %v494 = vsel %vm384, %v489, %v493
        %v495 = vshrl.u32 %v347, 16
        %v497 = vrot.slane %v495, 4
        %v498 = vor.u32 %v497, %v493
        %v499 = vrot.slane %v498, 4
        %v501 = vshll.u32 %v348, 16
        %v503 = vrot.slane %v501, 5
        %v504 = vsel %vm384, %v499, %v503
        %v506 = vshrl.u32 %v349, 16
        %v508 = vrot.slane %v506, 4
        %v509 = vshll.u32 %v349, 16
        %v511 = vrot.slane %v509, 5
        %v512 = vor.u32 %v508, %v511
        %v513 = vrot.slane %v512, 4
        %v515 = vshll.u32 %v350, 16
        %v517 = vrot.slane %v515, 5
        %v518 = vsel %vm384, %v513, %v517
        %v519 = vshrl.u32 %v350, 16
        %v521 = vrot.slane %v519, 4
        %v522 = vor.u32 %v521, %v517
        %v523 = vrot.slane %v522, 4
        %v525 = vshll.u32 %v351, 16
        %v527 = vrot.slane %v525, 5
        %v528 = vsel %vm384, %v523, %v527
        %v530 = vshrl.u32 %v352, 16
        %v532 = vrot.slane %v530, 4
        %v533 = vshll.u32 %v352, 16
        %v535 = vrot.slane %v533, 5
        %v536 = vor.u32 %v532, %v535
        %v537 = vrot.slane %v536, 4
        %v539 = vshll.u32 %v353, 16
        %v541 = vrot.slane %v539, 5
        %v542 = vsel %vm384, %v537, %v541
        %v543 = vshrl.u32 %v353, 16
        %v545 = vrot.slane %v543, 4
        %v546 = vor.u32 %v545, %v541
        %v547 = vrot.slane %v546, 4
        %v549 = vshll.u32 %v354, 16
        %v551 = vrot.slane %v549, 5
        %v552 = vsel %vm384, %v547, %v551
        %v554 = vshrl.u32 %v355, 16
        %v556 = vrot.slane %v554, 4
        %v557 = vshll.u32 %v355, 16
        %v559 = vrot.slane %v557, 5
        %v560 = vor.u32 %v556, %v559
        %v561 = vrot.slane %v560, 4
        %v563 = vshll.u32 %v356, 16
        %v565 = vrot.slane %v563, 5
        %v566 = vsel %vm384, %v561, %v565
        %v567 = vshrl.u32 %v356, 16
        %v569 = vrot.slane %v567, 4
        %v570 = vor.u32 %v569, %v565
        %v571 = vrot.slane %v570, 4
        %v573 = vshll.u32 %v357, 16
        %v575 = vrot.slane %v573, 5
        %v576 = vsel %vm384, %v571, %v575
        %v578 = vshrl.u32 %v358, 16
        %v580 = vrot.slane %v578, 4
        %v581 = vshll.u32 %v358, 16
        %v583 = vrot.slane %v581, 5
        %v584 = vor.u32 %v580, %v583
        %v585 = vrot.slane %v584, 4
        %v587 = vshll.u32 %v359, 16
        %v589 = vrot.slane %v587, 5
        %v590 = vsel %vm384, %v585, %v589
        %v591 = vshrl.u32 %v359, 16
        %v593 = vrot.slane %v591, 4
        %v594 = vor.u32 %v593, %v589
        %v595 = vrot.slane %v594, 4
        %v597 = vshll.u32 %v360, 16
        %v599 = vrot.slane %v597, 5
        %v600 = vsel %vm384, %v595, %v599
        %v602 = vshrl.u32 %v361, 16
        %v604 = vrot.slane %v602, 4
        %v605 = vshll.u32 %v361, 16
        %v607 = vrot.slane %v605, 5
        %v608 = vor.u32 %v604, %v607
        %v609 = vrot.slane %v608, 4
        %v611 = vshll.u32 %v362, 16
        %v613 = vrot.slane %v611, 5
        %v614 = vsel %vm384, %v609, %v613
        %v615 = vshrl.u32 %v362, 16
        %v617 = vrot.slane %v615, 4
        %v618 = vor.u32 %v617, %v613
        %v619 = vrot.slane %v618, 4
        %v621 = vshll.u32 %v363, 16
        %v623 = vrot.slane %v621, 5
        %v624 = vsel %vm384, %v619, %v623
        %v626 = vshrl.u32 %v364, 16
        %v628 = vrot.slane %v626, 4
        %v629 = vshll.u32 %v364, 16
        %v631 = vrot.slane %v629, 5
        %v632 = vor.u32 %v628, %v631
        %v633 = vrot.slane %v632, 4
        %v635 = vshll.u32 %v365, 16
        %v637 = vrot.slane %v635, 5
        %v638 = vsel %vm384, %v633, %v637
        %v639 = vshrl.u32 %v365, 16
        %v641 = vrot.slane %v639, 4
        %v642 = vor.u32 %v641, %v637
        %v643 = vrot.slane %v642, 4
        %v645 = vshll.u32 %v366, 16
        %v647 = vrot.slane %v645, 5
        %v648 = vsel %vm384, %v643, %v647
        %v650 = vshrl.u32 %v367, 16
        %v652 = vrot.slane %v650, 4
        %v653 = vshll.u32 %v367, 16
        %v655 = vrot.slane %v653, 5
        %v656 = vor.u32 %v652, %v655
        %v657 = vrot.slane %v656, 4
        %v659 = vshll.u32 %v368, 16
        %v661 = vrot.slane %v659, 5
        %v662 = vsel %vm384, %v657, %v661
        %v663 = vshrl.u32 %v368, 16
        %v665 = vrot.slane %v663, 4
        %v666 = vor.u32 %v665, %v661
        %v667 = vrot.slane %v666, 4
        %v669 = vshll.u32 %v369, 16
        %v671 = vrot.slane %v669, 5
        %v672 = vsel %vm384, %v667, %v671
        %v674 = vshrl.u32 %v370, 16
        %v676 = vrot.slane %v674, 4
        %v677 = vshll.u32 %v370, 16
        %v679 = vrot.slane %v677, 5
        %v680 = vor.u32 %v676, %v679
        %v681 = vrot.slane %v680, 4
        %v683 = vshll.u32 %v371, 16
        %v685 = vrot.slane %v683, 5
        %v686 = vsel %vm384, %v681, %v685
        %v687 = vshrl.u32 %v371, 16
        %v689 = vrot.slane %v687, 4
        %v690 = vor.u32 %v689, %v685
        %v691 = vrot.slane %v690, 4
        %v693 = vshll.u32 %v372, 16
        %v695 = vrot.slane %v693, 5
        %v696 = vsel %vm384, %v691, %v695
        %v698 = vshrl.u32 %v373, 16
        %v700 = vrot.slane %v698, 4
        %v701 = vshll.u32 %v373, 16
        %v703 = vrot.slane %v701, 5
        %v704 = vor.u32 %v700, %v703
        %v705 = vrot.slane %v704, 4
        %v707 = vshll.u32 %v374, 16
        %v709 = vrot.slane %v707, 5
        %v710 = vsel %vm384, %v705, %v709
        %v711 = vshrl.u32 %v374, 16
        %v713 = vrot.slane %v711, 4
        %v714 = vor.u32 %v713, %v709
        %v715 = vrot.slane %v714, 4
        %v717 = vshll.u32 %v375, 16
        %v719 = vrot.slane %v717, 5
        %v720 = vsel %vm384, %v715, %v719
        %v722 = vshrl.u32 %v376, 16
        %v724 = vrot.slane %v722, 4
        %v725 = vshll.u32 %v376, 16
        %v727 = vrot.slane %v725, 5
        %v728 = vor.u32 %v724, %v727
        %v729 = vrot.slane %v728, 4
        %v731 = vshll.u32 %v377, 16
        %v733 = vrot.slane %v731, 5
        %v734 = vsel %vm384, %v729, %v733
        %v735 = vshrl.u32 %v377, 16
        %v737 = vrot.slane %v735, 4
        %v738 = vor.u32 %v737, %v733
        %v739 = vrot.slane %v738, 4
        %v741 = vshll.u32 %v378, 16
        %v743 = vrot.slane %v741, 5
        %v744 = vsel %vm384, %v739, %v743
        %v746 = vshrl.u32 %v379, 16
        %v748 = vrot.slane %v746, 4
        %v749 = vshll.u32 %v379, 16
        %v751 = vrot.slane %v749, 5
        %v752 = vor.u32 %v748, %v751
        %v753 = vrot.slane %v752, 4
        %v755 = vshll.u32 %v380, 16
        %v757 = vrot.slane %v755, 5
        %v758 = vsel %vm384, %v753, %v757
        %v759 = vshrl.u32 %v380, 16
        %v761 = vrot.slane %v759, 4
        %v762 = vor.u32 %v761, %v757
        %v763 = vrot.slane %v762, 4
        %v765 = vshll.u32 %v381, 16
        %v767 = vrot.slane %v765, 5
        %v768 = vsel %vm384, %v763, %v767
        %v769 = vunpack.c.l.b16 %v398
        %v770 = vunpack.c.l.b16 %v408
        %v771 = vunpack.c.l.b16 %v422
        %v772 = vunpack.c.l.b16 %v432
        %v773 = vunpack.c.l.b16 %v446
        %v774 = vunpack.c.l.b16 %v456
        %v775 = vunpack.c.l.b16 %v470
        %v776 = vunpack.c.l.b16 %v480
        %v777 = vunpack.c.l.b16 %v494
        %v778 = vunpack.c.l.b16 %v504
        %v779 = vunpack.c.l.b16 %v518
        %v780 = vunpack.c.l.b16 %v528
        %v781 = vunpack.c.l.b16 %v542
        %v782 = vunpack.c.l.b16 %v552
        %v783 = vunpack.c.l.b16 %v566
        %v784 = vunpack.c.l.b16 %v576
        %v785 = vunpack.c.l.b16 %v590
        %v786 = vunpack.c.l.b16 %v600
        %v787 = vunpack.c.l.b16 %v614
        %v788 = vunpack.c.l.b16 %v624
        %v789 = vunpack.c.l.b16 %v638
        %v790 = vunpack.c.l.b16 %v648
        %v791 = vunpack.c.l.b16 %v662
        %v792 = vunpack.c.l.b16 %v672
        %v793 = vunpack.c.l.b16 %v686
        %v794 = vunpack.c.l.b16 %v696
        %v795 = vunpack.c.l.b16 %v710
        %v796 = vunpack.c.l.b16 %v720
        %v797 = vunpack.c.l.b16 %v734
        %v798 = vunpack.c.l.b16 %v744
        %v799 = vunpack.c.l.b16 %v758
        %v800 = vunpack.c.l.b16 %v768
        %v801 = vpack.c.b16 %v770, %v769
        %v802 = vpack.c.b16 %v772, %v771
        %v803 = vpack.c.b16 %v774, %v773
        %v804 = vpack.c.b16 %v776, %v775
        %v805 = vpack.c.b16 %v778, %v777
        %v806 = vpack.c.b16 %v780, %v779
        %v807 = vpack.c.b16 %v782, %v781
        %v808 = vpack.c.b16 %v784, %v783
        %v809 = vpack.c.b16 %v786, %v785
        %v810 = vpack.c.b16 %v788, %v787
        %v811 = vpack.c.b16 %v790, %v789
        %v812 = vpack.c.b16 %v792, %v791
        %v813 = vpack.c.b16 %v794, %v793
        %v814 = vpack.c.b16 %v796, %v795
        %v815 = vpack.c.b16 %v798, %v797
        %v816 = vpack.c.b16 %v800, %v799
        %817 = vrot.lane.b32.xlu0 %v801, 4
        %v818 = vpop.permute.xlu0 %817
        %819 = vrot.lane.b32.xlu0 %v802, 4
        %v820 = vpop.permute.xlu0 %819
        %821 = vrot.lane.b32.xlu0 %v803, 4
        %v822 = vpop.permute.xlu0 %821
        %823 = vrot.lane.b32.xlu0 %v804, 4
        %v824 = vpop.permute.xlu0 %823
        %825 = vrot.lane.b32.xlu0 %v805, 4
        %v826 = vpop.permute.xlu0 %825
        %827 = vrot.lane.b32.xlu0 %v806, 4
        %v828 = vpop.permute.xlu0 %827
        %829 = vrot.lane.b32.xlu0 %v807, 4
        %v830 = vpop.permute.xlu0 %829
        %831 = vrot.lane.b32.xlu0 %v808, 4
        %v832 = vpop.permute.xlu0 %831
        %833 = vrot.lane.b32.xlu0 %v809, 4
        %v834 = vpop.permute.xlu0 %833
        %835 = vrot.lane.b32.xlu0 %v810, 4
        %v836 = vpop.permute.xlu0 %835
        %837 = vrot.lane.b32.xlu0 %v811, 4
        %v838 = vpop.permute.xlu0 %837
        %839 = vrot.lane.b32.xlu0 %v812, 4
        %v840 = vpop.permute.xlu0 %839
        %841 = vrot.lane.b32.xlu0 %v813, 4
        %v842 = vpop.permute.xlu0 %841
        %843 = vrot.lane.b32.xlu0 %v814, 4
        %v844 = vpop.permute.xlu0 %843
        %845 = vrot.lane.b32.xlu0 %v815, 4
        %v846 = vpop.permute.xlu0 %845
        %847 = vrot.lane.b32.xlu0 %v816, 4
        %v848 = vpop.permute.xlu0 %847
        %vm865 = vcmask 64544
        %866 = vst.msk [vmem:[#allocation2] sm:$0xff] %vm865, %v818
        %867 = vst.msk [vmem:[#allocation2 + $0x8] sm:$0xff] %vm865, %v820
        %868 = vst.msk [vmem:[#allocation2 + $0x10] sm:$0xff] %vm865, %v822
        %869 = vst.msk [vmem:[#allocation2 + $0x18] sm:$0xff] %vm865, %v824
        %870 = vst.msk [vmem:[#allocation2 + $0x20] sm:$0xff] %vm865, %v826
        %871 = vst.msk [vmem:[#allocation2 + $0x28] sm:$0xff] %vm865, %v828
        %872 = vst.msk [vmem:[#allocation2 + $0x30] sm:$0xff] %vm865, %v830
        %873 = vst.msk [vmem:[#allocation2 + $0x38] sm:$0xff] %vm865, %v832
        %874 = vst.msk [vmem:[#allocation2 + $0x40] sm:$0xff] %vm865, %v834
        %875 = vst.msk [vmem:[#allocation2 + $0x48] sm:$0xff] %vm865, %v836
        %876 = vst.msk [vmem:[#allocation2 + $0x50] sm:$0xff] %vm865, %v838
        %877 = vst.msk [vmem:[#allocation2 + $0x58] sm:$0xff] %vm865, %v840
        %878 = vst.msk [vmem:[#allocation2 + $0x60] sm:$0xff] %vm865, %v842
        %879 = vst.msk [vmem:[#allocation2 + $0x68] sm:$0xff] %vm865, %v844
        %880 = vst.msk [vmem:[#allocation2 + $0x70] sm:$0xff] %vm865, %v846
        %881 = vst.msk [vmem:[#allocation2 + $0x78] sm:$0xff] %vm865, %v848
        %v882 = vld [vmem:[%s188] sm:$0xe]
        %v883 = vld [vmem:[%s188 + $0x4] sm:$0xf]
        %v884 = vld [vmem:[%s188 + $0x8] sm:$0x1]
        %v885 = vld [vmem:[%s188 + $0xc] sm:$0xe]
        %v886 = vld [vmem:[%s188 + $0x10] sm:$0xf]
        %v887 = vld [vmem:[%s188 + $0x14] sm:$0x1]
        %v888 = vld [vmem:[%s188 + $0x18] sm:$0xe]
        %v889 = vld [vmem:[%s188 + $0x1c] sm:$0xf]
        %v890 = vld [vmem:[%s188 + $0x20] sm:$0x1]
        %v891 = vld [vmem:[%s188 + $0x24] sm:$0xe]
        %v892 = vld [vmem:[%s188 + $0x28] sm:$0xf]
        %v893 = vld [vmem:[%s188 + $0x2c] sm:$0x1]
        %v894 = vld [vmem:[%s188 + $0x30] sm:$0xe]
        %v895 = vld [vmem:[%s188 + $0x34] sm:$0xf]
        %v896 = vld [vmem:[%s188 + $0x38] sm:$0x1]
        %v897 = vld [vmem:[%s188 + $0x3c] sm:$0xe]
        %v898 = vld [vmem:[%s188 + $0x40] sm:$0xf]
        %v899 = vld [vmem:[%s188 + $0x44] sm:$0x1]
        %v900 = vld [vmem:[%s188 + $0x48] sm:$0xe]
        %v901 = vld [vmem:[%s188 + $0x4c] sm:$0xf]
        %v902 = vld [vmem:[%s188 + $0x50] sm:$0x1]
        %v903 = vld [vmem:[%s188 + $0x54] sm:$0xe]
        %v904 = vld [vmem:[%s188 + $0x58] sm:$0xf]
        %v905 = vld [vmem:[%s188 + $0x5c] sm:$0x1]
        %v906 = vld [vmem:[%s188 + $0x60] sm:$0xe]
        %v907 = vld [vmem:[%s188 + $0x64] sm:$0xf]
        %v908 = vld [vmem:[%s188 + $0x68] sm:$0x1]
        %v909 = vld [vmem:[%s188 + $0x6c] sm:$0xe]
        %v910 = vld [vmem:[%s188 + $0x70] sm:$0xf]
        %v911 = vld [vmem:[%s188 + $0x74] sm:$0x1]
        %v912 = vld [vmem:[%s188 + $0x78] sm:$0xe]
        %v913 = vld [vmem:[%s188 + $0x7c] sm:$0xf]
        %v914 = vld [vmem:[%s188 + $0x80] sm:$0x1]
        %v915 = vld [vmem:[%s188 + $0x84] sm:$0xe]
        %v916 = vld [vmem:[%s188 + $0x88] sm:$0xf]
        %v917 = vld [vmem:[%s188 + $0x8c] sm:$0x1]
        %v918 = vld [vmem:[%s188 + $0x90] sm:$0xe]
        %v919 = vld [vmem:[%s188 + $0x94] sm:$0xf]
        %v920 = vld [vmem:[%s188 + $0x98] sm:$0x1]
        %v921 = vld [vmem:[%s188 + $0x9c] sm:$0xe]
        %v922 = vld [vmem:[%s188 + $0xa0] sm:$0xf]
        %v923 = vld [vmem:[%s188 + $0xa4] sm:$0x1]
        %v924 = vld [vmem:[%s188 + $0xa8] sm:$0xe]
        %v925 = vld [vmem:[%s188 + $0xac] sm:$0xf]
        %v926 = vld [vmem:[%s188 + $0xb0] sm:$0x1]
        %v927 = vld [vmem:[%s188 + $0xb4] sm:$0xe]
        %v928 = vld [vmem:[%s188 + $0xb8] sm:$0xf]
        %v929 = vld [vmem:[%s188 + $0xbc] sm:$0x1]
        %vm978 = vcmask 1042432
        %vm979 = vcmask 1046532
        %vm980 = vmor %vm978, %vm979
        %v981 = vrot.slane %v882, 5
        %v982 = vrot.slane %v981, 4
        %v983 = vrot.slane %v883, 5
        %v984 = vsel %vm980, %v982, %v983
        %v985 = vrot.slane %v983, 4
        %v986 = vrot.slane %v884, 5
        %v987 = vsel %vm980, %v985, %v986
        %v988 = vrot.slane %v885, 5
        %v989 = vrot.slane %v988, 4
        %v990 = vrot.slane %v886, 5
        %v991 = vsel %vm980, %v989, %v990
        %v992 = vrot.slane %v990, 4
        %v993 = vrot.slane %v887, 5
        %v994 = vsel %vm980, %v992, %v993
        %v995 = vrot.slane %v888, 5
        %v996 = vrot.slane %v995, 4
        %v997 = vrot.slane %v889, 5
        %v998 = vsel %vm980, %v996, %v997
        %v999 = vrot.slane %v997, 4
        %v1000 = vrot.slane %v890, 5
        %v1001 = vsel %vm980, %v999, %v1000
        %v1002 = vrot.slane %v891, 5
        %v1003 = vrot.slane %v1002, 4
        %v1004 = vrot.slane %v892, 5
        %v1005 = vsel %vm980, %v1003, %v1004
        %v1006 = vrot.slane %v1004, 4
        %v1007 = vrot.slane %v893, 5
        %v1008 = vsel %vm980, %v1006, %v1007
        %v1009 = vrot.slane %v894, 5
        %v1010 = vrot.slane %v1009, 4
        %v1011 = vrot.slane %v895, 5
        %v1012 = vsel %vm980, %v1010, %v1011
        %v1013 = vrot.slane %v1011, 4
        %v1014 = vrot.slane %v896, 5
        %v1015 = vsel %vm980, %v1013, %v1014
        %v1016 = vrot.slane %v897, 5
        %v1017 = vrot.slane %v1016, 4
        %v1018 = vrot.slane %v898, 5
        %v1019 = vsel %vm980, %v1017, %v1018
        %v1020 = vrot.slane %v1018, 4
        %v1021 = vrot.slane %v899, 5
        %v1022 = vsel %vm980, %v1020, %v1021
        %v1023 = vrot.slane %v900, 5
        %v1024 = vrot.slane %v1023, 4
        %v1025 = vrot.slane %v901, 5
        %v1026 = vsel %vm980, %v1024, %v1025
        %v1027 = vrot.slane %v1025, 4
        %v1028 = vrot.slane %v902, 5
        %v1029 = vsel %vm980, %v1027, %v1028
        %v1030 = vrot.slane %v903, 5
        %v1031 = vrot.slane %v1030, 4
        %v1032 = vrot.slane %v904, 5
        %v1033 = vsel %vm980, %v1031, %v1032
        %v1034 = vrot.slane %v1032, 4
        %v1035 = vrot.slane %v905, 5
        %v1036 = vsel %vm980, %v1034, %v1035
        %v1037 = vrot.slane %v906, 5
        %v1038 = vrot.slane %v1037, 4
        %v1039 = vrot.slane %v907, 5
        %v1040 = vsel %vm980, %v1038, %v1039
        %v1041 = vrot.slane %v1039, 4
        %v1042 = vrot.slane %v908, 5
        %v1043 = vsel %vm980, %v1041, %v1042
        %v1044 = vrot.slane %v909, 5
        %v1045 = vrot.slane %v1044, 4
        %v1046 = vrot.slane %v910, 5
        %v1047 = vsel %vm980, %v1045, %v1046
        %v1048 = vrot.slane %v1046, 4
        %v1049 = vrot.slane %v911, 5
        %v1050 = vsel %vm980, %v1048, %v1049
        %v1051 = vrot.slane %v912, 5
        %v1052 = vrot.slane %v1051, 4
        %v1053 = vrot.slane %v913, 5
        %v1054 = vsel %vm980, %v1052, %v1053
        %v1055 = vrot.slane %v1053, 4
        %v1056 = vrot.slane %v914, 5
        %v1057 = vsel %vm980, %v1055, %v1056
        %v1058 = vrot.slane %v915, 5
        %v1059 = vrot.slane %v1058, 4
        %v1060 = vrot.slane %v916, 5
        %v1061 = vsel %vm980, %v1059, %v1060
        %v1062 = vrot.slane %v1060, 4
        %v1063 = vrot.slane %v917, 5
        %v1064 = vsel %vm980, %v1062, %v1063
        %v1065 = vrot.slane %v918, 5
        %v1066 = vrot.slane %v1065, 4
        %v1067 = vrot.slane %v919, 5
        %v1068 = vsel %vm980, %v1066, %v1067
        %v1069 = vrot.slane %v1067, 4
        %v1070 = vrot.slane %v920, 5
        %v1071 = vsel %vm980, %v1069, %v1070
        %v1072 = vrot.slane %v921, 5
        %v1073 = vrot.slane %v1072, 4
        %v1074 = vrot.slane %v922, 5
        %v1075 = vsel %vm980, %v1073, %v1074
        %v1076 = vrot.slane %v1074, 4
        %v1077 = vrot.slane %v923, 5
        %v1078 = vsel %vm980, %v1076, %v1077
        %v1079 = vrot.slane %v924, 5
        %v1080 = vrot.slane %v1079, 4
        %v1081 = vrot.slane %v925, 5
        %v1082 = vsel %vm980, %v1080, %v1081
        %v1083 = vrot.slane %v1081, 4
        %v1084 = vrot.slane %v926, 5
        %v1085 = vsel %vm980, %v1083, %v1084
        %v1086 = vrot.slane %v927, 5
        %v1087 = vrot.slane %v1086, 4
        %v1088 = vrot.slane %v928, 5
        %v1089 = vsel %vm980, %v1087, %v1088
        %v1090 = vrot.slane %v1088, 4
        %v1091 = vrot.slane %v929, 5
        %v1092 = vsel %vm980, %v1090, %v1091
        %v1093 = vunpack.c.l.b16 %v984
        %v1094 = vunpack.c.l.b16 %v987
        %v1095 = vunpack.c.l.b16 %v991
        %v1096 = vunpack.c.l.b16 %v994
        %v1097 = vunpack.c.l.b16 %v998
        %v1098 = vunpack.c.l.b16 %v1001
        %v1099 = vunpack.c.l.b16 %v1005
        %v1100 = vunpack.c.l.b16 %v1008
        %v1101 = vunpack.c.l.b16 %v1012
        %v1102 = vunpack.c.l.b16 %v1015
        %v1103 = vunpack.c.l.b16 %v1019
        %v1104 = vunpack.c.l.b16 %v1022
        %v1105 = vunpack.c.l.b16 %v1026
        %v1106 = vunpack.c.l.b16 %v1029
        %v1107 = vunpack.c.l.b16 %v1033
        %v1108 = vunpack.c.l.b16 %v1036
        %v1109 = vunpack.c.l.b16 %v1040
        %v1110 = vunpack.c.l.b16 %v1043
        %v1111 = vunpack.c.l.b16 %v1047
        %v1112 = vunpack.c.l.b16 %v1050
        %v1113 = vunpack.c.l.b16 %v1054
        %v1114 = vunpack.c.l.b16 %v1057
        %v1115 = vunpack.c.l.b16 %v1061
        %v1116 = vunpack.c.l.b16 %v1064
        %v1117 = vunpack.c.l.b16 %v1068
        %v1118 = vunpack.c.l.b16 %v1071
        %v1119 = vunpack.c.l.b16 %v1075
        %v1120 = vunpack.c.l.b16 %v1078
        %v1121 = vunpack.c.l.b16 %v1082
        %v1122 = vunpack.c.l.b16 %v1085
        %v1123 = vunpack.c.l.b16 %v1089
        %v1124 = vunpack.c.l.b16 %v1092
        %v1125 = vpack.c.b16 %v1094, %v1093
        %v1126 = vpack.c.b16 %v1096, %v1095
        %v1127 = vpack.c.b16 %v1098, %v1097
        %v1128 = vpack.c.b16 %v1100, %v1099
        %v1129 = vpack.c.b16 %v1102, %v1101
        %v1130 = vpack.c.b16 %v1104, %v1103
        %v1131 = vpack.c.b16 %v1106, %v1105
        %v1132 = vpack.c.b16 %v1108, %v1107
        %v1133 = vpack.c.b16 %v1110, %v1109
        %v1134 = vpack.c.b16 %v1112, %v1111
        %v1135 = vpack.c.b16 %v1114, %v1113
        %v1136 = vpack.c.b16 %v1116, %v1115
        %v1137 = vpack.c.b16 %v1118, %v1117
        %v1138 = vpack.c.b16 %v1120, %v1119
        %v1139 = vpack.c.b16 %v1122, %v1121
        %v1140 = vpack.c.b16 %v1124, %v1123
        %1141 = vrot.lane.b32.xlu0 %v1125, 8
        %v1142 = vpop.permute.xlu0 %1141
        %1143 = vrot.lane.b32.xlu0 %v1126, 8
        %v1144 = vpop.permute.xlu0 %1143
        %1145 = vrot.lane.b32.xlu0 %v1127, 8
        %v1146 = vpop.permute.xlu0 %1145
        %1147 = vrot.lane.b32.xlu0 %v1128, 8
        %v1148 = vpop.permute.xlu0 %1147
        %1149 = vrot.lane.b32.xlu0 %v1129, 8
        %v1150 = vpop.permute.xlu0 %1149
        %1151 = vrot.lane.b32.xlu0 %v1130, 8
        %v1152 = vpop.permute.xlu0 %1151
        %1153 = vrot.lane.b32.xlu0 %v1131, 8
        %v1154 = vpop.permute.xlu0 %1153
        %1155 = vrot.lane.b32.xlu0 %v1132, 8
        %v1156 = vpop.permute.xlu0 %1155
        %1157 = vrot.lane.b32.xlu0 %v1133, 8
        %v1158 = vpop.permute.xlu0 %1157
        %1159 = vrot.lane.b32.xlu0 %v1134, 8
        %v1160 = vpop.permute.xlu0 %1159
        %1161 = vrot.lane.b32.xlu0 %v1135, 8
        %v1162 = vpop.permute.xlu0 %1161
        %1163 = vrot.lane.b32.xlu0 %v1136, 8
        %v1164 = vpop.permute.xlu0 %1163
        %1165 = vrot.lane.b32.xlu0 %v1137, 8
        %v1166 = vpop.permute.xlu0 %1165
        %1167 = vrot.lane.b32.xlu0 %v1138, 8
        %v1168 = vpop.permute.xlu0 %1167
        %1169 = vrot.lane.b32.xlu0 %v1139, 8
        %v1170 = vpop.permute.xlu0 %1169
        %1171 = vrot.lane.b32.xlu0 %v1140, 8
        %v1172 = vpop.permute.xlu0 %1171
        %vm1189 = vcmask 97344
        %1190 = vst.msk [vmem:[#allocation2] sm:$0xff] %vm1189, %v1142
        %1191 = vst.msk [vmem:[#allocation2 + $0x8] sm:$0xff] %vm1189, %v1144
        %1192 = vst.msk [vmem:[#allocation2 + $0x10] sm:$0xff] %vm1189, %v1146
        %1193 = vst.msk [vmem:[#allocation2 + $0x18] sm:$0xff] %vm1189, %v1148
        %1194 = vst.msk [vmem:[#allocation2 + $0x20] sm:$0xff] %vm1189, %v1150
        %1195 = vst.msk [vmem:[#allocation2 + $0x28] sm:$0xff] %vm1189, %v1152
        %1196 = vst.msk [vmem:[#allocation2 + $0x30] sm:$0xff] %vm1189, %v1154
        %1197 = vst.msk [vmem:[#allocation2 + $0x38] sm:$0xff] %vm1189, %v1156
        %1198 = vst.msk [vmem:[#allocation2 + $0x40] sm:$0xff] %vm1189, %v1158
        %1199 = vst.msk [vmem:[#allocation2 + $0x48] sm:$0xff] %vm1189, %v1160
        %1200 = vst.msk [vmem:[#allocation2 + $0x50] sm:$0xff] %vm1189, %v1162
        %1201 = vst.msk [vmem:[#allocation2 + $0x58] sm:$0xff] %vm1189, %v1164
        %1202 = vst.msk [vmem:[#allocation2 + $0x60] sm:$0xff] %vm1189, %v1166
        %1203 = vst.msk [vmem:[#allocation2 + $0x68] sm:$0xff] %vm1189, %v1168
        %1204 = vst.msk [vmem:[#allocation2 + $0x70] sm:$0xff] %vm1189, %v1170
        %1205 = vst.msk [vmem:[#allocation2 + $0x78] sm:$0xff] %vm1189, %v1172
        %s1206 = sadd.s32 %s185, 1
        %s1207 = smul.u32 %s1206, 3
        %s1208 = smul.addr %s1207, 4
        %s1209 = scalar_lea.vmem %s182, %s1208
        %v1210 = vld [vmem:[%s1209] sm:$0xf]
        %v1211 = vld [vmem:[%s1209 + $0x4] sm:$0xf]
        %v1212 = vld [vmem:[%s1209 + $0xc] sm:$0xf]
        %v1213 = vld [vmem:[%s1209 + $0x10] sm:$0xf]
        %v1214 = vld [vmem:[%s1209 + $0x18] sm:$0xf]
        %v1215 = vld [vmem:[%s1209 + $0x1c] sm:$0xf]
        %v1216 = vld [vmem:[%s1209 + $0x24] sm:$0xf]
        %v1217 = vld [vmem:[%s1209 + $0x28] sm:$0xf]
        %v1218 = vld [vmem:[%s1209 + $0x30] sm:$0xf]
        %v1219 = vld [vmem:[%s1209 + $0x34] sm:$0xf]
        %v1220 = vld [vmem:[%s1209 + $0x3c] sm:$0xf]
        %v1221 = vld [vmem:[%s1209 + $0x40] sm:$0xf]
        %v1222 = vld [vmem:[%s1209 + $0x48] sm:$0xf]
        %v1223 = vld [vmem:[%s1209 + $0x4c] sm:$0xf]
        %v1224 = vld [vmem:[%s1209 + $0x54] sm:$0xf]
        %v1225 = vld [vmem:[%s1209 + $0x58] sm:$0xf]
        %v1226 = vld [vmem:[%s1209 + $0x60] sm:$0xf]
        %v1227 = vld [vmem:[%s1209 + $0x64] sm:$0xf]
        %v1228 = vld [vmem:[%s1209 + $0x6c] sm:$0xf]
        %v1229 = vld [vmem:[%s1209 + $0x70] sm:$0xf]
        %v1230 = vld [vmem:[%s1209 + $0x78] sm:$0xf]
        %v1231 = vld [vmem:[%s1209 + $0x7c] sm:$0xf]
        %v1232 = vld [vmem:[%s1209 + $0x84] sm:$0xf]
        %v1233 = vld [vmem:[%s1209 + $0x88] sm:$0xf]
        %v1234 = vld [vmem:[%s1209 + $0x90] sm:$0xf]
        %v1235 = vld [vmem:[%s1209 + $0x94] sm:$0xf]
        %v1236 = vld [vmem:[%s1209 + $0x9c] sm:$0xf]
        %v1237 = vld [vmem:[%s1209 + $0xa0] sm:$0xf]
        %v1238 = vld [vmem:[%s1209 + $0xa8] sm:$0xf]
        %v1239 = vld [vmem:[%s1209 + $0xac] sm:$0xf]
        %v1240 = vld [vmem:[%s1209 + $0xb4] sm:$0xf]
        %v1241 = vld [vmem:[%s1209 + $0xb8] sm:$0xf]
        %v1274 = vunpack.c.l.b16 %v1210
        %v1275 = vunpack.c.l.b16 %v1211
        %v1276 = vunpack.c.l.b16 %v1212
        %v1277 = vunpack.c.l.b16 %v1213
        %v1278 = vunpack.c.l.b16 %v1214
        %v1279 = vunpack.c.l.b16 %v1215
        %v1280 = vunpack.c.l.b16 %v1216
        %v1281 = vunpack.c.l.b16 %v1217
        %v1282 = vunpack.c.l.b16 %v1218
        %v1283 = vunpack.c.l.b16 %v1219
        %v1284 = vunpack.c.l.b16 %v1220
        %v1285 = vunpack.c.l.b16 %v1221
        %v1286 = vunpack.c.l.b16 %v1222
        %v1287 = vunpack.c.l.b16 %v1223
        %v1288 = vunpack.c.l.b16 %v1224
        %v1289 = vunpack.c.l.b16 %v1225
        %v1290 = vunpack.c.l.b16 %v1226
        %v1291 = vunpack.c.l.b16 %v1227
        %v1292 = vunpack.c.l.b16 %v1228
        %v1293 = vunpack.c.l.b16 %v1229
        %v1294 = vunpack.c.l.b16 %v1230
        %v1295 = vunpack.c.l.b16 %v1231
        %v1296 = vunpack.c.l.b16 %v1232
        %v1297 = vunpack.c.l.b16 %v1233
        %v1298 = vunpack.c.l.b16 %v1234
        %v1299 = vunpack.c.l.b16 %v1235
        %v1300 = vunpack.c.l.b16 %v1236
        %v1301 = vunpack.c.l.b16 %v1237
        %v1302 = vunpack.c.l.b16 %v1238
        %v1303 = vunpack.c.l.b16 %v1239
        %v1304 = vunpack.c.l.b16 %v1240
        %v1305 = vunpack.c.l.b16 %v1241
        %v1306 = vpack.c.b16 %v1275, %v1274
        %v1307 = vpack.c.b16 %v1277, %v1276
        %v1308 = vpack.c.b16 %v1279, %v1278
        %v1309 = vpack.c.b16 %v1281, %v1280
        %v1310 = vpack.c.b16 %v1283, %v1282
        %v1311 = vpack.c.b16 %v1285, %v1284
        %v1312 = vpack.c.b16 %v1287, %v1286
        %v1313 = vpack.c.b16 %v1289, %v1288
        %v1314 = vpack.c.b16 %v1291, %v1290
        %v1315 = vpack.c.b16 %v1293, %v1292
        %v1316 = vpack.c.b16 %v1295, %v1294
        %v1317 = vpack.c.b16 %v1297, %v1296
        %v1318 = vpack.c.b16 %v1299, %v1298
        %v1319 = vpack.c.b16 %v1301, %v1300
        %v1320 = vpack.c.b16 %v1303, %v1302
        %v1321 = vpack.c.b16 %v1305, %v1304
        %1322 = vrot.lane.b32.xlu0 %v1306, 12
        %v1323 = vpop.permute.xlu0 %1322
        %1324 = vrot.lane.b32.xlu0 %v1307, 12
        %v1325 = vpop.permute.xlu0 %1324
        %1326 = vrot.lane.b32.xlu0 %v1308, 12
        %v1327 = vpop.permute.xlu0 %1326
        %1328 = vrot.lane.b32.xlu0 %v1309, 12
        %v1329 = vpop.permute.xlu0 %1328
        %1330 = vrot.lane.b32.xlu0 %v1310, 12
        %v1331 = vpop.permute.xlu0 %1330
        %1332 = vrot.lane.b32.xlu0 %v1311, 12
        %v1333 = vpop.permute.xlu0 %1332
        %1334 = vrot.lane.b32.xlu0 %v1312, 12
        %v1335 = vpop.permute.xlu0 %1334
        %1336 = vrot.lane.b32.xlu0 %v1313, 12
        %v1337 = vpop.permute.xlu0 %1336
        %1338 = vrot.lane.b32.xlu0 %v1314, 12
        %v1339 = vpop.permute.xlu0 %1338
        %1340 = vrot.lane.b32.xlu0 %v1315, 12
        %v1341 = vpop.permute.xlu0 %1340
        %1342 = vrot.lane.b32.xlu0 %v1316, 12
        %v1343 = vpop.permute.xlu0 %1342
        %1344 = vrot.lane.b32.xlu0 %v1317, 12
        %v1345 = vpop.permute.xlu0 %1344
        %1346 = vrot.lane.b32.xlu0 %v1318, 12
        %v1347 = vpop.permute.xlu0 %1346
        %1348 = vrot.lane.b32.xlu0 %v1319, 12
        %v1349 = vpop.permute.xlu0 %1348
        %1350 = vrot.lane.b32.xlu0 %v1320, 12
        %v1351 = vpop.permute.xlu0 %1350
        %1352 = vrot.lane.b32.xlu0 %v1321, 12
        %v1353 = vpop.permute.xlu0 %1352
        %vm1370 = vcmask 130144
        %1371 = vst.msk [vmem:[#allocation2] sm:$0xff] %vm1370, %v1323
        %1372 = vst.msk [vmem:[#allocation2 + $0x8] sm:$0xff] %vm1370, %v1325
        %1373 = vst.msk [vmem:[#allocation2 + $0x10] sm:$0xff] %vm1370, %v1327
        %1374 = vst.msk [vmem:[#allocation2 + $0x18] sm:$0xff] %vm1370, %v1329
        %1375 = vst.msk [vmem:[#allocation2 + $0x20] sm:$0xff] %vm1370, %v1331
        %1376 = vst.msk [vmem:[#allocation2 + $0x28] sm:$0xff] %vm1370, %v1333
        %1377 = vst.msk [vmem:[#allocation2 + $0x30] sm:$0xff] %vm1370, %v1335
        %1378 = vst.msk [vmem:[#allocation2 + $0x38] sm:$0xff] %vm1370, %v1337
        %1379 = vst.msk [vmem:[#allocation2 + $0x40] sm:$0xff] %vm1370, %v1339
        %1380 = vst.msk [vmem:[#allocation2 + $0x48] sm:$0xff] %vm1370, %v1341
        %1381 = vst.msk [vmem:[#allocation2 + $0x50] sm:$0xff] %vm1370, %v1343
        %1382 = vst.msk [vmem:[#allocation2 + $0x58] sm:$0xff] %vm1370, %v1345
        %1383 = vst.msk [vmem:[#allocation2 + $0x60] sm:$0xff] %vm1370, %v1347
        %1384 = vst.msk [vmem:[#allocation2 + $0x68] sm:$0xff] %vm1370, %v1349
        %1385 = vst.msk [vmem:[#allocation2 + $0x70] sm:$0xff] %vm1370, %v1351
        %1386 = vst.msk [vmem:[#allocation2 + $0x78] sm:$0xff] %vm1370, %v1353
        %v1387 = vld [vmem:[%s1209] sm:$0xf]
        %v1388 = vld [vmem:[%s1209 + $0x4] sm:$0xf]
        %v1389 = vld [vmem:[%s1209 + $0x8] sm:$0x1]
        %v1390 = vld [vmem:[%s1209 + $0xc] sm:$0xf]
        %v1391 = vld [vmem:[%s1209 + $0x10] sm:$0xf]
        %v1392 = vld [vmem:[%s1209 + $0x14] sm:$0x1]
        %v1393 = vld [vmem:[%s1209 + $0x18] sm:$0xf]
        %v1394 = vld [vmem:[%s1209 + $0x1c] sm:$0xf]
        %v1395 = vld [vmem:[%s1209 + $0x20] sm:$0x1]
        %v1396 = vld [vmem:[%s1209 + $0x24] sm:$0xf]
        %v1397 = vld [vmem:[%s1209 + $0x28] sm:$0xf]
        %v1398 = vld [vmem:[%s1209 + $0x2c] sm:$0x1]
        %v1399 = vld [vmem:[%s1209 + $0x30] sm:$0xf]
        %v1400 = vld [vmem:[%s1209 + $0x34] sm:$0xf]
        %v1401 = vld [vmem:[%s1209 + $0x38] sm:$0x1]
        %v1402 = vld [vmem:[%s1209 + $0x3c] sm:$0xf]
        %v1403 = vld [vmem:[%s1209 + $0x40] sm:$0xf]
        %v1404 = vld [vmem:[%s1209 + $0x44] sm:$0x1]
        %v1405 = vld [vmem:[%s1209 + $0x48] sm:$0xf]
        %v1406 = vld [vmem:[%s1209 + $0x4c] sm:$0xf]
        %v1407 = vld [vmem:[%s1209 + $0x50] sm:$0x1]
        %v1408 = vld [vmem:[%s1209 + $0x54] sm:$0xf]
        %v1409 = vld [vmem:[%s1209 + $0x58] sm:$0xf]
        %v1410 = vld [vmem:[%s1209 + $0x5c] sm:$0x1]
        %v1411 = vld [vmem:[%s1209 + $0x60] sm:$0xf]
        %v1412 = vld [vmem:[%s1209 + $0x64] sm:$0xf]
        %v1413 = vld [vmem:[%s1209 + $0x68] sm:$0x1]
        %v1414 = vld [vmem:[%s1209 + $0x6c] sm:$0xf]
        %v1415 = vld [vmem:[%s1209 + $0x70] sm:$0xf]
        %v1416 = vld [vmem:[%s1209 + $0x74] sm:$0x1]
        %v1417 = vld [vmem:[%s1209 + $0x78] sm:$0xf]
        %v1418 = vld [vmem:[%s1209 + $0x7c] sm:$0xf]
        %v1419 = vld [vmem:[%s1209 + $0x80] sm:$0x1]
        %v1420 = vld [vmem:[%s1209 + $0x84] sm:$0xf]
        %v1421 = vld [vmem:[%s1209 + $0x88] sm:$0xf]
        %v1422 = vld [vmem:[%s1209 + $0x8c] sm:$0x1]
        %v1423 = vld [vmem:[%s1209 + $0x90] sm:$0xf]
        %v1424 = vld [vmem:[%s1209 + $0x94] sm:$0xf]
        %v1425 = vld [vmem:[%s1209 + $0x98] sm:$0x1]
        %v1426 = vld [vmem:[%s1209 + $0x9c] sm:$0xf]
        %v1427 = vld [vmem:[%s1209 + $0xa0] sm:$0xf]
        %v1428 = vld [vmem:[%s1209 + $0xa4] sm:$0x1]
        %v1429 = vld [vmem:[%s1209 + $0xa8] sm:$0xf]
        %v1430 = vld [vmem:[%s1209 + $0xac] sm:$0xf]
        %v1431 = vld [vmem:[%s1209 + $0xb0] sm:$0x1]
        %v1432 = vld [vmem:[%s1209 + $0xb4] sm:$0xf]
        %v1433 = vld [vmem:[%s1209 + $0xb8] sm:$0xf]
        %v1434 = vld [vmem:[%s1209 + $0xbc] sm:$0x1]
        %v1436 = vshrl.u32 %v1387, 16
        %v1438 = vrot.slane %v1436, 4
        %v1439 = vshll.u32 %v1387, 16
        %v1441 = vrot.slane %v1439, 5
        %v1442 = vor.u32 %v1438, %v1441
        %v1443 = vrot.slane %v1442, 4
        %v1445 = vshll.u32 %v1388, 16
        %v1447 = vrot.slane %v1445, 5
        %v1448 = vsel %vm384, %v1443, %v1447
        %v1449 = vshrl.u32 %v1388, 16
        %v1451 = vrot.slane %v1449, 4
        %v1452 = vor.u32 %v1451, %v1447
        %v1453 = vrot.slane %v1452, 4
        %v1455 = vshll.u32 %v1389, 16
        %v1457 = vrot.slane %v1455, 5
        %v1458 = vsel %vm384, %v1453, %v1457
        %v1460 = vshrl.u32 %v1390, 16
        %v1462 = vrot.slane %v1460, 4
        %v1463 = vshll.u32 %v1390, 16
        %v1465 = vrot.slane %v1463, 5
        %v1466 = vor.u32 %v1462, %v1465
        %v1467 = vrot.slane %v1466, 4
        %v1469 = vshll.u32 %v1391, 16
        %v1471 = vrot.slane %v1469, 5
        %v1472 = vsel %vm384, %v1467, %v1471
        %v1473 = vshrl.u32 %v1391, 16
        %v1475 = vrot.slane %v1473, 4
        %v1476 = vor.u32 %v1475, %v1471
        %v1477 = vrot.slane %v1476, 4
        %v1479 = vshll.u32 %v1392, 16
        %v1481 = vrot.slane %v1479, 5
        %v1482 = vsel %vm384, %v1477, %v1481
        %v1484 = vshrl.u32 %v1393, 16
        %v1486 = vrot.slane %v1484, 4
        %v1487 = vshll.u32 %v1393, 16
        %v1489 = vrot.slane %v1487, 5
        %v1490 = vor.u32 %v1486, %v1489
        %v1491 = vrot.slane %v1490, 4
        %v1493 = vshll.u32 %v1394, 16
        %v1495 = vrot.slane %v1493, 5
        %v1496 = vsel %vm384, %v1491, %v1495
        %v1497 = vshrl.u32 %v1394, 16
        %v1499 = vrot.slane %v1497, 4
        %v1500 = vor.u32 %v1499, %v1495
        %v1501 = vrot.slane %v1500, 4
        %v1503 = vshll.u32 %v1395, 16
        %v1505 = vrot.slane %v1503, 5
        %v1506 = vsel %vm384, %v1501, %v1505
        %v1508 = vshrl.u32 %v1396, 16
        %v1510 = vrot.slane %v1508, 4
        %v1511 = vshll.u32 %v1396, 16
        %v1513 = vrot.slane %v1511, 5
        %v1514 = vor.u32 %v1510, %v1513
        %v1515 = vrot.slane %v1514, 4
        %v1517 = vshll.u32 %v1397, 16
        %v1519 = vrot.slane %v1517, 5
        %v1520 = vsel %vm384, %v1515, %v1519
        %v1521 = vshrl.u32 %v1397, 16
        %v1523 = vrot.slane %v1521, 4
        %v1524 = vor.u32 %v1523, %v1519
        %v1525 = vrot.slane %v1524, 4
        %v1527 = vshll.u32 %v1398, 16
        %v1529 = vrot.slane %v1527, 5
        %v1530 = vsel %vm384, %v1525, %v1529
        %v1532 = vshrl.u32 %v1399, 16
        %v1534 = vrot.slane %v1532, 4
        %v1535 = vshll.u32 %v1399, 16
        %v1537 = vrot.slane %v1535, 5
        %v1538 = vor.u32 %v1534, %v1537
        %v1539 = vrot.slane %v1538, 4
        %v1541 = vshll.u32 %v1400, 16
        %v1543 = vrot.slane %v1541, 5
        %v1544 = vsel %vm384, %v1539, %v1543
        %v1545 = vshrl.u32 %v1400, 16
        %v1547 = vrot.slane %v1545, 4
        %v1548 = vor.u32 %v1547, %v1543
        %v1549 = vrot.slane %v1548, 4
        %v1551 = vshll.u32 %v1401, 16
        %v1553 = vrot.slane %v1551, 5
        %v1554 = vsel %vm384, %v1549, %v1553
        %v1556 = vshrl.u32 %v1402, 16
        %v1558 = vrot.slane %v1556, 4
        %v1559 = vshll.u32 %v1402, 16
        %v1561 = vrot.slane %v1559, 5
        %v1562 = vor.u32 %v1558, %v1561
        %v1563 = vrot.slane %v1562, 4
        %v1565 = vshll.u32 %v1403, 16
        %v1567 = vrot.slane %v1565, 5
        %v1568 = vsel %vm384, %v1563, %v1567
        %v1569 = vshrl.u32 %v1403, 16
        %v1571 = vrot.slane %v1569, 4
        %v1572 = vor.u32 %v1571, %v1567
        %v1573 = vrot.slane %v1572, 4
        %v1575 = vshll.u32 %v1404, 16
        %v1577 = vrot.slane %v1575, 5
        %v1578 = vsel %vm384, %v1573, %v1577
        %v1580 = vshrl.u32 %v1405, 16
        %v1582 = vrot.slane %v1580, 4
        %v1583 = vshll.u32 %v1405, 16
        %v1585 = vrot.slane %v1583, 5
        %v1586 = vor.u32 %v1582, %v1585
        %v1587 = vrot.slane %v1586, 4
        %v1589 = vshll.u32 %v1406, 16
        %v1591 = vrot.slane %v1589, 5
        %v1592 = vsel %vm384, %v1587, %v1591
        %v1593 = vshrl.u32 %v1406, 16
        %v1595 = vrot.slane %v1593, 4
        %v1596 = vor.u32 %v1595, %v1591
        %v1597 = vrot.slane %v1596, 4
        %v1599 = vshll.u32 %v1407, 16
        %v1601 = vrot.slane %v1599, 5
        %v1602 = vsel %vm384, %v1597, %v1601
        %v1604 = vshrl.u32 %v1408, 16
        %v1606 = vrot.slane %v1604, 4
        %v1607 = vshll.u32 %v1408, 16
        %v1609 = vrot.slane %v1607, 5
        %v1610 = vor.u32 %v1606, %v1609
        %v1611 = vrot.slane %v1610, 4
        %v1613 = vshll.u32 %v1409, 16
        %v1615 = vrot.slane %v1613, 5
        %v1616 = vsel %vm384, %v1611, %v1615
        %v1617 = vshrl.u32 %v1409, 16
        %v1619 = vrot.slane %v1617, 4
        %v1620 = vor.u32 %v1619, %v1615
        %v1621 = vrot.slane %v1620, 4
        %v1623 = vshll.u32 %v1410, 16
        %v1625 = vrot.slane %v1623, 5
        %v1626 = vsel %vm384, %v1621, %v1625
        %v1628 = vshrl.u32 %v1411, 16
        %v1630 = vrot.slane %v1628, 4
        %v1631 = vshll.u32 %v1411, 16
        %v1633 = vrot.slane %v1631, 5
        %v1634 = vor.u32 %v1630, %v1633
        %v1635 = vrot.slane %v1634, 4
        %v1637 = vshll.u32 %v1412, 16
        %v1639 = vrot.slane %v1637, 5
        %v1640 = vsel %vm384, %v1635, %v1639
        %v1641 = vshrl.u32 %v1412, 16
        %v1643 = vrot.slane %v1641, 4
        %v1644 = vor.u32 %v1643, %v1639
        %v1645 = vrot.slane %v1644, 4
        %v1647 = vshll.u32 %v1413, 16
        %v1649 = vrot.slane %v1647, 5
        %v1650 = vsel %vm384, %v1645, %v1649
        %v1652 = vshrl.u32 %v1414, 16
        %v1654 = vrot.slane %v1652, 4
        %v1655 = vshll.u32 %v1414, 16
        %v1657 = vrot.slane %v1655, 5
        %v1658 = vor.u32 %v1654, %v1657
        %v1659 = vrot.slane %v1658, 4
        %v1661 = vshll.u32 %v1415, 16
        %v1663 = vrot.slane %v1661, 5
        %v1664 = vsel %vm384, %v1659, %v1663
        %v1665 = vshrl.u32 %v1415, 16
        %v1667 = vrot.slane %v1665, 4
        %v1668 = vor.u32 %v1667, %v1663
        %v1669 = vrot.slane %v1668, 4
        %v1671 = vshll.u32 %v1416, 16
        %v1673 = vrot.slane %v1671, 5
        %v1674 = vsel %vm384, %v1669, %v1673
        %v1676 = vshrl.u32 %v1417, 16
        %v1678 = vrot.slane %v1676, 4
        %v1679 = vshll.u32 %v1417, 16
        %v1681 = vrot.slane %v1679, 5
        %v1682 = vor.u32 %v1678, %v1681
        %v1683 = vrot.slane %v1682, 4
        %v1685 = vshll.u32 %v1418, 16
        %v1687 = vrot.slane %v1685, 5
        %v1688 = vsel %vm384, %v1683, %v1687
        %v1689 = vshrl.u32 %v1418, 16
        %v1691 = vrot.slane %v1689, 4
        %v1692 = vor.u32 %v1691, %v1687
        %v1693 = vrot.slane %v1692, 4
        %v1695 = vshll.u32 %v1419, 16
        %v1697 = vrot.slane %v1695, 5
        %v1698 = vsel %vm384, %v1693, %v1697
        %v1700 = vshrl.u32 %v1420, 16
        %v1702 = vrot.slane %v1700, 4
        %v1703 = vshll.u32 %v1420, 16
        %v1705 = vrot.slane %v1703, 5
        %v1706 = vor.u32 %v1702, %v1705
        %v1707 = vrot.slane %v1706, 4
        %v1709 = vshll.u32 %v1421, 16
        %v1711 = vrot.slane %v1709, 5
        %v1712 = vsel %vm384, %v1707, %v1711
        %v1713 = vshrl.u32 %v1421, 16
        %v1715 = vrot.slane %v1713, 4
        %v1716 = vor.u32 %v1715, %v1711
        %v1717 = vrot.slane %v1716, 4
        %v1719 = vshll.u32 %v1422, 16
        %v1721 = vrot.slane %v1719, 5
        %v1722 = vsel %vm384, %v1717, %v1721
        %v1724 = vshrl.u32 %v1423, 16
        %v1726 = vrot.slane %v1724, 4
        %v1727 = vshll.u32 %v1423, 16
        %v1729 = vrot.slane %v1727, 5
        %v1730 = vor.u32 %v1726, %v1729
        %v1731 = vrot.slane %v1730, 4
        %v1733 = vshll.u32 %v1424, 16
        %v1735 = vrot.slane %v1733, 5
        %v1736 = vsel %vm384, %v1731, %v1735
        %v1737 = vshrl.u32 %v1424, 16
        %v1739 = vrot.slane %v1737, 4
        %v1740 = vor.u32 %v1739, %v1735
        %v1741 = vrot.slane %v1740, 4
        %v1743 = vshll.u32 %v1425, 16
        %v1745 = vrot.slane %v1743, 5
        %v1746 = vsel %vm384, %v1741, %v1745
        %v1748 = vshrl.u32 %v1426, 16
        %v1750 = vrot.slane %v1748, 4
        %v1751 = vshll.u32 %v1426, 16
        %v1753 = vrot.slane %v1751, 5
        %v1754 = vor.u32 %v1750, %v1753
        %v1755 = vrot.slane %v1754, 4
        %v1757 = vshll.u32 %v1427, 16
        %v1759 = vrot.slane %v1757, 5
        %v1760 = vsel %vm384, %v1755, %v1759
        %v1761 = vshrl.u32 %v1427, 16
        %v1763 = vrot.slane %v1761, 4
        %v1764 = vor.u32 %v1763, %v1759
        %v1765 = vrot.slane %v1764, 4
        %v1767 = vshll.u32 %v1428, 16
        %v1769 = vrot.slane %v1767, 5
        %v1770 = vsel %vm384, %v1765, %v1769
        %v1772 = vshrl.u32 %v1429, 16
        %v1774 = vrot.slane %v1772, 4
        %v1775 = vshll.u32 %v1429, 16
        %v1777 = vrot.slane %v1775, 5
        %v1778 = vor.u32 %v1774, %v1777
        %v1779 = vrot.slane %v1778, 4
        %v1781 = vshll.u32 %v1430, 16
        %v1783 = vrot.slane %v1781, 5
        %v1784 = vsel %vm384, %v1779, %v1783
        %v1785 = vshrl.u32 %v1430, 16
        %v1787 = vrot.slane %v1785, 4
        %v1788 = vor.u32 %v1787, %v1783
        %v1789 = vrot.slane %v1788, 4
        %v1791 = vshll.u32 %v1431, 16
        %v1793 = vrot.slane %v1791, 5
        %v1794 = vsel %vm384, %v1789, %v1793
        %v1796 = vshrl.u32 %v1432, 16
        %v1798 = vrot.slane %v1796, 4
        %v1799 = vshll.u32 %v1432, 16
        %v1801 = vrot.slane %v1799, 5
        %v1802 = vor.u32 %v1798, %v1801
        %v1803 = vrot.slane %v1802, 4
        %v1805 = vshll.u32 %v1433, 16
        %v1807 = vrot.slane %v1805, 5
        %v1808 = vsel %vm384, %v1803, %v1807
        %v1809 = vshrl.u32 %v1433, 16
        %v1811 = vrot.slane %v1809, 4
        %v1812 = vor.u32 %v1811, %v1807
        %v1813 = vrot.slane %v1812, 4
        %v1815 = vshll.u32 %v1434, 16
        %v1817 = vrot.slane %v1815, 5
        %v1818 = vsel %vm384, %v1813, %v1817
        %v1819 = vunpack.c.l.b16 %v1448
        %v1820 = vunpack.c.l.b16 %v1458
        %v1821 = vunpack.c.l.b16 %v1472
        %v1822 = vunpack.c.l.b16 %v1482
        %v1823 = vunpack.c.l.b16 %v1496
        %v1824 = vunpack.c.l.b16 %v1506
        %v1825 = vunpack.c.l.b16 %v1520
        %v1826 = vunpack.c.l.b16 %v1530
        %v1827 = vunpack.c.l.b16 %v1544
        %v1828 = vunpack.c.l.b16 %v1554
        %v1829 = vunpack.c.l.b16 %v1568
        %v1830 = vunpack.c.l.b16 %v1578
        %v1831 = vunpack.c.l.b16 %v1592
        %v1832 = vunpack.c.l.b16 %v1602
        %v1833 = vunpack.c.l.b16 %v1616
        %v1834 = vunpack.c.l.b16 %v1626
        %v1835 = vunpack.c.l.b16 %v1640
        %v1836 = vunpack.c.l.b16 %v1650
        %v1837 = vunpack.c.l.b16 %v1664
        %v1838 = vunpack.c.l.b16 %v1674
        %v1839 = vunpack.c.l.b16 %v1688
        %v1840 = vunpack.c.l.b16 %v1698
        %v1841 = vunpack.c.l.b16 %v1712
        %v1842 = vunpack.c.l.b16 %v1722
        %v1843 = vunpack.c.l.b16 %v1736
        %v1844 = vunpack.c.l.b16 %v1746
        %v1845 = vunpack.c.l.b16 %v1760
        %v1846 = vunpack.c.l.b16 %v1770
        %v1847 = vunpack.c.l.b16 %v1784
        %v1848 = vunpack.c.l.b16 %v1794
        %v1849 = vunpack.c.l.b16 %v1808
        %v1850 = vunpack.c.l.b16 %v1818
        %v1851 = vpack.c.b16 %v1820, %v1819
        %v1852 = vpack.c.b16 %v1822, %v1821
        %v1853 = vpack.c.b16 %v1824, %v1823
        %v1854 = vpack.c.b16 %v1826, %v1825
        %v1855 = vpack.c.b16 %v1828, %v1827
        %v1856 = vpack.c.b16 %v1830, %v1829
        %v1857 = vpack.c.b16 %v1832, %v1831
        %v1858 = vpack.c.b16 %v1834, %v1833
        %v1859 = vpack.c.b16 %v1836, %v1835
        %v1860 = vpack.c.b16 %v1838, %v1837
        %v1861 = vpack.c.b16 %v1840, %v1839
        %v1862 = vpack.c.b16 %v1842, %v1841
        %v1863 = vpack.c.b16 %v1844, %v1843
        %v1864 = vpack.c.b16 %v1846, %v1845
        %v1865 = vpack.c.b16 %v1848, %v1847
        %v1866 = vpack.c.b16 %v1850, %v1849
        %1867 = vrot.lane.b32.xlu0 %v1851, 16
        %v1868 = vpop.permute.xlu0 %1867
        %1869 = vrot.lane.b32.xlu0 %v1852, 16
        %v1870 = vpop.permute.xlu0 %1869
        %1871 = vrot.lane.b32.xlu0 %v1853, 16
        %v1872 = vpop.permute.xlu0 %1871
        %1873 = vrot.lane.b32.xlu0 %v1854, 16
        %v1874 = vpop.permute.xlu0 %1873
        %1875 = vrot.lane.b32.xlu0 %v1855, 16
        %v1876 = vpop.permute.xlu0 %1875
        %1877 = vrot.lane.b32.xlu0 %v1856, 16
        %v1878 = vpop.permute.xlu0 %1877
        %1879 = vrot.lane.b32.xlu0 %v1857, 16
        %v1880 = vpop.permute.xlu0 %1879
        %1881 = vrot.lane.b32.xlu0 %v1858, 16
        %v1882 = vpop.permute.xlu0 %1881
        %1883 = vrot.lane.b32.xlu0 %v1859, 16
        %v1884 = vpop.permute.xlu0 %1883
        %1885 = vrot.lane.b32.xlu0 %v1860, 16
        %v1886 = vpop.permute.xlu0 %1885
        %1887 = vrot.lane.b32.xlu0 %v1861, 16
        %v1888 = vpop.permute.xlu0 %1887
        %1889 = vrot.lane.b32.xlu0 %v1862, 16
        %v1890 = vpop.permute.xlu0 %1889
        %1891 = vrot.lane.b32.xlu0 %v1863, 16
        %v1892 = vpop.permute.xlu0 %1891
        %1893 = vrot.lane.b32.xlu0 %v1864, 16
        %v1894 = vpop.permute.xlu0 %1893
        %1895 = vrot.lane.b32.xlu0 %v1865, 16
        %v1896 = vpop.permute.xlu0 %1895
        %1897 = vrot.lane.b32.xlu0 %v1866, 16
        %v1898 = vpop.permute.xlu0 %1897
        %vm1915 = vcmask 162944
        %1916 = vst.msk [vmem:[#allocation2] sm:$0xff] %vm1915, %v1868
        %1917 = vst.msk [vmem:[#allocation2 + $0x8] sm:$0xff] %vm1915, %v1870
        %1918 = vst.msk [vmem:[#allocation2 + $0x10] sm:$0xff] %vm1915, %v1872
        %1919 = vst.msk [vmem:[#allocation2 + $0x18] sm:$0xff] %vm1915, %v1874
        %1920 = vst.msk [vmem:[#allocation2 + $0x20] sm:$0xff] %vm1915, %v1876
        %1921 = vst.msk [vmem:[#allocation2 + $0x28] sm:$0xff] %vm1915, %v1878
        %1922 = vst.msk [vmem:[#allocation2 + $0x30] sm:$0xff] %vm1915, %v1880
        %1923 = vst.msk [vmem:[#allocation2 + $0x38] sm:$0xff] %vm1915, %v1882
        %1924 = vst.msk [vmem:[#allocation2 + $0x40] sm:$0xff] %vm1915, %v1884
        %1925 = vst.msk [vmem:[#allocation2 + $0x48] sm:$0xff] %vm1915, %v1886
        %1926 = vst.msk [vmem:[#allocation2 + $0x50] sm:$0xff] %vm1915, %v1888
        %1927 = vst.msk [vmem:[#allocation2 + $0x58] sm:$0xff] %vm1915, %v1890
        %1928 = vst.msk [vmem:[#allocation2 + $0x60] sm:$0xff] %vm1915, %v1892
        %1929 = vst.msk [vmem:[#allocation2 + $0x68] sm:$0xff] %vm1915, %v1894
        %1930 = vst.msk [vmem:[#allocation2 + $0x70] sm:$0xff] %vm1915, %v1896
        %1931 = vst.msk [vmem:[#allocation2 + $0x78] sm:$0xff] %vm1915, %v1898
        %v1932 = vld [vmem:[%s1209] sm:$0xe]
        %v1933 = vld [vmem:[%s1209 + $0x4] sm:$0xf]
        %v1934 = vld [vmem:[%s1209 + $0x8] sm:$0x1]
        %v1935 = vld [vmem:[%s1209 + $0xc] sm:$0xe]
        %v1936 = vld [vmem:[%s1209 + $0x10] sm:$0xf]
        %v1937 = vld [vmem:[%s1209 + $0x14] sm:$0x1]
        %v1938 = vld [vmem:[%s1209 + $0x18] sm:$0xe]
        %v1939 = vld [vmem:[%s1209 + $0x1c] sm:$0xf]
        %v1940 = vld [vmem:[%s1209 + $0x20] sm:$0x1]
        %v1941 = vld [vmem:[%s1209 + $0x24] sm:$0xe]
        %v1942 = vld [vmem:[%s1209 + $0x28] sm:$0xf]
        %v1943 = vld [vmem:[%s1209 + $0x2c] sm:$0x1]
        %v1944 = vld [vmem:[%s1209 + $0x30] sm:$0xe]
        %v1945 = vld [vmem:[%s1209 + $0x34] sm:$0xf]
        %v1946 = vld [vmem:[%s1209 + $0x38] sm:$0x1]
        %v1947 = vld [vmem:[%s1209 + $0x3c] sm:$0xe]
        %v1948 = vld [vmem:[%s1209 + $0x40] sm:$0xf]
        %v1949 = vld [vmem:[%s1209 + $0x44] sm:$0x1]
        %v1950 = vld [vmem:[%s1209 + $0x48] sm:$0xe]
        %v1951 = vld [vmem:[%s1209 + $0x4c] sm:$0xf]
        %v1952 = vld [vmem:[%s1209 + $0x50] sm:$0x1]
        %v1953 = vld [vmem:[%s1209 + $0x54] sm:$0xe]
        %v1954 = vld [vmem:[%s1209 + $0x58] sm:$0xf]
        %v1955 = vld [vmem:[%s1209 + $0x5c] sm:$0x1]
        %v1956 = vld [vmem:[%s1209 + $0x60] sm:$0xe]
        %v1957 = vld [vmem:[%s1209 + $0x64] sm:$0xf]
        %v1958 = vld [vmem:[%s1209 + $0x68] sm:$0x1]
        %v1959 = vld [vmem:[%s1209 + $0x6c] sm:$0xe]
        %v1960 = vld [vmem:[%s1209 + $0x70] sm:$0xf]
        %v1961 = vld [vmem:[%s1209 + $0x74] sm:$0x1]
        %v1962 = vld [vmem:[%s1209 + $0x78] sm:$0xe]
        %v1963 = vld [vmem:[%s1209 + $0x7c] sm:$0xf]
        %v1964 = vld [vmem:[%s1209 + $0x80] sm:$0x1]
        %v1965 = vld [vmem:[%s1209 + $0x84] sm:$0xe]
        %v1966 = vld [vmem:[%s1209 + $0x88] sm:$0xf]
        %v1967 = vld [vmem:[%s1209 + $0x8c] sm:$0x1]
        %v1968 = vld [vmem:[%s1209 + $0x90] sm:$0xe]
        %v1969 = vld [vmem:[%s1209 + $0x94] sm:$0xf]
        %v1970 = vld [vmem:[%s1209 + $0x98] sm:$0x1]
        %v1971 = vld [vmem:[%s1209 + $0x9c] sm:$0xe]
        %v1972 = vld [vmem:[%s1209 + $0xa0] sm:$0xf]
        %v1973 = vld [vmem:[%s1209 + $0xa4] sm:$0x1]
        %v1974 = vld [vmem:[%s1209 + $0xa8] sm:$0xe]
        %v1975 = vld [vmem:[%s1209 + $0xac] sm:$0xf]
        %v1976 = vld [vmem:[%s1209 + $0xb0] sm:$0x1]
        %v1977 = vld [vmem:[%s1209 + $0xb4] sm:$0xe]
        %v1978 = vld [vmem:[%s1209 + $0xb8] sm:$0xf]
        %v1979 = vld [vmem:[%s1209 + $0xbc] sm:$0x1]
        %v2028 = vrot.slane %v1932, 5
        %v2029 = vrot.slane %v2028, 4
        %v2030 = vrot.slane %v1933, 5
        %v2031 = vsel %vm980, %v2029, %v2030
        %v2032 = vrot.slane %v2030, 4
        %v2033 = vrot.slane %v1934, 5
        %v2034 = vsel %vm980, %v2032, %v2033
        %v2035 = vrot.slane %v1935, 5
        %v2036 = vrot.slane %v2035, 4
        %v2037 = vrot.slane %v1936, 5
        %v2038 = vsel %vm980, %v2036, %v2037
        %v2039 = vrot.slane %v2037, 4
        %v2040 = vrot.slane %v1937, 5
        %v2041 = vsel %vm980, %v2039, %v2040
        %v2042 = vrot.slane %v1938, 5
        %v2043 = vrot.slane %v2042, 4
        %v2044 = vrot.slane %v1939, 5
        %v2045 = vsel %vm980, %v2043, %v2044
        %v2046 = vrot.slane %v2044, 4
        %v2047 = vrot.slane %v1940, 5
        %v2048 = vsel %vm980, %v2046, %v2047
        %v2049 = vrot.slane %v1941, 5
        %v2050 = vrot.slane %v2049, 4
        %v2051 = vrot.slane %v1942, 5
        %v2052 = vsel %vm980, %v2050, %v2051
        %v2053 = vrot.slane %v2051, 4
        %v2054 = vrot.slane %v1943, 5
        %v2055 = vsel %vm980, %v2053, %v2054
        %v2056 = vrot.slane %v1944, 5
        %v2057 = vrot.slane %v2056, 4
        %v2058 = vrot.slane %v1945, 5
        %v2059 = vsel %vm980, %v2057, %v2058
        %v2060 = vrot.slane %v2058, 4
        %v2061 = vrot.slane %v1946, 5
        %v2062 = vsel %vm980, %v2060, %v2061
        %v2063 = vrot.slane %v1947, 5
        %v2064 = vrot.slane %v2063, 4
        %v2065 = vrot.slane %v1948, 5
        %v2066 = vsel %vm980, %v2064, %v2065
        %v2067 = vrot.slane %v2065, 4
        %v2068 = vrot.slane %v1949, 5
        %v2069 = vsel %vm980, %v2067, %v2068
        %v2070 = vrot.slane %v1950, 5
        %v2071 = vrot.slane %v2070, 4
        %v2072 = vrot.slane %v1951, 5
        %v2073 = vsel %vm980, %v2071, %v2072
        %v2074 = vrot.slane %v2072, 4
        %v2075 = vrot.slane %v1952, 5
        %v2076 = vsel %vm980, %v2074, %v2075
        %v2077 = vrot.slane %v1953, 5
        %v2078 = vrot.slane %v2077, 4
        %v2079 = vrot.slane %v1954, 5
        %v2080 = vsel %vm980, %v2078, %v2079
        %v2081 = vrot.slane %v2079, 4
        %v2082 = vrot.slane %v1955, 5
        %v2083 = vsel %vm980, %v2081, %v2082
        %v2084 = vrot.slane %v1956, 5
        %v2085 = vrot.slane %v2084, 4
        %v2086 = vrot.slane %v1957, 5
        %v2087 = vsel %vm980, %v2085, %v2086
        %v2088 = vrot.slane %v2086, 4
        %v2089 = vrot.slane %v1958, 5
        %v2090 = vsel %vm980, %v2088, %v2089
        %v2091 = vrot.slane %v1959, 5
        %v2092 = vrot.slane %v2091, 4
        %v2093 = vrot.slane %v1960, 5
        %v2094 = vsel %vm980, %v2092, %v2093
        %v2095 = vrot.slane %v2093, 4
        %v2096 = vrot.slane %v1961, 5
        %v2097 = vsel %vm980, %v2095, %v2096
        %v2098 = vrot.slane %v1962, 5
        %v2099 = vrot.slane %v2098, 4
        %v2100 = vrot.slane %v1963, 5
        %v2101 = vsel %vm980, %v2099, %v2100
        %v2102 = vrot.slane %v2100, 4
        %v2103 = vrot.slane %v1964, 5
        %v2104 = vsel %vm980, %v2102, %v2103
        %v2105 = vrot.slane %v1965, 5
        %v2106 = vrot.slane %v2105, 4
        %v2107 = vrot.slane %v1966, 5
        %v2108 = vsel %vm980, %v2106, %v2107
        %v2109 = vrot.slane %v2107, 4
        %v2110 = vrot.slane %v1967, 5
        %v2111 = vsel %vm980, %v2109, %v2110
        %v2112 = vrot.slane %v1968, 5
        %v2113 = vrot.slane %v2112, 4
        %v2114 = vrot.slane %v1969, 5
        %v2115 = vsel %vm980, %v2113, %v2114
        %v2116 = vrot.slane %v2114, 4
        %v2117 = vrot.slane %v1970, 5
        %v2118 = vsel %vm980, %v2116, %v2117
        %v2119 = vrot.slane %v1971, 5
        %v2120 = vrot.slane %v2119, 4
        %v2121 = vrot.slane %v1972, 5
        %v2122 = vsel %vm980, %v2120, %v2121
        %v2123 = vrot.slane %v2121, 4
        %v2124 = vrot.slane %v1973, 5
        %v2125 = vsel %vm980, %v2123, %v2124
        %v2126 = vrot.slane %v1974, 5
        %v2127 = vrot.slane %v2126, 4
        %v2128 = vrot.slane %v1975, 5
        %v2129 = vsel %vm980, %v2127, %v2128
        %v2130 = vrot.slane %v2128, 4
        %v2131 = vrot.slane %v1976, 5
        %v2132 = vsel %vm980, %v2130, %v2131
        %v2133 = vrot.slane %v1977, 5
        %v2134 = vrot.slane %v2133, 4
        %v2135 = vrot.slane %v1978, 5
        %v2136 = vsel %vm980, %v2134, %v2135
        %v2137 = vrot.slane %v2135, 4
        %v2138 = vrot.slane %v1979, 5
        %v2139 = vsel %vm980, %v2137, %v2138
        %v2140 = vunpack.c.l.b16 %v2031
        %v2141 = vunpack.c.l.b16 %v2034
        %v2142 = vunpack.c.l.b16 %v2038
        %v2143 = vunpack.c.l.b16 %v2041
        %v2144 = vunpack.c.l.b16 %v2045
        %v2145 = vunpack.c.l.b16 %v2048
        %v2146 = vunpack.c.l.b16 %v2052
        %v2147 = vunpack.c.l.b16 %v2055
        %v2148 = vunpack.c.l.b16 %v2059
        %v2149 = vunpack.c.l.b16 %v2062
        %v2150 = vunpack.c.l.b16 %v2066
        %v2151 = vunpack.c.l.b16 %v2069
        %v2152 = vunpack.c.l.b16 %v2073
        %v2153 = vunpack.c.l.b16 %v2076
        %v2154 = vunpack.c.l.b16 %v2080
        %v2155 = vunpack.c.l.b16 %v2083
        %v2156 = vunpack.c.l.b16 %v2087
        %v2157 = vunpack.c.l.b16 %v2090
        %v2158 = vunpack.c.l.b16 %v2094
        %v2159 = vunpack.c.l.b16 %v2097
        %v2160 = vunpack.c.l.b16 %v2101
        %v2161 = vunpack.c.l.b16 %v2104
        %v2162 = vunpack.c.l.b16 %v2108
        %v2163 = vunpack.c.l.b16 %v2111
        %v2164 = vunpack.c.l.b16 %v2115
        %v2165 = vunpack.c.l.b16 %v2118
        %v2166 = vunpack.c.l.b16 %v2122
        %v2167 = vunpack.c.l.b16 %v2125
        %v2168 = vunpack.c.l.b16 %v2129
        %v2169 = vunpack.c.l.b16 %v2132
        %v2170 = vunpack.c.l.b16 %v2136
        %v2171 = vunpack.c.l.b16 %v2139
        %v2172 = vpack.c.b16 %v2141, %v2140
        %v2173 = vpack.c.b16 %v2143, %v2142
        %v2174 = vpack.c.b16 %v2145, %v2144
        %v2175 = vpack.c.b16 %v2147, %v2146
        %v2176 = vpack.c.b16 %v2149, %v2148
        %v2177 = vpack.c.b16 %v2151, %v2150
        %v2178 = vpack.c.b16 %v2153, %v2152
        %v2179 = vpack.c.b16 %v2155, %v2154
        %v2180 = vpack.c.b16 %v2157, %v2156
        %v2181 = vpack.c.b16 %v2159, %v2158
        %v2182 = vpack.c.b16 %v2161, %v2160
        %v2183 = vpack.c.b16 %v2163, %v2162
        %v2184 = vpack.c.b16 %v2165, %v2164
        %v2185 = vpack.c.b16 %v2167, %v2166
        %v2186 = vpack.c.b16 %v2169, %v2168
        %v2187 = vpack.c.b16 %v2171, %v2170
        %2188 = vrot.lane.b32.xlu0 %v2172, 20
        %v2189 = vpop.permute.xlu0 %2188
        %2190 = vrot.lane.b32.xlu0 %v2173, 20
        %v2191 = vpop.permute.xlu0 %2190
        %2192 = vrot.lane.b32.xlu0 %v2174, 20
        %v2193 = vpop.permute.xlu0 %2192
        %2194 = vrot.lane.b32.xlu0 %v2175, 20
        %v2195 = vpop.permute.xlu0 %2194
        %2196 = vrot.lane.b32.xlu0 %v2176, 20
        %v2197 = vpop.permute.xlu0 %2196
        %2198 = vrot.lane.b32.xlu0 %v2177, 20
        %v2199 = vpop.permute.xlu0 %2198
        %2200 = vrot.lane.b32.xlu0 %v2178, 20
        %v2201 = vpop.permute.xlu0 %2200
        %2202 = vrot.lane.b32.xlu0 %v2179, 20
        %v2203 = vpop.permute.xlu0 %2202
        %2204 = vrot.lane.b32.xlu0 %v2180, 20
        %v2205 = vpop.permute.xlu0 %2204
        %2206 = vrot.lane.b32.xlu0 %v2181, 20
        %v2207 = vpop.permute.xlu0 %2206
        %2208 = vrot.lane.b32.xlu0 %v2182, 20
        %v2209 = vpop.permute.xlu0 %2208
        %2210 = vrot.lane.b32.xlu0 %v2183, 20
        %v2211 = vpop.permute.xlu0 %2210
        %2212 = vrot.lane.b32.xlu0 %v2184, 20
        %v2213 = vpop.permute.xlu0 %2212
        %2214 = vrot.lane.b32.xlu0 %v2185, 20
        %v2215 = vpop.permute.xlu0 %2214
        %2216 = vrot.lane.b32.xlu0 %v2186, 20
        %v2217 = vpop.permute.xlu0 %2216
        %2218 = vrot.lane.b32.xlu0 %v2187, 20
        %v2219 = vpop.permute.xlu0 %2218
        %vm2236 = vcmask 195744
        %2237 = vst.msk [vmem:[#allocation2] sm:$0xff] %vm2236, %v2189
        %2238 = vst.msk [vmem:[#allocation2 + $0x8] sm:$0xff] %vm2236, %v2191
        %2239 = vst.msk [vmem:[#allocation2 + $0x10] sm:$0xff] %vm2236, %v2193
        %2240 = vst.msk [vmem:[#allocation2 + $0x18] sm:$0xff] %vm2236, %v2195
        %2241 = vst.msk [vmem:[#allocation2 + $0x20] sm:$0xff] %vm2236, %v2197
        %2242 = vst.msk [vmem:[#allocation2 + $0x28] sm:$0xff] %vm2236, %v2199
        %2243 = vst.msk [vmem:[#allocation2 + $0x30] sm:$0xff] %vm2236, %v2201
        %2244 = vst.msk [vmem:[#allocation2 + $0x38] sm:$0xff] %vm2236, %v2203
        %2245 = vst.msk [vmem:[#allocation2 + $0x40] sm:$0xff] %vm2236, %v2205
        %2246 = vst.msk [vmem:[#allocation2 + $0x48] sm:$0xff] %vm2236, %v2207
        %2247 = vst.msk [vmem:[#allocation2 + $0x50] sm:$0xff] %vm2236, %v2209
        %2248 = vst.msk [vmem:[#allocation2 + $0x58] sm:$0xff] %vm2236, %v2211
        %2249 = vst.msk [vmem:[#allocation2 + $0x60] sm:$0xff] %vm2236, %v2213
        %2250 = vst.msk [vmem:[#allocation2 + $0x68] sm:$0xff] %vm2236, %v2215
        %2251 = vst.msk [vmem:[#allocation2 + $0x70] sm:$0xff] %vm2236, %v2217
        %2252 = vst.msk [vmem:[#allocation2 + $0x78] sm:$0xff] %vm2236, %v2219
        %s2253 = sadd.s32 %s185, 2
        %s2254 = smul.u32 %s2253, 3
        %s2255 = smul.addr %s2254, 4
        %s2256 = scalar_lea.vmem %s182, %s2255
        %v2257 = vld [vmem:[%s2256] sm:$0xf]
        %v2258 = vld [vmem:[%s2256 + $0x4] sm:$0xf]
        %v2259 = vld [vmem:[%s2256 + $0xc] sm:$0xf]
        %v2260 = vld [vmem:[%s2256 + $0x10] sm:$0xf]
        %v2261 = vld [vmem:[%s2256 + $0x18] sm:$0xf]
        %v2262 = vld [vmem:[%s2256 + $0x1c] sm:$0xf]
        %v2263 = vld [vmem:[%s2256 + $0x24] sm:$0xf]
        %v2264 = vld [vmem:[%s2256 + $0x28] sm:$0xf]
        %v2265 = vld [vmem:[%s2256 + $0x30] sm:$0xf]
        %v2266 = vld [vmem:[%s2256 + $0x34] sm:$0xf]
        %v2267 = vld [vmem:[%s2256 + $0x3c] sm:$0xf]
        %v2268 = vld [vmem:[%s2256 + $0x40] sm:$0xf]
        %v2269 = vld [vmem:[%s2256 + $0x48] sm:$0xf]
        %v2270 = vld [vmem:[%s2256 + $0x4c] sm:$0xf]
        %v2271 = vld [vmem:[%s2256 + $0x54] sm:$0xf]
        %v2272 = vld [vmem:[%s2256 + $0x58] sm:$0xf]
        %v2273 = vld [vmem:[%s2256 + $0x60] sm:$0xf]
        %v2274 = vld [vmem:[%s2256 + $0x64] sm:$0xf]
        %v2275 = vld [vmem:[%s2256 + $0x6c] sm:$0xf]
        %v2276 = vld [vmem:[%s2256 + $0x70] sm:$0xf]
        %v2277 = vld [vmem:[%s2256 + $0x78] sm:$0xf]
        %v2278 = vld [vmem:[%s2256 + $0x7c] sm:$0xf]
        %v2279 = vld [vmem:[%s2256 + $0x84] sm:$0xf]
        %v2280 = vld [vmem:[%s2256 + $0x88] sm:$0xf]
        %v2281 = vld [vmem:[%s2256 + $0x90] sm:$0xf]
        %v2282 = vld [vmem:[%s2256 + $0x94] sm:$0xf]
        %v2283 = vld [vmem:[%s2256 + $0x9c] sm:$0xf]
        %v2284 = vld [vmem:[%s2256 + $0xa0] sm:$0xf]
        %v2285 = vld [vmem:[%s2256 + $0xa8] sm:$0xf]
        %v2286 = vld [vmem:[%s2256 + $0xac] sm:$0xf]
        %v2287 = vld [vmem:[%s2256 + $0xb4] sm:$0xf]
        %v2288 = vld [vmem:[%s2256 + $0xb8] sm:$0xf]
        %v2321 = vunpack.c.l.b16 %v2257
        %v2322 = vunpack.c.l.b16 %v2258
        %v2323 = vunpack.c.l.b16 %v2259
        %v2324 = vunpack.c.l.b16 %v2260
        %v2325 = vunpack.c.l.b16 %v2261
        %v2326 = vunpack.c.l.b16 %v2262
        %v2327 = vunpack.c.l.b16 %v2263
        %v2328 = vunpack.c.l.b16 %v2264
        %v2329 = vunpack.c.l.b16 %v2265
        %v2330 = vunpack.c.l.b16 %v2266
        %v2331 = vunpack.c.l.b16 %v2267
        %v2332 = vunpack.c.l.b16 %v2268
        %v2333 = vunpack.c.l.b16 %v2269
        %v2334 = vunpack.c.l.b16 %v2270
        %v2335 = vunpack.c.l.b16 %v2271
        %v2336 = vunpack.c.l.b16 %v2272
        %v2337 = vunpack.c.l.b16 %v2273
        %v2338 = vunpack.c.l.b16 %v2274
        %v2339 = vunpack.c.l.b16 %v2275
        %v2340 = vunpack.c.l.b16 %v2276
        %v2341 = vunpack.c.l.b16 %v2277
        %v2342 = vunpack.c.l.b16 %v2278
        %v2343 = vunpack.c.l.b16 %v2279
        %v2344 = vunpack.c.l.b16 %v2280
        %v2345 = vunpack.c.l.b16 %v2281
        %v2346 = vunpack.c.l.b16 %v2282
        %v2347 = vunpack.c.l.b16 %v2283
        %v2348 = vunpack.c.l.b16 %v2284
        %v2349 = vunpack.c.l.b16 %v2285
        %v2350 = vunpack.c.l.b16 %v2286
        %v2351 = vunpack.c.l.b16 %v2287
        %v2352 = vunpack.c.l.b16 %v2288
        %v2353 = vpack.c.b16 %v2322, %v2321
        %v2354 = vpack.c.b16 %v2324, %v2323
        %v2355 = vpack.c.b16 %v2326, %v2325
        %v2356 = vpack.c.b16 %v2328, %v2327
        %v2357 = vpack.c.b16 %v2330, %v2329
        %v2358 = vpack.c.b16 %v2332, %v2331
        %v2359 = vpack.c.b16 %v2334, %v2333
        %v2360 = vpack.c.b16 %v2336, %v2335
        %v2361 = vpack.c.b16 %v2338, %v2337
        %v2362 = vpack.c.b16 %v2340, %v2339
        %v2363 = vpack.c.b16 %v2342, %v2341
        %v2364 = vpack.c.b16 %v2344, %v2343
        %v2365 = vpack.c.b16 %v2346, %v2345
        %v2366 = vpack.c.b16 %v2348, %v2347
        %v2367 = vpack.c.b16 %v2350, %v2349
        %v2368 = vpack.c.b16 %v2352, %v2351
        %2369 = vrot.lane.b32.xlu0 %v2353, 24
        %v2370 = vpop.permute.xlu0 %2369
        %2371 = vrot.lane.b32.xlu0 %v2354, 24
        %v2372 = vpop.permute.xlu0 %2371
        %2373 = vrot.lane.b32.xlu0 %v2355, 24
        %v2374 = vpop.permute.xlu0 %2373
        %2375 = vrot.lane.b32.xlu0 %v2356, 24
        %v2376 = vpop.permute.xlu0 %2375
        %2377 = vrot.lane.b32.xlu0 %v2357, 24
        %v2378 = vpop.permute.xlu0 %2377
        %2379 = vrot.lane.b32.xlu0 %v2358, 24
        %v2380 = vpop.permute.xlu0 %2379
        %2381 = vrot.lane.b32.xlu0 %v2359, 24
        %v2382 = vpop.permute.xlu0 %2381
        %2383 = vrot.lane.b32.xlu0 %v2360, 24
        %v2384 = vpop.permute.xlu0 %2383
        %2385 = vrot.lane.b32.xlu0 %v2361, 24
        %v2386 = vpop.permute.xlu0 %2385
        %2387 = vrot.lane.b32.xlu0 %v2362, 24
        %v2388 = vpop.permute.xlu0 %2387
        %2389 = vrot.lane.b32.xlu0 %v2363, 24
        %v2390 = vpop.permute.xlu0 %2389
        %2391 = vrot.lane.b32.xlu0 %v2364, 24
        %v2392 = vpop.permute.xlu0 %2391
        %2393 = vrot.lane.b32.xlu0 %v2365, 24
        %v2394 = vpop.permute.xlu0 %2393
        %2395 = vrot.lane.b32.xlu0 %v2366, 24
        %v2396 = vpop.permute.xlu0 %2395
        %2397 = vrot.lane.b32.xlu0 %v2367, 24
        %v2398 = vpop.permute.xlu0 %2397
        %2399 = vrot.lane.b32.xlu0 %v2368, 24
        %v2400 = vpop.permute.xlu0 %2399
        %vm2417 = vcmask 228544
        %2418 = vst.msk [vmem:[#allocation2] sm:$0xff] %vm2417, %v2370
        %2419 = vst.msk [vmem:[#allocation2 + $0x8] sm:$0xff] %vm2417, %v2372
        %2420 = vst.msk [vmem:[#allocation2 + $0x10] sm:$0xff] %vm2417, %v2374
        %2421 = vst.msk [vmem:[#allocation2 + $0x18] sm:$0xff] %vm2417, %v2376
        %2422 = vst.msk [vmem:[#allocation2 + $0x20] sm:$0xff] %vm2417, %v2378
        %2423 = vst.msk [vmem:[#allocation2 + $0x28] sm:$0xff] %vm2417, %v2380
        %2424 = vst.msk [vmem:[#allocation2 + $0x30] sm:$0xff] %vm2417, %v2382
        %2425 = vst.msk [vmem:[#allocation2 + $0x38] sm:$0xff] %vm2417, %v2384
        %2426 = vst.msk [vmem:[#allocation2 + $0x40] sm:$0xff] %vm2417, %v2386
        %2427 = vst.msk [vmem:[#allocation2 + $0x48] sm:$0xff] %vm2417, %v2388
        %2428 = vst.msk [vmem:[#allocation2 + $0x50] sm:$0xff] %vm2417, %v2390
        %2429 = vst.msk [vmem:[#allocation2 + $0x58] sm:$0xff] %vm2417, %v2392
        %2430 = vst.msk [vmem:[#allocation2 + $0x60] sm:$0xff] %vm2417, %v2394
        %2431 = vst.msk [vmem:[#allocation2 + $0x68] sm:$0xff] %vm2417, %v2396
        %2432 = vst.msk [vmem:[#allocation2 + $0x70] sm:$0xff] %vm2417, %v2398
        %2433 = vst.msk [vmem:[#allocation2 + $0x78] sm:$0xff] %vm2417, %v2400
        %v2434 = vld [vmem:[%s2256] sm:$0xf]
        %v2435 = vld [vmem:[%s2256 + $0x4] sm:$0xf]
        %v2436 = vld [vmem:[%s2256 + $0x8] sm:$0x1]
        %v2437 = vld [vmem:[%s2256 + $0xc] sm:$0xf]
        %v2438 = vld [vmem:[%s2256 + $0x10] sm:$0xf]
        %v2439 = vld [vmem:[%s2256 + $0x14] sm:$0x1]
        %v2440 = vld [vmem:[%s2256 + $0x18] sm:$0xf]
        %v2441 = vld [vmem:[%s2256 + $0x1c] sm:$0xf]
        %v2442 = vld [vmem:[%s2256 + $0x20] sm:$0x1]
        %v2443 = vld [vmem:[%s2256 + $0x24] sm:$0xf]
        %v2444 = vld [vmem:[%s2256 + $0x28] sm:$0xf]
        %v2445 = vld [vmem:[%s2256 + $0x2c] sm:$0x1]
        %v2446 = vld [vmem:[%s2256 + $0x30] sm:$0xf]
        %v2447 = vld [vmem:[%s2256 + $0x34] sm:$0xf]
        %v2448 = vld [vmem:[%s2256 + $0x38] sm:$0x1]
        %v2449 = vld [vmem:[%s2256 + $0x3c] sm:$0xf]
        %v2450 = vld [vmem:[%s2256 + $0x40] sm:$0xf]
        %v2451 = vld [vmem:[%s2256 + $0x44] sm:$0x1]
        %v2452 = vld [vmem:[%s2256 + $0x48] sm:$0xf]
        %v2453 = vld [vmem:[%s2256 + $0x4c] sm:$0xf]
        %v2454 = vld [vmem:[%s2256 + $0x50] sm:$0x1]
        %v2455 = vld [vmem:[%s2256 + $0x54] sm:$0xf]
        %v2456 = vld [vmem:[%s2256 + $0x58] sm:$0xf]
        %v2457 = vld [vmem:[%s2256 + $0x5c] sm:$0x1]
        %v2458 = vld [vmem:[%s2256 + $0x60] sm:$0xf]
        %v2459 = vld [vmem:[%s2256 + $0x64] sm:$0xf]
        %v2460 = vld [vmem:[%s2256 + $0x68] sm:$0x1]
        %v2461 = vld [vmem:[%s2256 + $0x6c] sm:$0xf]
        %v2462 = vld [vmem:[%s2256 + $0x70] sm:$0xf]
        %v2463 = vld [vmem:[%s2256 + $0x74] sm:$0x1]
        %v2464 = vld [vmem:[%s2256 + $0x78] sm:$0xf]
        %v2465 = vld [vmem:[%s2256 + $0x7c] sm:$0xf]
        %v2466 = vld [vmem:[%s2256 + $0x80] sm:$0x1]
        %v2467 = vld [vmem:[%s2256 + $0x84] sm:$0xf]
        %v2468 = vld [vmem:[%s2256 + $0x88] sm:$0xf]
        %v2469 = vld [vmem:[%s2256 + $0x8c] sm:$0x1]
        %v2470 = vld [vmem:[%s2256 + $0x90] sm:$0xf]
        %v2471 = vld [vmem:[%s2256 + $0x94] sm:$0xf]
        %v2472 = vld [vmem:[%s2256 + $0x98] sm:$0x1]
        %v2473 = vld [vmem:[%s2256 + $0x9c] sm:$0xf]
        %v2474 = vld [vmem:[%s2256 + $0xa0] sm:$0xf]
        %v2475 = vld [vmem:[%s2256 + $0xa4] sm:$0x1]
        %v2476 = vld [vmem:[%s2256 + $0xa8] sm:$0xf]
        %v2477 = vld [vmem:[%s2256 + $0xac] sm:$0xf]
        %v2478 = vld [vmem:[%s2256 + $0xb0] sm:$0x1]
        %v2479 = vld [vmem:[%s2256 + $0xb4] sm:$0xf]
        %v2480 = vld [vmem:[%s2256 + $0xb8] sm:$0xf]
        %v2481 = vld [vmem:[%s2256 + $0xbc] sm:$0x1]
        %v2483 = vshrl.u32 %v2434, 16
        %v2485 = vrot.slane %v2483, 4
        %v2486 = vshll.u32 %v2434, 16
        %v2488 = vrot.slane %v2486, 5
        %v2489 = vor.u32 %v2485, %v2488
        %v2490 = vrot.slane %v2489, 4
        %v2492 = vshll.u32 %v2435, 16
        %v2494 = vrot.slane %v2492, 5
        %v2495 = vsel %vm384, %v2490, %v2494
        %v2496 = vshrl.u32 %v2435, 16
        %v2498 = vrot.slane %v2496, 4
        %v2499 = vor.u32 %v2498, %v2494
        %v2500 = vrot.slane %v2499, 4
        %v2502 = vshll.u32 %v2436, 16
        %v2504 = vrot.slane %v2502, 5
        %v2505 = vsel %vm384, %v2500, %v2504
        %v2507 = vshrl.u32 %v2437, 16
        %v2509 = vrot.slane %v2507, 4
        %v2510 = vshll.u32 %v2437, 16
        %v2512 = vrot.slane %v2510, 5
        %v2513 = vor.u32 %v2509, %v2512
        %v2514 = vrot.slane %v2513, 4
        %v2516 = vshll.u32 %v2438, 16
        %v2518 = vrot.slane %v2516, 5
        %v2519 = vsel %vm384, %v2514, %v2518
        %v2520 = vshrl.u32 %v2438, 16
        %v2522 = vrot.slane %v2520, 4
        %v2523 = vor.u32 %v2522, %v2518
        %v2524 = vrot.slane %v2523, 4
        %v2526 = vshll.u32 %v2439, 16
        %v2528 = vrot.slane %v2526, 5
        %v2529 = vsel %vm384, %v2524, %v2528
        %v2531 = vshrl.u32 %v2440, 16
        %v2533 = vrot.slane %v2531, 4
        %v2534 = vshll.u32 %v2440, 16
        %v2536 = vrot.slane %v2534, 5
        %v2537 = vor.u32 %v2533, %v2536
        %v2538 = vrot.slane %v2537, 4
        %v2540 = vshll.u32 %v2441, 16
        %v2542 = vrot.slane %v2540, 5
        %v2543 = vsel %vm384, %v2538, %v2542
        %v2544 = vshrl.u32 %v2441, 16
        %v2546 = vrot.slane %v2544, 4
        %v2547 = vor.u32 %v2546, %v2542
        %v2548 = vrot.slane %v2547, 4
        %v2550 = vshll.u32 %v2442, 16
        %v2552 = vrot.slane %v2550, 5
        %v2553 = vsel %vm384, %v2548, %v2552
        %v2555 = vshrl.u32 %v2443, 16
        %v2557 = vrot.slane %v2555, 4
        %v2558 = vshll.u32 %v2443, 16
        %v2560 = vrot.slane %v2558, 5
        %v2561 = vor.u32 %v2557, %v2560
        %v2562 = vrot.slane %v2561, 4
        %v2564 = vshll.u32 %v2444, 16
        %v2566 = vrot.slane %v2564, 5
        %v2567 = vsel %vm384, %v2562, %v2566
        %v2568 = vshrl.u32 %v2444, 16
        %v2570 = vrot.slane %v2568, 4
        %v2571 = vor.u32 %v2570, %v2566
        %v2572 = vrot.slane %v2571, 4
        %v2574 = vshll.u32 %v2445, 16
        %v2576 = vrot.slane %v2574, 5
        %v2577 = vsel %vm384, %v2572, %v2576
        %v2579 = vshrl.u32 %v2446, 16
        %v2581 = vrot.slane %v2579, 4
        %v2582 = vshll.u32 %v2446, 16
        %v2584 = vrot.slane %v2582, 5
        %v2585 = vor.u32 %v2581, %v2584
        %v2586 = vrot.slane %v2585, 4
        %v2588 = vshll.u32 %v2447, 16
        %v2590 = vrot.slane %v2588, 5
        %v2591 = vsel %vm384, %v2586, %v2590
        %v2592 = vshrl.u32 %v2447, 16
        %v2594 = vrot.slane %v2592, 4
        %v2595 = vor.u32 %v2594, %v2590
        %v2596 = vrot.slane %v2595, 4
        %v2598 = vshll.u32 %v2448, 16
        %v2600 = vrot.slane %v2598, 5
        %v2601 = vsel %vm384, %v2596, %v2600
        %v2603 = vshrl.u32 %v2449, 16
        %v2605 = vrot.slane %v2603, 4
        %v2606 = vshll.u32 %v2449, 16
        %v2608 = vrot.slane %v2606, 5
        %v2609 = vor.u32 %v2605, %v2608
        %v2610 = vrot.slane %v2609, 4
        %v2612 = vshll.u32 %v2450, 16
        %v2614 = vrot.slane %v2612, 5
        %v2615 = vsel %vm384, %v2610, %v2614
        %v2616 = vshrl.u32 %v2450, 16
        %v2618 = vrot.slane %v2616, 4
        %v2619 = vor.u32 %v2618, %v2614
        %v2620 = vrot.slane %v2619, 4
        %v2622 = vshll.u32 %v2451, 16
        %v2624 = vrot.slane %v2622, 5
        %v2625 = vsel %vm384, %v2620, %v2624
        %v2627 = vshrl.u32 %v2452, 16
        %v2629 = vrot.slane %v2627, 4
        %v2630 = vshll.u32 %v2452, 16
        %v2632 = vrot.slane %v2630, 5
        %v2633 = vor.u32 %v2629, %v2632
        %v2634 = vrot.slane %v2633, 4
        %v2636 = vshll.u32 %v2453, 16
        %v2638 = vrot.slane %v2636, 5
        %v2639 = vsel %vm384, %v2634, %v2638
        %v2640 = vshrl.u32 %v2453, 16
        %v2642 = vrot.slane %v2640, 4
        %v2643 = vor.u32 %v2642, %v2638
        %v2644 = vrot.slane %v2643, 4
        %v2646 = vshll.u32 %v2454, 16
        %v2648 = vrot.slane %v2646, 5
        %v2649 = vsel %vm384, %v2644, %v2648
        %v2651 = vshrl.u32 %v2455, 16
        %v2653 = vrot.slane %v2651, 4
        %v2654 = vshll.u32 %v2455, 16
        %v2656 = vrot.slane %v2654, 5
        %v2657 = vor.u32 %v2653, %v2656
        %v2658 = vrot.slane %v2657, 4
        %v2660 = vshll.u32 %v2456, 16
        %v2662 = vrot.slane %v2660, 5
        %v2663 = vsel %vm384, %v2658, %v2662
        %v2664 = vshrl.u32 %v2456, 16
        %v2666 = vrot.slane %v2664, 4
        %v2667 = vor.u32 %v2666, %v2662
        %v2668 = vrot.slane %v2667, 4
        %v2670 = vshll.u32 %v2457, 16
        %v2672 = vrot.slane %v2670, 5
        %v2673 = vsel %vm384, %v2668, %v2672
        %v2675 = vshrl.u32 %v2458, 16
        %v2677 = vrot.slane %v2675, 4
        %v2678 = vshll.u32 %v2458, 16
        %v2680 = vrot.slane %v2678, 5
        %v2681 = vor.u32 %v2677, %v2680
        %v2682 = vrot.slane %v2681, 4
        %v2684 = vshll.u32 %v2459, 16
        %v2686 = vrot.slane %v2684, 5
        %v2687 = vsel %vm384, %v2682, %v2686
        %v2688 = vshrl.u32 %v2459, 16
        %v2690 = vrot.slane %v2688, 4
        %v2691 = vor.u32 %v2690, %v2686
        %v2692 = vrot.slane %v2691, 4
        %v2694 = vshll.u32 %v2460, 16
        %v2696 = vrot.slane %v2694, 5
        %v2697 = vsel %vm384, %v2692, %v2696
        %v2699 = vshrl.u32 %v2461, 16
        %v2701 = vrot.slane %v2699, 4
        %v2702 = vshll.u32 %v2461, 16
        %v2704 = vrot.slane %v2702, 5
        %v2705 = vor.u32 %v2701, %v2704
        %v2706 = vrot.slane %v2705, 4
        %v2708 = vshll.u32 %v2462, 16
        %v2710 = vrot.slane %v2708, 5
        %v2711 = vsel %vm384, %v2706, %v2710
        %v2712 = vshrl.u32 %v2462, 16
        %v2714 = vrot.slane %v2712, 4
        %v2715 = vor.u32 %v2714, %v2710
        %v2716 = vrot.slane %v2715, 4
        %v2718 = vshll.u32 %v2463, 16
        %v2720 = vrot.slane %v2718, 5
        %v2721 = vsel %vm384, %v2716, %v2720
        %v2723 = vshrl.u32 %v2464, 16
        %v2725 = vrot.slane %v2723, 4
        %v2726 = vshll.u32 %v2464, 16
        %v2728 = vrot.slane %v2726, 5
        %v2729 = vor.u32 %v2725, %v2728
        %v2730 = vrot.slane %v2729, 4
        %v2732 = vshll.u32 %v2465, 16
        %v2734 = vrot.slane %v2732, 5
        %v2735 = vsel %vm384, %v2730, %v2734
        %v2736 = vshrl.u32 %v2465, 16
        %v2738 = vrot.slane %v2736, 4
        %v2739 = vor.u32 %v2738, %v2734
        %v2740 = vrot.slane %v2739, 4
        %v2742 = vshll.u32 %v2466, 16
        %v2744 = vrot.slane %v2742, 5
        %v2745 = vsel %vm384, %v2740, %v2744
        %v2747 = vshrl.u32 %v2467, 16
        %v2749 = vrot.slane %v2747, 4
        %v2750 = vshll.u32 %v2467, 16
        %v2752 = vrot.slane %v2750, 5
        %v2753 = vor.u32 %v2749, %v2752
        %v2754 = vrot.slane %v2753, 4
        %v2756 = vshll.u32 %v2468, 16
        %v2758 = vrot.slane %v2756, 5
        %v2759 = vsel %vm384, %v2754, %v2758
        %v2760 = vshrl.u32 %v2468, 16
        %v2762 = vrot.slane %v2760, 4
        %v2763 = vor.u32 %v2762, %v2758
        %v2764 = vrot.slane %v2763, 4
        %v2766 = vshll.u32 %v2469, 16
        %v2768 = vrot.slane %v2766, 5
        %v2769 = vsel %vm384, %v2764, %v2768
        %v2771 = vshrl.u32 %v2470, 16
        %v2773 = vrot.slane %v2771, 4
        %v2774 = vshll.u32 %v2470, 16
        %v2776 = vrot.slane %v2774, 5
        %v2777 = vor.u32 %v2773, %v2776
        %v2778 = vrot.slane %v2777, 4
        %v2780 = vshll.u32 %v2471, 16
        %v2782 = vrot.slane %v2780, 5
        %v2783 = vsel %vm384, %v2778, %v2782
        %v2784 = vshrl.u32 %v2471, 16
        %v2786 = vrot.slane %v2784, 4
        %v2787 = vor.u32 %v2786, %v2782
        %v2788 = vrot.slane %v2787, 4
        %v2790 = vshll.u32 %v2472, 16
        %v2792 = vrot.slane %v2790, 5
        %v2793 = vsel %vm384, %v2788, %v2792
        %v2795 = vshrl.u32 %v2473, 16
        %v2797 = vrot.slane %v2795, 4
        %v2798 = vshll.u32 %v2473, 16
        %v2800 = vrot.slane %v2798, 5
        %v2801 = vor.u32 %v2797, %v2800
        %v2802 = vrot.slane %v2801, 4
        %v2804 = vshll.u32 %v2474, 16
        %v2806 = vrot.slane %v2804, 5
        %v2807 = vsel %vm384, %v2802, %v2806
        %v2808 = vshrl.u32 %v2474, 16
        %v2810 = vrot.slane %v2808, 4
        %v2811 = vor.u32 %v2810, %v2806
        %v2812 = vrot.slane %v2811, 4
        %v2814 = vshll.u32 %v2475, 16
        %v2816 = vrot.slane %v2814, 5
        %v2817 = vsel %vm384, %v2812, %v2816
        %v2819 = vshrl.u32 %v2476, 16
        %v2821 = vrot.slane %v2819, 4
        %v2822 = vshll.u32 %v2476, 16
        %v2824 = vrot.slane %v2822, 5
        %v2825 = vor.u32 %v2821, %v2824
        %v2826 = vrot.slane %v2825, 4
        %v2828 = vshll.u32 %v2477, 16
        %v2830 = vrot.slane %v2828, 5
        %v2831 = vsel %vm384, %v2826, %v2830
        %v2832 = vshrl.u32 %v2477, 16
        %v2834 = vrot.slane %v2832, 4
        %v2835 = vor.u32 %v2834, %v2830
        %v2836 = vrot.slane %v2835, 4
        %v2838 = vshll.u32 %v2478, 16
        %v2840 = vrot.slane %v2838, 5
        %v2841 = vsel %vm384, %v2836, %v2840
        %v2843 = vshrl.u32 %v2479, 16
        %v2845 = vrot.slane %v2843, 4
        %v2846 = vshll.u32 %v2479, 16
        %v2848 = vrot.slane %v2846, 5
        %v2849 = vor.u32 %v2845, %v2848
        %v2850 = vrot.slane %v2849, 4
        %v2852 = vshll.u32 %v2480, 16
        %v2854 = vrot.slane %v2852, 5
        %v2855 = vsel %vm384, %v2850, %v2854
        %v2856 = vshrl.u32 %v2480, 16
        %v2858 = vrot.slane %v2856, 4
        %v2859 = vor.u32 %v2858, %v2854
        %v2860 = vrot.slane %v2859, 4
        %v2862 = vshll.u32 %v2481, 16
        %v2864 = vrot.slane %v2862, 5
        %v2865 = vsel %vm384, %v2860, %v2864
        %v2866 = vunpack.c.l.b16 %v2495
        %v2867 = vunpack.c.l.b16 %v2505
        %v2868 = vunpack.c.l.b16 %v2519
        %v2869 = vunpack.c.l.b16 %v2529
        %v2870 = vunpack.c.l.b16 %v2543
        %v2871 = vunpack.c.l.b16 %v2553
        %v2872 = vunpack.c.l.b16 %v2567
        %v2873 = vunpack.c.l.b16 %v2577
        %v2874 = vunpack.c.l.b16 %v2591
        %v2875 = vunpack.c.l.b16 %v2601
        %v2876 = vunpack.c.l.b16 %v2615
        %v2877 = vunpack.c.l.b16 %v2625
        %v2878 = vunpack.c.l.b16 %v2639
        %v2879 = vunpack.c.l.b16 %v2649
        %v2880 = vunpack.c.l.b16 %v2663
        %v2881 = vunpack.c.l.b16 %v2673
        %v2882 = vunpack.c.l.b16 %v2687
        %v2883 = vunpack.c.l.b16 %v2697
        %v2884 = vunpack.c.l.b16 %v2711
        %v2885 = vunpack.c.l.b16 %v2721
        %v2886 = vunpack.c.l.b16 %v2735
        %v2887 = vunpack.c.l.b16 %v2745
        %v2888 = vunpack.c.l.b16 %v2759
        %v2889 = vunpack.c.l.b16 %v2769
        %v2890 = vunpack.c.l.b16 %v2783
        %v2891 = vunpack.c.l.b16 %v2793
        %v2892 = vunpack.c.l.b16 %v2807
        %v2893 = vunpack.c.l.b16 %v2817
        %v2894 = vunpack.c.l.b16 %v2831
        %v2895 = vunpack.c.l.b16 %v2841
        %v2896 = vunpack.c.l.b16 %v2855
        %v2897 = vunpack.c.l.b16 %v2865
        %v2898 = vpack.c.b16 %v2867, %v2866
        %v2899 = vpack.c.b16 %v2869, %v2868
        %v2900 = vpack.c.b16 %v2871, %v2870
        %v2901 = vpack.c.b16 %v2873, %v2872
        %v2902 = vpack.c.b16 %v2875, %v2874
        %v2903 = vpack.c.b16 %v2877, %v2876
        %v2904 = vpack.c.b16 %v2879, %v2878
        %v2905 = vpack.c.b16 %v2881, %v2880
        %v2906 = vpack.c.b16 %v2883, %v2882
        %v2907 = vpack.c.b16 %v2885, %v2884
        %v2908 = vpack.c.b16 %v2887, %v2886
        %v2909 = vpack.c.b16 %v2889, %v2888
        %v2910 = vpack.c.b16 %v2891, %v2890
        %v2911 = vpack.c.b16 %v2893, %v2892
        %v2912 = vpack.c.b16 %v2895, %v2894
        %v2913 = vpack.c.b16 %v2897, %v2896
        %2914 = vrot.lane.b32.xlu0 %v2898, 28
        %v2915 = vpop.permute.xlu0 %2914
        %2916 = vrot.lane.b32.xlu0 %v2899, 28
        %v2917 = vpop.permute.xlu0 %2916
        %2918 = vrot.lane.b32.xlu0 %v2900, 28
        %v2919 = vpop.permute.xlu0 %2918
        %2920 = vrot.lane.b32.xlu0 %v2901, 28
        %v2921 = vpop.permute.xlu0 %2920
        %2922 = vrot.lane.b32.xlu0 %v2902, 28
        %v2923 = vpop.permute.xlu0 %2922
        %2924 = vrot.lane.b32.xlu0 %v2903, 28
        %v2925 = vpop.permute.xlu0 %2924
        %2926 = vrot.lane.b32.xlu0 %v2904, 28
        %v2927 = vpop.permute.xlu0 %2926
        %2928 = vrot.lane.b32.xlu0 %v2905, 28
        %v2929 = vpop.permute.xlu0 %2928
        %2930 = vrot.lane.b32.xlu0 %v2906, 28
        %v2931 = vpop.permute.xlu0 %2930
        %2932 = vrot.lane.b32.xlu0 %v2907, 28
        %v2933 = vpop.permute.xlu0 %2932
        %2934 = vrot.lane.b32.xlu0 %v2908, 28
        %v2935 = vpop.permute.xlu0 %2934
        %2936 = vrot.lane.b32.xlu0 %v2909, 28
        %v2937 = vpop.permute.xlu0 %2936
        %2938 = vrot.lane.b32.xlu0 %v2910, 28
        %v2939 = vpop.permute.xlu0 %2938
        %2940 = vrot.lane.b32.xlu0 %v2911, 28
        %v2941 = vpop.permute.xlu0 %2940
        %2942 = vrot.lane.b32.xlu0 %v2912, 28
        %v2943 = vpop.permute.xlu0 %2942
        %2944 = vrot.lane.b32.xlu0 %v2913, 28
        %v2945 = vpop.permute.xlu0 %2944
        %vm2962 = vcmask 261344
        %2963 = vst.msk [vmem:[#allocation2] sm:$0xff] %vm2962, %v2915
        %2964 = vst.msk [vmem:[#allocation2 + $0x8] sm:$0xff] %vm2962, %v2917
        %2965 = vst.msk [vmem:[#allocation2 + $0x10] sm:$0xff] %vm2962, %v2919
        %2966 = vst.msk [vmem:[#allocation2 + $0x18] sm:$0xff] %vm2962, %v2921
        %2967 = vst.msk [vmem:[#allocation2 + $0x20] sm:$0xff] %vm2962, %v2923
        %2968 = vst.msk [vmem:[#allocation2 + $0x28] sm:$0xff] %vm2962, %v2925
        %2969 = vst.msk [vmem:[#allocation2 + $0x30] sm:$0xff] %vm2962, %v2927
        %2970 = vst.msk [vmem:[#allocation2 + $0x38] sm:$0xff] %vm2962, %v2929
        %2971 = vst.msk [vmem:[#allocation2 + $0x40] sm:$0xff] %vm2962, %v2931
        %2972 = vst.msk [vmem:[#allocation2 + $0x48] sm:$0xff] %vm2962, %v2933
        %2973 = vst.msk [vmem:[#allocation2 + $0x50] sm:$0xff] %vm2962, %v2935
        %2974 = vst.msk [vmem:[#allocation2 + $0x58] sm:$0xff] %vm2962, %v2937
        %2975 = vst.msk [vmem:[#allocation2 + $0x60] sm:$0xff] %vm2962, %v2939
        %2976 = vst.msk [vmem:[#allocation2 + $0x68] sm:$0xff] %vm2962, %v2941
        %2977 = vst.msk [vmem:[#allocation2 + $0x70] sm:$0xff] %vm2962, %v2943
        %2978 = vst.msk [vmem:[#allocation2 + $0x78] sm:$0xff] %vm2962, %v2945
        %v2979 = vld [vmem:[%s2256] sm:$0xe]
        %v2980 = vld [vmem:[%s2256 + $0x4] sm:$0xf]
        %v2981 = vld [vmem:[%s2256 + $0x8] sm:$0x1]
        %v2982 = vld [vmem:[%s2256 + $0xc] sm:$0xe]
        %v2983 = vld [vmem:[%s2256 + $0x10] sm:$0xf]
        %v2984 = vld [vmem:[%s2256 + $0x14] sm:$0x1]
        %v2985 = vld [vmem:[%s2256 + $0x18] sm:$0xe]
        %v2986 = vld [vmem:[%s2256 + $0x1c] sm:$0xf]
        %v2987 = vld [vmem:[%s2256 + $0x20] sm:$0x1]
        %v2988 = vld [vmem:[%s2256 + $0x24] sm:$0xe]
        %v2989 = vld [vmem:[%s2256 + $0x28] sm:$0xf]
        %v2990 = vld [vmem:[%s2256 + $0x2c] sm:$0x1]
        %v2991 = vld [vmem:[%s2256 + $0x30] sm:$0xe]
        %v2992 = vld [vmem:[%s2256 + $0x34] sm:$0xf]
        %v2993 = vld [vmem:[%s2256 + $0x38] sm:$0x1]
        %v2994 = vld [vmem:[%s2256 + $0x3c] sm:$0xe]
        %v2995 = vld [vmem:[%s2256 + $0x40] sm:$0xf]
        %v2996 = vld [vmem:[%s2256 + $0x44] sm:$0x1]
        %v2997 = vld [vmem:[%s2256 + $0x48] sm:$0xe]
        %v2998 = vld [vmem:[%s2256 + $0x4c] sm:$0xf]
        %v2999 = vld [vmem:[%s2256 + $0x50] sm:$0x1]
        %v3000 = vld [vmem:[%s2256 + $0x54] sm:$0xe]
        %v3001 = vld [vmem:[%s2256 + $0x58] sm:$0xf]
        %v3002 = vld [vmem:[%s2256 + $0x5c] sm:$0x1]
        %v3003 = vld [vmem:[%s2256 + $0x60] sm:$0xe]
        %v3004 = vld [vmem:[%s2256 + $0x64] sm:$0xf]
        %v3005 = vld [vmem:[%s2256 + $0x68] sm:$0x1]
        %v3006 = vld [vmem:[%s2256 + $0x6c] sm:$0xe]
        %v3007 = vld [vmem:[%s2256 + $0x70] sm:$0xf]
        %v3008 = vld [vmem:[%s2256 + $0x74] sm:$0x1]
        %v3009 = vld [vmem:[%s2256 + $0x78] sm:$0xe]
        %v3010 = vld [vmem:[%s2256 + $0x7c] sm:$0xf]
        %v3011 = vld [vmem:[%s2256 + $0x80] sm:$0x1]
        %v3012 = vld [vmem:[%s2256 + $0x84] sm:$0xe]
        %v3013 = vld [vmem:[%s2256 + $0x88] sm:$0xf]
        %v3014 = vld [vmem:[%s2256 + $0x8c] sm:$0x1]
        %v3015 = vld [vmem:[%s2256 + $0x90] sm:$0xe]
        %v3016 = vld [vmem:[%s2256 + $0x94] sm:$0xf]
        %v3017 = vld [vmem:[%s2256 + $0x98] sm:$0x1]
        %v3018 = vld [vmem:[%s2256 + $0x9c] sm:$0xe]
        %v3019 = vld [vmem:[%s2256 + $0xa0] sm:$0xf]
        %v3020 = vld [vmem:[%s2256 + $0xa4] sm:$0x1]
        %v3021 = vld [vmem:[%s2256 + $0xa8] sm:$0xe]
        %v3022 = vld [vmem:[%s2256 + $0xac] sm:$0xf]
        %v3023 = vld [vmem:[%s2256 + $0xb0] sm:$0x1]
        %v3024 = vld [vmem:[%s2256 + $0xb4] sm:$0xe]
        %v3025 = vld [vmem:[%s2256 + $0xb8] sm:$0xf]
        %v3026 = vld [vmem:[%s2256 + $0xbc] sm:$0x1]
        %v3075 = vrot.slane %v2979, 5
        %v3076 = vrot.slane %v3075, 4
        %v3077 = vrot.slane %v2980, 5
        %v3078 = vsel %vm980, %v3076, %v3077
        %v3079 = vrot.slane %v3077, 4
        %v3080 = vrot.slane %v2981, 5
        %v3081 = vsel %vm980, %v3079, %v3080
        %v3082 = vrot.slane %v2982, 5
        %v3083 = vrot.slane %v3082, 4
        %v3084 = vrot.slane %v2983, 5
        %v3085 = vsel %vm980, %v3083, %v3084
        %v3086 = vrot.slane %v3084, 4
        %v3087 = vrot.slane %v2984, 5
        %v3088 = vsel %vm980, %v3086, %v3087
        %v3089 = vrot.slane %v2985, 5
        %v3090 = vrot.slane %v3089, 4
        %v3091 = vrot.slane %v2986, 5
        %v3092 = vsel %vm980, %v3090, %v3091
        %v3093 = vrot.slane %v3091, 4
        %v3094 = vrot.slane %v2987, 5
        %v3095 = vsel %vm980, %v3093, %v3094
        %v3096 = vrot.slane %v2988, 5
        %v3097 = vrot.slane %v3096, 4
        %v3098 = vrot.slane %v2989, 5
        %v3099 = vsel %vm980, %v3097, %v3098
        %v3100 = vrot.slane %v3098, 4
        %v3101 = vrot.slane %v2990, 5
        %v3102 = vsel %vm980, %v3100, %v3101
        %v3103 = vrot.slane %v2991, 5
        %v3104 = vrot.slane %v3103, 4
        %v3105 = vrot.slane %v2992, 5
        %v3106 = vsel %vm980, %v3104, %v3105
        %v3107 = vrot.slane %v3105, 4
        %v3108 = vrot.slane %v2993, 5
        %v3109 = vsel %vm980, %v3107, %v3108
        %v3110 = vrot.slane %v2994, 5
        %v3111 = vrot.slane %v3110, 4
        %v3112 = vrot.slane %v2995, 5
        %v3113 = vsel %vm980, %v3111, %v3112
        %v3114 = vrot.slane %v3112, 4
        %v3115 = vrot.slane %v2996, 5
        %v3116 = vsel %vm980, %v3114, %v3115
        %v3117 = vrot.slane %v2997, 5
        %v3118 = vrot.slane %v3117, 4
        %v3119 = vrot.slane %v2998, 5
        %v3120 = vsel %vm980, %v3118, %v3119
        %v3121 = vrot.slane %v3119, 4
        %v3122 = vrot.slane %v2999, 5
        %v3123 = vsel %vm980, %v3121, %v3122
        %v3124 = vrot.slane %v3000, 5
        %v3125 = vrot.slane %v3124, 4
        %v3126 = vrot.slane %v3001, 5
        %v3127 = vsel %vm980, %v3125, %v3126
        %v3128 = vrot.slane %v3126, 4
        %v3129 = vrot.slane %v3002, 5
        %v3130 = vsel %vm980, %v3128, %v3129
        %v3131 = vrot.slane %v3003, 5
        %v3132 = vrot.slane %v3131, 4
        %v3133 = vrot.slane %v3004, 5
        %v3134 = vsel %vm980, %v3132, %v3133
        %v3135 = vrot.slane %v3133, 4
        %v3136 = vrot.slane %v3005, 5
        %v3137 = vsel %vm980, %v3135, %v3136
        %v3138 = vrot.slane %v3006, 5
        %v3139 = vrot.slane %v3138, 4
        %v3140 = vrot.slane %v3007, 5
        %v3141 = vsel %vm980, %v3139, %v3140
        %v3142 = vrot.slane %v3140, 4
        %v3143 = vrot.slane %v3008, 5
        %v3144 = vsel %vm980, %v3142, %v3143
        %v3145 = vrot.slane %v3009, 5
        %v3146 = vrot.slane %v3145, 4
        %v3147 = vrot.slane %v3010, 5
        %v3148 = vsel %vm980, %v3146, %v3147
        %v3149 = vrot.slane %v3147, 4
        %v3150 = vrot.slane %v3011, 5
        %v3151 = vsel %vm980, %v3149, %v3150
        %v3152 = vrot.slane %v3012, 5
        %v3153 = vrot.slane %v3152, 4
        %v3154 = vrot.slane %v3013, 5
        %v3155 = vsel %vm980, %v3153, %v3154
        %v3156 = vrot.slane %v3154, 4
        %v3157 = vrot.slane %v3014, 5
        %v3158 = vsel %vm980, %v3156, %v3157
        %v3159 = vrot.slane %v3015, 5
        %v3160 = vrot.slane %v3159, 4
        %v3161 = vrot.slane %v3016, 5
        %v3162 = vsel %vm980, %v3160, %v3161
        %v3163 = vrot.slane %v3161, 4
        %v3164 = vrot.slane %v3017, 5
        %v3165 = vsel %vm980, %v3163, %v3164
        %v3166 = vrot.slane %v3018, 5
        %v3167 = vrot.slane %v3166, 4
        %v3168 = vrot.slane %v3019, 5
        %v3169 = vsel %vm980, %v3167, %v3168
        %v3170 = vrot.slane %v3168, 4
        %v3171 = vrot.slane %v3020, 5
        %v3172 = vsel %vm980, %v3170, %v3171
        %v3173 = vrot.slane %v3021, 5
        %v3174 = vrot.slane %v3173, 4
        %v3175 = vrot.slane %v3022, 5
        %v3176 = vsel %vm980, %v3174, %v3175
        %v3177 = vrot.slane %v3175, 4
        %v3178 = vrot.slane %v3023, 5
        %v3179 = vsel %vm980, %v3177, %v3178
        %v3180 = vrot.slane %v3024, 5
        %v3181 = vrot.slane %v3180, 4
        %v3182 = vrot.slane %v3025, 5
        %v3183 = vsel %vm980, %v3181, %v3182
        %v3184 = vrot.slane %v3182, 4
        %v3185 = vrot.slane %v3026, 5
        %v3186 = vsel %vm980, %v3184, %v3185
        %v3187 = vunpack.c.l.b16 %v3078
        %v3188 = vunpack.c.l.b16 %v3081
        %v3189 = vunpack.c.l.b16 %v3085
        %v3190 = vunpack.c.l.b16 %v3088
        %v3191 = vunpack.c.l.b16 %v3092
        %v3192 = vunpack.c.l.b16 %v3095
        %v3193 = vunpack.c.l.b16 %v3099
        %v3194 = vunpack.c.l.b16 %v3102
        %v3195 = vunpack.c.l.b16 %v3106
        %v3196 = vunpack.c.l.b16 %v3109
        %v3197 = vunpack.c.l.b16 %v3113
        %v3198 = vunpack.c.l.b16 %v3116
        %v3199 = vunpack.c.l.b16 %v3120
        %v3200 = vunpack.c.l.b16 %v3123
        %v3201 = vunpack.c.l.b16 %v3127
        %v3202 = vunpack.c.l.b16 %v3130
        %v3203 = vunpack.c.l.b16 %v3134
        %v3204 = vunpack.c.l.b16 %v3137
        %v3205 = vunpack.c.l.b16 %v3141
        %v3206 = vunpack.c.l.b16 %v3144
        %v3207 = vunpack.c.l.b16 %v3148
        %v3208 = vunpack.c.l.b16 %v3151
        %v3209 = vunpack.c.l.b16 %v3155
        %v3210 = vunpack.c.l.b16 %v3158
        %v3211 = vunpack.c.l.b16 %v3162
        %v3212 = vunpack.c.l.b16 %v3165
        %v3213 = vunpack.c.l.b16 %v3169
        %v3214 = vunpack.c.l.b16 %v3172
        %v3215 = vunpack.c.l.b16 %v3176
        %v3216 = vunpack.c.l.b16 %v3179
        %v3217 = vunpack.c.l.b16 %v3183
        %v3218 = vunpack.c.l.b16 %v3186
        %v3219 = vpack.c.b16 %v3188, %v3187
        %v3220 = vpack.c.b16 %v3190, %v3189
        %v3221 = vpack.c.b16 %v3192, %v3191
        %v3222 = vpack.c.b16 %v3194, %v3193
        %v3223 = vpack.c.b16 %v3196, %v3195
        %v3224 = vpack.c.b16 %v3198, %v3197
        %v3225 = vpack.c.b16 %v3200, %v3199
        %v3226 = vpack.c.b16 %v3202, %v3201
        %v3227 = vpack.c.b16 %v3204, %v3203
        %v3228 = vpack.c.b16 %v3206, %v3205
        %v3229 = vpack.c.b16 %v3208, %v3207
        %v3230 = vpack.c.b16 %v3210, %v3209
        %v3231 = vpack.c.b16 %v3212, %v3211
        %v3232 = vpack.c.b16 %v3214, %v3213
        %v3233 = vpack.c.b16 %v3216, %v3215
        %v3234 = vpack.c.b16 %v3218, %v3217
        %3235 = vrot.lane.b32.xlu0 %v3219, 32
        %v3236 = vpop.permute.xlu0 %3235
        %3237 = vrot.lane.b32.xlu0 %v3220, 32
        %v3238 = vpop.permute.xlu0 %3237
        %3239 = vrot.lane.b32.xlu0 %v3221, 32
        %v3240 = vpop.permute.xlu0 %3239
        %3241 = vrot.lane.b32.xlu0 %v3222, 32
        %v3242 = vpop.permute.xlu0 %3241
        %3243 = vrot.lane.b32.xlu0 %v3223, 32
        %v3244 = vpop.permute.xlu0 %3243
        %3245 = vrot.lane.b32.xlu0 %v3224, 32
        %v3246 = vpop.permute.xlu0 %3245
        %3247 = vrot.lane.b32.xlu0 %v3225, 32
        %v3248 = vpop.permute.xlu0 %3247
        %3249 = vrot.lane.b32.xlu0 %v3226, 32
        %v3250 = vpop.permute.xlu0 %3249
        %3251 = vrot.lane.b32.xlu0 %v3227, 32
        %v3252 = vpop.permute.xlu0 %3251
        %3253 = vrot.lane.b32.xlu0 %v3228, 32
        %v3254 = vpop.permute.xlu0 %3253
        %3255 = vrot.lane.b32.xlu0 %v3229, 32
        %v3256 = vpop.permute.xlu0 %3255
        %3257 = vrot.lane.b32.xlu0 %v3230, 32
        %v3258 = vpop.permute.xlu0 %3257
        %3259 = vrot.lane.b32.xlu0 %v3231, 32
        %v3260 = vpop.permute.xlu0 %3259
        %3261 = vrot.lane.b32.xlu0 %v3232, 32
        %v3262 = vpop.permute.xlu0 %3261
        %3263 = vrot.lane.b32.xlu0 %v3233, 32
        %v3264 = vpop.permute.xlu0 %3263
        %3265 = vrot.lane.b32.xlu0 %v3234, 32
        %v3266 = vpop.permute.xlu0 %3265
        %vm3283 = vcmask 294144
        %3284 = vst.msk [vmem:[#allocation2] sm:$0xff] %vm3283, %v3236
        %3285 = vst.msk [vmem:[#allocation2 + $0x8] sm:$0xff] %vm3283, %v3238
        %3286 = vst.msk [vmem:[#allocation2 + $0x10] sm:$0xff] %vm3283, %v3240
        %3287 = vst.msk [vmem:[#allocation2 + $0x18] sm:$0xff] %vm3283, %v3242
        %3288 = vst.msk [vmem:[#allocation2 + $0x20] sm:$0xff] %vm3283, %v3244
        %3289 = vst.msk [vmem:[#allocation2 + $0x28] sm:$0xff] %vm3283, %v3246
        %3290 = vst.msk [vmem:[#allocation2 + $0x30] sm:$0xff] %vm3283, %v3248
        %3291 = vst.msk [vmem:[#allocation2 + $0x38] sm:$0xff] %vm3283, %v3250
        %3292 = vst.msk [vmem:[#allocation2 + $0x40] sm:$0xff] %vm3283, %v3252
        %3293 = vst.msk [vmem:[#allocation2 + $0x48] sm:$0xff] %vm3283, %v3254
        %3294 = vst.msk [vmem:[#allocation2 + $0x50] sm:$0xff] %vm3283, %v3256
        %3295 = vst.msk [vmem:[#allocation2 + $0x58] sm:$0xff] %vm3283, %v3258
        %3296 = vst.msk [vmem:[#allocation2 + $0x60] sm:$0xff] %vm3283, %v3260
        %3297 = vst.msk [vmem:[#allocation2 + $0x68] sm:$0xff] %vm3283, %v3262
        %3298 = vst.msk [vmem:[#allocation2 + $0x70] sm:$0xff] %vm3283, %v3264
        %3299 = vst.msk [vmem:[#allocation2 + $0x78] sm:$0xff] %vm3283, %v3266
        %v3300 = vld [vmem:[#allocation2] sm:$0xff]
        %v3301 = vld [vmem:[#allocation2 + $0x8] sm:$0xff]
        %v3302 = vld [vmem:[#allocation2 + $0x10] sm:$0xff]
        %v3303 = vld [vmem:[#allocation2 + $0x18] sm:$0xff]
        %v3304 = vld [vmem:[#allocation2 + $0x20] sm:$0xff]
        %v3305 = vld [vmem:[#allocation2 + $0x28] sm:$0xff]
        %v3306 = vld [vmem:[#allocation2 + $0x30] sm:$0xff]
        %v3307 = vld [vmem:[#allocation2 + $0x38] sm:$0xff]
        %v3308 = vld [vmem:[#allocation2 + $0x40] sm:$0xff]
        %v3309 = vld [vmem:[#allocation2 + $0x48] sm:$0xff]
        %v3310 = vld [vmem:[#allocation2 + $0x50] sm:$0xff]
        %v3311 = vld [vmem:[#allocation2 + $0x58] sm:$0xff]
        %v3312 = vld [vmem:[#allocation2 + $0x60] sm:$0xff]
        %v3313 = vld [vmem:[#allocation2 + $0x68] sm:$0xff]
        %v3314 = vld [vmem:[#allocation2 + $0x70] sm:$0xff]
        %v3315 = vld [vmem:[#allocation2 + $0x78] sm:$0xff]
        %v3316 = vld [vmem:[%s1] sm:$0xf]
        %v3317 = vld [vmem:[%s1 + $0x4] sm:$0xf]
        %v3318 = vld [vmem:[%s1 + $0x8] sm:$0xf]
        %v3319 = vld [vmem:[%s1 + $0xc] sm:$0xf]
        %v3320 = vld [vmem:[%s1 + $0x10] sm:$0x3]
        %v3321 = vld [vmem:[%s2] sm:$0x1]
        %v3323 = vlaneseq
        %v3324 = vshrl.u32 %v3323, 7
        %v3325 = vsub.s32 0, %v3324
        %v3326 = vrot.slane %v3321, %v3325
        %v3333 = vunpack.c.l.b16 %v3316
        %v3334 = vunpack.c.l.b16 %v3317
        %v3335 = vunpack.c.l.b16 %v3318
        %v3336 = vunpack.c.l.b16 %v3319
        %v3337 = vunpack.c.l.b16 %v3320
        %v3338 = vpack.c.b16 %v3334, %v3333
        %v3339 = vpack.c.b16 %v3336, %v3335
        %v3340 = vpack.c.b16 %v3337, %v3337
        %vm3343 = vcmask 293888
        %v3345 = vsel %vm3343, %v3300, 0
        %v3348 = vsel %vm3343, %v3301, 0
        %v3351 = vsel %vm3343, %v3302, 0
        %v3354 = vsel %vm3343, %v3303, 0
        %v3357 = vsel %vm3343, %v3304, 0
        %v3360 = vsel %vm3343, %v3305, 0
        %v3363 = vsel %vm3343, %v3306, 0
        %v3366 = vsel %vm3343, %v3307, 0
        %v3369 = vsel %vm3343, %v3308, 0
        %v3372 = vsel %vm3343, %v3309, 0
        %v3375 = vsel %vm3343, %v3310, 0
        %v3378 = vsel %vm3343, %v3311, 0
        %v3381 = vsel %vm3343, %v3312, 0
        %v3384 = vsel %vm3343, %v3313, 0
        %v3387 = vsel %vm3343, %v3314, 0
        %v3390 = vsel %vm3343, %v3315, 0
        %vm3392 = vcmask 1041408
        %v3394 = vsel %vm3392, %v3340, 0
        %3396 = vmatprep.subr.bf16.mxu0 0
        %3397 = vmatpush1.bf16.msra.mxu0 %v3338
        %3398 = vmatprep.subr.bf16.mxu0 0
        %3399 = vmatpush1.bf16.msra.mxu0 %v3339
        %3400 = vmatprep.subr.bf16.mxu0 0
        %3401 = vmatpush1.bf16.msra.mxu0 %v3394
        %3402 = vmatprep.subr.bf16.mxu0 0
        %3403 = vmatpush1.bf16.msra.mxu0 0
        %3404 = vmatprep.subr.bf16.mxu0 0
        %3405 = vmatpush1.bf16.msra.mxu0 0
        %3406 = vmatprep.subr.bf16.mxu0 0
        %3407 = vmatpush1.bf16.msra.mxu0 0
        %3408 = vmatprep.subr.bf16.mxu0 0
        %3409 = vmatpush1.bf16.msra.mxu0 0
        %3410 = vmatprep.subr.bf16.mxu0 0
        %3411 = vmatpush1.bf16.msra.mxu0 0
        %3412 = vmatprep.subr.bf16.mxu0 0
        %3413 = vmatpush1.bf16.msra.mxu0 0
        %3414 = vmatprep.subr.bf16.mxu0 0
        %3415 = vmatpush1.bf16.msra.mxu0 0
        %3416 = vmatprep.subr.bf16.mxu0 0
        %3417 = vmatpush1.bf16.msra.mxu0 0
        %3418 = vmatprep.subr.bf16.mxu0 0
        %3419 = vmatpush1.bf16.msra.mxu0 0
        %3420 = vmatprep.subr.bf16.mxu0 0
        %3421 = vmatpush1.bf16.msra.mxu0 0
        %3422 = vmatprep.subr.bf16.mxu0 0
        %3423 = vmatpush1.bf16.msra.mxu0 0
        %3424 = vmatprep.subr.bf16.mxu0 0
        %3425 = vmatpush1.bf16.msra.mxu0 0
        %3426 = vmatprep.subr.bf16.mxu0 0
        %3427 = vmatpush1.bf16.msra.mxu0 0
        %3428 = vmatprep.mubr.bf16.mxu0 0
        %3429 = vmatmul.mubr.bf16.gmra.mrb[0].mxu0 %v3345
        %v3430 = vpop.f32.mrb[0].mxu0
        %v3431 = vadd.f32 %v3326, %v3430
        %v3432 = vpop.f32.mrb[0].mxu0
        %v3433 = vpop.f32.mrb[0].mxu0
        %v3434 = vadd.f32 %v3326, %v3433
        %v3435 = vpop.f32.mrb[0].mxu0
        %3436 = vmatprep.mubr.bf16.mxu0 0
        %3437 = vmatmul.mubr.bf16.gmra.mrb[0].mxu0 %v3348
        %v3438 = vpop.f32.mrb[0].mxu0
        %v3439 = vadd.f32 %v3326, %v3438
        %v3440 = vpop.f32.mrb[0].mxu0
        %v3441 = vpop.f32.mrb[0].mxu0
        %v3442 = vadd.f32 %v3326, %v3441
        %v3443 = vpop.f32.mrb[0].mxu0
        %3444 = vmatprep.mubr.bf16.mxu0 0
        %3445 = vmatmul.mubr.bf16.gmra.mrb[0].mxu0 %v3351
        %v3446 = vpop.f32.mrb[0].mxu0
        %v3447 = vadd.f32 %v3326, %v3446
        %v3448 = vpop.f32.mrb[0].mxu0
        %v3449 = vpop.f32.mrb[0].mxu0
        %v3450 = vadd.f32 %v3326, %v3449
        %v3451 = vpop.f32.mrb[0].mxu0
        %3452 = vmatprep.mubr.bf16.mxu0 0
        %3453 = vmatmul.mubr.bf16.gmra.mrb[0].mxu0 %v3354
        %v3454 = vpop.f32.mrb[0].mxu0
        %v3455 = vadd.f32 %v3326, %v3454
        %v3456 = vpop.f32.mrb[0].mxu0
        %v3457 = vpop.f32.mrb[0].mxu0
        %v3458 = vadd.f32 %v3326, %v3457
        %v3459 = vpop.f32.mrb[0].mxu0
        %3460 = vmatprep.mubr.bf16.mxu0 0
        %3461 = vmatmul.mubr.bf16.gmra.mrb[0].mxu0 %v3357
        %v3462 = vpop.f32.mrb[0].mxu0
        %v3463 = vadd.f32 %v3326, %v3462
        %v3464 = vpop.f32.mrb[0].mxu0
        %v3465 = vpop.f32.mrb[0].mxu0
        %v3466 = vadd.f32 %v3326, %v3465
        %v3467 = vpop.f32.mrb[0].mxu0
        %3468 = vmatprep.mubr.bf16.mxu0 0
        %3469 = vmatmul.mubr.bf16.gmra.mrb[0].mxu0 %v3360
        %v3470 = vpop.f32.mrb[0].mxu0
        %v3471 = vadd.f32 %v3326, %v3470
        %v3472 = vpop.f32.mrb[0].mxu0
        %v3473 = vpop.f32.mrb[0].mxu0
        %v3474 = vadd.f32 %v3326, %v3473
        %v3475 = vpop.f32.mrb[0].mxu0
        %3476 = vmatprep.mubr.bf16.mxu0 0
        %3477 = vmatmul.mubr.bf16.gmra.mrb[0].mxu0 %v3363
        %v3478 = vpop.f32.mrb[0].mxu0
        %v3479 = vadd.f32 %v3326, %v3478
        %v3480 = vpop.f32.mrb[0].mxu0
        %v3481 = vpop.f32.mrb[0].mxu0
        %v3482 = vadd.f32 %v3326, %v3481
        %v3483 = vpop.f32.mrb[0].mxu0
        %3484 = vmatprep.mubr.bf16.mxu0 0
        %3485 = vmatmul.mubr.bf16.gmra.mrb[0].mxu0 %v3366
        %v3486 = vpop.f32.mrb[0].mxu0
        %v3487 = vadd.f32 %v3326, %v3486
        %v3488 = vpop.f32.mrb[0].mxu0
        %v3489 = vpop.f32.mrb[0].mxu0
        %v3490 = vadd.f32 %v3326, %v3489
        %v3491 = vpop.f32.mrb[0].mxu0
        %3492 = vmatprep.mubr.bf16.mxu0 0
        %3493 = vmatmul.mubr.bf16.gmra.mrb[0].mxu0 %v3369
        %v3494 = vpop.f32.mrb[0].mxu0
        %v3495 = vadd.f32 %v3326, %v3494
        %v3496 = vpop.f32.mrb[0].mxu0
        %v3497 = vpop.f32.mrb[0].mxu0
        %v3498 = vadd.f32 %v3326, %v3497
        %v3499 = vpop.f32.mrb[0].mxu0
        %3500 = vmatprep.mubr.bf16.mxu0 0
        %3501 = vmatmul.mubr.bf16.gmra.mrb[0].mxu0 %v3372
        %v3502 = vpop.f32.mrb[0].mxu0
        %v3503 = vadd.f32 %v3326, %v3502
        %v3504 = vpop.f32.mrb[0].mxu0
        %v3505 = vpop.f32.mrb[0].mxu0
        %v3506 = vadd.f32 %v3326, %v3505
        %v3507 = vpop.f32.mrb[0].mxu0
        %3508 = vmatprep.mubr.bf16.mxu0 0
        %3509 = vmatmul.mubr.bf16.gmra.mrb[0].mxu0 %v3375
        %v3510 = vpop.f32.mrb[0].mxu0
        %v3511 = vadd.f32 %v3326, %v3510
        %v3512 = vpop.f32.mrb[0].mxu0
        %v3513 = vpop.f32.mrb[0].mxu0
        %v3514 = vadd.f32 %v3326, %v3513
        %v3515 = vpop.f32.mrb[0].mxu0
        %3516 = vmatprep.mubr.bf16.mxu0 0
        %3517 = vmatmul.mubr.bf16.gmra.mrb[0].mxu0 %v3378
        %v3518 = vpop.f32.mrb[0].mxu0
        %v3519 = vadd.f32 %v3326, %v3518
        %v3520 = vpop.f32.mrb[0].mxu0
        %v3521 = vpop.f32.mrb[0].mxu0
        %v3522 = vadd.f32 %v3326, %v3521
        %v3523 = vpop.f32.mrb[0].mxu0
        %3524 = vmatprep.mubr.bf16.mxu0 0
        %3525 = vmatmul.mubr.bf16.gmra.mrb[0].mxu0 %v3381
        %v3526 = vpop.f32.mrb[0].mxu0
        %v3527 = vadd.f32 %v3326, %v3526
        %v3528 = vpop.f32.mrb[0].mxu0
        %v3529 = vpop.f32.mrb[0].mxu0
        %v3530 = vadd.f32 %v3326, %v3529
        %v3531 = vpop.f32.mrb[0].mxu0
        %3532 = vmatprep.mubr.bf16.mxu0 0
        %3533 = vmatmul.mubr.bf16.gmra.mrb[0].mxu0 %v3384
        %v3534 = vpop.f32.mrb[0].mxu0
        %v3535 = vadd.f32 %v3326, %v3534
        %v3536 = vpop.f32.mrb[0].mxu0
        %v3537 = vpop.f32.mrb[0].mxu0
        %v3538 = vadd.f32 %v3326, %v3537
        %v3539 = vpop.f32.mrb[0].mxu0
        %3540 = vmatprep.mubr.bf16.mxu0 0
        %3541 = vmatmul.mubr.bf16.gmra.mrb[0].mxu0 %v3387
        %v3542 = vpop.f32.mrb[0].mxu0
        %v3543 = vadd.f32 %v3326, %v3542
        %v3544 = vpop.f32.mrb[0].mxu0
        %v3545 = vpop.f32.mrb[0].mxu0
        %v3546 = vadd.f32 %v3326, %v3545
        %v3547 = vpop.f32.mrb[0].mxu0
        %3548 = vmatprep.mubr.bf16.mxu0 0
        %3549 = vmatmul.mubr.bf16.gmra.mrb[0].mxu0 %v3390
        %v3550 = vpop.f32.mrb[0].mxu0
        %v3551 = vadd.f32 %v3326, %v3550
        %v3552 = vpop.f32.mrb[0].mxu0
        %v3553 = vpop.f32.mrb[0].mxu0
        %v3554 = vadd.f32 %v3326, %v3553
        %v3555 = vpop.f32.mrb[0].mxu0
        %3556 = vdwg.mxu0
        %vm3557 = vcmp.ge.f32.partialorder %v3431, 0.0
        %vm3558 = vcmp.ge.f32.partialorder %v3434, 0.0
        %vm3559 = vcmp.ge.f32.partialorder %v3439, 0.0
        %vm3560 = vcmp.ge.f32.partialorder %v3442, 0.0
        %vm3561 = vcmp.ge.f32.partialorder %v3447, 0.0
        %vm3562 = vcmp.ge.f32.partialorder %v3450, 0.0
        %vm3563 = vcmp.ge.f32.partialorder %v3455, 0.0
        %vm3564 = vcmp.ge.f32.partialorder %v3458, 0.0
        %vm3565 = vcmp.ge.f32.partialorder %v3463, 0.0
        %vm3566 = vcmp.ge.f32.partialorder %v3466, 0.0
        %vm3567 = vcmp.ge.f32.partialorder %v3471, 0.0
        %vm3568 = vcmp.ge.f32.partialorder %v3474, 0.0
        %vm3569 = vcmp.ge.f32.partialorder %v3479, 0.0
        %vm3570 = vcmp.ge.f32.partialorder %v3482, 0.0
        %vm3571 = vcmp.ge.f32.partialorder %v3487, 0.0
        %vm3572 = vcmp.ge.f32.partialorder %v3490, 0.0
        %vm3573 = vcmp.ge.f32.partialorder %v3495, 0.0
        %vm3574 = vcmp.ge.f32.partialorder %v3498, 0.0
        %vm3575 = vcmp.ge.f32.partialorder %v3503, 0.0
        %vm3576 = vcmp.ge.f32.partialorder %v3506, 0.0
        %vm3577 = vcmp.ge.f32.partialorder %v3511, 0.0
        %vm3578 = vcmp.ge.f32.partialorder %v3514, 0.0
        %vm3579 = vcmp.ge.f32.partialorder %v3519, 0.0
        %vm3580 = vcmp.ge.f32.partialorder %v3522, 0.0
        %vm3581 = vcmp.ge.f32.partialorder %v3527, 0.0
        %vm3582 = vcmp.ge.f32.partialorder %v3530, 0.0
        %vm3583 = vcmp.ge.f32.partialorder %v3535, 0.0
        %vm3584 = vcmp.ge.f32.partialorder %v3538, 0.0
        %vm3585 = vcmp.ge.f32.partialorder %v3543, 0.0
        %vm3586 = vcmp.ge.f32.partialorder %v3546, 0.0
        %vm3587 = vcmp.ge.f32.partialorder %v3551, 0.0
        %vm3588 = vcmp.ge.f32.partialorder %v3554, 0.0
        %v3589 = vmul.f32 %v3431, 0.01
        %v3590 = vmul.f32 %v3434, 0.01
        %v3591 = vmul.f32 %v3439, 0.01
        %v3592 = vmul.f32 %v3442, 0.01
        %v3593 = vmul.f32 %v3447, 0.01
        %v3594 = vmul.f32 %v3450, 0.01
        %v3595 = vmul.f32 %v3455, 0.01
        %v3596 = vmul.f32 %v3458, 0.01
        %v3597 = vmul.f32 %v3463, 0.01
        %v3598 = vmul.f32 %v3466, 0.01
        %v3599 = vmul.f32 %v3471, 0.01
        %v3600 = vmul.f32 %v3474, 0.01
        %v3601 = vmul.f32 %v3479, 0.01
        %v3602 = vmul.f32 %v3482, 0.01
        %v3603 = vmul.f32 %v3487, 0.01
        %v3604 = vmul.f32 %v3490, 0.01
        %v3605 = vmul.f32 %v3495, 0.01
        %v3606 = vmul.f32 %v3498, 0.01
        %v3607 = vmul.f32 %v3503, 0.01
        %v3608 = vmul.f32 %v3506, 0.01
        %v3609 = vmul.f32 %v3511, 0.01
        %v3610 = vmul.f32 %v3514, 0.01
        %v3611 = vmul.f32 %v3519, 0.01
        %v3612 = vmul.f32 %v3522, 0.01
        %v3613 = vmul.f32 %v3527, 0.01
        %v3614 = vmul.f32 %v3530, 0.01
        %v3615 = vmul.f32 %v3535, 0.01
        %v3616 = vmul.f32 %v3538, 0.01
        %v3617 = vmul.f32 %v3543, 0.01
        %v3618 = vmul.f32 %v3546, 0.01
        %v3619 = vmul.f32 %v3551, 0.01
        %v3620 = vmul.f32 %v3554, 0.01
        %v3621 = vsel %vm3557, %v3431, %v3589
        %v3622 = vsel %vm3558, %v3434, %v3590
        %v3623 = vsel %vm3559, %v3439, %v3591
        %v3624 = vsel %vm3560, %v3442, %v3592
        %v3625 = vsel %vm3561, %v3447, %v3593
        %v3626 = vsel %vm3562, %v3450, %v3594
        %v3627 = vsel %vm3563, %v3455, %v3595
        %v3628 = vsel %vm3564, %v3458, %v3596
        %v3629 = vsel %vm3565, %v3463, %v3597
        %v3630 = vsel %vm3566, %v3466, %v3598
        %v3631 = vsel %vm3567, %v3471, %v3599
        %v3632 = vsel %vm3568, %v3474, %v3600
        %v3633 = vsel %vm3569, %v3479, %v3601
        %v3634 = vsel %vm3570, %v3482, %v3602
        %v3635 = vsel %vm3571, %v3487, %v3603
        %v3636 = vsel %vm3572, %v3490, %v3604
        %v3637 = vsel %vm3573, %v3495, %v3605
        %v3638 = vsel %vm3574, %v3498, %v3606
        %v3639 = vsel %vm3575, %v3503, %v3607
        %v3640 = vsel %vm3576, %v3506, %v3608
        %v3641 = vsel %vm3577, %v3511, %v3609
        %v3642 = vsel %vm3578, %v3514, %v3610
        %v3643 = vsel %vm3579, %v3519, %v3611
        %v3644 = vsel %vm3580, %v3522, %v3612
        %v3645 = vsel %vm3581, %v3527, %v3613
        %v3646 = vsel %vm3582, %v3530, %v3614
        %v3647 = vsel %vm3583, %v3535, %v3615
        %v3648 = vsel %vm3584, %v3538, %v3616
        %v3649 = vsel %vm3585, %v3543, %v3617
        %v3650 = vsel %vm3586, %v3546, %v3618
        %v3651 = vsel %vm3587, %v3551, %v3619
        %v3652 = vsel %vm3588, %v3554, %v3620
        %3653 = vst [vmem:[%s177] sm:$0xff] %v3621
        %3654 = vst [vmem:[%s177 + $0x8] sm:$0xff] %v3622
        %3655 = vst [vmem:[%s177 + $0x10] sm:$0xff] %v3623
        %3656 = vst [vmem:[%s177 + $0x18] sm:$0xff] %v3624
        %3657 = vst [vmem:[%s177 + $0x20] sm:$0xff] %v3625
        %3658 = vst [vmem:[%s177 + $0x28] sm:$0xff] %v3626
        %3659 = vst [vmem:[%s177 + $0x30] sm:$0xff] %v3627
        %3660 = vst [vmem:[%s177 + $0x38] sm:$0xff] %v3628
        %3661 = vst [vmem:[%s177 + $0x40] sm:$0xff] %v3629
        %3662 = vst [vmem:[%s177 + $0x48] sm:$0xff] %v3630
        %3663 = vst [vmem:[%s177 + $0x50] sm:$0xff] %v3631
        %3664 = vst [vmem:[%s177 + $0x58] sm:$0xff] %v3632
        %3665 = vst [vmem:[%s177 + $0x60] sm:$0xff] %v3633
        %3666 = vst [vmem:[%s177 + $0x68] sm:$0xff] %v3634
        %3667 = vst [vmem:[%s177 + $0x70] sm:$0xff] %v3635
        %3668 = vst [vmem:[%s177 + $0x78] sm:$0xff] %v3636
        %3669 = vst [vmem:[%s177 + $0x80] sm:$0xff] %v3637
        %3670 = vst [vmem:[%s177 + $0x88] sm:$0xff] %v3638
        %3671 = vst [vmem:[%s177 + $0x90] sm:$0xff] %v3639
        %3672 = vst [vmem:[%s177 + $0x98] sm:$0xff] %v3640
        %3673 = vst [vmem:[%s177 + $0xa0] sm:$0xff] %v3641
        %3674 = vst [vmem:[%s177 + $0xa8] sm:$0xff] %v3642
        %3675 = vst [vmem:[%s177 + $0xb0] sm:$0xff] %v3643
        %3676 = vst [vmem:[%s177 + $0xb8] sm:$0xff] %v3644
        %3677 = vst [vmem:[%s177 + $0xc0] sm:$0xff] %v3645
        %3678 = vst [vmem:[%s177 + $0xc8] sm:$0xff] %v3646
        %3679 = vst [vmem:[%s177 + $0xd0] sm:$0xff] %v3647
        %3680 = vst [vmem:[%s177 + $0xd8] sm:$0xff] %v3648
        %3681 = vst [vmem:[%s177 + $0xe0] sm:$0xff] %v3649
        %3682 = vst [vmem:[%s177 + $0xe8] sm:$0xff] %v3650
        %3683 = vst [vmem:[%s177 + $0xf0] sm:$0xff] %v3651
        %3684 = vst [vmem:[%s177 + $0xf8] sm:$0xff] %v3652
        %s3685 = sand.u32 %s107, 1
        %s3686 = scalar_lea.sflag [#allocation4], %s3685
        %s3687 = sand.u32 %s107, 1
        %s3688 = smul.addr %s3687, 256
        %s3689 = scalar_lea.vmem [#allocation3], %s3688
        // Predicated region
        $region33: #{tpu_custom_call.1} parent=31 // pred_check
          %p3690 = pneg %p117
        $region34: #{tpu_custom_call.1} parent=31 // pred_check_branch
          %3692 = sbr.rel (%p3690) target = $region36
        $region35: #{tpu_custom_call.1} parent=31 // pred_region
          %s3693 = smul.u32 32, %s22
          %s3695 = ssub.s32 4096, 4096
          %3696 = vsyncadd %s3686, %s3695
          %s3697 = smul.addr %s21, 32
          %s3698 = sadd.s32 %s3693, %s3697
          %s3699 = smul.addr %s3698, 128
          %s3700 = scalar_lea.hbm %s3, %s3699
          %s3701 = sshll.u32 %s3689, 4
          %s3702 = int_to_ptr.vmem [resolvable:$true] %s3701
          %3707 = dma.vmem_to_hbm [thread:$0]  %s3702, 4096, %s3700, %s3686, 128, 128, 8
        $region36: #{tpu_custom_call.1} parent=31 // pred_fallthru
          _
      $region32: #{tpu_custom_call.1} parent=5 // pred_fallthru
        _
      %p3708 = scmp.le.s32.totalorder 2, %s12
      // Predicated region
      $region37: #{tpu_custom_call.1} parent=5 // pred_check
        %p3709 = pneg %p3708
      $region38: #{tpu_custom_call.1} parent=5 // pred_check_branch
        %3711 = sbr.rel (%p3709) target = $region40
      $region39: #{tpu_custom_call.1} parent=5 // pred_region
        %s3712 = ssub.s32 %s12, 2
        // Predicated region
        $region41: #{tpu_custom_call.1} parent=39 // pred_check
          %p3713 = pneg %p123
        $region42: #{tpu_custom_call.1} parent=39 // pred_check_branch
          %3715 = sbr.rel (%p3713) target = $region44
        $region43: #{tpu_custom_call.1} parent=39 // pred_region
          %s3716 = sand.u32 %s108, 1
          %s3717 = scalar_lea.sflag [#allocation4], %s3716
          %s3718 = sand.u32 %s108, 1
          %s3719 = smul.addr %s3718, 256
          %s3720 = scalar_lea.vmem [#allocation3], %s3719
          %3721 = dma.done %s3717, 4096
        $region44: #{tpu_custom_call.1} parent=39 // pred_fallthru
          _
      $region40: #{tpu_custom_call.1} parent=5 // pred_fallthru
        _
    $region6: #{tpu_custom_call.1} parent=1 // loop_footer
      %s16 = sadd.s32 1, %s12
    $region7: #{tpu_custom_call.1} parent=1 // loop_footer_branch
      %11 = sbr.rel target = $region3
    $region8: #{tpu_custom_call.1} parent=1 // loop_exit
      _
    %3722 = vsyncpa [#allocation4], 1
    %s3723 = scalar_lea.sflag [#allocation4], 1
    %3724 = vsyncpa %s3723, 1

</llo_original>
